<compile_context>
chip_gen: v7x
topology: tpu7x:2x2x1
jax: 0.10.0
libtpu: 0.0.40
codegen_flags: <defaults>
</compile_context>

<pallas_src>
import jax
import jax.numpy as jnp
from jax.experimental import pallas as pl
from jax.experimental.pallas import tpu as pltpu

EPS = 1e-5                      # channel_norm epsilon (AdaIN convention)
_MAX_LANES_ELEMWISE = 2048      # lane width cap for lane-dense elementwise views
_MAX_LANE_TILE = 16384          # lane (spatial) tile cap for the stats kernels


# ---------------------------------------------------------------------------
# Device-derived VMEM budgets
# ---------------------------------------------------------------------------
def _derive_vmem_budgets():
    cap = 0
    try:
        info = pltpu.get_tpu_info()
        cap = int(getattr(info, "vmem_capacity_bytes", 0))
    except Exception:
        cap = 0
    if cap <= 0:
        cap = 64 << 20                       # conservative: v7x physical VMEM
    limit = min((cap * 3) // 4, 96 << 20)    # scoped-VMEM limit we request
    budget = min((cap * 2) // 5, 48 << 20)   # bytes for double-buffered inputs
    budget = max(budget, 8 << 20)
    limit = max(limit, budget + (8 << 20))
    return budget, limit


_VMEM_BUDGET, _VMEM_LIMIT = _derive_vmem_budgets()


# ---------------------------------------------------------------------------
# Layout / tiling helpers
# ---------------------------------------------------------------------------
def _lane_dense_2d(x):
    """Free reshape of a contiguous tensor to a lane-dense 2-D view.

    Prefers lane widths that are a multiple of 128 with >= 8 rows so vregs are
    fully populated; falls back to the trailing dim otherwise.
    """
    n = x.size
    start = min(n, _MAX_LANES_ELEMWISE)
    start -= start % 128
    fallback = None
    for lanes in range(start, 127, -128):
        if n % lanes == 0:
            rows = n // lanes
            if rows >= 8:
                return x.reshape(rows, lanes)
            if fallback is None:
                fallback = (rows, lanes)
    if fallback is not None:
        return x.reshape(fallback)
    return x.reshape(-1, x.shape[-1])


def _per_channel_2d(x):
    b, c, h, w = x.shape
    return x.reshape(b * c, h * w)


def _pick_lane_tile(n_spatial):
    """Spatial (lane) tile: full extent if it fits, else a multiple of 128."""
    if n_spatial <= _MAX_LANE_TILE:
        return n_spatial
    cap = (_MAX_LANE_TILE // 128) * 128
    for t in range(cap, max(cap // 2, 128) - 1, -128):
        if n_spatial % t == 0:
            return t
    return cap


def _pick_row_tile(rows, lane_tile, n_arrays, itemsize, extra_bytes_per_row=0):
    """Largest row tile (multiple of 8, or full extent) whose double-buffered
    inputs plus per-row scratch fit the VMEM budget.  Prefers a divisor of
    `rows` so no masked partial block is needed."""
    per_row = n_arrays * 2 * lane_tile * itemsize + extra_bytes_per_row
    cap = (_VMEM_BUDGET // max(per_row, 1)) // 8 * 8
    cap = max(8, min(2048, cap))
    if rows <= cap:
        return rows                                  # full extent (always legal)
    for t in range(cap, max(cap // 2, 8) - 1, -8):   # try to divide rows evenly
        if rows % t == 0:
            return t
    return cap


# ---------------------------------------------------------------------------
# Kernel factories
# ---------------------------------------------------------------------------
def _make_sqdiff_kernel(n_pairs, pair_out, n_out, rows, row_tile, need_row_mask):
    """sum((x-y)^2) for n_pairs tensor pairs; pair p contributes to output
    pair_out[p].  Grid = (row_blocks,).  Accumulation in (row_tile,1) scratch;
    the cross-sublane reduce + scalar store happen only on the last step."""

    def kernel(*refs):
        in_refs = refs[:2 * n_pairs]
        out_refs = refs[2 * n_pairs:2 * n_pairs + n_out]
        acc_refs = refs[2 * n_pairs + n_out:]
        step = pl.program_id(0)

        @pl.when(step == 0)
        def _():
            for a in acc_refs:
                a[...] = jnp.zeros_like(a)

        partial = [None] * n_out
        for p in range(n_pairs):
            x = in_refs[2 * p][...].astype(jnp.float32)
            y = in_refs[2 * p + 1][...].astype(jnp.float32)
            d = x - y
            r = jnp.sum(d * d, axis=-1, keepdims=True)        # (row_tile, 1)
            o = pair_out[p]
            partial[o] = r if partial[o] is None else partial[o] + r

        if need_row_mask:
            rid = step * row_tile + jax.lax.broadcasted_iota(
                jnp.int32, (row_tile, 1), 0)
            valid = rid < rows
            partial = [jnp.where(valid, r, 0.0) for r in partial]

        for o in range(n_out):
            acc_refs[o][...] += partial[o]

        @pl.when(step == pl.num_programs(0) - 1)
        def _():
            for o in range(n_out):
                out_refs[o][...] = jnp.sum(acc_refs[o][...], axis=0,
                                           keepdims=True)

    return kernel


def _make_stats_kernel(n_sets, with_content, rows, row_tile, lane_tile,
                       n_spatial, need_row_mask, need_lane_mask):
    """Per-channel mean/std(-MSE) and (optionally) channel-norm-MSE partials.

    Each set is (o, s) or (o, c, s) in (B*C, H*W) layout, all identically
    shaped.  Grid = (row_blocks, lane_blocks) with the lane (spatial) axis
    innermost.  Raw moments are accumulated per row across lane blocks in
    (row_tile, 1) scratch; metrics are finalized once per row block; the
    scalar outputs are written only on the very last step."""
    n_in_per_set = 3 if with_content else 2
    n_in = n_sets * n_in_per_set
    n_out = 3 if with_content else 2            # [cn,] mu, sd
    n_sums = 7 if with_content else 4
    inv_n = 1.0 / n_spatial
    inv_nm1 = 1.0 / max(n_spatial - 1, 1)
    n_f = float(n_spatial)

    def kernel(*refs):
        in_refs = refs[:n_in]
        out_refs = refs[n_in:n_in + n_out]
        scr = refs[n_in + n_out:]
        sum_refs = scr[:n_sets * n_sums]
        acc_refs = scr[n_sets * n_sums:]

        ri = pl.program_id(0)
        li = pl.program_id(1)
        last_row = pl.num_programs(0) - 1
        last_lane = pl.num_programs(1) - 1

        @pl.when(jnp.logical_and(ri == 0, li == 0))
        def _():
            for a in acc_refs:
                a[...] = jnp.zeros_like(a)

        @pl.when(li == 0)
        def _():
            for a in sum_refs:
                a[...] = jnp.zeros_like(a)

        if need_lane_mask:
            pos = li * lane_tile + jax.lax.broadcasted_iota(
                jnp.int32, (1, lane_tile), 1)
            lane_valid = pos < n_spatial

        def masked(t):
            return jnp.where(lane_valid, t, 0.0) if need_lane_mask else t

        # Streaming phase: one-pass raw-moment accumulation per set.
        for s in range(n_sets):
            srefs = sum_refs[s * n_sums:(s + 1) * n_sums]
            base = s * n_in_per_set
            o = masked(in_refs[base][...].astype(jnp.float32))
            if with_content:
                c = masked(in_refs[base + 1][...].astype(jnp.float32))
                sty = masked(in_refs[base + 2][...].astype(jnp.float32))
            else:
                sty = masked(in_refs[base + 1][...].astype(jnp.float32))
            srefs[0][...] += jnp.sum(o, axis=-1, keepdims=True)
            srefs[1][...] += jnp.sum(o * o, axis=-1, keepdims=True)
            if with_content:
                srefs[2][...] += jnp.sum(c, axis=-1, keepdims=True)
                srefs[3][...] += jnp.sum(c * c, axis=-1, keepdims=True)
                srefs[4][...] += jnp.sum(o * c, axis=-1, keepdims=True)
                srefs[5][...] += jnp.sum(sty, axis=-1, keepdims=True)
                srefs[6][...] += jnp.sum(sty * sty, axis=-1, keepdims=True)
            else:
                srefs[2][...] += jnp.sum(sty, axis=-1, keepdims=True)
                srefs[3][...] += jnp.sum(sty * sty, axis=-1, keepdims=True)

        # Finalize this row block once its full spatial extent has streamed.
        @pl.when(li == last_lane)
        def _():
            if need_row_mask:
                rid = ri * row_tile + jax.lax.broadcasted_iota(
                    jnp.int32, (row_tile, 1), 0)
                row_valid = rid < rows
            for s in range(n_sets):
                srefs = sum_refs[s * n_sums:(s + 1) * n_sums]
                so, so2 = srefs[0][...], srefs[1][...]
                if with_content:
                    sc, sc2, soc = srefs[2][...], srefs[3][...], srefs[4][...]
                    ss, ss2 = srefs[5][...], srefs[6][...]
                else:
                    ss, ss2 = srefs[2][...], srefs[3][...]
                mo = so * inv_n
                ms = ss * inv_n
                vo = jnp.maximum((so2 - n_f * mo * mo) * inv_nm1, 0.0)
                vs = jnp.maximum((ss2 - n_f * ms * ms) * inv_nm1, 0.0)
                mu_row = (mo - ms) ** 2
                sd_row = (jnp.sqrt(vo) - jnp.sqrt(vs)) ** 2
                if with_content:
                    mc = sc * inv_n
                    vc = jnp.maximum((sc2 - n_f * mc * mc) * inv_nm1, 0.0)
                    ao = jax.lax.rsqrt(vo + EPS)
                    ac = jax.lax.rsqrt(vc + EPS)
                    # sum_i ((o_i-mo)*ao - (c_i-mc)*ac)^2 in raw moments
                    cn_row = jnp.maximum(
                        ao * ao * so2 - 2.0 * ao * ac * soc + ac * ac * sc2
                        - n_f * (ao * mo - ac * mc) ** 2, 0.0)
                    metrics = [cn_row, mu_row, sd_row]
                else:
                    metrics = [mu_row, sd_row]
                if need_row_mask:
                    metrics = [jnp.where(row_valid, m, 0.0) for m in metrics]
                for oi in range(n_out):
                    acc_refs[oi][...] += metrics[oi]

        @pl.when(jnp.logical_and(ri == last_row, li == last_lane))
        def _():
            for oi in range(n_out):
                out_refs[oi][...] = jnp.sum(acc_refs[oi][...], axis=0,
                                            keepdims=True)

    return kernel


# ---------------------------------------------------------------------------
# pallas_call wrappers
# ---------------------------------------------------------------------------
def _sqdiff_call(pairs, pair_out, n_out):
    """Fused sum((x-y)^2) over several equally shaped tensor pairs."""
    views = []
    for x, y in pairs:
        views.append(_lane_dense_2d(x))
        views.append(_lane_dense_2d(y))
    rows, lanes = views[0].shape
    itemsize = max(int(v.dtype.itemsize) for v in views)
    extra = n_out * 128 * 4                              # lane-padded scratch/row
    row_tile = _pick_row_tile(rows, lanes, len(views), itemsize, extra)
    nb = pl.cdiv(rows, row_tile)
    need_row_mask = (nb * row_tile) != rows

    kernel = _make_sqdiff_kernel(len(pairs), tuple(pair_out), n_out,
                                 rows, row_tile, need_row_mask)
    in_specs = [pl.BlockSpec((row_tile, lanes), lambda i: (i, 0))
                for _ in views]
    out_shape = tuple(jax.ShapeDtypeStruct((1, 1), jnp.float32)
                      for _ in range(n_out))
    out_specs = tuple(pl.BlockSpec((1, 1), lambda i: (0, 0))
                      for _ in range(n_out))
    scratch = [pltpu.VMEM((row_tile, 1), jnp.float32) for _ in range(n_out)]

    outs = pl.pallas_call(
        kernel,
        out_shape=out_shape,
        grid=(nb,),
        in_specs=in_specs,
        out_specs=out_specs,
        scratch_shapes=scratch,
        compiler_params=pltpu.CompilerParams(
            dimension_semantics=("arbitrary",),
            vmem_limit_bytes=_VMEM_LIMIT),
    )(*views)
    return tuple(o[0, 0] for o in outs)


def _stats_call(sets, with_content, n_spatial):
    """Fused per-channel stats for several identically shaped layer sets."""
    views = [a for st in sets for a in st]
    rows = views[0].shape[0]
    n_out = 3 if with_content else 2
    n_sums = 7 if with_content else 4

    lane_tile = _pick_lane_tile(n_spatial)
    n_lane_blocks = pl.cdiv(n_spatial, lane_tile)
    need_lane_mask = (n_lane_blocks * lane_tile) != n_spatial

    itemsize = max(int(v.dtype.itemsize) for v in views)
    n_scratch = len(sets) * n_sums + n_out
    extra = n_scratch * 128 * 4                          # lane-padded scratch/row
    row_tile = _pick_row_tile(rows, lane_tile, len(views), itemsize, extra)
    nb = pl.cdiv(rows, row_tile)
    need_row_mask = (nb * row_tile) != rows

    kernel = _make_stats_kernel(len(sets), with_content, rows, row_tile,
                                lane_tile, n_spatial, need_row_mask,
                                need_lane_mask)
    in_specs = [pl.BlockSpec((row_tile, lane_tile), lambda ri, li: (ri, li))
                for _ in views]
    out_shape = tuple(jax.ShapeDtypeStruct((1, 1), jnp.float32)
                      for _ in range(n_out))
    out_specs = tuple(pl.BlockSpec((1, 1), lambda ri, li: (0, 0))
                      for _ in range(n_out))
    scratch = ([pltpu.VMEM((row_tile, 1), jnp.float32)
                for _ in range(len(sets) * n_sums)]
               + [pltpu.VMEM((row_tile, 1), jnp.float32)
                  for _ in range(n_out)])

    outs = pl.pallas_call(
        kernel,
        out_shape=out_shape,
        grid=(nb, n_lane_blocks),
        in_specs=in_specs,
        out_specs=out_specs,
        scratch_shapes=scratch,
        compiler_params=pltpu.CompilerParams(
            dimension_semantics=("arbitrary", "arbitrary"),
            vmem_limit_bytes=_VMEM_LIMIT),
    )(*views)
    return tuple(o[0, 0] for o in outs)


def _group_by_shape(layers, ref_map):
    groups = {}
    for layer in layers:
        shp = tuple(int(d) for d in ref_map[layer].shape)
        groups.setdefault(shp, []).append(layer)
    return groups


# ---------------------------------------------------------------------------
# STLoss forward (scalar glue in plain JAX; all tensor streaming in Pallas)
# ---------------------------------------------------------------------------
class STLoss:
    def __init__(self, lmbda_c=1, lmbda_s=3, lmbda_i1=30, lmbda_i2=1):
        self.lmbda_c = lmbda_c
        self.lmbda_s = lmbda_s
        self.lmbda_i1 = lmbda_i1
        self.lmbda_i2 = lmbda_i2

    def __call__(self, output_map, content_map, style_map,
                 content_identity_map, style_identity_map,
                 content, style, content_identity, style_identity):
        layers = list(output_map.keys())
        cs_layers = [l for l in layers if l in ('relu4_1', 'relu5_1')]
        so_layers = [l for l in layers if l not in ('relu4_1', 'relu5_1')]

        content_loss = 0.0
        style_loss = 0.0

        # relu4_1 / relu5_1: channel-norm content term + mean/std style term,
        # fused so `output` is streamed from HBM exactly once per layer.
        for shp, group in _group_by_shape(cs_layers, output_map).items():
            b, ch, h, w = shp
            sets = [(_per_channel_2d(output_map[l]),
                     _per_channel_2d(content_map[l]),
                     _per_channel_2d(style_map[l])) for l in group]
            cn_s, mu_s, sd_s = _stats_call(sets, True, h * w)
            content_loss += cn_s / float(b * ch * h * w)
            style_loss += (mu_s + sd_s) / float(b * ch)

        # remaining layers: mean/std style term only.
        for shp, group in _group_by_shape(so_layers, output_map).items():
            b, ch, h, w = shp
            sets = [(_per_channel_2d(output_map[l]),
                     _per_channel_2d(style_map[l])) for l in group]
            mu_s, sd_s = _stats_call(sets, False, h * w)
            style_loss += (mu_s + sd_s) / float(b * ch)

        # identity-1: Frobenius norms of the image-space residuals (one call).
        s1, s2 = _sqdiff_call([(content_identity, content),
                               (style_identity, style)],
                              pair_out=(0, 1), n_out=2)
        i1_loss = jnp.sqrt(s1) + jnp.sqrt(s2)

        # identity-2: per-layer MSEs, fused per distinct layer shape.
        i2_loss = 0.0
        for shp, group in _group_by_shape(layers, content_map).items():
            numel = 1
            for d in shp:
                numel *= d
            pairs = []
            for l in group:
                pairs.append((content_identity_map[l], content_map[l]))
                pairs.append((style_identity_map[l], style_map[l]))
            (tot,) = _sqdiff_call(pairs, pair_out=tuple(0 for _ in pairs),
                                  n_out=1)
            i2_loss += tot / float(numel)

        identity_loss = self.lmbda_i1 * i1_loss + self.lmbda_i2 * i2_loss
        return (self.lmbda_c * content_loss + self.lmbda_s * style_loss
                + identity_loss)


# ---------------------------------------------------------------------------
# Pure-JAX reference (correctness sanity check)
# ---------------------------------------------------------------------------
def _ref_channel_norm(x):
    b, c, h, w = x.shape
    xf = x.reshape(b, c, h * w)
    mean = xf.mean(-1, keepdims=True)
    var = ((xf - mean) ** 2).sum(-1, keepdims=True) / max(h * w - 1, 1)
    return ((xf - mean) / jnp.sqrt(var + EPS)).reshape(b, c, h, w)


def _ref_mean_std(x):
    b, c, h, w = x.shape
    xf = x.reshape(b, c, h * w)
    m = xf.mean(-1)
    s = jnp.sqrt(((xf - m[..., None]) ** 2).sum(-1) / max(h * w - 1, 1))
    return m, s


def _ref_mse(x, y):
    return jnp.mean((x - y) ** 2)


def _ref_loss(out_m, c_m, s_m, ci_m, si_m, content, style, c_id, s_id,
              lc=1, ls=3, li1=30, li2=1):
    content_loss = (_ref_mse(_ref_channel_norm(out_m['relu4_1']),
                             _ref_channel_norm(c_m['relu4_1']))
                    + _ref_mse(_ref_channel_norm(out_m['relu5_1']),
                               _ref_channel_norm(c_m['relu5_1'])))
    style_loss = 0.0
    for layer in out_m.keys():
        mo, so = _ref_mean_std(out_m[layer])
        ms, ss = _ref_mean_std(s_m[layer])
        style_loss += _ref_mse(mo, ms) + _ref_mse(so, ss)
    i1 = (jnp.sqrt(jnp.sum((c_id - content) ** 2))
          + jnp.sqrt(jnp.sum((s_id - style) ** 2)))
    i2 = 0.0
    for layer in out_m.keys():
        i2 += _ref_mse(ci_m[layer], c_m[layer]) + _ref_mse(si_m[layer], s_m[layer])
    return lc * content_loss + ls * style_loss + li1 * i1 + li2 * i2


# ---------------------------------------------------------------------------
if __name__ == "__main__":
    key = jax.random.PRNGKey(0)

    # VGG-like feature-map shapes (batch=2); relu2/3 and relu4/5 share a shape
    # so the same-shape fusion path is exercised.
    layer_shapes = {
        'relu1_1': (2, 8, 32, 32),
        'relu2_1': (2, 16, 16, 16),
        'relu3_1': (2, 16, 16, 16),
        'relu4_1': (2, 32, 8, 8),
        'relu5_1': (2, 32, 8, 8),
    }
    img_shape = (2, 3, 32, 32)

    def make_map(k):
        m = {}
        for name, shp in layer_shapes.items():
            k, sub = jax.random.split(k)
            m[name] = jax.random.normal(sub, shp, dtype=jnp.float32)
        return m, k

    output_map, key = make_map(key)
    content_map, key = make_map(key)
    style_map, key = make_map(key)
    content_identity_map, key = make_map(key)
    style_identity_map, key = make_map(key)

    key, k1, k2, k3, k4 = jax.random.split(key, 5)
    content = jax.random.normal(k1, img_shape, dtype=jnp.float32)
    style = jax.random.normal(k2, img_shape, dtype=jnp.float32)
    content_identity = jax.random.normal(k3, img_shape, dtype=jnp.float32)
    style_identity = jax.random.normal(k4, img_shape, dtype=jnp.float32)

    loss_fn = STLoss(lmbda_c=1, lmbda_s=3, lmbda_i1=30, lmbda_i2=1)
    loss_jit = jax.jit(lambda *args: loss_fn(*args))

    loss = loss_jit(output_map, content_map, style_map,
                    content_identity_map, style_identity_map,
                    content, style, content_identity, style_identity)
    loss = jax.block_until_ready(loss)

    ref = _ref_loss(output_map, content_map, style_map,
                    content_identity_map, style_identity_map,
                    content, style, content_identity, style_identity)
    ref = jax.block_until_ready(ref)

    assert jnp.isfinite(loss), "non-finite loss"
    assert abs(float(loss) - float(ref)) <= 1e-3 * (abs(float(ref)) + 1.0), \
        f"mismatch: pallas={float(loss)} ref={float(ref)}"

    print("KERNEL_OK")
</pallas_src>

<mosaic_0001>
module attributes {stable_mosaic.version = 11 : i64} {
  func.func @kernel(%arg0: i32, %arg1: i32, %arg2: memref<16x1024xf32, #tpu.memory_space<vmem>>, %arg3: memref<16x1024xf32, #tpu.memory_space<vmem>>, %arg4: memref<1x1xf32, #tpu.memory_space<vmem>>, %arg5: memref<1x1xf32, #tpu.memory_space<vmem>>, %arg6: memref<16x1xf32, #tpu.memory_space<vmem>>, %arg7: memref<16x1xf32, #tpu.memory_space<vmem>>, %arg8: memref<16x1xf32, #tpu.memory_space<vmem>>, %arg9: memref<16x1xf32, #tpu.memory_space<vmem>>, %arg10: memref<16x1xf32, #tpu.memory_space<vmem>>, %arg11: memref<16x1xf32, #tpu.memory_space<vmem>>) attributes {dimension_semantics = [#tpu.dimension_semantics<arbitrary>, #tpu.dimension_semantics<arbitrary>], iteration_bounds = array<i64: 1, 1>, scalar_prefetch = 0 : i64, scratch_operands = 6 : i64, tpu.core_type = #tpu.core_type<tc>, window_params = [{transform_indices = @transform_0, window_bounds = array<i64: 16, 1024>}, {transform_indices = @transform_1, window_bounds = array<i64: 16, 1024>}, {pipeline_mode = #tpu.pipeline_mode<synchronous>, transform_indices = @transform_2, window_bounds = array<i64: 1, 1>}, {pipeline_mode = #tpu.pipeline_mode<synchronous>, transform_indices = @transform_3, window_bounds = array<i64: 1, 1>}]} {
    %c0_i32 = arith.constant 0 : i32
    %0 = arith.cmpi eq, %arg0, %c0_i32 : i32
    %c0_i32_0 = arith.constant 0 : i32
    %1 = arith.cmpi eq, %arg1, %c0_i32_0 : i32
    %2 = arith.andi %0, %1 : i1
    %3 = arith.extui %2 : i1 to i32
    %c0_i32_1 = arith.constant 0 : i32
    %4 = arith.cmpi ne, %3, %c0_i32_1 : i32
    scf.if %4 {
      %cst_31 = arith.constant 0.000000e+00 : f32
      %40 = vector.broadcast %cst_31 : f32 to vector<16x1xf32>
      %c0_32 = arith.constant 0 : index
      %c0_33 = arith.constant 0 : index
      %41 = vector.load %arg10[%c0_32, %c0_33] : memref<16x1xf32, #tpu.memory_space<vmem>>, vector<16x1xf32>
      tpu.vector_store %arg10[%c0_32, %c0_33], %40 {strides = array<i32>} : memref<16x1xf32, #tpu.memory_space<vmem>>, vector<16x1xf32>,
      %cst_34 = arith.constant 0.000000e+00 : f32
      %42 = vector.broadcast %cst_34 : f32 to vector<16x1xf32>
      %c0_35 = arith.constant 0 : index
      %c0_36 = arith.constant 0 : index
      %43 = vector.load %arg11[%c0_35, %c0_36] : memref<16x1xf32, #tpu.memory_space<vmem>>, vector<16x1xf32>
      tpu.vector_store %arg11[%c0_35, %c0_36], %42 {strides = array<i32>} : memref<16x1xf32, #tpu.memory_space<vmem>>, vector<16x1xf32>,
    } else {
    }
    %c0_i32_2 = arith.constant 0 : i32
    %5 = arith.cmpi eq, %arg1, %c0_i32_2 : i32
    %6 = arith.extui %5 : i1 to i32
    %c0_i32_3 = arith.constant 0 : i32
    %7 = arith.cmpi ne, %6, %c0_i32_3 : i32
    scf.if %7 {
      %cst_31 = arith.constant 0.000000e+00 : f32
      %40 = vector.broadcast %cst_31 : f32 to vector<16x1xf32>
      %c0_32 = arith.constant 0 : index
      %c0_33 = arith.constant 0 : index
      %41 = vector.load %arg6[%c0_32, %c0_33] : memref<16x1xf32, #tpu.memory_space<vmem>>, vector<16x1xf32>
      tpu.vector_store %arg6[%c0_32, %c0_33], %40 {strides = array<i32>} : memref<16x1xf32, #tpu.memory_space<vmem>>, vector<16x1xf32>,
      %cst_34 = arith.constant 0.000000e+00 : f32
      %42 = vector.broadcast %cst_34 : f32 to vector<16x1xf32>
      %c0_35 = arith.constant 0 : index
      %c0_36 = arith.constant 0 : index
      %43 = vector.load %arg7[%c0_35, %c0_36] : memref<16x1xf32, #tpu.memory_space<vmem>>, vector<16x1xf32>
      tpu.vector_store %arg7[%c0_35, %c0_36], %42 {strides = array<i32>} : memref<16x1xf32, #tpu.memory_space<vmem>>, vector<16x1xf32>,
      %cst_37 = arith.constant 0.000000e+00 : f32
      %44 = vector.broadcast %cst_37 : f32 to vector<16x1xf32>
      %c0_38 = arith.constant 0 : index
      %c0_39 = arith.constant 0 : index
      %45 = vector.load %arg8[%c0_38, %c0_39] : memref<16x1xf32, #tpu.memory_space<vmem>>, vector<16x1xf32>
      tpu.vector_store %arg8[%c0_38, %c0_39], %44 {strides = array<i32>} : memref<16x1xf32, #tpu.memory_space<vmem>>, vector<16x1xf32>,
      %cst_40 = arith.constant 0.000000e+00 : f32
      %46 = vector.broadcast %cst_40 : f32 to vector<16x1xf32>
      %c0_41 = arith.constant 0 : index
      %c0_42 = arith.constant 0 : index
      %47 = vector.load %arg9[%c0_41, %c0_42] : memref<16x1xf32, #tpu.memory_space<vmem>>, vector<16x1xf32>
      tpu.vector_store %arg9[%c0_41, %c0_42], %46 {strides = array<i32>} : memref<16x1xf32, #tpu.memory_space<vmem>>, vector<16x1xf32>,
    } else {
    }
    %c0 = arith.constant 0 : index
    %c0_4 = arith.constant 0 : index
    %8 = vector.load %arg2[%c0, %c0_4] : memref<16x1024xf32, #tpu.memory_space<vmem>>, vector<16x1024xf32>
    %c0_5 = arith.constant 0 : index
    %c0_6 = arith.constant 0 : index
    %9 = vector.load %arg3[%c0_5, %c0_6] : memref<16x1024xf32, #tpu.memory_space<vmem>>, vector<16x1024xf32>
    %c0_7 = arith.constant 0 : index
    %c0_8 = arith.constant 0 : index
    %10 = vector.load %arg6[%c0_7, %c0_8] : memref<16x1xf32, #tpu.memory_space<vmem>>, vector<16x1xf32>
    %cst = arith.constant dense<0.000000e+00> : vector<16xf32>
    %11 = vector.multi_reduction <add>, %8, %cst [1] : vector<16x1024xf32> to vector<16xf32>
    %12 = vector.shape_cast %11 : vector<16xf32> to vector<16x1xf32>
    %13 = arith.addf %10, %12 : vector<16x1xf32>
    %c0_9 = arith.constant 0 : index
    %c0_10 = arith.constant 0 : index
    %14 = vector.load %arg6[%c0_9, %c0_10] : memref<16x1xf32, #tpu.memory_space<vmem>>, vector<16x1xf32>
    tpu.vector_store %arg6[%c0_9, %c0_10], %13 {strides = array<i32>} : memref<16x1xf32, #tpu.memory_space<vmem>>, vector<16x1xf32>,
    %c0_11 = arith.constant 0 : index
    %c0_12 = arith.constant 0 : index
    %15 = vector.load %arg7[%c0_11, %c0_12] : memref<16x1xf32, #tpu.memory_space<vmem>>, vector<16x1xf32>
    %16 = arith.mulf %8, %8 : vector<16x1024xf32>
    %cst_13 = arith.constant dense<0.000000e+00> : vector<16xf32>
    %17 = vector.multi_reduction <add>, %16, %cst_13 [1] : vector<16x1024xf32> to vector<16xf32>
    %18 = vector.shape_cast %17 : vector<16xf32> to vector<16x1xf32>
    %19 = arith.addf %15, %18 : vector<16x1xf32>
    %c0_14 = arith.constant 0 : index
    %c0_15 = arith.constant 0 : index
    %20 = vector.load %arg7[%c0_14, %c0_15] : memref<16x1xf32, #tpu.memory_space<vmem>>, vector<16x1xf32>
    tpu.vector_store %arg7[%c0_14, %c0_15], %19 {strides = array<i32>} : memref<16x1xf32, #tpu.memory_space<vmem>>, vector<16x1xf32>,
    %c0_16 = arith.constant 0 : index
    %c0_17 = arith.constant 0 : index
    %21 = vector.load %arg8[%c0_16, %c0_17] : memref<16x1xf32, #tpu.memory_space<vmem>>, vector<16x1xf32>
    %cst_18 = arith.constant dense<0.000000e+00> : vector<16xf32>
    %22 = vector.multi_reduction <add>, %9, %cst_18 [1] : vector<16x1024xf32> to vector<16xf32>
    %23 = vector.shape_cast %22 : vector<16xf32> to vector<16x1xf32>
    %24 = arith.addf %21, %23 : vector<16x1xf32>
    %c0_19 = arith.constant 0 : index
    %c0_20 = arith.constant 0 : index
    %25 = vector.load %arg8[%c0_19, %c0_20] : memref<16x1xf32, #tpu.memory_space<vmem>>, vector<16x1xf32>
    tpu.vector_store %arg8[%c0_19, %c0_20], %24 {strides = array<i32>} : memref<16x1xf32, #tpu.memory_space<vmem>>, vector<16x1xf32>,
    %c0_21 = arith.constant 0 : index
    %c0_22 = arith.constant 0 : index
    %26 = vector.load %arg9[%c0_21, %c0_22] : memref<16x1xf32, #tpu.memory_space<vmem>>, vector<16x1xf32>
    %27 = arith.mulf %9, %9 : vector<16x1024xf32>
    %cst_23 = arith.constant dense<0.000000e+00> : vector<16xf32>
    %28 = vector.multi_reduction <add>, %27, %cst_23 [1] : vector<16x1024xf32> to vector<16xf32>
    %29 = vector.shape_cast %28 : vector<16xf32> to vector<16x1xf32>
    %30 = arith.addf %26, %29 : vector<16x1xf32>
    %c0_24 = arith.constant 0 : index
    %c0_25 = arith.constant 0 : index
    %31 = vector.load %arg9[%c0_24, %c0_25] : memref<16x1xf32, #tpu.memory_space<vmem>>, vector<16x1xf32>
    tpu.vector_store %arg9[%c0_24, %c0_25], %30 {strides = array<i32>} : memref<16x1xf32, #tpu.memory_space<vmem>>, vector<16x1xf32>,
    %c0_i32_26 = arith.constant 0 : i32
    %32 = arith.cmpi eq, %arg1, %c0_i32_26 : i32
    %33 = arith.extui %32 : i1 to i32
    %c0_i32_27 = arith.constant 0 : i32
    %34 = arith.cmpi ne, %33, %c0_i32_27 : i32
    scf.if %34 {
      %c0_31 = arith.constant 0 : index
      %c0_32 = arith.constant 0 : index
      %40 = vector.load %arg6[%c0_31, %c0_32] : memref<16x1xf32, #tpu.memory_space<vmem>>, vector<16x1xf32>
      %c0_33 = arith.constant 0 : index
      %c0_34 = arith.constant 0 : index
      %41 = vector.load %arg7[%c0_33, %c0_34] : memref<16x1xf32, #tpu.memory_space<vmem>>, vector<16x1xf32>
      %c0_35 = arith.constant 0 : index
      %c0_36 = arith.constant 0 : index
      %42 = vector.load %arg8[%c0_35, %c0_36] : memref<16x1xf32, #tpu.memory_space<vmem>>, vector<16x1xf32>
      %c0_37 = arith.constant 0 : index
      %c0_38 = arith.constant 0 : index
      %43 = vector.load %arg9[%c0_37, %c0_38] : memref<16x1xf32, #tpu.memory_space<vmem>>, vector<16x1xf32>
      %cst_39 = arith.constant 9.765625E-4 : f32
      %44 = vector.broadcast %cst_39 : f32 to vector<16x1xf32>
      %45 = arith.mulf %40, %44 : vector<16x1xf32>
      %cst_40 = arith.constant 9.765625E-4 : f32
      %46 = vector.broadcast %cst_40 : f32 to vector<16x1xf32>
      %47 = arith.mulf %42, %46 : vector<16x1xf32>
      %cst_41 = arith.constant 1.024000e+03 : f32
      %48 = vector.broadcast %cst_41 : f32 to vector<16x1xf32>
      %49 = arith.mulf %48, %45 : vector<16x1xf32>
      %50 = arith.mulf %49, %45 : vector<16x1xf32>
      %51 = arith.subf %41, %50 : vector<16x1xf32>
      %cst_42 = arith.constant 9.77517105E-4 : f32
      %52 = vector.broadcast %cst_42 : f32 to vector<16x1xf32>
      %53 = arith.mulf %51, %52 : vector<16x1xf32>
      %cst_43 = arith.constant 0.000000e+00 : f32
      %54 = vector.broadcast %cst_43 : f32 to vector<16x1xf32>
      %55 = arith.maximumf %53, %54 : vector<16x1xf32>
      %cst_44 = arith.constant 1.024000e+03 : f32
      %56 = vector.broadcast %cst_44 : f32 to vector<16x1xf32>
      %57 = arith.mulf %56, %47 : vector<16x1xf32>
      %58 = arith.mulf %57, %47 : vector<16x1xf32>
      %59 = arith.subf %43, %58 : vector<16x1xf32>
      %cst_45 = arith.constant 9.77517105E-4 : f32
      %60 = vector.broadcast %cst_45 : f32 to vector<16x1xf32>
      %61 = arith.mulf %59, %60 : vector<16x1xf32>
      %cst_46 = arith.constant 0.000000e+00 : f32
      %62 = vector.broadcast %cst_46 : f32 to vector<16x1xf32>
      %63 = arith.maximumf %61, %62 : vector<16x1xf32>
      %64 = arith.subf %45, %47 : vector<16x1xf32>
      %65 = arith.mulf %64, %64 : vector<16x1xf32>
      %66 = math.sqrt %55 : vector<16x1xf32>
      %67 = math.sqrt %63 : vector<16x1xf32>
      %68 = arith.subf %66, %67 : vector<16x1xf32>
      %69 = arith.mulf %68, %68 : vector<16x1xf32>
      %c0_47 = arith.constant 0 : index
      %c0_48 = arith.constant 0 : index
      %70 = vector.load %arg10[%c0_47, %c0_48] : memref<16x1xf32, #tpu.memory_space<vmem>>, vector<16x1xf32>
      %71 = arith.addf %70, %65 : vector<16x1xf32>
      %c0_49 = arith.constant 0 : index
      %c0_50 = arith.constant 0 : index
      %72 = vector.load %arg10[%c0_49, %c0_50] : memref<16x1xf32, #tpu.memory_space<vmem>>, vector<16x1xf32>
      tpu.vector_store %arg10[%c0_49, %c0_50], %71 {strides = array<i32>} : memref<16x1xf32, #tpu.memory_space<vmem>>, vector<16x1xf32>,
      %c0_51 = arith.constant 0 : index
      %c0_52 = arith.constant 0 : index
      %73 = vector.load %arg11[%c0_51, %c0_52] : memref<16x1xf32, #tpu.memory_space<vmem>>, vector<16x1xf32>
      %74 = arith.addf %73, %69 : vector<16x1xf32>
      %c0_53 = arith.constant 0 : index
      %c0_54 = arith.constant 0 : index
      %75 = vector.load %arg11[%c0_53, %c0_54] : memref<16x1xf32, #tpu.memory_space<vmem>>, vector<16x1xf32>
      tpu.vector_store %arg11[%c0_53, %c0_54], %74 {strides = array<i32>} : memref<16x1xf32, #tpu.memory_space<vmem>>, vector<16x1xf32>,
    } else {
    }
    %c0_i32_28 = arith.constant 0 : i32
    %35 = arith.cmpi eq, %arg0, %c0_i32_28 : i32
    %c0_i32_29 = arith.constant 0 : i32
    %36 = arith.cmpi eq, %arg1, %c0_i32_29 : i32
    %37 = arith.andi %35, %36 : i1
    %38 = arith.extui %37 : i1 to i32
    %c0_i32_30 = arith.constant 0 : i32
    %39 = arith.cmpi ne, %38, %c0_i32_30 : i32
    scf.if %39 {
      %c0_31 = arith.constant 0 : index
      %c0_32 = arith.constant 0 : index
      %40 = vector.load %arg10[%c0_31, %c0_32] : memref<16x1xf32, #tpu.memory_space<vmem>>, vector<16x1xf32>
      %cst_33 = arith.constant dense<0.000000e+00> : vector<1xf32>
      %41 = vector.multi_reduction <add>, %40, %cst_33 [0] : vector<16x1xf32> to vector<1xf32>
      %42 = vector.shape_cast %41 : vector<1xf32> to vector<1x1xf32>
      %c0_34 = arith.constant 0 : index
      %c0_35 = arith.constant 0 : index
      %43 = vector.load %arg4[%c0_34, %c0_35] : memref<1x1xf32, #tpu.memory_space<vmem>>, vector<1x1xf32>
      tpu.vector_store %arg4[%c0_34, %c0_35], %42 {strides = array<i32>} : memref<1x1xf32, #tpu.memory_space<vmem>>, vector<1x1xf32>,
      %c0_36 = arith.constant 0 : index
      %c0_37 = arith.constant 0 : index
      %44 = vector.load %arg11[%c0_36, %c0_37] : memref<16x1xf32, #tpu.memory_space<vmem>>, vector<16x1xf32>
      %cst_38 = arith.constant dense<0.000000e+00> : vector<1xf32>
      %45 = vector.multi_reduction <add>, %44, %cst_38 [0] : vector<16x1xf32> to vector<1xf32>
      %46 = vector.shape_cast %45 : vector<1xf32> to vector<1x1xf32>
      %c0_39 = arith.constant 0 : index
      %c0_40 = arith.constant 0 : index
      %47 = vector.load %arg5[%c0_39, %c0_40] : memref<1x1xf32, #tpu.memory_space<vmem>>, vector<1x1xf32>
      tpu.vector_store %arg5[%c0_39, %c0_40], %46 {strides = array<i32>} : memref<1x1xf32, #tpu.memory_space<vmem>>, vector<1x1xf32>,
    } else {
    }
    return
  }
  func.func @transform_0(%arg0: i32, %arg1: i32) -> (i32, i32) {
    %c0_i32 = arith.constant 0 : i32
    return %arg0, %arg1 : i32, i32
  }
  func.func @transform_1(%arg0: i32, %arg1: i32) -> (i32, i32) {
    %c0_i32 = arith.constant 0 : i32
    return %arg0, %arg1 : i32, i32
  }
  func.func @transform_2(%arg0: i32, %arg1: i32) -> (i32, i32) {
    %c0_i32 = arith.constant 0 : i32
    %c0_i32_0 = arith.constant 0 : i32
    %c0_i32_1 = arith.constant 0 : i32
    return %c0_i32, %c0_i32_0 : i32, i32
  }
  func.func @transform_3(%arg0: i32, %arg1: i32) -> (i32, i32) {
    %c0_i32 = arith.constant 0 : i32
    %c0_i32_0 = arith.constant 0 : i32
    %c0_i32_1 = arith.constant 0 : i32
    return %c0_i32, %c0_i32_0 : i32, i32
  }
}

module attributes {stable_mosaic.version = 11 : i64} {
  func.func @kernel(%arg0: i32, %arg1: i32, %arg2: memref<64x64xf32, #tpu.memory_space<vmem>>, %arg3: memref<64x64xf32, #tpu.memory_space<vmem>>, %arg4: memref<64x64xf32, #tpu.memory_space<vmem>>, %arg5: memref<64x64xf32, #tpu.memory_space<vmem>>, %arg6: memref<64x64xf32, #tpu.memory_space<vmem>>, %arg7: memref<64x64xf32, #tpu.memory_space<vmem>>, %arg8: memref<1x1xf32, #tpu.memory_space<vmem>>, %arg9: memref<1x1xf32, #tpu.memory_space<vmem>>, %arg10: memref<1x1xf32, #tpu.memory_space<vmem>>, %arg11: memref<64x1xf32, #tpu.memory_space<vmem>>, %arg12: memref<64x1xf32, #tpu.memory_space<vmem>>, %arg13: memref<64x1xf32, #tpu.memory_space<vmem>>, %arg14: memref<64x1xf32, #tpu.memory_space<vmem>>, %arg15: memref<64x1xf32, #tpu.memory_space<vmem>>, %arg16: memref<64x1xf32, #tpu.memory_space<vmem>>, %arg17: memref<64x1xf32, #tpu.memory_space<vmem>>, %arg18: memref<64x1xf32, #tpu.memory_space<vmem>>, %arg19: memref<64x1xf32, #tpu.memory_space<vmem>>, %arg20: memref<64x1xf32, #tpu.memory_space<vmem>>, %arg21: memref<64x1xf32, #tpu.memory_space<vmem>>, %arg22: memref<64x1xf32, #tpu.memory_space<vmem>>, %arg23: memref<64x1xf32, #tpu.memory_space<vmem>>, %arg24: memref<64x1xf32, #tpu.memory_space<vmem>>, %arg25: memref<64x1xf32, #tpu.memory_space<vmem>>, %arg26: memref<64x1xf32, #tpu.memory_space<vmem>>, %arg27: memref<64x1xf32, #tpu.memory_space<vmem>>) attributes {dimension_semantics = [#tpu.dimension_semantics<arbitrary>, #tpu.dimension_semantics<arbitrary>], iteration_bounds = array<i64: 1, 1>, scalar_prefetch = 0 : i64, scratch_operands = 17 : i64, tpu.core_type = #tpu.core_type<tc>, window_params = [{transform_indices = @transform_0, window_bounds = array<i64: 64, 64>}, {transform_indices = @transform_1, window_bounds = array<i64: 64, 64>}, {transform_indices = @transform_2, window_bounds = array<i64: 64, 64>}, {transform_indices = @transform_3, window_bounds = array<i64: 64, 64>}, {transform_indices = @transform_4, window_bounds = array<i64: 64, 64>}, {transform_indices = @transform_5, window_bounds = array<i64: 64, 64>}, {pipeline_mode = #tpu.pipeline_mode<synchronous>, transform_indices = @transform_6, window_bounds = array<i64: 1, 1>}, {pipeline_mode = #tpu.pipeline_mode<synchronous>, transform_indices = @transform_7, window_bounds = array<i64: 1, 1>}, {pipeline_mode = #tpu.pipeline_mode<synchronous>, transform_indices = @transform_8, window_bounds = array<i64: 1, 1>}]} {
    %c0_i32 = arith.constant 0 : i32
    %0 = arith.cmpi eq, %arg0, %c0_i32 : i32
    %c0_i32_0 = arith.constant 0 : i32
    %1 = arith.cmpi eq, %arg1, %c0_i32_0 : i32
    %2 = arith.andi %0, %1 : i1
    %3 = arith.extui %2 : i1 to i32
    %c0_i32_1 = arith.constant 0 : i32
    %4 = arith.cmpi ne, %3, %c0_i32_1 : i32
    scf.if %4 {
      %cst_89 = arith.constant 0.000000e+00 : f32
      %100 = vector.broadcast %cst_89 : f32 to vector<64x1xf32>
      %c0_90 = arith.constant 0 : index
      %c0_91 = arith.constant 0 : index
      %101 = vector.load %arg25[%c0_90, %c0_91] : memref<64x1xf32, #tpu.memory_space<vmem>>, vector<64x1xf32>
      tpu.vector_store %arg25[%c0_90, %c0_91], %100 {strides = array<i32>} : memref<64x1xf32, #tpu.memory_space<vmem>>, vector<64x1xf32>,
      %cst_92 = arith.constant 0.000000e+00 : f32
      %102 = vector.broadcast %cst_92 : f32 to vector<64x1xf32>
      %c0_93 = arith.constant 0 : index
      %c0_94 = arith.constant 0 : index
      %103 = vector.load %arg26[%c0_93, %c0_94] : memref<64x1xf32, #tpu.memory_space<vmem>>, vector<64x1xf32>
      tpu.vector_store %arg26[%c0_93, %c0_94], %102 {strides = array<i32>} : memref<64x1xf32, #tpu.memory_space<vmem>>, vector<64x1xf32>,
      %cst_95 = arith.constant 0.000000e+00 : f32
      %104 = vector.broadcast %cst_95 : f32 to vector<64x1xf32>
      %c0_96 = arith.constant 0 : index
      %c0_97 = arith.constant 0 : index
      %105 = vector.load %arg27[%c0_96, %c0_97] : memref<64x1xf32, #tpu.memory_space<vmem>>, vector<64x1xf32>
      tpu.vector_store %arg27[%c0_96, %c0_97], %104 {strides = array<i32>} : memref<64x1xf32, #tpu.memory_space<vmem>>, vector<64x1xf32>,
    } else {
    }
    %c0_i32_2 = arith.constant 0 : i32
    %5 = arith.cmpi eq, %arg1, %c0_i32_2 : i32
    %6 = arith.extui %5 : i1 to i32
    %c0_i32_3 = arith.constant 0 : i32
    %7 = arith.cmpi ne, %6, %c0_i32_3 : i32
    scf.if %7 {
      %cst_89 = arith.constant 0.000000e+00 : f32
      %100 = vector.broadcast %cst_89 : f32 to vector<64x1xf32>
      %c0_90 = arith.constant 0 : index
      %c0_91 = arith.constant 0 : index
      %101 = vector.load %arg11[%c0_90, %c0_91] : memref<64x1xf32, #tpu.memory_space<vmem>>, vector<64x1xf32>
      tpu.vector_store %arg11[%c0_90, %c0_91], %100 {strides = array<i32>} : memref<64x1xf32, #tpu.memory_space<vmem>>, vector<64x1xf32>,
      %cst_92 = arith.constant 0.000000e+00 : f32
      %102 = vector.broadcast %cst_92 : f32 to vector<64x1xf32>
      %c0_93 = arith.constant 0 : index
      %c0_94 = arith.constant 0 : index
      %103 = vector.load %arg12[%c0_93, %c0_94] : memref<64x1xf32, #tpu.memory_space<vmem>>, vector<64x1xf32>
      tpu.vector_store %arg12[%c0_93, %c0_94], %102 {strides = array<i32>} : memref<64x1xf32, #tpu.memory_space<vmem>>, vector<64x1xf32>,
      %cst_95 = arith.constant 0.000000e+00 : f32
      %104 = vector.broadcast %cst_95 : f32 to vector<64x1xf32>
      %c0_96 = arith.constant 0 : index
      %c0_97 = arith.constant 0 : index
      %105 = vector.load %arg13[%c0_96, %c0_97] : memref<64x1xf32, #tpu.memory_space<vmem>>, vector<64x1xf32>
      tpu.vector_store %arg13[%c0_96, %c0_97], %104 {strides = array<i32>} : memref<64x1xf32, #tpu.memory_space<vmem>>, vector<64x1xf32>,
      %cst_98 = arith.constant 0.000000e+00 : f32
      %106 = vector.broadcast %cst_98 : f32 to vector<64x1xf32>
      %c0_99 = arith.constant 0 : index
      %c0_100 = arith.constant 0 : index
      %107 = vector.load %arg14[%c0_99, %c0_100] : memref<64x1xf32, #tpu.memory_space<vmem>>, vector<64x1xf32>
      tpu.vector_store %arg14[%c0_99, %c0_100], %106 {strides = array<i32>} : memref<64x1xf32, #tpu.memory_space<vmem>>, vector<64x1xf32>,
      %cst_101 = arith.constant 0.000000e+00 : f32
      %108 = vector.broadcast %cst_101 : f32 to vector<64x1xf32>
      %c0_102 = arith.constant 0 : index
      %c0_103 = arith.constant 0 : index
      %109 = vector.load %arg15[%c0_102, %c0_103] : memref<64x1xf32, #tpu.memory_space<vmem>>, vector<64x1xf32>
      tpu.vector_store %arg15[%c0_102, %c0_103], %108 {strides = array<i32>} : memref<64x1xf32, #tpu.memory_space<vmem>>, vector<64x1xf32>,
      %cst_104 = arith.constant 0.000000e+00 : f32
      %110 = vector.broadcast %cst_104 : f32 to vector<64x1xf32>
      %c0_105 = arith.constant 0 : index
      %c0_106 = arith.constant 0 : index
      %111 = vector.load %arg16[%c0_105, %c0_106] : memref<64x1xf32, #tpu.memory_space<vmem>>, vector<64x1xf32>
      tpu.vector_store %arg16[%c0_105, %c0_106], %110 {strides = array<i32>} : memref<64x1xf32, #tpu.memory_space<vmem>>, vector<64x1xf32>,
      %cst_107 = arith.constant 0.000000e+00 : f32
      %112 = vector.broadcast %cst_107 : f32 to vector<64x1xf32>
      %c0_108 = arith.constant 0 : index
      %c0_109 = arith.constant 0 : index
      %113 = vector.load %arg17[%c0_108, %c0_109] : memref<64x1xf32, #tpu.memory_space<vmem>>, vector<64x1xf32>
      tpu.vector_store %arg17[%c0_108, %c0_109], %112 {strides = array<i32>} : memref<64x1xf32, #tpu.memory_space<vmem>>, vector<64x1xf32>,
      %cst_110 = arith.constant 0.000000e+00 : f32
      %114 = vector.broadcast %cst_110 : f32 to vector<64x1xf32>
      %c0_111 = arith.constant 0 : index
      %c0_112 = arith.constant 0 : index
      %115 = vector.load %arg18[%c0_111, %c0_112] : memref<64x1xf32, #tpu.memory_space<vmem>>, vector<64x1xf32>
      tpu.vector_store %arg18[%c0_111, %c0_112], %114 {strides = array<i32>} : memref<64x1xf32, #tpu.memory_space<vmem>>, vector<64x1xf32>,
      %cst_113 = arith.constant 0.000000e+00 : f32
      %116 = vector.broadcast %cst_113 : f32 to vector<64x1xf32>
      %c0_114 = arith.constant 0 : index
      %c0_115 = arith.constant 0 : index
      %117 = vector.load %arg19[%c0_114, %c0_115] : memref<64x1xf32, #tpu.memory_space<vmem>>, vector<64x1xf32>
      tpu.vector_store %arg19[%c0_114, %c0_115], %116 {strides = array<i32>} : memref<64x1xf32, #tpu.memory_space<vmem>>, vector<64x1xf32>,
      %cst_116 = arith.constant 0.000000e+00 : f32
      %118 = vector.broadcast %cst_116 : f32 to vector<64x1xf32>
      %c0_117 = arith.constant 0 : index
      %c0_118 = arith.constant 0 : index
      %119 = vector.load %arg20[%c0_117, %c0_118] : memref<64x1xf32, #tpu.memory_space<vmem>>, vector<64x1xf32>
      tpu.vector_store %arg20[%c0_117, %c0_118], %118 {strides = array<i32>} : memref<64x1xf32, #tpu.memory_space<vmem>>, vector<64x1xf32>,
      %cst_119 = arith.constant 0.000000e+00 : f32
      %120 = vector.broadcast %cst_119 : f32 to vector<64x1xf32>
      %c0_120 = arith.constant 0 : index
      %c0_121 = arith.constant 0 : index
      %121 = vector.load %arg21[%c0_120, %c0_121] : memref<64x1xf32, #tpu.memory_space<vmem>>, vector<64x1xf32>
      tpu.vector_store %arg21[%c0_120, %c0_121], %120 {strides = array<i32>} : memref<64x1xf32, #tpu.memory_space<vmem>>, vector<64x1xf32>,
      %cst_122 = arith.constant 0.000000e+00 : f32
      %122 = vector.broadcast %cst_122 : f32 to vector<64x1xf32>
      %c0_123 = arith.constant 0 : index
      %c0_124 = arith.constant 0 : index
      %123 = vector.load %arg22[%c0_123, %c0_124] : memref<64x1xf32, #tpu.memory_space<vmem>>, vector<64x1xf32>
      tpu.vector_store %arg22[%c0_123, %c0_124], %122 {strides = array<i32>} : memref<64x1xf32, #tpu.memory_space<vmem>>, vector<64x1xf32>,
      %cst_125 = arith.constant 0.000000e+00 : f32
      %124 = vector.broadcast %cst_125 : f32 to vector<64x1xf32>
      %c0_126 = arith.constant 0 : index
      %c0_127 = arith.constant 0 : index
      %125 = vector.load %arg23[%c0_126, %c0_127] : memref<64x1xf32, #tpu.memory_space<vmem>>, vector<64x1xf32>
      tpu.vector_store %arg23[%c0_126, %c0_127], %124 {strides = array<i32>} : memref<64x1xf32, #tpu.memory_space<vmem>>, vector<64x1xf32>,
      %cst_128 = arith.constant 0.000000e+00 : f32
      %126 = vector.broadcast %cst_128 : f32 to vector<64x1xf32>
      %c0_129 = arith.constant 0 : index
      %c0_130 = arith.constant 0 : index
      %127 = vector.load %arg24[%c0_129, %c0_130] : memref<64x1xf32, #tpu.memory_space<vmem>>, vector<64x1xf32>
      tpu.vector_store %arg24[%c0_129, %c0_130], %126 {strides = array<i32>} : memref<64x1xf32, #tpu.memory_space<vmem>>, vector<64x1xf32>,
    } else {
    }
    %c0 = arith.constant 0 : index
    %c0_4 = arith.constant 0 : index
    %8 = vector.load %arg2[%c0, %c0_4] : memref<64x64xf32, #tpu.memory_space<vmem>>, vector<64x64xf32>
    %c0_5 = arith.constant 0 : index
    %c0_6 = arith.constant 0 : index
    %9 = vector.load %arg3[%c0_5, %c0_6] : memref<64x64xf32, #tpu.memory_space<vmem>>, vector<64x64xf32>
    %c0_7 = arith.constant 0 : index
    %c0_8 = arith.constant 0 : index
    %10 = vector.load %arg4[%c0_7, %c0_8] : memref<64x64xf32, #tpu.memory_space<vmem>>, vector<64x64xf32>
    %c0_9 = arith.constant 0 : index
    %c0_10 = arith.constant 0 : index
    %11 = vector.load %arg11[%c0_9, %c0_10] : memref<64x1xf32, #tpu.memory_space<vmem>>, vector<64x1xf32>
    %cst = arith.constant dense<0.000000e+00> : vector<64xf32>
    %12 = vector.multi_reduction <add>, %8, %cst [1] : vector<64x64xf32> to vector<64xf32>
    %13 = vector.shape_cast %12 : vector<64xf32> to vector<64x1xf32>
    %14 = arith.addf %11, %13 : vector<64x1xf32>
    %c0_11 = arith.constant 0 : index
    %c0_12 = arith.constant 0 : index
    %15 = vector.load %arg11[%c0_11, %c0_12] : memref<64x1xf32, #tpu.memory_space<vmem>>, vector<64x1xf32>
    tpu.vector_store %arg11[%c0_11, %c0_12], %14 {strides = array<i32>} : memref<64x1xf32, #tpu.memory_space<vmem>>, vector<64x1xf32>,
    %c0_13 = arith.constant 0 : index
    %c0_14 = arith.constant 0 : index
    %16 = vector.load %arg12[%c0_13, %c0_14] : memref<64x1xf32, #tpu.memory_space<vmem>>, vector<64x1xf32>
    %17 = arith.mulf %8, %8 : vector<64x64xf32>
    %cst_15 = arith.constant dense<0.000000e+00> : vector<64xf32>
    %18 = vector.multi_reduction <add>, %17, %cst_15 [1] : vector<64x64xf32> to vector<64xf32>
    %19 = vector.shape_cast %18 : vector<64xf32> to vector<64x1xf32>
    %20 = arith.addf %16, %19 : vector<64x1xf32>
    %c0_16 = arith.constant 0 : index
    %c0_17 = arith.constant 0 : index
    %21 = vector.load %arg12[%c0_16, %c0_17] : memref<64x1xf32, #tpu.memory_space<vmem>>, vector<64x1xf32>
    tpu.vector_store %arg12[%c0_16, %c0_17], %20 {strides = array<i32>} : memref<64x1xf32, #tpu.memory_space<vmem>>, vector<64x1xf32>,
    %c0_18 = arith.constant 0 : index
    %c0_19 = arith.constant 0 : index
    %22 = vector.load %arg13[%c0_18, %c0_19] : memref<64x1xf32, #tpu.memory_space<vmem>>, vector<64x1xf32>
    %cst_20 = arith.constant dense<0.000000e+00> : vector<64xf32>
    %23 = vector.multi_reduction <add>, %9, %cst_20 [1] : vector<64x64xf32> to vector<64xf32>
    %24 = vector.shape_cast %23 : vector<64xf32> to vector<64x1xf32>
    %25 = arith.addf %22, %24 : vector<64x1xf32>
    %c0_21 = arith.constant 0 : index
    %c0_22 = arith.constant 0 : index
    %26 = vector.load %arg13[%c0_21, %c0_22] : memref<64x1xf32, #tpu.memory_space<vmem>>, vector<64x1xf32>
    tpu.vector_store %arg13[%c0_21, %c0_22], %25 {strides = array<i32>} : memref<64x1xf32, #tpu.memory_space<vmem>>, vector<64x1xf32>,
    %c0_23 = arith.constant 0 : index
    %c0_24 = arith.constant 0 : index
    %27 = vector.load %arg14[%c0_23, %c0_24] : memref<64x1xf32, #tpu.memory_space<vmem>>, vector<64x1xf32>
    %28 = arith.mulf %9, %9 : vector<64x64xf32>
    %cst_25 = arith.constant dense<0.000000e+00> : vector<64xf32>
    %29 = vector.multi_reduction <add>, %28, %cst_25 [1] : vector<64x64xf32> to vector<64xf32>
    %30 = vector.shape_cast %29 : vector<64xf32> to vector<64x1xf32>
    %31 = arith.addf %27, %30 : vector<64x1xf32>
    %c0_26 = arith.constant 0 : index
    %c0_27 = arith.constant 0 : index
    %32 = vector.load %arg14[%c0_26, %c0_27] : memref<64x1xf32, #tpu.memory_space<vmem>>, vector<64x1xf32>
    tpu.vector_store %arg14[%c0_26, %c0_27], %31 {strides = array<i32>} : memref<64x1xf32, #tpu.memory_space<vmem>>, vector<64x1xf32>,
    %c0_28 = arith.constant 0 : index
    %c0_29 = arith.constant 0 : index
    %33 = vector.load %arg15[%c0_28, %c0_29] : memref<64x1xf32, #tpu.memory_space<vmem>>, vector<64x1xf32>
    %34 = arith.mulf %8, %9 : vector<64x64xf32>
    %cst_30 = arith.constant dense<0.000000e+00> : vector<64xf32>
    %35 = vector.multi_reduction <add>, %34, %cst_30 [1] : vector<64x64xf32> to vector<64xf32>
    %36 = vector.shape_cast %35 : vector<64xf32> to vector<64x1xf32>
    %37 = arith.addf %33, %36 : vector<64x1xf32>
    %c0_31 = arith.constant 0 : index
    %c0_32 = arith.constant 0 : index
    %38 = vector.load %arg15[%c0_31, %c0_32] : memref<64x1xf32, #tpu.memory_space<vmem>>, vector<64x1xf32>
    tpu.vector_store %arg15[%c0_31, %c0_32], %37 {strides = array<i32>} : memref<64x1xf32, #tpu.memory_space<vmem>>, vector<64x1xf32>,
    %c0_33 = arith.constant 0 : index
    %c0_34 = arith.constant 0 : index
    %39 = vector.load %arg16[%c0_33, %c0_34] : memref<64x1xf32, #tpu.memory_space<vmem>>, vector<64x1xf32>
    %cst_35 = arith.constant dense<0.000000e+00> : vector<64xf32>
    %40 = vector.multi_reduction <add>, %10, %cst_35 [1] : vector<64x64xf32> to vector<64xf32>
    %41 = vector.shape_cast %40 : vector<64xf32> to vector<64x1xf32>
    %42 = arith.addf %39, %41 : vector<64x1xf32>
    %c0_36 = arith.constant 0 : index
    %c0_37 = arith.constant 0 : index
    %43 = vector.load %arg16[%c0_36, %c0_37] : memref<64x1xf32, #tpu.memory_space<vmem>>, vector<64x1xf32>
    tpu.vector_store %arg16[%c0_36, %c0_37], %42 {strides = array<i32>} : memref<64x1xf32, #tpu.memory_space<vmem>>, vector<64x1xf32>,
    %c0_38 = arith.constant 0 : index
    %c0_39 = arith.constant 0 : index
    %44 = vector.load %arg17[%c0_38, %c0_39] : memref<64x1xf32, #tpu.memory_space<vmem>>, vector<64x1xf32>
    %45 = arith.mulf %10, %10 : vector<64x64xf32>
    %cst_40 = arith.constant dense<0.000000e+00> : vector<64xf32>
    %46 = vector.multi_reduction <add>, %45, %cst_40 [1] : vector<64x64xf32> to vector<64xf32>
    %47 = vector.shape_cast %46 : vector<64xf32> to vector<64x1xf32>
    %48 = arith.addf %44, %47 : vector<64x1xf32>
    %c0_41 = arith.constant 0 : index
    %c0_42 = arith.constant 0 : index
    %49 = vector.load %arg17[%c0_41, %c0_42] : memref<64x1xf32, #tpu.memory_space<vmem>>, vector<64x1xf32>
    tpu.vector_store %arg17[%c0_41, %c0_42], %48 {strides = array<i32>} : memref<64x1xf32, #tpu.memory_space<vmem>>, vector<64x1xf32>,
    %c0_43 = arith.constant 0 : index
    %c0_44 = arith.constant 0 : index
    %50 = vector.load %arg5[%c0_43, %c0_44] : memref<64x64xf32, #tpu.memory_space<vmem>>, vector<64x64xf32>
    %c0_45 = arith.constant 0 : index
    %c0_46 = arith.constant 0 : index
    %51 = vector.load %arg6[%c0_45, %c0_46] : memref<64x64xf32, #tpu.memory_space<vmem>>, vector<64x64xf32>
    %c0_47 = arith.constant 0 : index
    %c0_48 = arith.constant 0 : index
    %52 = vector.load %arg7[%c0_47, %c0_48] : memref<64x64xf32, #tpu.memory_space<vmem>>, vector<64x64xf32>
    %c0_49 = arith.constant 0 : index
    %c0_50 = arith.constant 0 : index
    %53 = vector.load %arg18[%c0_49, %c0_50] : memref<64x1xf32, #tpu.memory_space<vmem>>, vector<64x1xf32>
    %cst_51 = arith.constant dense<0.000000e+00> : vector<64xf32>
    %54 = vector.multi_reduction <add>, %50, %cst_51 [1] : vector<64x64xf32> to vector<64xf32>
    %55 = vector.shape_cast %54 : vector<64xf32> to vector<64x1xf32>
    %56 = arith.addf %53, %55 : vector<64x1xf32>
    %c0_52 = arith.constant 0 : index
    %c0_53 = arith.constant 0 : index
    %57 = vector.load %arg18[%c0_52, %c0_53] : memref<64x1xf32, #tpu.memory_space<vmem>>, vector<64x1xf32>
    tpu.vector_store %arg18[%c0_52, %c0_53], %56 {strides = array<i32>} : memref<64x1xf32, #tpu.memory_space<vmem>>, vector<64x1xf32>,
    %c0_54 = arith.constant 0 : index
    %c0_55 = arith.constant 0 : index
    %58 = vector.load %arg19[%c0_54, %c0_55] : memref<64x1xf32, #tpu.memory_space<vmem>>, vector<64x1xf32>
    %59 = arith.mulf %50, %50 : vector<64x64xf32>
    %cst_56 = arith.constant dense<0.000000e+00> : vector<64xf32>
    %60 = vector.multi_reduction <add>, %59, %cst_56 [1] : vector<64x64xf32> to vector<64xf32>
    %61 = vector.shape_cast %60 : vector<64xf32> to vector<64x1xf32>
    %62 = arith.addf %58, %61 : vector<64x1xf32>
    %c0_57 = arith.constant 0 : index
    %c0_58 = arith.constant 0 : index
    %63 = vector.load %arg19[%c0_57, %c0_58] : memref<64x1xf32, #tpu.memory_space<vmem>>, vector<64x1xf32>
    tpu.vector_store %arg19[%c0_57, %c0_58], %62 {strides = array<i32>} : memref<64x1xf32, #tpu.memory_space<vmem>>, vector<64x1xf32>,
    %c0_59 = arith.constant 0 : index
    %c0_60 = arith.constant 0 : index
    %64 = vector.load %arg20[%c0_59, %c0_60] : memref<64x1xf32, #tpu.memory_space<vmem>>, vector<64x1xf32>
    %cst_61 = arith.constant dense<0.000000e+00> : vector<64xf32>
    %65 = vector.multi_reduction <add>, %51, %cst_61 [1] : vector<64x64xf32> to vector<64xf32>
    %66 = vector.shape_cast %65 : vector<64xf32> to vector<64x1xf32>
    %67 = arith.addf %64, %66 : vector<64x1xf32>
    %c0_62 = arith.constant 0 : index
    %c0_63 = arith.constant 0 : index
    %68 = vector.load %arg20[%c0_62, %c0_63] : memref<64x1xf32, #tpu.memory_space<vmem>>, vector<64x1xf32>
    tpu.vector_store %arg20[%c0_62, %c0_63], %67 {strides = array<i32>} : memref<64x1xf32, #tpu.memory_space<vmem>>, vector<64x1xf32>,
    %c0_64 = arith.constant 0 : index
    %c0_65 = arith.constant 0 : index
    %69 = vector.load %arg21[%c0_64, %c0_65] : memref<64x1xf32, #tpu.memory_space<vmem>>, vector<64x1xf32>
    %70 = arith.mulf %51, %51 : vector<64x64xf32>
    %cst_66 = arith.constant dense<0.000000e+00> : vector<64xf32>
    %71 = vector.multi_reduction <add>, %70, %cst_66 [1] : vector<64x64xf32> to vector<64xf32>
    %72 = vector.shape_cast %71 : vector<64xf32> to vector<64x1xf32>
    %73 = arith.addf %69, %72 : vector<64x1xf32>
    %c0_67 = arith.constant 0 : index
    %c0_68 = arith.constant 0 : index
    %74 = vector.load %arg21[%c0_67, %c0_68] : memref<64x1xf32, #tpu.memory_space<vmem>>, vector<64x1xf32>
    tpu.vector_store %arg21[%c0_67, %c0_68], %73 {strides = array<i32>} : memref<64x1xf32, #tpu.memory_space<vmem>>, vector<64x1xf32>,
    %c0_69 = arith.constant 0 : index
    %c0_70 = arith.constant 0 : index
    %75 = vector.load %arg22[%c0_69, %c0_70] : memref<64x1xf32, #tpu.memory_space<vmem>>, vector<64x1xf32>
    %76 = arith.mulf %50, %51 : vector<64x64xf32>
    %cst_71 = arith.constant dense<0.000000e+00> : vector<64xf32>
    %77 = vector.multi_reduction <add>, %76, %cst_71 [1] : vector<64x64xf32> to vector<64xf32>
    %78 = vector.shape_cast %77 : vector<64xf32> to vector<64x1xf32>
    %79 = arith.addf %75, %78 : vector<64x1xf32>
    %c0_72 = arith.constant 0 : index
    %c0_73 = arith.constant 0 : index
    %80 = vector.load %arg22[%c0_72, %c0_73] : memref<64x1xf32, #tpu.memory_space<vmem>>, vector<64x1xf32>
    tpu.vector_store %arg22[%c0_72, %c0_73], %79 {strides = array<i32>} : memref<64x1xf32, #tpu.memory_space<vmem>>, vector<64x1xf32>,
    %c0_74 = arith.constant 0 : index
    %c0_75 = arith.constant 0 : index
    %81 = vector.load %arg23[%c0_74, %c0_75] : memref<64x1xf32, #tpu.memory_space<vmem>>, vector<64x1xf32>
    %cst_76 = arith.constant dense<0.000000e+00> : vector<64xf32>
    %82 = vector.multi_reduction <add>, %52, %cst_76 [1] : vector<64x64xf32> to vector<64xf32>
    %83 = vector.shape_cast %82 : vector<64xf32> to vector<64x1xf32>
    %84 = arith.addf %81, %83 : vector<64x1xf32>
    %c0_77 = arith.constant 0 : index
    %c0_78 = arith.constant 0 : index
    %85 = vector.load %arg23[%c0_77, %c0_78] : memref<64x1xf32, #tpu.memory_space<vmem>>, vector<64x1xf32>
    tpu.vector_store %arg23[%c0_77, %c0_78], %84 {strides = array<i32>} : memref<64x1xf32, #tpu.memory_space<vmem>>, vector<64x1xf32>,
    %c0_79 = arith.constant 0 : index
    %c0_80 = arith.constant 0 : index
    %86 = vector.load %arg24[%c0_79, %c0_80] : memref<64x1xf32, #tpu.memory_space<vmem>>, vector<64x1xf32>
    %87 = arith.mulf %52, %52 : vector<64x64xf32>
    %cst_81 = arith.constant dense<0.000000e+00> : vector<64xf32>
    %88 = vector.multi_reduction <add>, %87, %cst_81 [1] : vector<64x64xf32> to vector<64xf32>
    %89 = vector.shape_cast %88 : vector<64xf32> to vector<64x1xf32>
    %90 = arith.addf %86, %89 : vector<64x1xf32>
    %c0_82 = arith.constant 0 : index
    %c0_83 = arith.constant 0 : index
    %91 = vector.load %arg24[%c0_82, %c0_83] : memref<64x1xf32, #tpu.memory_space<vmem>>, vector<64x1xf32>
    tpu.vector_store %arg24[%c0_82, %c0_83], %90 {strides = array<i32>} : memref<64x1xf32, #tpu.memory_space<vmem>>, vector<64x1xf32>,
    %c0_i32_84 = arith.constant 0 : i32
    %92 = arith.cmpi eq, %arg1, %c0_i32_84 : i32
    %93 = arith.extui %92 : i1 to i32
    %c0_i32_85 = arith.constant 0 : i32
    %94 = arith.cmpi ne, %93, %c0_i32_85 : i32
    scf.if %94 {
      %c0_89 = arith.constant 0 : index
      %c0_90 = arith.constant 0 : index
      %100 = vector.load %arg11[%c0_89, %c0_90] : memref<64x1xf32, #tpu.memory_space<vmem>>, vector<64x1xf32>
      %c0_91 = arith.constant 0 : index
      %c0_92 = arith.constant 0 : index
      %101 = vector.load %arg12[%c0_91, %c0_92] : memref<64x1xf32, #tpu.memory_space<vmem>>, vector<64x1xf32>
      %c0_93 = arith.constant 0 : index
      %c0_94 = arith.constant 0 : index
      %102 = vector.load %arg13[%c0_93, %c0_94] : memref<64x1xf32, #tpu.memory_space<vmem>>, vector<64x1xf32>
      %c0_95 = arith.constant 0 : index
      %c0_96 = arith.constant 0 : index
      %103 = vector.load %arg14[%c0_95, %c0_96] : memref<64x1xf32, #tpu.memory_space<vmem>>, vector<64x1xf32>
      %c0_97 = arith.constant 0 : index
      %c0_98 = arith.constant 0 : index
      %104 = vector.load %arg15[%c0_97, %c0_98] : memref<64x1xf32, #tpu.memory_space<vmem>>, vector<64x1xf32>
      %c0_99 = arith.constant 0 : index
      %c0_100 = arith.constant 0 : index
      %105 = vector.load %arg16[%c0_99, %c0_100] : memref<64x1xf32, #tpu.memory_space<vmem>>, vector<64x1xf32>
      %c0_101 = arith.constant 0 : index
      %c0_102 = arith.constant 0 : index
      %106 = vector.load %arg17[%c0_101, %c0_102] : memref<64x1xf32, #tpu.memory_space<vmem>>, vector<64x1xf32>
      %cst_103 = arith.constant 1.562500e-02 : f32
      %107 = vector.broadcast %cst_103 : f32 to vector<64x1xf32>
      %108 = arith.mulf %100, %107 : vector<64x1xf32>
      %cst_104 = arith.constant 1.562500e-02 : f32
      %109 = vector.broadcast %cst_104 : f32 to vector<64x1xf32>
      %110 = arith.mulf %105, %109 : vector<64x1xf32>
      %cst_105 = arith.constant 6.400000e+01 : f32
      %111 = vector.broadcast %cst_105 : f32 to vector<64x1xf32>
      %112 = arith.mulf %111, %108 : vector<64x1xf32>
      %113 = arith.mulf %112, %108 : vector<64x1xf32>
      %114 = arith.subf %101, %113 : vector<64x1xf32>
      %cst_106 = arith.constant 0.0158730168 : f32
      %115 = vector.broadcast %cst_106 : f32 to vector<64x1xf32>
      %116 = arith.mulf %114, %115 : vector<64x1xf32>
      %cst_107 = arith.constant 0.000000e+00 : f32
      %117 = vector.broadcast %cst_107 : f32 to vector<64x1xf32>
      %118 = arith.maximumf %116, %117 : vector<64x1xf32>
      %cst_108 = arith.constant 6.400000e+01 : f32
      %119 = vector.broadcast %cst_108 : f32 to vector<64x1xf32>
      %120 = arith.mulf %119, %110 : vector<64x1xf32>
      %121 = arith.mulf %120, %110 : vector<64x1xf32>
      %122 = arith.subf %106, %121 : vector<64x1xf32>
      %cst_109 = arith.constant 0.0158730168 : f32
      %123 = vector.broadcast %cst_109 : f32 to vector<64x1xf32>
      %124 = arith.mulf %122, %123 : vector<64x1xf32>
      %cst_110 = arith.constant 0.000000e+00 : f32
      %125 = vector.broadcast %cst_110 : f32 to vector<64x1xf32>
      %126 = arith.maximumf %124, %125 : vector<64x1xf32>
      %127 = arith.subf %108, %110 : vector<64x1xf32>
      %128 = arith.mulf %127, %127 : vector<64x1xf32>
      %129 = math.sqrt %118 : vector<64x1xf32>
      %130 = math.sqrt %126 : vector<64x1xf32>
      %131 = arith.subf %129, %130 : vector<64x1xf32>
      %132 = arith.mulf %131, %131 : vector<64x1xf32>
      %cst_111 = arith.constant 1.562500e-02 : f32
      %133 = vector.broadcast %cst_111 : f32 to vector<64x1xf32>
      %134 = arith.mulf %102, %133 : vector<64x1xf32>
      %cst_112 = arith.constant 6.400000e+01 : f32
      %135 = vector.broadcast %cst_112 : f32 to vector<64x1xf32>
      %136 = arith.mulf %135, %134 : vector<64x1xf32>
      %137 = arith.mulf %136, %134 : vector<64x1xf32>
      %138 = arith.subf %103, %137 : vector<64x1xf32>
      %cst_113 = arith.constant 0.0158730168 : f32
      %139 = vector.broadcast %cst_113 : f32 to vector<64x1xf32>
      %140 = arith.mulf %138, %139 : vector<64x1xf32>
      %cst_114 = arith.constant 0.000000e+00 : f32
      %141 = vector.broadcast %cst_114 : f32 to vector<64x1xf32>
      %142 = arith.maximumf %140, %141 : vector<64x1xf32>
      %cst_115 = arith.constant 9.99999974E-6 : f32
      %143 = vector.broadcast %cst_115 : f32 to vector<64x1xf32>
      %144 = arith.addf %118, %143 : vector<64x1xf32>
      %145 = math.rsqrt %144 : vector<64x1xf32>
      %cst_116 = arith.constant 9.99999974E-6 : f32
      %146 = vector.broadcast %cst_116 : f32 to vector<64x1xf32>
      %147 = arith.addf %142, %146 : vector<64x1xf32>
      %148 = math.rsqrt %147 : vector<64x1xf32>
      %149 = arith.mulf %145, %145 : vector<64x1xf32>
      %150 = arith.mulf %149, %101 : vector<64x1xf32>
      %cst_117 = arith.constant 2.000000e+00 : f32
      %151 = vector.broadcast %cst_117 : f32 to vector<64x1xf32>
      %152 = arith.mulf %151, %145 : vector<64x1xf32>
      %153 = arith.mulf %152, %148 : vector<64x1xf32>
      %154 = arith.mulf %153, %104 : vector<64x1xf32>
      %155 = arith.subf %150, %154 : vector<64x1xf32>
      %156 = arith.mulf %148, %148 : vector<64x1xf32>
      %157 = arith.mulf %156, %103 : vector<64x1xf32>
      %158 = arith.addf %155, %157 : vector<64x1xf32>
      %159 = arith.mulf %145, %108 : vector<64x1xf32>
      %160 = arith.mulf %148, %134 : vector<64x1xf32>
      %161 = arith.subf %159, %160 : vector<64x1xf32>
      %162 = arith.mulf %161, %161 : vector<64x1xf32>
      %cst_118 = arith.constant 6.400000e+01 : f32
      %163 = vector.broadcast %cst_118 : f32 to vector<64x1xf32>
      %164 = arith.mulf %163, %162 : vector<64x1xf32>
      %165 = arith.subf %158, %164 : vector<64x1xf32>
      %cst_119 = arith.constant 0.000000e+00 : f32
      %166 = vector.broadcast %cst_119 : f32 to vector<64x1xf32>
      %167 = arith.maximumf %165, %166 : vector<64x1xf32>
      %c0_120 = arith.constant 0 : index
      %c0_121 = arith.constant 0 : index
      %168 = vector.load %arg25[%c0_120, %c0_121] : memref<64x1xf32, #tpu.memory_space<vmem>>, vector<64x1xf32>
      %169 = arith.addf %168, %167 : vector<64x1xf32>
      %c0_122 = arith.constant 0 : index
      %c0_123 = arith.constant 0 : index
      %170 = vector.load %arg25[%c0_122, %c0_123] : memref<64x1xf32, #tpu.memory_space<vmem>>, vector<64x1xf32>
      tpu.vector_store %arg25[%c0_122, %c0_123], %169 {strides = array<i32>} : memref<64x1xf32, #tpu.memory_space<vmem>>, vector<64x1xf32>,
      %c0_124 = arith.constant 0 : index
      %c0_125 = arith.constant 0 : index
      %171 = vector.load %arg26[%c0_124, %c0_125] : memref<64x1xf32, #tpu.memory_space<vmem>>, vector<64x1xf32>
      %172 = arith.addf %171, %128 : vector<64x1xf32>
      %c0_126 = arith.constant 0 : index
      %c0_127 = arith.constant 0 : index
      %173 = vector.load %arg26[%c0_126, %c0_127] : memref<64x1xf32, #tpu.memory_space<vmem>>, vector<64x1xf32>
      tpu.vector_store %arg26[%c0_126, %c0_127], %172 {strides = array<i32>} : memref<64x1xf32, #tpu.memory_space<vmem>>, vector<64x1xf32>,
      %c0_128 = arith.constant 0 : index
      %c0_129 = arith.constant 0 : index
      %174 = vector.load %arg27[%c0_128, %c0_129] : memref<64x1xf32, #tpu.memory_space<vmem>>, vector<64x1xf32>
      %175 = arith.addf %174, %132 : vector<64x1xf32>
      %c0_130 = arith.constant 0 : index
      %c0_131 = arith.constant 0 : index
      %176 = vector.load %arg27[%c0_130, %c0_131] : memref<64x1xf32, #tpu.memory_space<vmem>>, vector<64x1xf32>
      tpu.vector_store %arg27[%c0_130, %c0_131], %175 {strides = array<i32>} : memref<64x1xf32, #tpu.memory_space<vmem>>, vector<64x1xf32>,
      %c0_132 = arith.constant 0 : index
      %c0_133 = arith.constant 0 : index
      %177 = vector.load %arg18[%c0_132, %c0_133] : memref<64x1xf32, #tpu.memory_space<vmem>>, vector<64x1xf32>
      %c0_134 = arith.constant 0 : index
      %c0_135 = arith.constant 0 : index
      %178 = vector.load %arg19[%c0_134, %c0_135] : memref<64x1xf32, #tpu.memory_space<vmem>>, vector<64x1xf32>
      %c0_136 = arith.constant 0 : index
      %c0_137 = arith.constant 0 : index
      %179 = vector.load %arg20[%c0_136, %c0_137] : memref<64x1xf32, #tpu.memory_space<vmem>>, vector<64x1xf32>
      %c0_138 = arith.constant 0 : index
      %c0_139 = arith.constant 0 : index
      %180 = vector.load %arg21[%c0_138, %c0_139] : memref<64x1xf32, #tpu.memory_space<vmem>>, vector<64x1xf32>
      %c0_140 = arith.constant 0 : index
      %c0_141 = arith.constant 0 : index
      %181 = vector.load %arg22[%c0_140, %c0_141] : memref<64x1xf32, #tpu.memory_space<vmem>>, vector<64x1xf32>
      %c0_142 = arith.constant 0 : index
      %c0_143 = arith.constant 0 : index
      %182 = vector.load %arg23[%c0_142, %c0_143] : memref<64x1xf32, #tpu.memory_space<vmem>>, vector<64x1xf32>
      %c0_144 = arith.constant 0 : index
      %c0_145 = arith.constant 0 : index
      %183 = vector.load %arg24[%c0_144, %c0_145] : memref<64x1xf32, #tpu.memory_space<vmem>>, vector<64x1xf32>
      %cst_146 = arith.constant 1.562500e-02 : f32
      %184 = vector.broadcast %cst_146 : f32 to vector<64x1xf32>
      %185 = arith.mulf %177, %184 : vector<64x1xf32>
      %cst_147 = arith.constant 1.562500e-02 : f32
      %186 = vector.broadcast %cst_147 : f32 to vector<64x1xf32>
      %187 = arith.mulf %182, %186 : vector<64x1xf32>
      %cst_148 = arith.constant 6.400000e+01 : f32
      %188 = vector.broadcast %cst_148 : f32 to vector<64x1xf32>
      %189 = arith.mulf %188, %185 : vector<64x1xf32>
      %190 = arith.mulf %189, %185 : vector<64x1xf32>
      %191 = arith.subf %178, %190 : vector<64x1xf32>
      %cst_149 = arith.constant 0.0158730168 : f32
      %192 = vector.broadcast %cst_149 : f32 to vector<64x1xf32>
      %193 = arith.mulf %191, %192 : vector<64x1xf32>
      %cst_150 = arith.constant 0.000000e+00 : f32
      %194 = vector.broadcast %cst_150 : f32 to vector<64x1xf32>
      %195 = arith.maximumf %193, %194 : vector<64x1xf32>
      %cst_151 = arith.constant 6.400000e+01 : f32
      %196 = vector.broadcast %cst_151 : f32 to vector<64x1xf32>
      %197 = arith.mulf %196, %187 : vector<64x1xf32>
      %198 = arith.mulf %197, %187 : vector<64x1xf32>
      %199 = arith.subf %183, %198 : vector<64x1xf32>
      %cst_152 = arith.constant 0.0158730168 : f32
      %200 = vector.broadcast %cst_152 : f32 to vector<64x1xf32>
      %201 = arith.mulf %199, %200 : vector<64x1xf32>
      %cst_153 = arith.constant 0.000000e+00 : f32
      %202 = vector.broadcast %cst_153 : f32 to vector<64x1xf32>
      %203 = arith.maximumf %201, %202 : vector<64x1xf32>
      %204 = arith.subf %185, %187 : vector<64x1xf32>
      %205 = arith.mulf %204, %204 : vector<64x1xf32>
      %206 = math.sqrt %195 : vector<64x1xf32>
      %207 = math.sqrt %203 : vector<64x1xf32>
      %208 = arith.subf %206, %207 : vector<64x1xf32>
      %209 = arith.mulf %208, %208 : vector<64x1xf32>
      %cst_154 = arith.constant 1.562500e-02 : f32
      %210 = vector.broadcast %cst_154 : f32 to vector<64x1xf32>
      %211 = arith.mulf %179, %210 : vector<64x1xf32>
      %cst_155 = arith.constant 6.400000e+01 : f32
      %212 = vector.broadcast %cst_155 : f32 to vector<64x1xf32>
      %213 = arith.mulf %212, %211 : vector<64x1xf32>
      %214 = arith.mulf %213, %211 : vector<64x1xf32>
      %215 = arith.subf %180, %214 : vector<64x1xf32>
      %cst_156 = arith.constant 0.0158730168 : f32
      %216 = vector.broadcast %cst_156 : f32 to vector<64x1xf32>
      %217 = arith.mulf %215, %216 : vector<64x1xf32>
      %cst_157 = arith.constant 0.000000e+00 : f32
      %218 = vector.broadcast %cst_157 : f32 to vector<64x1xf32>
      %219 = arith.maximumf %217, %218 : vector<64x1xf32>
      %cst_158 = arith.constant 9.99999974E-6 : f32
      %220 = vector.broadcast %cst_158 : f32 to vector<64x1xf32>
      %221 = arith.addf %195, %220 : vector<64x1xf32>
      %222 = math.rsqrt %221 : vector<64x1xf32>
      %cst_159 = arith.constant 9.99999974E-6 : f32
      %223 = vector.broadcast %cst_159 : f32 to vector<64x1xf32>
      %224 = arith.addf %219, %223 : vector<64x1xf32>
      %225 = math.rsqrt %224 : vector<64x1xf32>
      %226 = arith.mulf %222, %222 : vector<64x1xf32>
      %227 = arith.mulf %226, %178 : vector<64x1xf32>
      %cst_160 = arith.constant 2.000000e+00 : f32
      %228 = vector.broadcast %cst_160 : f32 to vector<64x1xf32>
      %229 = arith.mulf %228, %222 : vector<64x1xf32>
      %230 = arith.mulf %229, %225 : vector<64x1xf32>
      %231 = arith.mulf %230, %181 : vector<64x1xf32>
      %232 = arith.subf %227, %231 : vector<64x1xf32>
      %233 = arith.mulf %225, %225 : vector<64x1xf32>
      %234 = arith.mulf %233, %180 : vector<64x1xf32>
      %235 = arith.addf %232, %234 : vector<64x1xf32>
      %236 = arith.mulf %222, %185 : vector<64x1xf32>
      %237 = arith.mulf %225, %211 : vector<64x1xf32>
      %238 = arith.subf %236, %237 : vector<64x1xf32>
      %239 = arith.mulf %238, %238 : vector<64x1xf32>
      %cst_161 = arith.constant 6.400000e+01 : f32
      %240 = vector.broadcast %cst_161 : f32 to vector<64x1xf32>
      %241 = arith.mulf %240, %239 : vector<64x1xf32>
      %242 = arith.subf %235, %241 : vector<64x1xf32>
      %cst_162 = arith.constant 0.000000e+00 : f32
      %243 = vector.broadcast %cst_162 : f32 to vector<64x1xf32>
      %244 = arith.maximumf %242, %243 : vector<64x1xf32>
      %c0_163 = arith.constant 0 : index
      %c0_164 = arith.constant 0 : index
      %245 = vector.load %arg25[%c0_163, %c0_164] : memref<64x1xf32, #tpu.memory_space<vmem>>, vector<64x1xf32>
      %246 = arith.addf %245, %244 : vector<64x1xf32>
      %c0_165 = arith.constant 0 : index
      %c0_166 = arith.constant 0 : index
      %247 = vector.load %arg25[%c0_165, %c0_166] : memref<64x1xf32, #tpu.memory_space<vmem>>, vector<64x1xf32>
      tpu.vector_store %arg25[%c0_165, %c0_166], %246 {strides = array<i32>} : memref<64x1xf32, #tpu.memory_space<vmem>>, vector<64x1xf32>,
      %c0_167 = arith.constant 0 : index
      %c0_168 = arith.constant 0 : index
      %248 = vector.load %arg26[%c0_167, %c0_168] : memref<64x1xf32, #tpu.memory_space<vmem>>, vector<64x1xf32>
      %249 = arith.addf %248, %205 : vector<64x1xf32>
      %c0_169 = arith.constant 0 : index
      %c0_170 = arith.constant 0 : index
      %250 = vector.load %arg26[%c0_169, %c0_170] : memref<64x1xf32, #tpu.memory_space<vmem>>, vector<64x1xf32>
      tpu.vector_store %arg26[%c0_169, %c0_170], %249 {strides = array<i32>} : memref<64x1xf32, #tpu.memory_space<vmem>>, vector<64x1xf32>,
      %c0_171 = arith.constant 0 : index
      %c0_172 = arith.constant 0 : index
      %251 = vector.load %arg27[%c0_171, %c0_172] : memref<64x1xf32, #tpu.memory_space<vmem>>, vector<64x1xf32>
      %252 = arith.addf %251, %209 : vector<64x1xf32>
      %c0_173 = arith.constant 0 : index
      %c0_174 = arith.constant 0 : index
      %253 = vector.load %arg27[%c0_173, %c0_174] : memref<64x1xf32, #tpu.memory_space<vmem>>, vector<64x1xf32>
      tpu.vector_store %arg27[%c0_173, %c0_174], %252 {strides = array<i32>} : memref<64x1xf32, #tpu.memory_space<vmem>>, vector<64x1xf32>,
    } else {
    }
    %c0_i32_86 = arith.constant 0 : i32
    %95 = arith.cmpi eq, %arg0, %c0_i32_86 : i32
    %c0_i32_87 = arith.constant 0 : i32
    %96 = arith.cmpi eq, %arg1, %c0_i32_87 : i32
    %97 = arith.andi %95, %96 : i1
    %98 = arith.extui %97 : i1 to i32
    %c0_i32_88 = arith.constant 0 : i32
    %99 = arith.cmpi ne, %98, %c0_i32_88 : i32
    scf.if %99 {
      %c0_89 = arith.constant 0 : index
      %c0_90 = arith.constant 0 : index
      %100 = vector.load %arg25[%c0_89, %c0_90] : memref<64x1xf32, #tpu.memory_space<vmem>>, vector<64x1xf32>
      %cst_91 = arith.constant dense<0.000000e+00> : vector<1xf32>
      %101 = vector.multi_reduction <add>, %100, %cst_91 [0] : vector<64x1xf32> to vector<1xf32>
      %102 = vector.shape_cast %101 : vector<1xf32> to vector<1x1xf32>
      %c0_92 = arith.constant 0 : index
      %c0_93 = arith.constant 0 : index
      %103 = vector.load %arg8[%c0_92, %c0_93] : memref<1x1xf32, #tpu.memory_space<vmem>>, vector<1x1xf32>
      tpu.vector_store %arg8[%c0_92, %c0_93], %102 {strides = array<i32>} : memref<1x1xf32, #tpu.memory_space<vmem>>, vector<1x1xf32>,
      %c0_94 = arith.constant 0 : index
      %c0_95 = arith.constant 0 : index
      %104 = vector.load %arg26[%c0_94, %c0_95] : memref<64x1xf32, #tpu.memory_space<vmem>>, vector<64x1xf32>
      %cst_96 = arith.constant dense<0.000000e+00> : vector<1xf32>
      %105 = vector.multi_reduction <add>, %104, %cst_96 [0] : vector<64x1xf32> to vector<1xf32>
      %106 = vector.shape_cast %105 : vector<1xf32> to vector<1x1xf32>
      %c0_97 = arith.constant 0 : index
      %c0_98 = arith.constant 0 : index
      %107 = vector.load %arg9[%c0_97, %c0_98] : memref<1x1xf32, #tpu.memory_space<vmem>>, vector<1x1xf32>
      tpu.vector_store %arg9[%c0_97, %c0_98], %106 {strides = array<i32>} : memref<1x1xf32, #tpu.memory_space<vmem>>, vector<1x1xf32>,
      %c0_99 = arith.constant 0 : index
      %c0_100 = arith.constant 0 : index
      %108 = vector.load %arg27[%c0_99, %c0_100] : memref<64x1xf32, #tpu.memory_space<vmem>>, vector<64x1xf32>
      %cst_101 = arith.constant dense<0.000000e+00> : vector<1xf32>
      %109 = vector.multi_reduction <add>, %108, %cst_101 [0] : vector<64x1xf32> to vector<1xf32>
      %110 = vector.shape_cast %109 : vector<1xf32> to vector<1x1xf32>
      %c0_102 = arith.constant 0 : index
      %c0_103 = arith.constant 0 : index
      %111 = vector.load %arg10[%c0_102, %c0_103] : memref<1x1xf32, #tpu.memory_space<vmem>>, vector<1x1xf32>
      tpu.vector_store %arg10[%c0_102, %c0_103], %110 {strides = array<i32>} : memref<1x1xf32, #tpu.memory_space<vmem>>, vector<1x1xf32>,
    } else {
    }
    return
  }
  func.func @transform_0(%arg0: i32, %arg1: i32) -> (i32, i32) {
    %c0_i32 = arith.constant 0 : i32
    return %arg0, %arg1 : i32, i32
  }
  func.func @transform_1(%arg0: i32, %arg1: i32) -> (i32, i32) {
    %c0_i32 = arith.constant 0 : i32
    return %arg0, %arg1 : i32, i32
  }
  func.func @transform_2(%arg0: i32, %arg1: i32) -> (i32, i32) {
    %c0_i32 = arith.constant 0 : i32
    return %arg0, %arg1 : i32, i32
  }
  func.func @transform_3(%arg0: i32, %arg1: i32) -> (i32, i32) {
    %c0_i32 = arith.constant 0 : i32
    return %arg0, %arg1 : i32, i32
  }
  func.func @transform_4(%arg0: i32, %arg1: i32) -> (i32, i32) {
    %c0_i32 = arith.constant 0 : i32
    return %arg0, %arg1 : i32, i32
  }
  func.func @transform_5(%arg0: i32, %arg1: i32) -> (i32, i32) {
    %c0_i32 = arith.constant 0 : i32
    return %arg0, %arg1 : i32, i32
  }
  func.func @transform_6(%arg0: i32, %arg1: i32) -> (i32, i32) {
    %c0_i32 = arith.constant 0 : i32
    %c0_i32_0 = arith.constant 0 : i32
    %c0_i32_1 = arith.constant 0 : i32
    return %c0_i32, %c0_i32_0 : i32, i32
  }
  func.func @transform_7(%arg0: i32, %arg1: i32) -> (i32, i32) {
    %c0_i32 = arith.constant 0 : i32
    %c0_i32_0 = arith.constant 0 : i32
    %c0_i32_1 = arith.constant 0 : i32
    return %c0_i32, %c0_i32_0 : i32, i32
  }
  func.func @transform_8(%arg0: i32, %arg1: i32) -> (i32, i32) {
    %c0_i32 = arith.constant 0 : i32
    %c0_i32_0 = arith.constant 0 : i32
    %c0_i32_1 = arith.constant 0 : i32
    return %c0_i32, %c0_i32_0 : i32, i32
  }
}

module attributes {stable_mosaic.version = 11 : i64} {
  func.func @kernel(%arg0: i32, %arg1: i32, %arg2: memref<32x256xf32, #tpu.memory_space<vmem>>, %arg3: memref<32x256xf32, #tpu.memory_space<vmem>>, %arg4: memref<32x256xf32, #tpu.memory_space<vmem>>, %arg5: memref<32x256xf32, #tpu.memory_space<vmem>>, %arg6: memref<1x1xf32, #tpu.memory_space<vmem>>, %arg7: memref<1x1xf32, #tpu.memory_space<vmem>>, %arg8: memref<32x1xf32, #tpu.memory_space<vmem>>, %arg9: memref<32x1xf32, #tpu.memory_space<vmem>>, %arg10: memref<32x1xf32, #tpu.memory_space<vmem>>, %arg11: memref<32x1xf32, #tpu.memory_space<vmem>>, %arg12: memref<32x1xf32, #tpu.memory_space<vmem>>, %arg13: memref<32x1xf32, #tpu.memory_space<vmem>>, %arg14: memref<32x1xf32, #tpu.memory_space<vmem>>, %arg15: memref<32x1xf32, #tpu.memory_space<vmem>>, %arg16: memref<32x1xf32, #tpu.memory_space<vmem>>, %arg17: memref<32x1xf32, #tpu.memory_space<vmem>>) attributes {dimension_semantics = [#tpu.dimension_semantics<arbitrary>, #tpu.dimension_semantics<arbitrary>], iteration_bounds = array<i64: 1, 1>, scalar_prefetch = 0 : i64, scratch_operands = 10 : i64, tpu.core_type = #tpu.core_type<tc>, window_params = [{transform_indices = @transform_0, window_bounds = array<i64: 32, 256>}, {transform_indices = @transform_1, window_bounds = array<i64: 32, 256>}, {transform_indices = @transform_2, window_bounds = array<i64: 32, 256>}, {transform_indices = @transform_3, window_bounds = array<i64: 32, 256>}, {pipeline_mode = #tpu.pipeline_mode<synchronous>, transform_indices = @transform_4, window_bounds = array<i64: 1, 1>}, {pipeline_mode = #tpu.pipeline_mode<synchronous>, transform_indices = @transform_5, window_bounds = array<i64: 1, 1>}]} {
    %c0_i32 = arith.constant 0 : i32
    %0 = arith.cmpi eq, %arg0, %c0_i32 : i32
    %c0_i32_0 = arith.constant 0 : i32
    %1 = arith.cmpi eq, %arg1, %c0_i32_0 : i32
    %2 = arith.andi %0, %1 : i1
    %3 = arith.extui %2 : i1 to i32
    %c0_i32_1 = arith.constant 0 : i32
    %4 = arith.cmpi ne, %3, %c0_i32_1 : i32
    scf.if %4 {
      %cst_55 = arith.constant 0.000000e+00 : f32
      %64 = vector.broadcast %cst_55 : f32 to vector<32x1xf32>
      %c0_56 = arith.constant 0 : index
      %c0_57 = arith.constant 0 : index
      %65 = vector.load %arg16[%c0_56, %c0_57] : memref<32x1xf32, #tpu.memory_space<vmem>>, vector<32x1xf32>
      tpu.vector_store %arg16[%c0_56, %c0_57], %64 {strides = array<i32>} : memref<32x1xf32, #tpu.memory_space<vmem>>, vector<32x1xf32>,
      %cst_58 = arith.constant 0.000000e+00 : f32
      %66 = vector.broadcast %cst_58 : f32 to vector<32x1xf32>
      %c0_59 = arith.constant 0 : index
      %c0_60 = arith.constant 0 : index
      %67 = vector.load %arg17[%c0_59, %c0_60] : memref<32x1xf32, #tpu.memory_space<vmem>>, vector<32x1xf32>
      tpu.vector_store %arg17[%c0_59, %c0_60], %66 {strides = array<i32>} : memref<32x1xf32, #tpu.memory_space<vmem>>, vector<32x1xf32>,
    } else {
    }
    %c0_i32_2 = arith.constant 0 : i32
    %5 = arith.cmpi eq, %arg1, %c0_i32_2 : i32
    %6 = arith.extui %5 : i1 to i32
    %c0_i32_3 = arith.constant 0 : i32
    %7 = arith.cmpi ne, %6, %c0_i32_3 : i32
    scf.if %7 {
      %cst_55 = arith.constant 0.000000e+00 : f32
      %64 = vector.broadcast %cst_55 : f32 to vector<32x1xf32>
      %c0_56 = arith.constant 0 : index
      %c0_57 = arith.constant 0 : index
      %65 = vector.load %arg8[%c0_56, %c0_57] : memref<32x1xf32, #tpu.memory_space<vmem>>, vector<32x1xf32>
      tpu.vector_store %arg8[%c0_56, %c0_57], %64 {strides = array<i32>} : memref<32x1xf32, #tpu.memory_space<vmem>>, vector<32x1xf32>,
      %cst_58 = arith.constant 0.000000e+00 : f32
      %66 = vector.broadcast %cst_58 : f32 to vector<32x1xf32>
      %c0_59 = arith.constant 0 : index
      %c0_60 = arith.constant 0 : index
      %67 = vector.load %arg9[%c0_59, %c0_60] : memref<32x1xf32, #tpu.memory_space<vmem>>, vector<32x1xf32>
      tpu.vector_store %arg9[%c0_59, %c0_60], %66 {strides = array<i32>} : memref<32x1xf32, #tpu.memory_space<vmem>>, vector<32x1xf32>,
      %cst_61 = arith.constant 0.000000e+00 : f32
      %68 = vector.broadcast %cst_61 : f32 to vector<32x1xf32>
      %c0_62 = arith.constant 0 : index
      %c0_63 = arith.constant 0 : index
      %69 = vector.load %arg10[%c0_62, %c0_63] : memref<32x1xf32, #tpu.memory_space<vmem>>, vector<32x1xf32>
      tpu.vector_store %arg10[%c0_62, %c0_63], %68 {strides = array<i32>} : memref<32x1xf32, #tpu.memory_space<vmem>>, vector<32x1xf32>,
      %cst_64 = arith.constant 0.000000e+00 : f32
      %70 = vector.broadcast %cst_64 : f32 to vector<32x1xf32>
      %c0_65 = arith.constant 0 : index
      %c0_66 = arith.constant 0 : index
      %71 = vector.load %arg11[%c0_65, %c0_66] : memref<32x1xf32, #tpu.memory_space<vmem>>, vector<32x1xf32>
      tpu.vector_store %arg11[%c0_65, %c0_66], %70 {strides = array<i32>} : memref<32x1xf32, #tpu.memory_space<vmem>>, vector<32x1xf32>,
      %cst_67 = arith.constant 0.000000e+00 : f32
      %72 = vector.broadcast %cst_67 : f32 to vector<32x1xf32>
      %c0_68 = arith.constant 0 : index
      %c0_69 = arith.constant 0 : index
      %73 = vector.load %arg12[%c0_68, %c0_69] : memref<32x1xf32, #tpu.memory_space<vmem>>, vector<32x1xf32>
      tpu.vector_store %arg12[%c0_68, %c0_69], %72 {strides = array<i32>} : memref<32x1xf32, #tpu.memory_space<vmem>>, vector<32x1xf32>,
      %cst_70 = arith.constant 0.000000e+00 : f32
      %74 = vector.broadcast %cst_70 : f32 to vector<32x1xf32>
      %c0_71 = arith.constant 0 : index
      %c0_72 = arith.constant 0 : index
      %75 = vector.load %arg13[%c0_71, %c0_72] : memref<32x1xf32, #tpu.memory_space<vmem>>, vector<32x1xf32>
      tpu.vector_store %arg13[%c0_71, %c0_72], %74 {strides = array<i32>} : memref<32x1xf32, #tpu.memory_space<vmem>>, vector<32x1xf32>,
      %cst_73 = arith.constant 0.000000e+00 : f32
      %76 = vector.broadcast %cst_73 : f32 to vector<32x1xf32>
      %c0_74 = arith.constant 0 : index
      %c0_75 = arith.constant 0 : index
      %77 = vector.load %arg14[%c0_74, %c0_75] : memref<32x1xf32, #tpu.memory_space<vmem>>, vector<32x1xf32>
      tpu.vector_store %arg14[%c0_74, %c0_75], %76 {strides = array<i32>} : memref<32x1xf32, #tpu.memory_space<vmem>>, vector<32x1xf32>,
      %cst_76 = arith.constant 0.000000e+00 : f32
      %78 = vector.broadcast %cst_76 : f32 to vector<32x1xf32>
      %c0_77 = arith.constant 0 : index
      %c0_78 = arith.constant 0 : index
      %79 = vector.load %arg15[%c0_77, %c0_78] : memref<32x1xf32, #tpu.memory_space<vmem>>, vector<32x1xf32>
      tpu.vector_store %arg15[%c0_77, %c0_78], %78 {strides = array<i32>} : memref<32x1xf32, #tpu.memory_space<vmem>>, vector<32x1xf32>,
    } else {
    }
    %c0 = arith.constant 0 : index
    %c0_4 = arith.constant 0 : index
    %8 = vector.load %arg2[%c0, %c0_4] : memref<32x256xf32, #tpu.memory_space<vmem>>, vector<32x256xf32>
    %c0_5 = arith.constant 0 : index
    %c0_6 = arith.constant 0 : index
    %9 = vector.load %arg3[%c0_5, %c0_6] : memref<32x256xf32, #tpu.memory_space<vmem>>, vector<32x256xf32>
    %c0_7 = arith.constant 0 : index
    %c0_8 = arith.constant 0 : index
    %10 = vector.load %arg8[%c0_7, %c0_8] : memref<32x1xf32, #tpu.memory_space<vmem>>, vector<32x1xf32>
    %cst = arith.constant dense<0.000000e+00> : vector<32xf32>
    %11 = vector.multi_reduction <add>, %8, %cst [1] : vector<32x256xf32> to vector<32xf32>
    %12 = vector.shape_cast %11 : vector<32xf32> to vector<32x1xf32>
    %13 = arith.addf %10, %12 : vector<32x1xf32>
    %c0_9 = arith.constant 0 : index
    %c0_10 = arith.constant 0 : index
    %14 = vector.load %arg8[%c0_9, %c0_10] : memref<32x1xf32, #tpu.memory_space<vmem>>, vector<32x1xf32>
    tpu.vector_store %arg8[%c0_9, %c0_10], %13 {strides = array<i32>} : memref<32x1xf32, #tpu.memory_space<vmem>>, vector<32x1xf32>,
    %c0_11 = arith.constant 0 : index
    %c0_12 = arith.constant 0 : index
    %15 = vector.load %arg9[%c0_11, %c0_12] : memref<32x1xf32, #tpu.memory_space<vmem>>, vector<32x1xf32>
    %16 = arith.mulf %8, %8 : vector<32x256xf32>
    %cst_13 = arith.constant dense<0.000000e+00> : vector<32xf32>
    %17 = vector.multi_reduction <add>, %16, %cst_13 [1] : vector<32x256xf32> to vector<32xf32>
    %18 = vector.shape_cast %17 : vector<32xf32> to vector<32x1xf32>
    %19 = arith.addf %15, %18 : vector<32x1xf32>
    %c0_14 = arith.constant 0 : index
    %c0_15 = arith.constant 0 : index
    %20 = vector.load %arg9[%c0_14, %c0_15] : memref<32x1xf32, #tpu.memory_space<vmem>>, vector<32x1xf32>
    tpu.vector_store %arg9[%c0_14, %c0_15], %19 {strides = array<i32>} : memref<32x1xf32, #tpu.memory_space<vmem>>, vector<32x1xf32>,
    %c0_16 = arith.constant 0 : index
    %c0_17 = arith.constant 0 : index
    %21 = vector.load %arg10[%c0_16, %c0_17] : memref<32x1xf32, #tpu.memory_space<vmem>>, vector<32x1xf32>
    %cst_18 = arith.constant dense<0.000000e+00> : vector<32xf32>
    %22 = vector.multi_reduction <add>, %9, %cst_18 [1] : vector<32x256xf32> to vector<32xf32>
    %23 = vector.shape_cast %22 : vector<32xf32> to vector<32x1xf32>
    %24 = arith.addf %21, %23 : vector<32x1xf32>
    %c0_19 = arith.constant 0 : index
    %c0_20 = arith.constant 0 : index
    %25 = vector.load %arg10[%c0_19, %c0_20] : memref<32x1xf32, #tpu.memory_space<vmem>>, vector<32x1xf32>
    tpu.vector_store %arg10[%c0_19, %c0_20], %24 {strides = array<i32>} : memref<32x1xf32, #tpu.memory_space<vmem>>, vector<32x1xf32>,
    %c0_21 = arith.constant 0 : index
    %c0_22 = arith.constant 0 : index
    %26 = vector.load %arg11[%c0_21, %c0_22] : memref<32x1xf32, #tpu.memory_space<vmem>>, vector<32x1xf32>
    %27 = arith.mulf %9, %9 : vector<32x256xf32>
    %cst_23 = arith.constant dense<0.000000e+00> : vector<32xf32>
    %28 = vector.multi_reduction <add>, %27, %cst_23 [1] : vector<32x256xf32> to vector<32xf32>
    %29 = vector.shape_cast %28 : vector<32xf32> to vector<32x1xf32>
    %30 = arith.addf %26, %29 : vector<32x1xf32>
    %c0_24 = arith.constant 0 : index
    %c0_25 = arith.constant 0 : index
    %31 = vector.load %arg11[%c0_24, %c0_25] : memref<32x1xf32, #tpu.memory_space<vmem>>, vector<32x1xf32>
    tpu.vector_store %arg11[%c0_24, %c0_25], %30 {strides = array<i32>} : memref<32x1xf32, #tpu.memory_space<vmem>>, vector<32x1xf32>,
    %c0_26 = arith.constant 0 : index
    %c0_27 = arith.constant 0 : index
    %32 = vector.load %arg4[%c0_26, %c0_27] : memref<32x256xf32, #tpu.memory_space<vmem>>, vector<32x256xf32>
    %c0_28 = arith.constant 0 : index
    %c0_29 = arith.constant 0 : index
    %33 = vector.load %arg5[%c0_28, %c0_29] : memref<32x256xf32, #tpu.memory_space<vmem>>, vector<32x256xf32>
    %c0_30 = arith.constant 0 : index
    %c0_31 = arith.constant 0 : index
    %34 = vector.load %arg12[%c0_30, %c0_31] : memref<32x1xf32, #tpu.memory_space<vmem>>, vector<32x1xf32>
    %cst_32 = arith.constant dense<0.000000e+00> : vector<32xf32>
    %35 = vector.multi_reduction <add>, %32, %cst_32 [1] : vector<32x256xf32> to vector<32xf32>
    %36 = vector.shape_cast %35 : vector<32xf32> to vector<32x1xf32>
    %37 = arith.addf %34, %36 : vector<32x1xf32>
    %c0_33 = arith.constant 0 : index
    %c0_34 = arith.constant 0 : index
    %38 = vector.load %arg12[%c0_33, %c0_34] : memref<32x1xf32, #tpu.memory_space<vmem>>, vector<32x1xf32>
    tpu.vector_store %arg12[%c0_33, %c0_34], %37 {strides = array<i32>} : memref<32x1xf32, #tpu.memory_space<vmem>>, vector<32x1xf32>,
    %c0_35 = arith.constant 0 : index
    %c0_36 = arith.constant 0 : index
    %39 = vector.load %arg13[%c0_35, %c0_36] : memref<32x1xf32, #tpu.memory_space<vmem>>, vector<32x1xf32>
    %40 = arith.mulf %32, %32 : vector<32x256xf32>
    %cst_37 = arith.constant dense<0.000000e+00> : vector<32xf32>
    %41 = vector.multi_reduction <add>, %40, %cst_37 [1] : vector<32x256xf32> to vector<32xf32>
    %42 = vector.shape_cast %41 : vector<32xf32> to vector<32x1xf32>
    %43 = arith.addf %39, %42 : vector<32x1xf32>
    %c0_38 = arith.constant 0 : index
    %c0_39 = arith.constant 0 : index
    %44 = vector.load %arg13[%c0_38, %c0_39] : memref<32x1xf32, #tpu.memory_space<vmem>>, vector<32x1xf32>
    tpu.vector_store %arg13[%c0_38, %c0_39], %43 {strides = array<i32>} : memref<32x1xf32, #tpu.memory_space<vmem>>, vector<32x1xf32>,
    %c0_40 = arith.constant 0 : index
    %c0_41 = arith.constant 0 : index
    %45 = vector.load %arg14[%c0_40, %c0_41] : memref<32x1xf32, #tpu.memory_space<vmem>>, vector<32x1xf32>
    %cst_42 = arith.constant dense<0.000000e+00> : vector<32xf32>
    %46 = vector.multi_reduction <add>, %33, %cst_42 [1] : vector<32x256xf32> to vector<32xf32>
    %47 = vector.shape_cast %46 : vector<32xf32> to vector<32x1xf32>
    %48 = arith.addf %45, %47 : vector<32x1xf32>
    %c0_43 = arith.constant 0 : index
    %c0_44 = arith.constant 0 : index
    %49 = vector.load %arg14[%c0_43, %c0_44] : memref<32x1xf32, #tpu.memory_space<vmem>>, vector<32x1xf32>
    tpu.vector_store %arg14[%c0_43, %c0_44], %48 {strides = array<i32>} : memref<32x1xf32, #tpu.memory_space<vmem>>, vector<32x1xf32>,
    %c0_45 = arith.constant 0 : index
    %c0_46 = arith.constant 0 : index
    %50 = vector.load %arg15[%c0_45, %c0_46] : memref<32x1xf32, #tpu.memory_space<vmem>>, vector<32x1xf32>
    %51 = arith.mulf %33, %33 : vector<32x256xf32>
    %cst_47 = arith.constant dense<0.000000e+00> : vector<32xf32>
    %52 = vector.multi_reduction <add>, %51, %cst_47 [1] : vector<32x256xf32> to vector<32xf32>
    %53 = vector.shape_cast %52 : vector<32xf32> to vector<32x1xf32>
    %54 = arith.addf %50, %53 : vector<32x1xf32>
    %c0_48 = arith.constant 0 : index
    %c0_49 = arith.constant 0 : index
    %55 = vector.load %arg15[%c0_48, %c0_49] : memref<32x1xf32, #tpu.memory_space<vmem>>, vector<32x1xf32>
    tpu.vector_store %arg15[%c0_48, %c0_49], %54 {strides = array<i32>} : memref<32x1xf32, #tpu.memory_space<vmem>>, vector<32x1xf32>,
    %c0_i32_50 = arith.constant 0 : i32
    %56 = arith.cmpi eq, %arg1, %c0_i32_50 : i32
    %57 = arith.extui %56 : i1 to i32
    %c0_i32_51 = arith.constant 0 : i32
    %58 = arith.cmpi ne, %57, %c0_i32_51 : i32
    scf.if %58 {
      %c0_55 = arith.constant 0 : index
      %c0_56 = arith.constant 0 : index
      %64 = vector.load %arg8[%c0_55, %c0_56] : memref<32x1xf32, #tpu.memory_space<vmem>>, vector<32x1xf32>
      %c0_57 = arith.constant 0 : index
      %c0_58 = arith.constant 0 : index
      %65 = vector.load %arg9[%c0_57, %c0_58] : memref<32x1xf32, #tpu.memory_space<vmem>>, vector<32x1xf32>
      %c0_59 = arith.constant 0 : index
      %c0_60 = arith.constant 0 : index
      %66 = vector.load %arg10[%c0_59, %c0_60] : memref<32x1xf32, #tpu.memory_space<vmem>>, vector<32x1xf32>
      %c0_61 = arith.constant 0 : index
      %c0_62 = arith.constant 0 : index
      %67 = vector.load %arg11[%c0_61, %c0_62] : memref<32x1xf32, #tpu.memory_space<vmem>>, vector<32x1xf32>
      %cst_63 = arith.constant 3.906250e-03 : f32
      %68 = vector.broadcast %cst_63 : f32 to vector<32x1xf32>
      %69 = arith.mulf %64, %68 : vector<32x1xf32>
      %cst_64 = arith.constant 3.906250e-03 : f32
      %70 = vector.broadcast %cst_64 : f32 to vector<32x1xf32>
      %71 = arith.mulf %66, %70 : vector<32x1xf32>
      %cst_65 = arith.constant 2.560000e+02 : f32
      %72 = vector.broadcast %cst_65 : f32 to vector<32x1xf32>
      %73 = arith.mulf %72, %69 : vector<32x1xf32>
      %74 = arith.mulf %73, %69 : vector<32x1xf32>
      %75 = arith.subf %65, %74 : vector<32x1xf32>
      %cst_66 = arith.constant 0.00392156886 : f32
      %76 = vector.broadcast %cst_66 : f32 to vector<32x1xf32>
      %77 = arith.mulf %75, %76 : vector<32x1xf32>
      %cst_67 = arith.constant 0.000000e+00 : f32
      %78 = vector.broadcast %cst_67 : f32 to vector<32x1xf32>
      %79 = arith.maximumf %77, %78 : vector<32x1xf32>
      %cst_68 = arith.constant 2.560000e+02 : f32
      %80 = vector.broadcast %cst_68 : f32 to vector<32x1xf32>
      %81 = arith.mulf %80, %71 : vector<32x1xf32>
      %82 = arith.mulf %81, %71 : vector<32x1xf32>
      %83 = arith.subf %67, %82 : vector<32x1xf32>
      %cst_69 = arith.constant 0.00392156886 : f32
      %84 = vector.broadcast %cst_69 : f32 to vector<32x1xf32>
      %85 = arith.mulf %83, %84 : vector<32x1xf32>
      %cst_70 = arith.constant 0.000000e+00 : f32
      %86 = vector.broadcast %cst_70 : f32 to vector<32x1xf32>
      %87 = arith.maximumf %85, %86 : vector<32x1xf32>
      %88 = arith.subf %69, %71 : vector<32x1xf32>
      %89 = arith.mulf %88, %88 : vector<32x1xf32>
      %90 = math.sqrt %79 : vector<32x1xf32>
      %91 = math.sqrt %87 : vector<32x1xf32>
      %92 = arith.subf %90, %91 : vector<32x1xf32>
      %93 = arith.mulf %92, %92 : vector<32x1xf32>
      %c0_71 = arith.constant 0 : index
      %c0_72 = arith.constant 0 : index
      %94 = vector.load %arg16[%c0_71, %c0_72] : memref<32x1xf32, #tpu.memory_space<vmem>>, vector<32x1xf32>
      %95 = arith.addf %94, %89 : vector<32x1xf32>
      %c0_73 = arith.constant 0 : index
      %c0_74 = arith.constant 0 : index
      %96 = vector.load %arg16[%c0_73, %c0_74] : memref<32x1xf32, #tpu.memory_space<vmem>>, vector<32x1xf32>
      tpu.vector_store %arg16[%c0_73, %c0_74], %95 {strides = array<i32>} : memref<32x1xf32, #tpu.memory_space<vmem>>, vector<32x1xf32>,
      %c0_75 = arith.constant 0 : index
      %c0_76 = arith.constant 0 : index
      %97 = vector.load %arg17[%c0_75, %c0_76] : memref<32x1xf32, #tpu.memory_space<vmem>>, vector<32x1xf32>
      %98 = arith.addf %97, %93 : vector<32x1xf32>
      %c0_77 = arith.constant 0 : index
      %c0_78 = arith.constant 0 : index
      %99 = vector.load %arg17[%c0_77, %c0_78] : memref<32x1xf32, #tpu.memory_space<vmem>>, vector<32x1xf32>
      tpu.vector_store %arg17[%c0_77, %c0_78], %98 {strides = array<i32>} : memref<32x1xf32, #tpu.memory_space<vmem>>, vector<32x1xf32>,
      %c0_79 = arith.constant 0 : index
      %c0_80 = arith.constant 0 : index
      %100 = vector.load %arg12[%c0_79, %c0_80] : memref<32x1xf32, #tpu.memory_space<vmem>>, vector<32x1xf32>
      %c0_81 = arith.constant 0 : index
      %c0_82 = arith.constant 0 : index
      %101 = vector.load %arg13[%c0_81, %c0_82] : memref<32x1xf32, #tpu.memory_space<vmem>>, vector<32x1xf32>
      %c0_83 = arith.constant 0 : index
      %c0_84 = arith.constant 0 : index
      %102 = vector.load %arg14[%c0_83, %c0_84] : memref<32x1xf32, #tpu.memory_space<vmem>>, vector<32x1xf32>
      %c0_85 = arith.constant 0 : index
      %c0_86 = arith.constant 0 : index
      %103 = vector.load %arg15[%c0_85, %c0_86] : memref<32x1xf32, #tpu.memory_space<vmem>>, vector<32x1xf32>
      %cst_87 = arith.constant 3.906250e-03 : f32
      %104 = vector.broadcast %cst_87 : f32 to vector<32x1xf32>
      %105 = arith.mulf %100, %104 : vector<32x1xf32>
      %cst_88 = arith.constant 3.906250e-03 : f32
      %106 = vector.broadcast %cst_88 : f32 to vector<32x1xf32>
      %107 = arith.mulf %102, %106 : vector<32x1xf32>
      %cst_89 = arith.constant 2.560000e+02 : f32
      %108 = vector.broadcast %cst_89 : f32 to vector<32x1xf32>
      %109 = arith.mulf %108, %105 : vector<32x1xf32>
      %110 = arith.mulf %109, %105 : vector<32x1xf32>
      %111 = arith.subf %101, %110 : vector<32x1xf32>
      %cst_90 = arith.constant 0.00392156886 : f32
      %112 = vector.broadcast %cst_90 : f32 to vector<32x1xf32>
      %113 = arith.mulf %111, %112 : vector<32x1xf32>
      %cst_91 = arith.constant 0.000000e+00 : f32
      %114 = vector.broadcast %cst_91 : f32 to vector<32x1xf32>
      %115 = arith.maximumf %113, %114 : vector<32x1xf32>
      %cst_92 = arith.constant 2.560000e+02 : f32
      %116 = vector.broadcast %cst_92 : f32 to vector<32x1xf32>
      %117 = arith.mulf %116, %107 : vector<32x1xf32>
      %118 = arith.mulf %117, %107 : vector<32x1xf32>
      %119 = arith.subf %103, %118 : vector<32x1xf32>
      %cst_93 = arith.constant 0.00392156886 : f32
      %120 = vector.broadcast %cst_93 : f32 to vector<32x1xf32>
      %121 = arith.mulf %119, %120 : vector<32x1xf32>
      %cst_94 = arith.constant 0.000000e+00 : f32
      %122 = vector.broadcast %cst_94 : f32 to vector<32x1xf32>
      %123 = arith.maximumf %121, %122 : vector<32x1xf32>
      %124 = arith.subf %105, %107 : vector<32x1xf32>
      %125 = arith.mulf %124, %124 : vector<32x1xf32>
      %126 = math.sqrt %115 : vector<32x1xf32>
      %127 = math.sqrt %123 : vector<32x1xf32>
      %128 = arith.subf %126, %127 : vector<32x1xf32>
      %129 = arith.mulf %128, %128 : vector<32x1xf32>
      %c0_95 = arith.constant 0 : index
      %c0_96 = arith.constant 0 : index
      %130 = vector.load %arg16[%c0_95, %c0_96] : memref<32x1xf32, #tpu.memory_space<vmem>>, vector<32x1xf32>
      %131 = arith.addf %130, %125 : vector<32x1xf32>
      %c0_97 = arith.constant 0 : index
      %c0_98 = arith.constant 0 : index
      %132 = vector.load %arg16[%c0_97, %c0_98] : memref<32x1xf32, #tpu.memory_space<vmem>>, vector<32x1xf32>
      tpu.vector_store %arg16[%c0_97, %c0_98], %131 {strides = array<i32>} : memref<32x1xf32, #tpu.memory_space<vmem>>, vector<32x1xf32>,
      %c0_99 = arith.constant 0 : index
      %c0_100 = arith.constant 0 : index
      %133 = vector.load %arg17[%c0_99, %c0_100] : memref<32x1xf32, #tpu.memory_space<vmem>>, vector<32x1xf32>
      %134 = arith.addf %133, %129 : vector<32x1xf32>
      %c0_101 = arith.constant 0 : index
      %c0_102 = arith.constant 0 : index
      %135 = vector.load %arg17[%c0_101, %c0_102] : memref<32x1xf32, #tpu.memory_space<vmem>>, vector<32x1xf32>
      tpu.vector_store %arg17[%c0_101, %c0_102], %134 {strides = array<i32>} : memref<32x1xf32, #tpu.memory_space<vmem>>, vector<32x1xf32>,
    } else {
    }
    %c0_i32_52 = arith.constant 0 : i32
    %59 = arith.cmpi eq, %arg0, %c0_i32_52 : i32
    %c0_i32_53 = arith.constant 0 : i32
    %60 = arith.cmpi eq, %arg1, %c0_i32_53 : i32
    %61 = arith.andi %59, %60 : i1
    %62 = arith.extui %61 : i1 to i32
    %c0_i32_54 = arith.constant 0 : i32
    %63 = arith.cmpi ne, %62, %c0_i32_54 : i32
    scf.if %63 {
      %c0_55 = arith.constant 0 : index
      %c0_56 = arith.constant 0 : index
      %64 = vector.load %arg16[%c0_55, %c0_56] : memref<32x1xf32, #tpu.memory_space<vmem>>, vector<32x1xf32>
      %cst_57 = arith.constant dense<0.000000e+00> : vector<1xf32>
      %65 = vector.multi_reduction <add>, %64, %cst_57 [0] : vector<32x1xf32> to vector<1xf32>
      %66 = vector.shape_cast %65 : vector<1xf32> to vector<1x1xf32>
      %c0_58 = arith.constant 0 : index
      %c0_59 = arith.constant 0 : index
      %67 = vector.load %arg6[%c0_58, %c0_59] : memref<1x1xf32, #tpu.memory_space<vmem>>, vector<1x1xf32>
      tpu.vector_store %arg6[%c0_58, %c0_59], %66 {strides = array<i32>} : memref<1x1xf32, #tpu.memory_space<vmem>>, vector<1x1xf32>,
      %c0_60 = arith.constant 0 : index
      %c0_61 = arith.constant 0 : index
      %68 = vector.load %arg17[%c0_60, %c0_61] : memref<32x1xf32, #tpu.memory_space<vmem>>, vector<32x1xf32>
      %cst_62 = arith.constant dense<0.000000e+00> : vector<1xf32>
      %69 = vector.multi_reduction <add>, %68, %cst_62 [0] : vector<32x1xf32> to vector<1xf32>
      %70 = vector.shape_cast %69 : vector<1xf32> to vector<1x1xf32>
      %c0_63 = arith.constant 0 : index
      %c0_64 = arith.constant 0 : index
      %71 = vector.load %arg7[%c0_63, %c0_64] : memref<1x1xf32, #tpu.memory_space<vmem>>, vector<1x1xf32>
      tpu.vector_store %arg7[%c0_63, %c0_64], %70 {strides = array<i32>} : memref<1x1xf32, #tpu.memory_space<vmem>>, vector<1x1xf32>,
    } else {
    }
    return
  }
  func.func @transform_0(%arg0: i32, %arg1: i32) -> (i32, i32) {
    %c0_i32 = arith.constant 0 : i32
    return %arg0, %arg1 : i32, i32
  }
  func.func @transform_1(%arg0: i32, %arg1: i32) -> (i32, i32) {
    %c0_i32 = arith.constant 0 : i32
    return %arg0, %arg1 : i32, i32
  }
  func.func @transform_2(%arg0: i32, %arg1: i32) -> (i32, i32) {
    %c0_i32 = arith.constant 0 : i32
    return %arg0, %arg1 : i32, i32
  }
  func.func @transform_3(%arg0: i32, %arg1: i32) -> (i32, i32) {
    %c0_i32 = arith.constant 0 : i32
    return %arg0, %arg1 : i32, i32
  }
  func.func @transform_4(%arg0: i32, %arg1: i32) -> (i32, i32) {
    %c0_i32 = arith.constant 0 : i32
    %c0_i32_0 = arith.constant 0 : i32
    %c0_i32_1 = arith.constant 0 : i32
    return %c0_i32, %c0_i32_0 : i32, i32
  }
  func.func @transform_5(%arg0: i32, %arg1: i32) -> (i32, i32) {
    %c0_i32 = arith.constant 0 : i32
    %c0_i32_0 = arith.constant 0 : i32
    %c0_i32_1 = arith.constant 0 : i32
    return %c0_i32, %c0_i32_0 : i32, i32
  }
}

module attributes {stable_mosaic.version = 11 : i64} {
  func.func @kernel(%arg0: i32, %arg1: memref<8x768xf32, #tpu.memory_space<vmem>>, %arg2: memref<8x768xf32, #tpu.memory_space<vmem>>, %arg3: memref<8x768xf32, #tpu.memory_space<vmem>>, %arg4: memref<8x768xf32, #tpu.memory_space<vmem>>, %arg5: memref<1x1xf32, #tpu.memory_space<vmem>>, %arg6: memref<1x1xf32, #tpu.memory_space<vmem>>, %arg7: memref<8x1xf32, #tpu.memory_space<vmem>>, %arg8: memref<8x1xf32, #tpu.memory_space<vmem>>) attributes {dimension_semantics = [#tpu.dimension_semantics<arbitrary>], iteration_bounds = array<i64: 1>, scalar_prefetch = 0 : i64, scratch_operands = 2 : i64, tpu.core_type = #tpu.core_type<tc>, window_params = [{transform_indices = @transform_0, window_bounds = array<i64: 8, 768>}, {transform_indices = @transform_1, window_bounds = array<i64: 8, 768>}, {transform_indices = @transform_2, window_bounds = array<i64: 8, 768>}, {transform_indices = @transform_3, window_bounds = array<i64: 8, 768>}, {pipeline_mode = #tpu.pipeline_mode<synchronous>, transform_indices = @transform_4, window_bounds = array<i64: 1, 1>}, {pipeline_mode = #tpu.pipeline_mode<synchronous>, transform_indices = @transform_5, window_bounds = array<i64: 1, 1>}]} {
    %c0_i32 = arith.constant 0 : i32
    %0 = arith.cmpi eq, %arg0, %c0_i32 : i32
    %1 = arith.extui %0 : i1 to i32
    %c0_i32_0 = arith.constant 0 : i32
    %2 = arith.cmpi ne, %1, %c0_i32_0 : i32
    scf.if %2 {
      %cst_19 = arith.constant 0.000000e+00 : f32
      %24 = vector.broadcast %cst_19 : f32 to vector<8x1xf32>
      %c0_20 = arith.constant 0 : index
      %c0_21 = arith.constant 0 : index
      %25 = vector.load %arg7[%c0_20, %c0_21] : memref<8x1xf32, #tpu.memory_space<vmem>>, vector<8x1xf32>
      tpu.vector_store %arg7[%c0_20, %c0_21], %24 {strides = array<i32>} : memref<8x1xf32, #tpu.memory_space<vmem>>, vector<8x1xf32>,
      %cst_22 = arith.constant 0.000000e+00 : f32
      %26 = vector.broadcast %cst_22 : f32 to vector<8x1xf32>
      %c0_23 = arith.constant 0 : index
      %c0_24 = arith.constant 0 : index
      %27 = vector.load %arg8[%c0_23, %c0_24] : memref<8x1xf32, #tpu.memory_space<vmem>>, vector<8x1xf32>
      tpu.vector_store %arg8[%c0_23, %c0_24], %26 {strides = array<i32>} : memref<8x1xf32, #tpu.memory_space<vmem>>, vector<8x1xf32>,
    } else {
    }
    %c0 = arith.constant 0 : index
    %c0_1 = arith.constant 0 : index
    %3 = vector.load %arg1[%c0, %c0_1] : memref<8x768xf32, #tpu.memory_space<vmem>>, vector<8x768xf32>
    %c0_2 = arith.constant 0 : index
    %c0_3 = arith.constant 0 : index
    %4 = vector.load %arg2[%c0_2, %c0_3] : memref<8x768xf32, #tpu.memory_space<vmem>>, vector<8x768xf32>
    %5 = arith.subf %3, %4 : vector<8x768xf32>
    %6 = arith.mulf %5, %5 : vector<8x768xf32>
    %cst = arith.constant dense<0.000000e+00> : vector<8xf32>
    %7 = vector.multi_reduction <add>, %6, %cst [1] : vector<8x768xf32> to vector<8xf32>
    %8 = vector.shape_cast %7 : vector<8xf32> to vector<8x1xf32>
    %c0_4 = arith.constant 0 : index
    %c0_5 = arith.constant 0 : index
    %9 = vector.load %arg3[%c0_4, %c0_5] : memref<8x768xf32, #tpu.memory_space<vmem>>, vector<8x768xf32>
    %c0_6 = arith.constant 0 : index
    %c0_7 = arith.constant 0 : index
    %10 = vector.load %arg4[%c0_6, %c0_7] : memref<8x768xf32, #tpu.memory_space<vmem>>, vector<8x768xf32>
    %11 = arith.subf %9, %10 : vector<8x768xf32>
    %12 = arith.mulf %11, %11 : vector<8x768xf32>
    %cst_8 = arith.constant dense<0.000000e+00> : vector<8xf32>
    %13 = vector.multi_reduction <add>, %12, %cst_8 [1] : vector<8x768xf32> to vector<8xf32>
    %14 = vector.shape_cast %13 : vector<8xf32> to vector<8x1xf32>
    %c0_9 = arith.constant 0 : index
    %c0_10 = arith.constant 0 : index
    %15 = vector.load %arg7[%c0_9, %c0_10] : memref<8x1xf32, #tpu.memory_space<vmem>>, vector<8x1xf32>
    %16 = arith.addf %15, %8 : vector<8x1xf32>
    %c0_11 = arith.constant 0 : index
    %c0_12 = arith.constant 0 : index
    %17 = vector.load %arg7[%c0_11, %c0_12] : memref<8x1xf32, #tpu.memory_space<vmem>>, vector<8x1xf32>
    tpu.vector_store %arg7[%c0_11, %c0_12], %16 {strides = array<i32>} : memref<8x1xf32, #tpu.memory_space<vmem>>, vector<8x1xf32>,
    %c0_13 = arith.constant 0 : index
    %c0_14 = arith.constant 0 : index
    %18 = vector.load %arg8[%c0_13, %c0_14] : memref<8x1xf32, #tpu.memory_space<vmem>>, vector<8x1xf32>
    %19 = arith.addf %18, %14 : vector<8x1xf32>
    %c0_15 = arith.constant 0 : index
    %c0_16 = arith.constant 0 : index
    %20 = vector.load %arg8[%c0_15, %c0_16] : memref<8x1xf32, #tpu.memory_space<vmem>>, vector<8x1xf32>
    tpu.vector_store %arg8[%c0_15, %c0_16], %19 {strides = array<i32>} : memref<8x1xf32, #tpu.memory_space<vmem>>, vector<8x1xf32>,
    %c0_i32_17 = arith.constant 0 : i32
    %21 = arith.cmpi eq, %arg0, %c0_i32_17 : i32
    %22 = arith.extui %21 : i1 to i32
    %c0_i32_18 = arith.constant 0 : i32
    %23 = arith.cmpi ne, %22, %c0_i32_18 : i32
    scf.if %23 {
      %c0_19 = arith.constant 0 : index
      %c0_20 = arith.constant 0 : index
      %24 = vector.load %arg7[%c0_19, %c0_20] : memref<8x1xf32, #tpu.memory_space<vmem>>, vector<8x1xf32>
      %cst_21 = arith.constant dense<0.000000e+00> : vector<1xf32>
      %25 = vector.multi_reduction <add>, %24, %cst_21 [0] : vector<8x1xf32> to vector<1xf32>
      %26 = vector.shape_cast %25 : vector<1xf32> to vector<1x1xf32>
      %c0_22 = arith.constant 0 : index
      %c0_23 = arith.constant 0 : index
      %27 = vector.load %arg5[%c0_22, %c0_23] : memref<1x1xf32, #tpu.memory_space<vmem>>, vector<1x1xf32>
      tpu.vector_store %arg5[%c0_22, %c0_23], %26 {strides = array<i32>} : memref<1x1xf32, #tpu.memory_space<vmem>>, vector<1x1xf32>,
      %c0_24 = arith.constant 0 : index
      %c0_25 = arith.constant 0 : index
      %28 = vector.load %arg8[%c0_24, %c0_25] : memref<8x1xf32, #tpu.memory_space<vmem>>, vector<8x1xf32>
      %cst_26 = arith.constant dense<0.000000e+00> : vector<1xf32>
      %29 = vector.multi_reduction <add>, %28, %cst_26 [0] : vector<8x1xf32> to vector<1xf32>
      %30 = vector.shape_cast %29 : vector<1xf32> to vector<1x1xf32>
      %c0_27 = arith.constant 0 : index
      %c0_28 = arith.constant 0 : index
      %31 = vector.load %arg6[%c0_27, %c0_28] : memref<1x1xf32, #tpu.memory_space<vmem>>, vector<1x1xf32>
      tpu.vector_store %arg6[%c0_27, %c0_28], %30 {strides = array<i32>} : memref<1x1xf32, #tpu.memory_space<vmem>>, vector<1x1xf32>,
    } else {
    }
    return
  }
  func.func @transform_0(%arg0: i32) -> (i32, i32) {
    %c0_i32 = arith.constant 0 : i32
    %c0_i32_0 = arith.constant 0 : i32
    return %arg0, %c0_i32 : i32, i32
  }
  func.func @transform_1(%arg0: i32) -> (i32, i32) {
    %c0_i32 = arith.constant 0 : i32
    %c0_i32_0 = arith.constant 0 : i32
    return %arg0, %c0_i32 : i32, i32
  }
  func.func @transform_2(%arg0: i32) -> (i32, i32) {
    %c0_i32 = arith.constant 0 : i32
    %c0_i32_0 = arith.constant 0 : i32
    return %arg0, %c0_i32 : i32, i32
  }
  func.func @transform_3(%arg0: i32) -> (i32, i32) {
    %c0_i32 = arith.constant 0 : i32
    %c0_i32_0 = arith.constant 0 : i32
    return %arg0, %c0_i32 : i32, i32
  }
  func.func @transform_4(%arg0: i32) -> (i32, i32) {
    %c0_i32 = arith.constant 0 : i32
    %c0_i32_0 = arith.constant 0 : i32
    %c0_i32_1 = arith.constant 0 : i32
    return %c0_i32, %c0_i32_0 : i32, i32
  }
  func.func @transform_5(%arg0: i32) -> (i32, i32) {
    %c0_i32 = arith.constant 0 : i32
    %c0_i32_0 = arith.constant 0 : i32
    %c0_i32_1 = arith.constant 0 : i32
    return %c0_i32, %c0_i32_0 : i32, i32
  }
}

module attributes {stable_mosaic.version = 11 : i64} {
  func.func @kernel(%arg0: i32, %arg1: memref<8x512xf32, #tpu.memory_space<vmem>>, %arg2: memref<8x512xf32, #tpu.memory_space<vmem>>, %arg3: memref<8x512xf32, #tpu.memory_space<vmem>>, %arg4: memref<8x512xf32, #tpu.memory_space<vmem>>, %arg5: memref<8x512xf32, #tpu.memory_space<vmem>>, %arg6: memref<8x512xf32, #tpu.memory_space<vmem>>, %arg7: memref<8x512xf32, #tpu.memory_space<vmem>>, %arg8: memref<8x512xf32, #tpu.memory_space<vmem>>, %arg9: memref<1x1xf32, #tpu.memory_space<vmem>>, %arg10: memref<8x1xf32, #tpu.memory_space<vmem>>) attributes {dimension_semantics = [#tpu.dimension_semantics<arbitrary>], iteration_bounds = array<i64: 1>, scalar_prefetch = 0 : i64, scratch_operands = 1 : i64, tpu.core_type = #tpu.core_type<tc>, window_params = [{transform_indices = @transform_0, window_bounds = array<i64: 8, 512>}, {transform_indices = @transform_1, window_bounds = array<i64: 8, 512>}, {transform_indices = @transform_2, window_bounds = array<i64: 8, 512>}, {transform_indices = @transform_3, window_bounds = array<i64: 8, 512>}, {transform_indices = @transform_4, window_bounds = array<i64: 8, 512>}, {transform_indices = @transform_5, window_bounds = array<i64: 8, 512>}, {transform_indices = @transform_6, window_bounds = array<i64: 8, 512>}, {transform_indices = @transform_7, window_bounds = array<i64: 8, 512>}, {pipeline_mode = #tpu.pipeline_mode<synchronous>, transform_indices = @transform_8, window_bounds = array<i64: 1, 1>}]} {
    %c0_i32 = arith.constant 0 : i32
    %0 = arith.cmpi eq, %arg0, %c0_i32 : i32
    %1 = arith.extui %0 : i1 to i32
    %c0_i32_0 = arith.constant 0 : i32
    %2 = arith.cmpi ne, %1, %c0_i32_0 : i32
    scf.if %2 {
      %cst_25 = arith.constant 0.000000e+00 : f32
      %36 = vector.broadcast %cst_25 : f32 to vector<8x1xf32>
      %c0_26 = arith.constant 0 : index
      %c0_27 = arith.constant 0 : index
      %37 = vector.load %arg10[%c0_26, %c0_27] : memref<8x1xf32, #tpu.memory_space<vmem>>, vector<8x1xf32>
      tpu.vector_store %arg10[%c0_26, %c0_27], %36 {strides = array<i32>} : memref<8x1xf32, #tpu.memory_space<vmem>>, vector<8x1xf32>,
    } else {
    }
    %c0 = arith.constant 0 : index
    %c0_1 = arith.constant 0 : index
    %3 = vector.load %arg1[%c0, %c0_1] : memref<8x512xf32, #tpu.memory_space<vmem>>, vector<8x512xf32>
    %c0_2 = arith.constant 0 : index
    %c0_3 = arith.constant 0 : index
    %4 = vector.load %arg2[%c0_2, %c0_3] : memref<8x512xf32, #tpu.memory_space<vmem>>, vector<8x512xf32>
    %5 = arith.subf %3, %4 : vector<8x512xf32>
    %6 = arith.mulf %5, %5 : vector<8x512xf32>
    %cst = arith.constant dense<0.000000e+00> : vector<8xf32>
    %7 = vector.multi_reduction <add>, %6, %cst [1] : vector<8x512xf32> to vector<8xf32>
    %8 = vector.shape_cast %7 : vector<8xf32> to vector<8x1xf32>
    %c0_4 = arith.constant 0 : index
    %c0_5 = arith.constant 0 : index
    %9 = vector.load %arg3[%c0_4, %c0_5] : memref<8x512xf32, #tpu.memory_space<vmem>>, vector<8x512xf32>
    %c0_6 = arith.constant 0 : index
    %c0_7 = arith.constant 0 : index
    %10 = vector.load %arg4[%c0_6, %c0_7] : memref<8x512xf32, #tpu.memory_space<vmem>>, vector<8x512xf32>
    %11 = arith.subf %9, %10 : vector<8x512xf32>
    %12 = arith.mulf %11, %11 : vector<8x512xf32>
    %cst_8 = arith.constant dense<0.000000e+00> : vector<8xf32>
    %13 = vector.multi_reduction <add>, %12, %cst_8 [1] : vector<8x512xf32> to vector<8xf32>
    %14 = vector.shape_cast %13 : vector<8xf32> to vector<8x1xf32>
    %15 = arith.addf %8, %14 : vector<8x1xf32>
    %c0_9 = arith.constant 0 : index
    %c0_10 = arith.constant 0 : index
    %16 = vector.load %arg5[%c0_9, %c0_10] : memref<8x512xf32, #tpu.memory_space<vmem>>, vector<8x512xf32>
    %c0_11 = arith.constant 0 : index
    %c0_12 = arith.constant 0 : index
    %17 = vector.load %arg6[%c0_11, %c0_12] : memref<8x512xf32, #tpu.memory_space<vmem>>, vector<8x512xf32>
    %18 = arith.subf %16, %17 : vector<8x512xf32>
    %19 = arith.mulf %18, %18 : vector<8x512xf32>
    %cst_13 = arith.constant dense<0.000000e+00> : vector<8xf32>
    %20 = vector.multi_reduction <add>, %19, %cst_13 [1] : vector<8x512xf32> to vector<8xf32>
    %21 = vector.shape_cast %20 : vector<8xf32> to vector<8x1xf32>
    %22 = arith.addf %15, %21 : vector<8x1xf32>
    %c0_14 = arith.constant 0 : index
    %c0_15 = arith.constant 0 : index
    %23 = vector.load %arg7[%c0_14, %c0_15] : memref<8x512xf32, #tpu.memory_space<vmem>>, vector<8x512xf32>
    %c0_16 = arith.constant 0 : index
    %c0_17 = arith.constant 0 : index
    %24 = vector.load %arg8[%c0_16, %c0_17] : memref<8x512xf32, #tpu.memory_space<vmem>>, vector<8x512xf32>
    %25 = arith.subf %23, %24 : vector<8x512xf32>
    %26 = arith.mulf %25, %25 : vector<8x512xf32>
    %cst_18 = arith.constant dense<0.000000e+00> : vector<8xf32>
    %27 = vector.multi_reduction <add>, %26, %cst_18 [1] : vector<8x512xf32> to vector<8xf32>
    %28 = vector.shape_cast %27 : vector<8xf32> to vector<8x1xf32>
    %29 = arith.addf %22, %28 : vector<8x1xf32>
    %c0_19 = arith.constant 0 : index
    %c0_20 = arith.constant 0 : index
    %30 = vector.load %arg10[%c0_19, %c0_20] : memref<8x1xf32, #tpu.memory_space<vmem>>, vector<8x1xf32>
    %31 = arith.addf %30, %29 : vector<8x1xf32>
    %c0_21 = arith.constant 0 : index
    %c0_22 = arith.constant 0 : index
    %32 = vector.load %arg10[%c0_21, %c0_22] : memref<8x1xf32, #tpu.memory_space<vmem>>, vector<8x1xf32>
    tpu.vector_store %arg10[%c0_21, %c0_22], %31 {strides = array<i32>} : memref<8x1xf32, #tpu.memory_space<vmem>>, vector<8x1xf32>,
    %c0_i32_23 = arith.constant 0 : i32
    %33 = arith.cmpi eq, %arg0, %c0_i32_23 : i32
    %34 = arith.extui %33 : i1 to i32
    %c0_i32_24 = arith.constant 0 : i32
    %35 = arith.cmpi ne, %34, %c0_i32_24 : i32
    scf.if %35 {
      %c0_25 = arith.constant 0 : index
      %c0_26 = arith.constant 0 : index
      %36 = vector.load %arg10[%c0_25, %c0_26] : memref<8x1xf32, #tpu.memory_space<vmem>>, vector<8x1xf32>
      %cst_27 = arith.constant dense<0.000000e+00> : vector<1xf32>
      %37 = vector.multi_reduction <add>, %36, %cst_27 [0] : vector<8x1xf32> to vector<1xf32>
      %38 = vector.shape_cast %37 : vector<1xf32> to vector<1x1xf32>
      %c0_28 = arith.constant 0 : index
      %c0_29 = arith.constant 0 : index
      %39 = vector.load %arg9[%c0_28, %c0_29] : memref<1x1xf32, #tpu.memory_space<vmem>>, vector<1x1xf32>
      tpu.vector_store %arg9[%c0_28, %c0_29], %38 {strides = array<i32>} : memref<1x1xf32, #tpu.memory_space<vmem>>, vector<1x1xf32>,
    } else {
    }
    return
  }
  func.func @transform_0(%arg0: i32) -> (i32, i32) {
    %c0_i32 = arith.constant 0 : i32
    %c0_i32_0 = arith.constant 0 : i32
    return %arg0, %c0_i32 : i32, i32
  }
  func.func @transform_1(%arg0: i32) -> (i32, i32) {
    %c0_i32 = arith.constant 0 : i32
    %c0_i32_0 = arith.constant 0 : i32
    return %arg0, %c0_i32 : i32, i32
  }
  func.func @transform_2(%arg0: i32) -> (i32, i32) {
    %c0_i32 = arith.constant 0 : i32
    %c0_i32_0 = arith.constant 0 : i32
    return %arg0, %c0_i32 : i32, i32
  }
  func.func @transform_3(%arg0: i32) -> (i32, i32) {
    %c0_i32 = arith.constant 0 : i32
    %c0_i32_0 = arith.constant 0 : i32
    return %arg0, %c0_i32 : i32, i32
  }
  func.func @transform_4(%arg0: i32) -> (i32, i32) {
    %c0_i32 = arith.constant 0 : i32
    %c0_i32_0 = arith.constant 0 : i32
    return %arg0, %c0_i32 : i32, i32
  }
  func.func @transform_5(%arg0: i32) -> (i32, i32) {
    %c0_i32 = arith.constant 0 : i32
    %c0_i32_0 = arith.constant 0 : i32
    return %arg0, %c0_i32 : i32, i32
  }
  func.func @transform_6(%arg0: i32) -> (i32, i32) {
    %c0_i32 = arith.constant 0 : i32
    %c0_i32_0 = arith.constant 0 : i32
    return %arg0, %c0_i32 : i32, i32
  }
  func.func @transform_7(%arg0: i32) -> (i32, i32) {
    %c0_i32 = arith.constant 0 : i32
    %c0_i32_0 = arith.constant 0 : i32
    return %arg0, %c0_i32 : i32, i32
  }
  func.func @transform_8(%arg0: i32) -> (i32, i32) {
    %c0_i32 = arith.constant 0 : i32
    %c0_i32_0 = arith.constant 0 : i32
    %c0_i32_1 = arith.constant 0 : i32
    return %c0_i32, %c0_i32_0 : i32, i32
  }
}

module attributes {stable_mosaic.version = 11 : i64} {
  func.func @kernel(%arg0: i32, %arg1: memref<8x2048xf32, #tpu.memory_space<vmem>>, %arg2: memref<8x2048xf32, #tpu.memory_space<vmem>>, %arg3: memref<8x2048xf32, #tpu.memory_space<vmem>>, %arg4: memref<8x2048xf32, #tpu.memory_space<vmem>>, %arg5: memref<1x1xf32, #tpu.memory_space<vmem>>, %arg6: memref<8x1xf32, #tpu.memory_space<vmem>>) attributes {dimension_semantics = [#tpu.dimension_semantics<arbitrary>], iteration_bounds = array<i64: 1>, scalar_prefetch = 0 : i64, scratch_operands = 1 : i64, tpu.core_type = #tpu.core_type<tc>, window_params = [{transform_indices = @transform_0, window_bounds = array<i64: 8, 2048>}, {transform_indices = @transform_1, window_bounds = array<i64: 8, 2048>}, {transform_indices = @transform_2, window_bounds = array<i64: 8, 2048>}, {transform_indices = @transform_3, window_bounds = array<i64: 8, 2048>}, {pipeline_mode = #tpu.pipeline_mode<synchronous>, transform_indices = @transform_4, window_bounds = array<i64: 1, 1>}]} {
    %c0_i32 = arith.constant 0 : i32
    %0 = arith.cmpi eq, %arg0, %c0_i32 : i32
    %1 = arith.extui %0 : i1 to i32
    %c0_i32_0 = arith.constant 0 : i32
    %2 = arith.cmpi ne, %1, %c0_i32_0 : i32
    scf.if %2 {
      %cst_15 = arith.constant 0.000000e+00 : f32
      %22 = vector.broadcast %cst_15 : f32 to vector<8x1xf32>
      %c0_16 = arith.constant 0 : index
      %c0_17 = arith.constant 0 : index
      %23 = vector.load %arg6[%c0_16, %c0_17] : memref<8x1xf32, #tpu.memory_space<vmem>>, vector<8x1xf32>
      tpu.vector_store %arg6[%c0_16, %c0_17], %22 {strides = array<i32>} : memref<8x1xf32, #tpu.memory_space<vmem>>, vector<8x1xf32>,
    } else {
    }
    %c0 = arith.constant 0 : index
    %c0_1 = arith.constant 0 : index
    %3 = vector.load %arg1[%c0, %c0_1] : memref<8x2048xf32, #tpu.memory_space<vmem>>, vector<8x2048xf32>
    %c0_2 = arith.constant 0 : index
    %c0_3 = arith.constant 0 : index
    %4 = vector.load %arg2[%c0_2, %c0_3] : memref<8x2048xf32, #tpu.memory_space<vmem>>, vector<8x2048xf32>
    %5 = arith.subf %3, %4 : vector<8x2048xf32>
    %6 = arith.mulf %5, %5 : vector<8x2048xf32>
    %cst = arith.constant dense<0.000000e+00> : vector<8xf32>
    %7 = vector.multi_reduction <add>, %6, %cst [1] : vector<8x2048xf32> to vector<8xf32>
    %8 = vector.shape_cast %7 : vector<8xf32> to vector<8x1xf32>
    %c0_4 = arith.constant 0 : index
    %c0_5 = arith.constant 0 : index
    %9 = vector.load %arg3[%c0_4, %c0_5] : memref<8x2048xf32, #tpu.memory_space<vmem>>, vector<8x2048xf32>
    %c0_6 = arith.constant 0 : index
    %c0_7 = arith.constant 0 : index
    %10 = vector.load %arg4[%c0_6, %c0_7] : memref<8x2048xf32, #tpu.memory_space<vmem>>, vector<8x2048xf32>
    %11 = arith.subf %9, %10 : vector<8x2048xf32>
    %12 = arith.mulf %11, %11 : vector<8x2048xf32>
    %cst_8 = arith.constant dense<0.000000e+00> : vector<8xf32>
    %13 = vector.multi_reduction <add>, %12, %cst_8 [1] : vector<8x2048xf32> to vector<8xf32>
    %14 = vector.shape_cast %13 : vector<8xf32> to vector<8x1xf32>
    %15 = arith.addf %8, %14 : vector<8x1xf32>
    %c0_9 = arith.constant 0 : index
    %c0_10 = arith.constant 0 : index
    %16 = vector.load %arg6[%c0_9, %c0_10] : memref<8x1xf32, #tpu.memory_space<vmem>>, vector<8x1xf32>
    %17 = arith.addf %16, %15 : vector<8x1xf32>
    %c0_11 = arith.constant 0 : index
    %c0_12 = arith.constant 0 : index
    %18 = vector.load %arg6[%c0_11, %c0_12] : memref<8x1xf32, #tpu.memory_space<vmem>>, vector<8x1xf32>
    tpu.vector_store %arg6[%c0_11, %c0_12], %17 {strides = array<i32>} : memref<8x1xf32, #tpu.memory_space<vmem>>, vector<8x1xf32>,
    %c0_i32_13 = arith.constant 0 : i32
    %19 = arith.cmpi eq, %arg0, %c0_i32_13 : i32
    %20 = arith.extui %19 : i1 to i32
    %c0_i32_14 = arith.constant 0 : i32
    %21 = arith.cmpi ne, %20, %c0_i32_14 : i32
    scf.if %21 {
      %c0_15 = arith.constant 0 : index
      %c0_16 = arith.constant 0 : index
      %22 = vector.load %arg6[%c0_15, %c0_16] : memref<8x1xf32, #tpu.memory_space<vmem>>, vector<8x1xf32>
      %cst_17 = arith.constant dense<0.000000e+00> : vector<1xf32>
      %23 = vector.multi_reduction <add>, %22, %cst_17 [0] : vector<8x1xf32> to vector<1xf32>
      %24 = vector.shape_cast %23 : vector<1xf32> to vector<1x1xf32>
      %c0_18 = arith.constant 0 : index
      %c0_19 = arith.constant 0 : index
      %25 = vector.load %arg5[%c0_18, %c0_19] : memref<1x1xf32, #tpu.memory_space<vmem>>, vector<1x1xf32>
      tpu.vector_store %arg5[%c0_18, %c0_19], %24 {strides = array<i32>} : memref<1x1xf32, #tpu.memory_space<vmem>>, vector<1x1xf32>,
    } else {
    }
    return
  }
  func.func @transform_0(%arg0: i32) -> (i32, i32) {
    %c0_i32 = arith.constant 0 : i32
    %c0_i32_0 = arith.constant 0 : i32
    return %arg0, %c0_i32 : i32, i32
  }
  func.func @transform_1(%arg0: i32) -> (i32, i32) {
    %c0_i32 = arith.constant 0 : i32
    %c0_i32_0 = arith.constant 0 : i32
    return %arg0, %c0_i32 : i32, i32
  }
  func.func @transform_2(%arg0: i32) -> (i32, i32) {
    %c0_i32 = arith.constant 0 : i32
    %c0_i32_0 = arith.constant 0 : i32
    return %arg0, %c0_i32 : i32, i32
  }
  func.func @transform_3(%arg0: i32) -> (i32, i32) {
    %c0_i32 = arith.constant 0 : i32
    %c0_i32_0 = arith.constant 0 : i32
    return %arg0, %c0_i32 : i32, i32
  }
  func.func @transform_4(%arg0: i32) -> (i32, i32) {
    %c0_i32 = arith.constant 0 : i32
    %c0_i32_0 = arith.constant 0 : i32
    %c0_i32_1 = arith.constant 0 : i32
    return %c0_i32, %c0_i32_0 : i32, i32
  }
}

module attributes {stable_mosaic.version = 11 : i64} {
  func.func @kernel(%arg0: i32, %arg1: memref<8x1024xf32, #tpu.memory_space<vmem>>, %arg2: memref<8x1024xf32, #tpu.memory_space<vmem>>, %arg3: memref<8x1024xf32, #tpu.memory_space<vmem>>, %arg4: memref<8x1024xf32, #tpu.memory_space<vmem>>, %arg5: memref<8x1024xf32, #tpu.memory_space<vmem>>, %arg6: memref<8x1024xf32, #tpu.memory_space<vmem>>, %arg7: memref<8x1024xf32, #tpu.memory_space<vmem>>, %arg8: memref<8x1024xf32, #tpu.memory_space<vmem>>, %arg9: memref<1x1xf32, #tpu.memory_space<vmem>>, %arg10: memref<8x1xf32, #tpu.memory_space<vmem>>) attributes {dimension_semantics = [#tpu.dimension_semantics<arbitrary>], iteration_bounds = array<i64: 1>, scalar_prefetch = 0 : i64, scratch_operands = 1 : i64, tpu.core_type = #tpu.core_type<tc>, window_params = [{transform_indices = @transform_0, window_bounds = array<i64: 8, 1024>}, {transform_indices = @transform_1, window_bounds = array<i64: 8, 1024>}, {transform_indices = @transform_2, window_bounds = array<i64: 8, 1024>}, {transform_indices = @transform_3, window_bounds = array<i64: 8, 1024>}, {transform_indices = @transform_4, window_bounds = array<i64: 8, 1024>}, {transform_indices = @transform_5, window_bounds = array<i64: 8, 1024>}, {transform_indices = @transform_6, window_bounds = array<i64: 8, 1024>}, {transform_indices = @transform_7, window_bounds = array<i64: 8, 1024>}, {pipeline_mode = #tpu.pipeline_mode<synchronous>, transform_indices = @transform_8, window_bounds = array<i64: 1, 1>}]} {
    %c0_i32 = arith.constant 0 : i32
    %0 = arith.cmpi eq, %arg0, %c0_i32 : i32
    %1 = arith.extui %0 : i1 to i32
    %c0_i32_0 = arith.constant 0 : i32
    %2 = arith.cmpi ne, %1, %c0_i32_0 : i32
    scf.if %2 {
      %cst_25 = arith.constant 0.000000e+00 : f32
      %36 = vector.broadcast %cst_25 : f32 to vector<8x1xf32>
      %c0_26 = arith.constant 0 : index
      %c0_27 = arith.constant 0 : index
      %37 = vector.load %arg10[%c0_26, %c0_27] : memref<8x1xf32, #tpu.memory_space<vmem>>, vector<8x1xf32>
      tpu.vector_store %arg10[%c0_26, %c0_27], %36 {strides = array<i32>} : memref<8x1xf32, #tpu.memory_space<vmem>>, vector<8x1xf32>,
    } else {
    }
    %c0 = arith.constant 0 : index
    %c0_1 = arith.constant 0 : index
    %3 = vector.load %arg1[%c0, %c0_1] : memref<8x1024xf32, #tpu.memory_space<vmem>>, vector<8x1024xf32>
    %c0_2 = arith.constant 0 : index
    %c0_3 = arith.constant 0 : index
    %4 = vector.load %arg2[%c0_2, %c0_3] : memref<8x1024xf32, #tpu.memory_space<vmem>>, vector<8x1024xf32>
    %5 = arith.subf %3, %4 : vector<8x1024xf32>
    %6 = arith.mulf %5, %5 : vector<8x1024xf32>
    %cst = arith.constant dense<0.000000e+00> : vector<8xf32>
    %7 = vector.multi_reduction <add>, %6, %cst [1] : vector<8x1024xf32> to vector<8xf32>
    %8 = vector.shape_cast %7 : vector<8xf32> to vector<8x1xf32>
    %c0_4 = arith.constant 0 : index
    %c0_5 = arith.constant 0 : index
    %9 = vector.load %arg3[%c0_4, %c0_5] : memref<8x1024xf32, #tpu.memory_space<vmem>>, vector<8x1024xf32>
    %c0_6 = arith.constant 0 : index
    %c0_7 = arith.constant 0 : index
    %10 = vector.load %arg4[%c0_6, %c0_7] : memref<8x1024xf32, #tpu.memory_space<vmem>>, vector<8x1024xf32>
    %11 = arith.subf %9, %10 : vector<8x1024xf32>
    %12 = arith.mulf %11, %11 : vector<8x1024xf32>
    %cst_8 = arith.constant dense<0.000000e+00> : vector<8xf32>
    %13 = vector.multi_reduction <add>, %12, %cst_8 [1] : vector<8x1024xf32> to vector<8xf32>
    %14 = vector.shape_cast %13 : vector<8xf32> to vector<8x1xf32>
    %15 = arith.addf %8, %14 : vector<8x1xf32>
    %c0_9 = arith.constant 0 : index
    %c0_10 = arith.constant 0 : index
    %16 = vector.load %arg5[%c0_9, %c0_10] : memref<8x1024xf32, #tpu.memory_space<vmem>>, vector<8x1024xf32>
    %c0_11 = arith.constant 0 : index
    %c0_12 = arith.constant 0 : index
    %17 = vector.load %arg6[%c0_11, %c0_12] : memref<8x1024xf32, #tpu.memory_space<vmem>>, vector<8x1024xf32>
    %18 = arith.subf %16, %17 : vector<8x1024xf32>
    %19 = arith.mulf %18, %18 : vector<8x1024xf32>
    %cst_13 = arith.constant dense<0.000000e+00> : vector<8xf32>
    %20 = vector.multi_reduction <add>, %19, %cst_13 [1] : vector<8x1024xf32> to vector<8xf32>
    %21 = vector.shape_cast %20 : vector<8xf32> to vector<8x1xf32>
    %22 = arith.addf %15, %21 : vector<8x1xf32>
    %c0_14 = arith.constant 0 : index
    %c0_15 = arith.constant 0 : index
    %23 = vector.load %arg7[%c0_14, %c0_15] : memref<8x1024xf32, #tpu.memory_space<vmem>>, vector<8x1024xf32>
    %c0_16 = arith.constant 0 : index
    %c0_17 = arith.constant 0 : index
    %24 = vector.load %arg8[%c0_16, %c0_17] : memref<8x1024xf32, #tpu.memory_space<vmem>>, vector<8x1024xf32>
    %25 = arith.subf %23, %24 : vector<8x1024xf32>
    %26 = arith.mulf %25, %25 : vector<8x1024xf32>
    %cst_18 = arith.constant dense<0.000000e+00> : vector<8xf32>
    %27 = vector.multi_reduction <add>, %26, %cst_18 [1] : vector<8x1024xf32> to vector<8xf32>
    %28 = vector.shape_cast %27 : vector<8xf32> to vector<8x1xf32>
    %29 = arith.addf %22, %28 : vector<8x1xf32>
    %c0_19 = arith.constant 0 : index
    %c0_20 = arith.constant 0 : index
    %30 = vector.load %arg10[%c0_19, %c0_20] : memref<8x1xf32, #tpu.memory_space<vmem>>, vector<8x1xf32>
    %31 = arith.addf %30, %29 : vector<8x1xf32>
    %c0_21 = arith.constant 0 : index
    %c0_22 = arith.constant 0 : index
    %32 = vector.load %arg10[%c0_21, %c0_22] : memref<8x1xf32, #tpu.memory_space<vmem>>, vector<8x1xf32>
    tpu.vector_store %arg10[%c0_21, %c0_22], %31 {strides = array<i32>} : memref<8x1xf32, #tpu.memory_space<vmem>>, vector<8x1xf32>,
    %c0_i32_23 = arith.constant 0 : i32
    %33 = arith.cmpi eq, %arg0, %c0_i32_23 : i32
    %34 = arith.extui %33 : i1 to i32
    %c0_i32_24 = arith.constant 0 : i32
    %35 = arith.cmpi ne, %34, %c0_i32_24 : i32
    scf.if %35 {
      %c0_25 = arith.constant 0 : index
      %c0_26 = arith.constant 0 : index
      %36 = vector.load %arg10[%c0_25, %c0_26] : memref<8x1xf32, #tpu.memory_space<vmem>>, vector<8x1xf32>
      %cst_27 = arith.constant dense<0.000000e+00> : vector<1xf32>
      %37 = vector.multi_reduction <add>, %36, %cst_27 [0] : vector<8x1xf32> to vector<1xf32>
      %38 = vector.shape_cast %37 : vector<1xf32> to vector<1x1xf32>
      %c0_28 = arith.constant 0 : index
      %c0_29 = arith.constant 0 : index
      %39 = vector.load %arg9[%c0_28, %c0_29] : memref<1x1xf32, #tpu.memory_space<vmem>>, vector<1x1xf32>
      tpu.vector_store %arg9[%c0_28, %c0_29], %38 {strides = array<i32>} : memref<1x1xf32, #tpu.memory_space<vmem>>, vector<1x1xf32>,
    } else {
    }
    return
  }
  func.func @transform_0(%arg0: i32) -> (i32, i32) {
    %c0_i32 = arith.constant 0 : i32
    %c0_i32_0 = arith.constant 0 : i32
    return %arg0, %c0_i32 : i32, i32
  }
  func.func @transform_1(%arg0: i32) -> (i32, i32) {
    %c0_i32 = arith.constant 0 : i32
    %c0_i32_0 = arith.constant 0 : i32
    return %arg0, %c0_i32 : i32, i32
  }
  func.func @transform_2(%arg0: i32) -> (i32, i32) {
    %c0_i32 = arith.constant 0 : i32
    %c0_i32_0 = arith.constant 0 : i32
    return %arg0, %c0_i32 : i32, i32
  }
  func.func @transform_3(%arg0: i32) -> (i32, i32) {
    %c0_i32 = arith.constant 0 : i32
    %c0_i32_0 = arith.constant 0 : i32
    return %arg0, %c0_i32 : i32, i32
  }
  func.func @transform_4(%arg0: i32) -> (i32, i32) {
    %c0_i32 = arith.constant 0 : i32
    %c0_i32_0 = arith.constant 0 : i32
    return %arg0, %c0_i32 : i32, i32
  }
  func.func @transform_5(%arg0: i32) -> (i32, i32) {
    %c0_i32 = arith.constant 0 : i32
    %c0_i32_0 = arith.constant 0 : i32
    return %arg0, %c0_i32 : i32, i32
  }
  func.func @transform_6(%arg0: i32) -> (i32, i32) {
    %c0_i32 = arith.constant 0 : i32
    %c0_i32_0 = arith.constant 0 : i32
    return %arg0, %c0_i32 : i32, i32
  }
  func.func @transform_7(%arg0: i32) -> (i32, i32) {
    %c0_i32 = arith.constant 0 : i32
    %c0_i32_0 = arith.constant 0 : i32
    return %arg0, %c0_i32 : i32, i32
  }
  func.func @transform_8(%arg0: i32) -> (i32, i32) {
    %c0_i32 = arith.constant 0 : i32
    %c0_i32_0 = arith.constant 0 : i32
    %c0_i32_1 = arith.constant 0 : i32
    return %c0_i32, %c0_i32_0 : i32, i32
  }
}

</mosaic_0001>

<llo_original>
// kernel: _lambda_.8
$region0: #{_lambda_.8}
  #allocation0 [shape = 'u32[]', space=smem, size = 0x4, offset = 0x4, fixed_abs, tag = 'smem constant byte address 0x4 - core index']
  #allocation1 [shape = 'u32[144,128]{1,0:T(1,128)}', space=vmem, size = 0x12000, scoped, tag = 'internal scratch']
  #allocation2 [shape = 'f32[16,1]{1,0:T(8,128)}', space=vmem, size = 0x2000, scoped, tag = 'scratch operand']
  #allocation3 [shape = 'f32[16,1]{1,0:T(8,128)}', space=vmem, size = 0x2000, scoped, tag = 'scratch operand']
  #allocation4 [shape = 'f32[16,1]{1,0:T(8,128)}', space=vmem, size = 0x2000, scoped, tag = 'scratch operand']
  #allocation5 [shape = 'f32[16,1]{1,0:T(8,128)}', space=vmem, size = 0x2000, scoped, tag = 'scratch operand']
  #allocation6 [shape = 'f32[16,1]{1,0:T(8,128)}', space=vmem, size = 0x2000, scoped, tag = 'scratch operand']
  #allocation7 [shape = 'f32[16,1]{1,0:T(8,128)}', space=vmem, size = 0x2000, scoped, tag = 'scratch operand']
  %s0 = inlined_call_operand.vmem [shape: f32[16,1024], index: 0, kind: input, shape index: {}]
  %s1 = inlined_call_operand.vmem [shape: f32[16,1024], index: 1, kind: input, shape index: {}]
  %s2 = inlined_call_operand.hbm [shape: f32[1,1], index: 2, kind: output, shape index: {0}]
  %s3 = inlined_call_operand.hbm [shape: f32[1,1], index: 3, kind: output, shape index: {1}]
  %4 = xla_tuple %s2, %s3
  %s5 = sld [smem:[#allocation0]]
  $region42: #{_lambda_.8} parent=0
    _
  %s7 = ssub.s32 1, %s5
  %s8 = scalar_select 0, %s7, %s5
  $region1: #{_lambda_.8} parent=0
    #allocation8 [shape = 'u8[512]{0}', space=vmem, size = 0x400, scoped, tag = 'output window, operand 0, single buffered']
    #allocation9 [shape = 's32[1]{0}', space=sflag, size = 0x4, scoped, tag = 'scoped memory for _lambda_.8']
    #allocation10 [shape = 'u8[512]{0}', space=vmem, size = 0x400, scoped, tag = 'output window, operand 1, single buffered']
    #allocation11 [shape = 's32[1]{0}', space=sflag, size = 0x4, scoped, tag = 'scoped memory for _lambda_.8']
    %9 = vsyncpa [#allocation9], 0
    %10 = vsyncpa [#allocation11], 0
    // Predicated region
    $region2: #{_lambda_.8} parent=1 // pred_check
      _
    $region3: #{_lambda_.8} parent=1 // pred_check_branch
      %12 = sbr.rel (0) target = $region5
    $region4: #{_lambda_.8} parent=1 // pred_region
      _
    $region5: #{_lambda_.8} parent=1 // pred_fallthru
      _
    // Predicated region
    $region6: #{_lambda_.8} parent=1 // pred_check
      _
    $region7: #{_lambda_.8} parent=1 // pred_check_branch
      %14 = sbr.rel (0) target = $region9
    $region8: #{_lambda_.8} parent=1 // pred_region
      _
    $region9: #{_lambda_.8} parent=1 // pred_fallthru
      _
    %p15 = scmp.eq.s32.totalorder 0, 0
    %p16 = scmp.eq.s32.totalorder 0, 0
    %p17 = pnand %p15, %p16
    %p18 = pneg %p17
    // Predicated region
    $region10: #{_lambda_.8} parent=1 // pred_check
      _
    $region11: #{_lambda_.8} parent=1 // pred_check_branch
      %20 = sbr.rel (%p17) target = $region13
    $region12: #{_lambda_.8} parent=1 // pred_region
      %vm21 = vcmask 7168
      %22 = vst.msk [vmem:[#allocation6] sm:$0xff] %vm21, 0.0
      %23 = vst.msk [vmem:[#allocation6 + $0x8] sm:$0xff] %vm21, 0.0
      %24 = vst.msk [vmem:[#allocation7] sm:$0xff] %vm21, 0.0
      %25 = vst.msk [vmem:[#allocation7 + $0x8] sm:$0xff] %vm21, 0.0
    $region13: #{_lambda_.8} parent=1 // pred_fallthru
      _
    // Predicated region
    $region14: #{_lambda_.8} parent=1 // pred_check
      %p26 = pneg %p16
    $region15: #{_lambda_.8} parent=1 // pred_check_branch
      %28 = sbr.rel (%p26) target = $region17
    $region16: #{_lambda_.8} parent=1 // pred_region
      %vm29 = vcmask 7168
      %30 = vst.msk [vmem:[#allocation2] sm:$0xff] %vm29, 0.0
      %31 = vst.msk [vmem:[#allocation2 + $0x8] sm:$0xff] %vm29, 0.0
      %32 = vst.msk [vmem:[#allocation3] sm:$0xff] %vm29, 0.0
      %33 = vst.msk [vmem:[#allocation3 + $0x8] sm:$0xff] %vm29, 0.0
      %34 = vst.msk [vmem:[#allocation4] sm:$0xff] %vm29, 0.0
      %35 = vst.msk [vmem:[#allocation4 + $0x8] sm:$0xff] %vm29, 0.0
      %36 = vst.msk [vmem:[#allocation5] sm:$0xff] %vm29, 0.0
      %37 = vst.msk [vmem:[#allocation5 + $0x8] sm:$0xff] %vm29, 0.0
    $region17: #{_lambda_.8} parent=1 // pred_fallthru
      _
    %v38 = vld [vmem:[%s0] sm:$0xff]
    %v39 = vld [vmem:[%s0 + $0x8] sm:$0xff]
    %v40 = vld [vmem:[%s0 + $0x10] sm:$0xff]
    %v41 = vld [vmem:[%s0 + $0x18] sm:$0xff]
    %v42 = vld [vmem:[%s0 + $0x20] sm:$0xff]
    %v43 = vld [vmem:[%s0 + $0x28] sm:$0xff]
    %v44 = vld [vmem:[%s0 + $0x30] sm:$0xff]
    %v45 = vld [vmem:[%s0 + $0x38] sm:$0xff]
    %v46 = vld [vmem:[%s0 + $0x40] sm:$0xff]
    %v47 = vld [vmem:[%s0 + $0x48] sm:$0xff]
    %v48 = vld [vmem:[%s0 + $0x50] sm:$0xff]
    %v49 = vld [vmem:[%s0 + $0x58] sm:$0xff]
    %v50 = vld [vmem:[%s0 + $0x60] sm:$0xff]
    %v51 = vld [vmem:[%s0 + $0x68] sm:$0xff]
    %v52 = vld [vmem:[%s0 + $0x70] sm:$0xff]
    %v53 = vld [vmem:[%s0 + $0x78] sm:$0xff]
    %v54 = vld [vmem:[%s1] sm:$0xff]
    %v55 = vld [vmem:[%s1 + $0x8] sm:$0xff]
    %v56 = vld [vmem:[%s1 + $0x10] sm:$0xff]
    %v57 = vld [vmem:[%s1 + $0x18] sm:$0xff]
    %v58 = vld [vmem:[%s1 + $0x20] sm:$0xff]
    %v59 = vld [vmem:[%s1 + $0x28] sm:$0xff]
    %v60 = vld [vmem:[%s1 + $0x30] sm:$0xff]
    %v61 = vld [vmem:[%s1 + $0x38] sm:$0xff]
    %v62 = vld [vmem:[%s1 + $0x40] sm:$0xff]
    %v63 = vld [vmem:[%s1 + $0x48] sm:$0xff]
    %v64 = vld [vmem:[%s1 + $0x50] sm:$0xff]
    %v65 = vld [vmem:[%s1 + $0x58] sm:$0xff]
    %v66 = vld [vmem:[%s1 + $0x60] sm:$0xff]
    %v67 = vld [vmem:[%s1 + $0x68] sm:$0xff]
    %v68 = vld [vmem:[%s1 + $0x70] sm:$0xff]
    %v69 = vld [vmem:[%s1 + $0x78] sm:$0xff]
    %v70 = vld [vmem:[#allocation2] sm:$0xff]
    %v71 = vld [vmem:[#allocation2 + $0x8] sm:$0xff]
    %v72 = vadd.f32 %v38, %v39
    %v73 = vadd.f32 %v72, %v40
    %v74 = vadd.f32 %v73, %v41
    %v75 = vadd.f32 %v74, %v42
    %v76 = vadd.f32 %v75, %v43
    %v77 = vadd.f32 %v76, %v44
    %v78 = vadd.f32 %v77, %v45
    %79 = vadd.xlane.f32.xlu0 %v78
    %v80 = vpop.xlane.xlu0 %79
    %v81 = vadd.f32 %v46, %v47
    %v82 = vadd.f32 %v81, %v48
    %v83 = vadd.f32 %v82, %v49
    %v84 = vadd.f32 %v83, %v50
    %v85 = vadd.f32 %v84, %v51
    %v86 = vadd.f32 %v85, %v52
    %v87 = vadd.f32 %v86, %v53
    %88 = vadd.xlane.f32.xlu0 %v87
    %v89 = vpop.xlane.xlu0 %88
    %v90 = vadd.f32 %v70, %v80
    %v91 = vadd.f32 %v71, %v89
    %vm92 = vcmask 7168
    %93 = vst.msk [vmem:[#allocation2] sm:$0xff] %vm92, %v90
    %94 = vst.msk [vmem:[#allocation2 + $0x8] sm:$0xff] %vm92, %v91
    %v95 = vld [vmem:[#allocation3] sm:$0xff]
    %v96 = vld [vmem:[#allocation3 + $0x8] sm:$0xff]
    %v97 = vmul.f32 %v38, %v38
    %v98 = vmul.f32 %v39, %v39
    %v99 = vmul.f32 %v40, %v40
    %v100 = vmul.f32 %v41, %v41
    %v101 = vmul.f32 %v42, %v42
    %v102 = vmul.f32 %v43, %v43
    %v103 = vmul.f32 %v44, %v44
    %v104 = vmul.f32 %v45, %v45
    %v105 = vmul.f32 %v46, %v46
    %v106 = vmul.f32 %v47, %v47
    %v107 = vmul.f32 %v48, %v48
    %v108 = vmul.f32 %v49, %v49
    %v109 = vmul.f32 %v50, %v50
    %v110 = vmul.f32 %v51, %v51
    %v111 = vmul.f32 %v52, %v52
    %v112 = vmul.f32 %v53, %v53
    %v113 = vadd.f32 %v97, %v98
    %v114 = vadd.f32 %v113, %v99
    %v115 = vadd.f32 %v114, %v100
    %v116 = vadd.f32 %v115, %v101
    %v117 = vadd.f32 %v116, %v102
    %v118 = vadd.f32 %v117, %v103
    %v119 = vadd.f32 %v118, %v104
    %120 = vadd.xlane.f32.xlu0 %v119
    %v121 = vpop.xlane.xlu0 %120
    %v122 = vadd.f32 %v105, %v106
    %v123 = vadd.f32 %v122, %v107
    %v124 = vadd.f32 %v123, %v108
    %v125 = vadd.f32 %v124, %v109
    %v126 = vadd.f32 %v125, %v110
    %v127 = vadd.f32 %v126, %v111
    %v128 = vadd.f32 %v127, %v112
    %129 = vadd.xlane.f32.xlu0 %v128
    %v130 = vpop.xlane.xlu0 %129
    %v131 = vadd.f32 %v95, %v121
    %v132 = vadd.f32 %v96, %v130
    %133 = vst.msk [vmem:[#allocation3] sm:$0xff] %vm92, %v131
    %134 = vst.msk [vmem:[#allocation3 + $0x8] sm:$0xff] %vm92, %v132
    %v135 = vld [vmem:[#allocation4] sm:$0xff]
    %v136 = vld [vmem:[#allocation4 + $0x8] sm:$0xff]
    %v137 = vadd.f32 %v54, %v55
    %v138 = vadd.f32 %v137, %v56
    %v139 = vadd.f32 %v138, %v57
    %v140 = vadd.f32 %v139, %v58
    %v141 = vadd.f32 %v140, %v59
    %v142 = vadd.f32 %v141, %v60
    %v143 = vadd.f32 %v142, %v61
    %144 = vadd.xlane.f32.xlu0 %v143
    %v145 = vpop.xlane.xlu0 %144
    %v146 = vadd.f32 %v62, %v63
    %v147 = vadd.f32 %v146, %v64
    %v148 = vadd.f32 %v147, %v65
    %v149 = vadd.f32 %v148, %v66
    %v150 = vadd.f32 %v149, %v67
    %v151 = vadd.f32 %v150, %v68
    %v152 = vadd.f32 %v151, %v69
    %153 = vadd.xlane.f32.xlu0 %v152
    %v154 = vpop.xlane.xlu0 %153
    %v155 = vadd.f32 %v135, %v145
    %v156 = vadd.f32 %v136, %v154
    %157 = vst.msk [vmem:[#allocation4] sm:$0xff] %vm92, %v155
    %158 = vst.msk [vmem:[#allocation4 + $0x8] sm:$0xff] %vm92, %v156
    %v159 = vld [vmem:[#allocation5] sm:$0xff]
    %v160 = vld [vmem:[#allocation5 + $0x8] sm:$0xff]
    %v161 = vmul.f32 %v54, %v54
    %v162 = vmul.f32 %v55, %v55
    %v163 = vmul.f32 %v56, %v56
    %v164 = vmul.f32 %v57, %v57
    %v165 = vmul.f32 %v58, %v58
    %v166 = vmul.f32 %v59, %v59
    %v167 = vmul.f32 %v60, %v60
    %v168 = vmul.f32 %v61, %v61
    %v169 = vmul.f32 %v62, %v62
    %v170 = vmul.f32 %v63, %v63
    %v171 = vmul.f32 %v64, %v64
    %v172 = vmul.f32 %v65, %v65
    %v173 = vmul.f32 %v66, %v66
    %v174 = vmul.f32 %v67, %v67
    %v175 = vmul.f32 %v68, %v68
    %v176 = vmul.f32 %v69, %v69
    %v177 = vadd.f32 %v161, %v162
    %v178 = vadd.f32 %v177, %v163
    %v179 = vadd.f32 %v178, %v164
    %v180 = vadd.f32 %v179, %v165
    %v181 = vadd.f32 %v180, %v166
    %v182 = vadd.f32 %v181, %v167
    %v183 = vadd.f32 %v182, %v168
    %184 = vadd.xlane.f32.xlu0 %v183
    %v185 = vpop.xlane.xlu0 %184
    %v186 = vadd.f32 %v169, %v170
    %v187 = vadd.f32 %v186, %v171
    %v188 = vadd.f32 %v187, %v172
    %v189 = vadd.f32 %v188, %v173
    %v190 = vadd.f32 %v189, %v174
    %v191 = vadd.f32 %v190, %v175
    %v192 = vadd.f32 %v191, %v176
    %193 = vadd.xlane.f32.xlu0 %v192
    %v194 = vpop.xlane.xlu0 %193
    %v195 = vadd.f32 %v159, %v185
    %v196 = vadd.f32 %v160, %v194
    %197 = vst.msk [vmem:[#allocation5] sm:$0xff] %vm92, %v195
    %198 = vst.msk [vmem:[#allocation5 + $0x8] sm:$0xff] %vm92, %v196
    // Predicated region
    $region18: #{_lambda_.8} parent=1 // pred_check
      %p199 = pneg %p16
    $region19: #{_lambda_.8} parent=1 // pred_check_branch
      %201 = sbr.rel (%p199) target = $region21
    $region20: #{_lambda_.8} parent=1 // pred_region
      %v202 = vld [vmem:[#allocation2] sm:$0xff]
      %v203 = vld [vmem:[#allocation2 + $0x8] sm:$0xff]
      %v204 = vld [vmem:[#allocation3] sm:$0xff]
      %v205 = vld [vmem:[#allocation3 + $0x8] sm:$0xff]
      %v206 = vld [vmem:[#allocation4] sm:$0xff]
      %v207 = vld [vmem:[#allocation4 + $0x8] sm:$0xff]
      %v208 = vld [vmem:[#allocation5] sm:$0xff]
      %v209 = vld [vmem:[#allocation5 + $0x8] sm:$0xff]
      %v210 = vmul.f32 %v202, 0.0009765625
      %v211 = vmul.f32 %v203, 0.0009765625
      %v212 = vmul.f32 %v206, 0.0009765625
      %v213 = vmul.f32 %v207, 0.0009765625
      %v214 = vmul.f32 %v210, 1024.0
      %v215 = vmul.f32 %v211, 1024.0
      %v216 = vmul.f32 %v214, %v210
      %v217 = vmul.f32 %v215, %v211
      %v218 = vsub.f32 %v204, %v216
      %v219 = vsub.f32 %v205, %v217
      %v220 = vmul.f32 %v218, 0.0009775171
      %v221 = vmul.f32 %v219, 0.0009775171
      %v222 = vmax.f32 %v220, 0.0
      %v223 = vmax.f32 %v221, 0.0
      %v224 = vmul.f32 %v212, 1024.0
      %v225 = vmul.f32 %v213, 1024.0
      %v226 = vmul.f32 %v224, %v212
      %v227 = vmul.f32 %v225, %v213
      %v228 = vsub.f32 %v208, %v226
      %v229 = vsub.f32 %v209, %v227
      %v230 = vmul.f32 %v228, 0.0009775171
      %v231 = vmul.f32 %v229, 0.0009775171
      %v232 = vmax.f32 %v230, 0.0
      %v233 = vmax.f32 %v231, 0.0
      %v234 = vsub.f32 %v210, %v212
      %v235 = vsub.f32 %v211, %v213
      %v236 = vmul.f32 %v234, %v234
      %v237 = vmul.f32 %v235, %v235
      %v238 = vrsqrt.pop %v222
      %v239 = vmul.f32 %v222, %v238
      %vm240 = vcmp.eq.f32.partialorder %v222, inf
      %v241 = vsel %vm240, %v222, %v239
      %vm242 = vcmp.eq.f32.partialorder %v222, 0.0
      %v243 = vand.u32 %v222, 2147483648
      %v244 = vsel %vm242, %v243, %v241
      %v245 = vrsqrt.pop %v223
      %v246 = vmul.f32 %v223, %v245
      %vm247 = vcmp.eq.f32.partialorder %v223, inf
      %v248 = vsel %vm247, %v223, %v246
      %vm249 = vcmp.eq.f32.partialorder %v223, 0.0
      %v250 = vand.u32 %v223, 2147483648
      %v251 = vsel %vm249, %v250, %v248
      %v252 = vrsqrt.pop %v232
      %v253 = vmul.f32 %v232, %v252
      %vm254 = vcmp.eq.f32.partialorder %v232, inf
      %v255 = vsel %vm254, %v232, %v253
      %vm256 = vcmp.eq.f32.partialorder %v232, 0.0
      %v257 = vand.u32 %v232, 2147483648
      %v258 = vsel %vm256, %v257, %v255
      %v259 = vrsqrt.pop %v233
      %v260 = vmul.f32 %v233, %v259
      %vm261 = vcmp.eq.f32.partialorder %v233, inf
      %v262 = vsel %vm261, %v233, %v260
      %vm263 = vcmp.eq.f32.partialorder %v233, 0.0
      %v264 = vand.u32 %v233, 2147483648
      %v265 = vsel %vm263, %v264, %v262
      %v266 = vsub.f32 %v244, %v258
      %v267 = vsub.f32 %v251, %v265
      %v268 = vmul.f32 %v266, %v266
      %v269 = vmul.f32 %v267, %v267
      %v270 = vld [vmem:[#allocation6] sm:$0xff]
      %v271 = vld [vmem:[#allocation6 + $0x8] sm:$0xff]
      %v272 = vadd.f32 %v270, %v236
      %v273 = vadd.f32 %v271, %v237
      %274 = vst.msk [vmem:[#allocation6] sm:$0xff] %vm92, %v272
      %275 = vst.msk [vmem:[#allocation6 + $0x8] sm:$0xff] %vm92, %v273
      %v276 = vld [vmem:[#allocation7] sm:$0xff]
      %v277 = vld [vmem:[#allocation7 + $0x8] sm:$0xff]
      %v278 = vadd.f32 %v276, %v268
      %v279 = vadd.f32 %v277, %v269
      %280 = vst.msk [vmem:[#allocation7] sm:$0xff] %vm92, %v278
      %281 = vst.msk [vmem:[#allocation7 + $0x8] sm:$0xff] %vm92, %v279
    $region21: #{_lambda_.8} parent=1 // pred_fallthru
      _
    // Predicated region
    $region22: #{_lambda_.8} parent=1 // pred_check
      _
    $region23: #{_lambda_.8} parent=1 // pred_check_branch
      %283 = sbr.rel (%p17) target = $region25
    $region24: #{_lambda_.8} parent=1 // pred_region
      %v284 = vld [vmem:[#allocation6] sm:$0xff]
      %v285 = vld [vmem:[#allocation6 + $0x8] sm:$0xff]
      %v286 = vsel %vm92, %v284, 0.0
      %v287 = vsel %vm92, %v285, 0.0
      %v288 = vadd.f32 %v286, %v287
      %v289 = vrot.slane %v288, 4
      %v290 = vadd.f32 %v288, %v289
      %v291 = vrot.slane %v290, 2
      %v292 = vadd.f32 %v290, %v291
      %v293 = vrot.slane %v292, 1
      %v294 = vadd.f32 %v292, %v293
      %vm295 = vcmask 0
      %296 = vst.msk [vmem:[#allocation8] sm:$0x1] %vm295, %v294
      %v297 = vld [vmem:[#allocation7] sm:$0xff]
      %v298 = vld [vmem:[#allocation7 + $0x8] sm:$0xff]
      %v299 = vsel %vm92, %v297, 0.0
      %v300 = vsel %vm92, %v298, 0.0
      %v301 = vadd.f32 %v299, %v300
      %v302 = vrot.slane %v301, 4
      %v303 = vadd.f32 %v301, %v302
      %v304 = vrot.slane %v303, 2
      %v305 = vadd.f32 %v303, %v304
      %v306 = vrot.slane %v305, 1
      %v307 = vadd.f32 %v305, %v306
      %308 = vst.msk [vmem:[#allocation10] sm:$0x1] %vm295, %v307
    $region25: #{_lambda_.8} parent=1 // pred_fallthru
      _
    // Predicated region
    $region26: #{_lambda_.8} parent=1 // pred_check
      _
    $region27: #{_lambda_.8} parent=1 // pred_check_branch
      %310 = sbr.rel (0) target = $region29
    $region28: #{_lambda_.8} parent=1 // pred_region
      %s312 = ssub.s32 16, 16
      %313 = vsyncadd [#allocation9], %s312
      %s315 = sshll.u32 [#allocation8], 4
      %s316 = int_to_ptr.vmem [resolvable:$true] %s315
      %318 = dma.vmem_to_hbm [thread:$0]  %s316, 16, %s2, [#allocation9]
    $region29: #{_lambda_.8} parent=1 // pred_fallthru
      _
    // Predicated region
    $region30: #{_lambda_.8} parent=1 // pred_check
      _
    $region31: #{_lambda_.8} parent=1 // pred_check_branch
      %320 = sbr.rel (0) target = $region33
    $region32: #{_lambda_.8} parent=1 // pred_region
      %s322 = ssub.s32 16, 16
      %323 = vsyncadd [#allocation11], %s322
      %s325 = sshll.u32 [#allocation10], 4
      %s326 = int_to_ptr.vmem [resolvable:$true] %s325
      %328 = dma.vmem_to_hbm [thread:$0]  %s326, 16, %s3, [#allocation11]
    $region33: #{_lambda_.8} parent=1 // pred_fallthru
      _
    // Predicated region
    $region34: #{_lambda_.8} parent=1 // pred_check
      _
    $region35: #{_lambda_.8} parent=1 // pred_check_branch
      %330 = sbr.rel (0) target = $region37
    $region36: #{_lambda_.8} parent=1 // pred_region
      %331 = dma.done [#allocation9], 16
    $region37: #{_lambda_.8} parent=1 // pred_fallthru
      _
    // Predicated region
    $region38: #{_lambda_.8} parent=1 // pred_check
      _
    $region39: #{_lambda_.8} parent=1 // pred_check_branch
      %333 = sbr.rel (0) target = $region41
    $region40: #{_lambda_.8} parent=1 // pred_region
      %334 = dma.done [#allocation11], 16
    $region41: #{_lambda_.8} parent=1 // pred_fallthru
      _
    %335 = vsyncpa [#allocation9], 1
    %336 = vsyncpa [#allocation11], 1

// kernel: _lambda_.9
$region0: #{_lambda_.9}
  #allocation0 [shape = 'u32[]', space=smem, size = 0x4, offset = 0x4, fixed_abs, tag = 'smem constant byte address 0x4 - core index']
  #allocation1 [shape = 'u32[144,128]{1,0:T(1,128)}', space=vmem, size = 0x12000, scoped, tag = 'internal scratch']
  #allocation2 [shape = 'f32[32,1]{1,0:T(8,128)}', space=vmem, size = 0x4000, scoped, tag = 'scratch operand']
  #allocation3 [shape = 'f32[32,1]{1,0:T(8,128)}', space=vmem, size = 0x4000, scoped, tag = 'scratch operand']
  #allocation4 [shape = 'f32[32,1]{1,0:T(8,128)}', space=vmem, size = 0x4000, scoped, tag = 'scratch operand']
  #allocation5 [shape = 'f32[32,1]{1,0:T(8,128)}', space=vmem, size = 0x4000, scoped, tag = 'scratch operand']
  #allocation6 [shape = 'f32[32,1]{1,0:T(8,128)}', space=vmem, size = 0x4000, scoped, tag = 'scratch operand']
  #allocation7 [shape = 'f32[32,1]{1,0:T(8,128)}', space=vmem, size = 0x4000, scoped, tag = 'scratch operand']
  #allocation8 [shape = 'f32[32,1]{1,0:T(8,128)}', space=vmem, size = 0x4000, scoped, tag = 'scratch operand']
  #allocation9 [shape = 'f32[32,1]{1,0:T(8,128)}', space=vmem, size = 0x4000, scoped, tag = 'scratch operand']
  #allocation10 [shape = 'f32[32,1]{1,0:T(8,128)}', space=vmem, size = 0x4000, scoped, tag = 'scratch operand']
  #allocation11 [shape = 'f32[32,1]{1,0:T(8,128)}', space=vmem, size = 0x4000, scoped, tag = 'scratch operand']
  %s0 = inlined_call_operand.vmem [shape: f32[32,256], index: 0, kind: input, shape index: {}]
  %s1 = inlined_call_operand.vmem [shape: f32[32,256], index: 1, kind: input, shape index: {}]
  %s2 = inlined_call_operand.vmem [shape: f32[32,256], index: 2, kind: input, shape index: {}]
  %s3 = inlined_call_operand.vmem [shape: f32[32,256], index: 3, kind: input, shape index: {}]
  %s4 = inlined_call_operand.hbm [shape: f32[1,1], index: 4, kind: output, shape index: {0}]
  %s5 = inlined_call_operand.hbm [shape: f32[1,1], index: 5, kind: output, shape index: {1}]
  %6 = xla_tuple %s4, %s5
  %s7 = sld [smem:[#allocation0]]
  $region50: #{_lambda_.9} parent=0
    _
  %s9 = ssub.s32 1, %s7
  %s10 = scalar_select 0, %s9, %s7
  $region1: #{_lambda_.9} parent=0
    #allocation12 [shape = 'u8[512]{0}', space=vmem, size = 0x400, scoped, tag = 'output window, operand 0, single buffered']
    #allocation13 [shape = 's32[1]{0}', space=sflag, size = 0x4, scoped, tag = 'scoped memory for _lambda_.9']
    #allocation14 [shape = 'u8[512]{0}', space=vmem, size = 0x400, scoped, tag = 'output window, operand 1, single buffered']
    #allocation15 [shape = 's32[1]{0}', space=sflag, size = 0x4, scoped, tag = 'scoped memory for _lambda_.9']
    %11 = vsyncpa [#allocation13], 0
    %12 = vsyncpa [#allocation15], 0
    // Predicated region
    $region2: #{_lambda_.9} parent=1 // pred_check
      _
    $region3: #{_lambda_.9} parent=1 // pred_check_branch
      %14 = sbr.rel (0) target = $region5
    $region4: #{_lambda_.9} parent=1 // pred_region
      _
    $region5: #{_lambda_.9} parent=1 // pred_fallthru
      _
    // Predicated region
    $region6: #{_lambda_.9} parent=1 // pred_check
      _
    $region7: #{_lambda_.9} parent=1 // pred_check_branch
      %16 = sbr.rel (0) target = $region9
    $region8: #{_lambda_.9} parent=1 // pred_region
      _
    $region9: #{_lambda_.9} parent=1 // pred_fallthru
      _
    // Predicated region
    $region10: #{_lambda_.9} parent=1 // pred_check
      _
    $region11: #{_lambda_.9} parent=1 // pred_check_branch
      %18 = sbr.rel (0) target = $region13
    $region12: #{_lambda_.9} parent=1 // pred_region
      _
    $region13: #{_lambda_.9} parent=1 // pred_fallthru
      _
    // Predicated region
    $region14: #{_lambda_.9} parent=1 // pred_check
      _
    $region15: #{_lambda_.9} parent=1 // pred_check_branch
      %20 = sbr.rel (0) target = $region17
    $region16: #{_lambda_.9} parent=1 // pred_region
      _
    $region17: #{_lambda_.9} parent=1 // pred_fallthru
      _
    %p21 = scmp.eq.s32.totalorder 0, 0
    %p22 = scmp.eq.s32.totalorder 0, 0
    %p23 = pnand %p21, %p22
    %p24 = pneg %p23
    // Predicated region
    $region18: #{_lambda_.9} parent=1 // pred_check
      _
    $region19: #{_lambda_.9} parent=1 // pred_check_branch
      %26 = sbr.rel (%p23) target = $region21
    $region20: #{_lambda_.9} parent=1 // pred_region
      %vm27 = vcmask 7168
      %28 = vst.msk [vmem:[#allocation10] sm:$0xff] %vm27, 0.0
      %29 = vst.msk [vmem:[#allocation10 + $0x8] sm:$0xff] %vm27, 0.0
      %30 = vst.msk [vmem:[#allocation10 + $0x10] sm:$0xff] %vm27, 0.0
      %31 = vst.msk [vmem:[#allocation10 + $0x18] sm:$0xff] %vm27, 0.0
      %32 = vst.msk [vmem:[#allocation11] sm:$0xff] %vm27, 0.0
      %33 = vst.msk [vmem:[#allocation11 + $0x8] sm:$0xff] %vm27, 0.0
      %34 = vst.msk [vmem:[#allocation11 + $0x10] sm:$0xff] %vm27, 0.0
      %35 = vst.msk [vmem:[#allocation11 + $0x18] sm:$0xff] %vm27, 0.0
    $region21: #{_lambda_.9} parent=1 // pred_fallthru
      _
    // Predicated region
    $region22: #{_lambda_.9} parent=1 // pred_check
      %p36 = pneg %p22
    $region23: #{_lambda_.9} parent=1 // pred_check_branch
      %38 = sbr.rel (%p36) target = $region25
    $region24: #{_lambda_.9} parent=1 // pred_region
      %vm39 = vcmask 7168
      %40 = vst.msk [vmem:[#allocation2] sm:$0xff] %vm39, 0.0
      %41 = vst.msk [vmem:[#allocation2 + $0x8] sm:$0xff] %vm39, 0.0
      %42 = vst.msk [vmem:[#allocation2 + $0x10] sm:$0xff] %vm39, 0.0
      %43 = vst.msk [vmem:[#allocation2 + $0x18] sm:$0xff] %vm39, 0.0
      %44 = vst.msk [vmem:[#allocation3] sm:$0xff] %vm39, 0.0
      %45 = vst.msk [vmem:[#allocation3 + $0x8] sm:$0xff] %vm39, 0.0
      %46 = vst.msk [vmem:[#allocation3 + $0x10] sm:$0xff] %vm39, 0.0
      %47 = vst.msk [vmem:[#allocation3 + $0x18] sm:$0xff] %vm39, 0.0
      %48 = vst.msk [vmem:[#allocation4] sm:$0xff] %vm39, 0.0
      %49 = vst.msk [vmem:[#allocation4 + $0x8] sm:$0xff] %vm39, 0.0
      %50 = vst.msk [vmem:[#allocation4 + $0x10] sm:$0xff] %vm39, 0.0
      %51 = vst.msk [vmem:[#allocation4 + $0x18] sm:$0xff] %vm39, 0.0
      %52 = vst.msk [vmem:[#allocation5] sm:$0xff] %vm39, 0.0
      %53 = vst.msk [vmem:[#allocation5 + $0x8] sm:$0xff] %vm39, 0.0
      %54 = vst.msk [vmem:[#allocation5 + $0x10] sm:$0xff] %vm39, 0.0
      %55 = vst.msk [vmem:[#allocation5 + $0x18] sm:$0xff] %vm39, 0.0
      %56 = vst.msk [vmem:[#allocation6] sm:$0xff] %vm39, 0.0
      %57 = vst.msk [vmem:[#allocation6 + $0x8] sm:$0xff] %vm39, 0.0
      %58 = vst.msk [vmem:[#allocation6 + $0x10] sm:$0xff] %vm39, 0.0
      %59 = vst.msk [vmem:[#allocation6 + $0x18] sm:$0xff] %vm39, 0.0
      %60 = vst.msk [vmem:[#allocation7] sm:$0xff] %vm39, 0.0
      %61 = vst.msk [vmem:[#allocation7 + $0x8] sm:$0xff] %vm39, 0.0
      %62 = vst.msk [vmem:[#allocation7 + $0x10] sm:$0xff] %vm39, 0.0
      %63 = vst.msk [vmem:[#allocation7 + $0x18] sm:$0xff] %vm39, 0.0
      %64 = vst.msk [vmem:[#allocation8] sm:$0xff] %vm39, 0.0
      %65 = vst.msk [vmem:[#allocation8 + $0x8] sm:$0xff] %vm39, 0.0
      %66 = vst.msk [vmem:[#allocation8 + $0x10] sm:$0xff] %vm39, 0.0
      %67 = vst.msk [vmem:[#allocation8 + $0x18] sm:$0xff] %vm39, 0.0
      %68 = vst.msk [vmem:[#allocation9] sm:$0xff] %vm39, 0.0
      %69 = vst.msk [vmem:[#allocation9 + $0x8] sm:$0xff] %vm39, 0.0
      %70 = vst.msk [vmem:[#allocation9 + $0x10] sm:$0xff] %vm39, 0.0
      %71 = vst.msk [vmem:[#allocation9 + $0x18] sm:$0xff] %vm39, 0.0
    $region25: #{_lambda_.9} parent=1 // pred_fallthru
      _
    %v72 = vld [vmem:[%s0] sm:$0xff]
    %v73 = vld [vmem:[%s0 + $0x8] sm:$0xff]
    %v74 = vld [vmem:[%s0 + $0x10] sm:$0xff]
    %v75 = vld [vmem:[%s0 + $0x18] sm:$0xff]
    %v76 = vld [vmem:[%s0 + $0x20] sm:$0xff]
    %v77 = vld [vmem:[%s0 + $0x28] sm:$0xff]
    %v78 = vld [vmem:[%s0 + $0x30] sm:$0xff]
    %v79 = vld [vmem:[%s0 + $0x38] sm:$0xff]
    %v80 = vld [vmem:[%s1] sm:$0xff]
    %v81 = vld [vmem:[%s1 + $0x8] sm:$0xff]
    %v82 = vld [vmem:[%s1 + $0x10] sm:$0xff]
    %v83 = vld [vmem:[%s1 + $0x18] sm:$0xff]
    %v84 = vld [vmem:[%s1 + $0x20] sm:$0xff]
    %v85 = vld [vmem:[%s1 + $0x28] sm:$0xff]
    %v86 = vld [vmem:[%s1 + $0x30] sm:$0xff]
    %v87 = vld [vmem:[%s1 + $0x38] sm:$0xff]
    %v88 = vld [vmem:[#allocation2] sm:$0xff]
    %v89 = vld [vmem:[#allocation2 + $0x8] sm:$0xff]
    %v90 = vld [vmem:[#allocation2 + $0x10] sm:$0xff]
    %v91 = vld [vmem:[#allocation2 + $0x18] sm:$0xff]
    %v92 = vadd.f32 %v72, %v73
    %93 = vadd.xlane.f32.xlu0 %v92
    %v94 = vpop.xlane.xlu0 %93
    %v95 = vadd.f32 %v74, %v75
    %96 = vadd.xlane.f32.xlu0 %v95
    %v97 = vpop.xlane.xlu0 %96
    %v98 = vadd.f32 %v76, %v77
    %99 = vadd.xlane.f32.xlu0 %v98
    %v100 = vpop.xlane.xlu0 %99
    %v101 = vadd.f32 %v78, %v79
    %102 = vadd.xlane.f32.xlu0 %v101
    %v103 = vpop.xlane.xlu0 %102
    %v104 = vadd.f32 %v88, %v94
    %v105 = vadd.f32 %v89, %v97
    %v106 = vadd.f32 %v90, %v100
    %v107 = vadd.f32 %v91, %v103
    %vm108 = vcmask 7168
    %109 = vst.msk [vmem:[#allocation2] sm:$0xff] %vm108, %v104
    %110 = vst.msk [vmem:[#allocation2 + $0x8] sm:$0xff] %vm108, %v105
    %111 = vst.msk [vmem:[#allocation2 + $0x10] sm:$0xff] %vm108, %v106
    %112 = vst.msk [vmem:[#allocation2 + $0x18] sm:$0xff] %vm108, %v107
    %v113 = vld [vmem:[#allocation3] sm:$0xff]
    %v114 = vld [vmem:[#allocation3 + $0x8] sm:$0xff]
    %v115 = vld [vmem:[#allocation3 + $0x10] sm:$0xff]
    %v116 = vld [vmem:[#allocation3 + $0x18] sm:$0xff]
    %v117 = vmul.f32 %v72, %v72
    %v118 = vmul.f32 %v73, %v73
    %v119 = vmul.f32 %v74, %v74
    %v120 = vmul.f32 %v75, %v75
    %v121 = vmul.f32 %v76, %v76
    %v122 = vmul.f32 %v77, %v77
    %v123 = vmul.f32 %v78, %v78
    %v124 = vmul.f32 %v79, %v79
    %v125 = vadd.f32 %v117, %v118
    %126 = vadd.xlane.f32.xlu0 %v125
    %v127 = vpop.xlane.xlu0 %126
    %v128 = vadd.f32 %v119, %v120
    %129 = vadd.xlane.f32.xlu0 %v128
    %v130 = vpop.xlane.xlu0 %129
    %v131 = vadd.f32 %v121, %v122
    %132 = vadd.xlane.f32.xlu0 %v131
    %v133 = vpop.xlane.xlu0 %132
    %v134 = vadd.f32 %v123, %v124
    %135 = vadd.xlane.f32.xlu0 %v134
    %v136 = vpop.xlane.xlu0 %135
    %v137 = vadd.f32 %v113, %v127
    %v138 = vadd.f32 %v114, %v130
    %v139 = vadd.f32 %v115, %v133
    %v140 = vadd.f32 %v116, %v136
    %141 = vst.msk [vmem:[#allocation3] sm:$0xff] %vm108, %v137
    %142 = vst.msk [vmem:[#allocation3 + $0x8] sm:$0xff] %vm108, %v138
    %143 = vst.msk [vmem:[#allocation3 + $0x10] sm:$0xff] %vm108, %v139
    %144 = vst.msk [vmem:[#allocation3 + $0x18] sm:$0xff] %vm108, %v140
    %v145 = vld [vmem:[#allocation4] sm:$0xff]
    %v146 = vld [vmem:[#allocation4 + $0x8] sm:$0xff]
    %v147 = vld [vmem:[#allocation4 + $0x10] sm:$0xff]
    %v148 = vld [vmem:[#allocation4 + $0x18] sm:$0xff]
    %v149 = vadd.f32 %v80, %v81
    %150 = vadd.xlane.f32.xlu0 %v149
    %v151 = vpop.xlane.xlu0 %150
    %v152 = vadd.f32 %v82, %v83
    %153 = vadd.xlane.f32.xlu0 %v152
    %v154 = vpop.xlane.xlu0 %153
    %v155 = vadd.f32 %v84, %v85
    %156 = vadd.xlane.f32.xlu0 %v155
    %v157 = vpop.xlane.xlu0 %156
    %v158 = vadd.f32 %v86, %v87
    %159 = vadd.xlane.f32.xlu0 %v158
    %v160 = vpop.xlane.xlu0 %159
    %v161 = vadd.f32 %v145, %v151
    %v162 = vadd.f32 %v146, %v154
    %v163 = vadd.f32 %v147, %v157
    %v164 = vadd.f32 %v148, %v160
    %165 = vst.msk [vmem:[#allocation4] sm:$0xff] %vm108, %v161
    %166 = vst.msk [vmem:[#allocation4 + $0x8] sm:$0xff] %vm108, %v162
    %167 = vst.msk [vmem:[#allocation4 + $0x10] sm:$0xff] %vm108, %v163
    %168 = vst.msk [vmem:[#allocation4 + $0x18] sm:$0xff] %vm108, %v164
    %v169 = vld [vmem:[#allocation5] sm:$0xff]
    %v170 = vld [vmem:[#allocation5 + $0x8] sm:$0xff]
    %v171 = vld [vmem:[#allocation5 + $0x10] sm:$0xff]
    %v172 = vld [vmem:[#allocation5 + $0x18] sm:$0xff]
    %v173 = vmul.f32 %v80, %v80
    %v174 = vmul.f32 %v81, %v81
    %v175 = vmul.f32 %v82, %v82
    %v176 = vmul.f32 %v83, %v83
    %v177 = vmul.f32 %v84, %v84
    %v178 = vmul.f32 %v85, %v85
    %v179 = vmul.f32 %v86, %v86
    %v180 = vmul.f32 %v87, %v87
    %v181 = vadd.f32 %v173, %v174
    %182 = vadd.xlane.f32.xlu0 %v181
    %v183 = vpop.xlane.xlu0 %182
    %v184 = vadd.f32 %v175, %v176
    %185 = vadd.xlane.f32.xlu0 %v184
    %v186 = vpop.xlane.xlu0 %185
    %v187 = vadd.f32 %v177, %v178
    %188 = vadd.xlane.f32.xlu0 %v187
    %v189 = vpop.xlane.xlu0 %188
    %v190 = vadd.f32 %v179, %v180
    %191 = vadd.xlane.f32.xlu0 %v190
    %v192 = vpop.xlane.xlu0 %191
    %v193 = vadd.f32 %v169, %v183
    %v194 = vadd.f32 %v170, %v186
    %v195 = vadd.f32 %v171, %v189
    %v196 = vadd.f32 %v172, %v192
    %197 = vst.msk [vmem:[#allocation5] sm:$0xff] %vm108, %v193
    %198 = vst.msk [vmem:[#allocation5 + $0x8] sm:$0xff] %vm108, %v194
    %199 = vst.msk [vmem:[#allocation5 + $0x10] sm:$0xff] %vm108, %v195
    %200 = vst.msk [vmem:[#allocation5 + $0x18] sm:$0xff] %vm108, %v196
    %v201 = vld [vmem:[%s2] sm:$0xff]
    %v202 = vld [vmem:[%s2 + $0x8] sm:$0xff]
    %v203 = vld [vmem:[%s2 + $0x10] sm:$0xff]
    %v204 = vld [vmem:[%s2 + $0x18] sm:$0xff]
    %v205 = vld [vmem:[%s2 + $0x20] sm:$0xff]
    %v206 = vld [vmem:[%s2 + $0x28] sm:$0xff]
    %v207 = vld [vmem:[%s2 + $0x30] sm:$0xff]
    %v208 = vld [vmem:[%s2 + $0x38] sm:$0xff]
    %v209 = vld [vmem:[%s3] sm:$0xff]
    %v210 = vld [vmem:[%s3 + $0x8] sm:$0xff]
    %v211 = vld [vmem:[%s3 + $0x10] sm:$0xff]
    %v212 = vld [vmem:[%s3 + $0x18] sm:$0xff]
    %v213 = vld [vmem:[%s3 + $0x20] sm:$0xff]
    %v214 = vld [vmem:[%s3 + $0x28] sm:$0xff]
    %v215 = vld [vmem:[%s3 + $0x30] sm:$0xff]
    %v216 = vld [vmem:[%s3 + $0x38] sm:$0xff]
    %v217 = vld [vmem:[#allocation6] sm:$0xff]
    %v218 = vld [vmem:[#allocation6 + $0x8] sm:$0xff]
    %v219 = vld [vmem:[#allocation6 + $0x10] sm:$0xff]
    %v220 = vld [vmem:[#allocation6 + $0x18] sm:$0xff]
    %v221 = vadd.f32 %v201, %v202
    %222 = vadd.xlane.f32.xlu0 %v221
    %v223 = vpop.xlane.xlu0 %222
    %v224 = vadd.f32 %v203, %v204
    %225 = vadd.xlane.f32.xlu0 %v224
    %v226 = vpop.xlane.xlu0 %225
    %v227 = vadd.f32 %v205, %v206
    %228 = vadd.xlane.f32.xlu0 %v227
    %v229 = vpop.xlane.xlu0 %228
    %v230 = vadd.f32 %v207, %v208
    %231 = vadd.xlane.f32.xlu0 %v230
    %v232 = vpop.xlane.xlu0 %231
    %v233 = vadd.f32 %v217, %v223
    %v234 = vadd.f32 %v218, %v226
    %v235 = vadd.f32 %v219, %v229
    %v236 = vadd.f32 %v220, %v232
    %237 = vst.msk [vmem:[#allocation6] sm:$0xff] %vm108, %v233
    %238 = vst.msk [vmem:[#allocation6 + $0x8] sm:$0xff] %vm108, %v234
    %239 = vst.msk [vmem:[#allocation6 + $0x10] sm:$0xff] %vm108, %v235
    %240 = vst.msk [vmem:[#allocation6 + $0x18] sm:$0xff] %vm108, %v236
    %v241 = vld [vmem:[#allocation7] sm:$0xff]
    %v242 = vld [vmem:[#allocation7 + $0x8] sm:$0xff]
    %v243 = vld [vmem:[#allocation7 + $0x10] sm:$0xff]
    %v244 = vld [vmem:[#allocation7 + $0x18] sm:$0xff]
    %v245 = vmul.f32 %v201, %v201
    %v246 = vmul.f32 %v202, %v202
    %v247 = vmul.f32 %v203, %v203
    %v248 = vmul.f32 %v204, %v204
    %v249 = vmul.f32 %v205, %v205
    %v250 = vmul.f32 %v206, %v206
    %v251 = vmul.f32 %v207, %v207
    %v252 = vmul.f32 %v208, %v208
    %v253 = vadd.f32 %v245, %v246
    %254 = vadd.xlane.f32.xlu0 %v253
    %v255 = vpop.xlane.xlu0 %254
    %v256 = vadd.f32 %v247, %v248
    %257 = vadd.xlane.f32.xlu0 %v256
    %v258 = vpop.xlane.xlu0 %257
    %v259 = vadd.f32 %v249, %v250
    %260 = vadd.xlane.f32.xlu0 %v259
    %v261 = vpop.xlane.xlu0 %260
    %v262 = vadd.f32 %v251, %v252
    %263 = vadd.xlane.f32.xlu0 %v262
    %v264 = vpop.xlane.xlu0 %263
    %v265 = vadd.f32 %v241, %v255
    %v266 = vadd.f32 %v242, %v258
    %v267 = vadd.f32 %v243, %v261
    %v268 = vadd.f32 %v244, %v264
    %269 = vst.msk [vmem:[#allocation7] sm:$0xff] %vm108, %v265
    %270 = vst.msk [vmem:[#allocation7 + $0x8] sm:$0xff] %vm108, %v266
    %271 = vst.msk [vmem:[#allocation7 + $0x10] sm:$0xff] %vm108, %v267
    %272 = vst.msk [vmem:[#allocation7 + $0x18] sm:$0xff] %vm108, %v268
    %v273 = vld [vmem:[#allocation8] sm:$0xff]
    %v274 = vld [vmem:[#allocation8 + $0x8] sm:$0xff]
    %v275 = vld [vmem:[#allocation8 + $0x10] sm:$0xff]
    %v276 = vld [vmem:[#allocation8 + $0x18] sm:$0xff]
    %v277 = vadd.f32 %v209, %v210
    %278 = vadd.xlane.f32.xlu0 %v277
    %v279 = vpop.xlane.xlu0 %278
    %v280 = vadd.f32 %v211, %v212
    %281 = vadd.xlane.f32.xlu0 %v280
    %v282 = vpop.xlane.xlu0 %281
    %v283 = vadd.f32 %v213, %v214
    %284 = vadd.xlane.f32.xlu0 %v283
    %v285 = vpop.xlane.xlu0 %284
    %v286 = vadd.f32 %v215, %v216
    %287 = vadd.xlane.f32.xlu0 %v286
    %v288 = vpop.xlane.xlu0 %287
    %v289 = vadd.f32 %v273, %v279
    %v290 = vadd.f32 %v274, %v282
    %v291 = vadd.f32 %v275, %v285
    %v292 = vadd.f32 %v276, %v288
    %293 = vst.msk [vmem:[#allocation8] sm:$0xff] %vm108, %v289
    %294 = vst.msk [vmem:[#allocation8 + $0x8] sm:$0xff] %vm108, %v290
    %295 = vst.msk [vmem:[#allocation8 + $0x10] sm:$0xff] %vm108, %v291
    %296 = vst.msk [vmem:[#allocation8 + $0x18] sm:$0xff] %vm108, %v292
    %v297 = vld [vmem:[#allocation9] sm:$0xff]
    %v298 = vld [vmem:[#allocation9 + $0x8] sm:$0xff]
    %v299 = vld [vmem:[#allocation9 + $0x10] sm:$0xff]
    %v300 = vld [vmem:[#allocation9 + $0x18] sm:$0xff]
    %v301 = vmul.f32 %v209, %v209
    %v302 = vmul.f32 %v210, %v210
    %v303 = vmul.f32 %v211, %v211
    %v304 = vmul.f32 %v212, %v212
    %v305 = vmul.f32 %v213, %v213
    %v306 = vmul.f32 %v214, %v214
    %v307 = vmul.f32 %v215, %v215
    %v308 = vmul.f32 %v216, %v216
    %v309 = vadd.f32 %v301, %v302
    %310 = vadd.xlane.f32.xlu0 %v309
    %v311 = vpop.xlane.xlu0 %310
    %v312 = vadd.f32 %v303, %v304
    %313 = vadd.xlane.f32.xlu0 %v312
    %v314 = vpop.xlane.xlu0 %313
    %v315 = vadd.f32 %v305, %v306
    %316 = vadd.xlane.f32.xlu0 %v315
    %v317 = vpop.xlane.xlu0 %316
    %v318 = vadd.f32 %v307, %v308
    %319 = vadd.xlane.f32.xlu0 %v318
    %v320 = vpop.xlane.xlu0 %319
    %v321 = vadd.f32 %v297, %v311
    %v322 = vadd.f32 %v298, %v314
    %v323 = vadd.f32 %v299, %v317
    %v324 = vadd.f32 %v300, %v320
    %325 = vst.msk [vmem:[#allocation9] sm:$0xff] %vm108, %v321
    %326 = vst.msk [vmem:[#allocation9 + $0x8] sm:$0xff] %vm108, %v322
    %327 = vst.msk [vmem:[#allocation9 + $0x10] sm:$0xff] %vm108, %v323
    %328 = vst.msk [vmem:[#allocation9 + $0x18] sm:$0xff] %vm108, %v324
    // Predicated region
    $region26: #{_lambda_.9} parent=1 // pred_check
      %p329 = pneg %p22
    $region27: #{_lambda_.9} parent=1 // pred_check_branch
      %331 = sbr.rel (%p329) target = $region29
    $region28: #{_lambda_.9} parent=1 // pred_region
      %v332 = vld [vmem:[#allocation2] sm:$0xff]
      %v333 = vld [vmem:[#allocation2 + $0x8] sm:$0xff]
      %v334 = vld [vmem:[#allocation2 + $0x10] sm:$0xff]
      %v335 = vld [vmem:[#allocation2 + $0x18] sm:$0xff]
      %v336 = vld [vmem:[#allocation3] sm:$0xff]
      %v337 = vld [vmem:[#allocation3 + $0x8] sm:$0xff]
      %v338 = vld [vmem:[#allocation3 + $0x10] sm:$0xff]
      %v339 = vld [vmem:[#allocation3 + $0x18] sm:$0xff]
      %v340 = vld [vmem:[#allocation4] sm:$0xff]
      %v341 = vld [vmem:[#allocation4 + $0x8] sm:$0xff]
      %v342 = vld [vmem:[#allocation4 + $0x10] sm:$0xff]
      %v343 = vld [vmem:[#allocation4 + $0x18] sm:$0xff]
      %v344 = vld [vmem:[#allocation5] sm:$0xff]
      %v345 = vld [vmem:[#allocation5 + $0x8] sm:$0xff]
      %v346 = vld [vmem:[#allocation5 + $0x10] sm:$0xff]
      %v347 = vld [vmem:[#allocation5 + $0x18] sm:$0xff]
      %v348 = vmul.f32 %v332, 0.00390625
      %v349 = vmul.f32 %v333, 0.00390625
      %v350 = vmul.f32 %v334, 0.00390625
      %v351 = vmul.f32 %v335, 0.00390625
      %v352 = vmul.f32 %v340, 0.00390625
      %v353 = vmul.f32 %v341, 0.00390625
      %v354 = vmul.f32 %v342, 0.00390625
      %v355 = vmul.f32 %v343, 0.00390625
      %v356 = vmul.f32 %v348, 256.0
      %v357 = vmul.f32 %v349, 256.0
      %v358 = vmul.f32 %v350, 256.0
      %v359 = vmul.f32 %v351, 256.0
      %v360 = vmul.f32 %v356, %v348
      %v361 = vmul.f32 %v357, %v349
      %v362 = vmul.f32 %v358, %v350
      %v363 = vmul.f32 %v359, %v351
      %v364 = vsub.f32 %v336, %v360
      %v365 = vsub.f32 %v337, %v361
      %v366 = vsub.f32 %v338, %v362
      %v367 = vsub.f32 %v339, %v363
      %v368 = vmul.f32 %v364, 0.003921569
      %v369 = vmul.f32 %v365, 0.003921569
      %v370 = vmul.f32 %v366, 0.003921569
      %v371 = vmul.f32 %v367, 0.003921569
      %v372 = vmax.f32 %v368, 0.0
      %v373 = vmax.f32 %v369, 0.0
      %v374 = vmax.f32 %v370, 0.0
      %v375 = vmax.f32 %v371, 0.0
      %v376 = vmul.f32 %v352, 256.0
      %v377 = vmul.f32 %v353, 256.0
      %v378 = vmul.f32 %v354, 256.0
      %v379 = vmul.f32 %v355, 256.0
      %v380 = vmul.f32 %v376, %v352
      %v381 = vmul.f32 %v377, %v353
      %v382 = vmul.f32 %v378, %v354
      %v383 = vmul.f32 %v379, %v355
      %v384 = vsub.f32 %v344, %v380
      %v385 = vsub.f32 %v345, %v381
      %v386 = vsub.f32 %v346, %v382
      %v387 = vsub.f32 %v347, %v383
      %v388 = vmul.f32 %v384, 0.003921569
      %v389 = vmul.f32 %v385, 0.003921569
      %v390 = vmul.f32 %v386, 0.003921569
      %v391 = vmul.f32 %v387, 0.003921569
      %v392 = vmax.f32 %v388, 0.0
      %v393 = vmax.f32 %v389, 0.0
      %v394 = vmax.f32 %v390, 0.0
      %v395 = vmax.f32 %v391, 0.0
      %v396 = vsub.f32 %v348, %v352
      %v397 = vsub.f32 %v349, %v353
      %v398 = vsub.f32 %v350, %v354
      %v399 = vsub.f32 %v351, %v355
      %v400 = vmul.f32 %v396, %v396
      %v401 = vmul.f32 %v397, %v397
      %v402 = vmul.f32 %v398, %v398
      %v403 = vmul.f32 %v399, %v399
      %v404 = vrsqrt.pop %v372
      %v405 = vmul.f32 %v372, %v404
      %vm406 = vcmp.eq.f32.partialorder %v372, inf
      %v407 = vsel %vm406, %v372, %v405
      %vm408 = vcmp.eq.f32.partialorder %v372, 0.0
      %v409 = vand.u32 %v372, 2147483648
      %v410 = vsel %vm408, %v409, %v407
      %v411 = vrsqrt.pop %v373
      %v412 = vmul.f32 %v373, %v411
      %vm413 = vcmp.eq.f32.partialorder %v373, inf
      %v414 = vsel %vm413, %v373, %v412
      %vm415 = vcmp.eq.f32.partialorder %v373, 0.0
      %v416 = vand.u32 %v373, 2147483648
      %v417 = vsel %vm415, %v416, %v414
      %v418 = vrsqrt.pop %v374
      %v419 = vmul.f32 %v374, %v418
      %vm420 = vcmp.eq.f32.partialorder %v374, inf
      %v421 = vsel %vm420, %v374, %v419
      %vm422 = vcmp.eq.f32.partialorder %v374, 0.0
      %v423 = vand.u32 %v374, 2147483648
      %v424 = vsel %vm422, %v423, %v421
      %v425 = vrsqrt.pop %v375
      %v426 = vmul.f32 %v375, %v425
      %vm427 = vcmp.eq.f32.partialorder %v375, inf
      %v428 = vsel %vm427, %v375, %v426
      %vm429 = vcmp.eq.f32.partialorder %v375, 0.0
      %v430 = vand.u32 %v375, 2147483648
      %v431 = vsel %vm429, %v430, %v428
      %v432 = vrsqrt.pop %v392
      %v433 = vmul.f32 %v392, %v432
      %vm434 = vcmp.eq.f32.partialorder %v392, inf
      %v435 = vsel %vm434, %v392, %v433
      %vm436 = vcmp.eq.f32.partialorder %v392, 0.0
      %v437 = vand.u32 %v392, 2147483648
      %v438 = vsel %vm436, %v437, %v435
      %v439 = vrsqrt.pop %v393
      %v440 = vmul.f32 %v393, %v439
      %vm441 = vcmp.eq.f32.partialorder %v393, inf
      %v442 = vsel %vm441, %v393, %v440
      %vm443 = vcmp.eq.f32.partialorder %v393, 0.0
      %v444 = vand.u32 %v393, 2147483648
      %v445 = vsel %vm443, %v444, %v442
      %v446 = vrsqrt.pop %v394
      %v447 = vmul.f32 %v394, %v446
      %vm448 = vcmp.eq.f32.partialorder %v394, inf
      %v449 = vsel %vm448, %v394, %v447
      %vm450 = vcmp.eq.f32.partialorder %v394, 0.0
      %v451 = vand.u32 %v394, 2147483648
      %v452 = vsel %vm450, %v451, %v449
      %v453 = vrsqrt.pop %v395
      %v454 = vmul.f32 %v395, %v453
      %vm455 = vcmp.eq.f32.partialorder %v395, inf
      %v456 = vsel %vm455, %v395, %v454
      %vm457 = vcmp.eq.f32.partialorder %v395, 0.0
      %v458 = vand.u32 %v395, 2147483648
      %v459 = vsel %vm457, %v458, %v456
      %v460 = vsub.f32 %v410, %v438
      %v461 = vsub.f32 %v417, %v445
      %v462 = vsub.f32 %v424, %v452
      %v463 = vsub.f32 %v431, %v459
      %v464 = vmul.f32 %v460, %v460
      %v465 = vmul.f32 %v461, %v461
      %v466 = vmul.f32 %v462, %v462
      %v467 = vmul.f32 %v463, %v463
      %v468 = vld [vmem:[#allocation10] sm:$0xff]
      %v469 = vld [vmem:[#allocation10 + $0x8] sm:$0xff]
      %v470 = vld [vmem:[#allocation10 + $0x10] sm:$0xff]
      %v471 = vld [vmem:[#allocation10 + $0x18] sm:$0xff]
      %v472 = vadd.f32 %v468, %v400
      %v473 = vadd.f32 %v469, %v401
      %v474 = vadd.f32 %v470, %v402
      %v475 = vadd.f32 %v471, %v403
      %476 = vst.msk [vmem:[#allocation10] sm:$0xff] %vm108, %v472
      %477 = vst.msk [vmem:[#allocation10 + $0x8] sm:$0xff] %vm108, %v473
      %478 = vst.msk [vmem:[#allocation10 + $0x10] sm:$0xff] %vm108, %v474
      %479 = vst.msk [vmem:[#allocation10 + $0x18] sm:$0xff] %vm108, %v475
      %v480 = vld [vmem:[#allocation11] sm:$0xff]
      %v481 = vld [vmem:[#allocation11 + $0x8] sm:$0xff]
      %v482 = vld [vmem:[#allocation11 + $0x10] sm:$0xff]
      %v483 = vld [vmem:[#allocation11 + $0x18] sm:$0xff]
      %v484 = vadd.f32 %v480, %v464
      %v485 = vadd.f32 %v481, %v465
      %v486 = vadd.f32 %v482, %v466
      %v487 = vadd.f32 %v483, %v467
      %488 = vst.msk [vmem:[#allocation11] sm:$0xff] %vm108, %v484
      %489 = vst.msk [vmem:[#allocation11 + $0x8] sm:$0xff] %vm108, %v485
      %490 = vst.msk [vmem:[#allocation11 + $0x10] sm:$0xff] %vm108, %v486
      %491 = vst.msk [vmem:[#allocation11 + $0x18] sm:$0xff] %vm108, %v487
      %v492 = vld [vmem:[#allocation6] sm:$0xff]
      %v493 = vld [vmem:[#allocation6 + $0x8] sm:$0xff]
      %v494 = vld [vmem:[#allocation6 + $0x10] sm:$0xff]
      %v495 = vld [vmem:[#allocation6 + $0x18] sm:$0xff]
      %v496 = vld [vmem:[#allocation7] sm:$0xff]
      %v497 = vld [vmem:[#allocation7 + $0x8] sm:$0xff]
      %v498 = vld [vmem:[#allocation7 + $0x10] sm:$0xff]
      %v499 = vld [vmem:[#allocation7 + $0x18] sm:$0xff]
      %v500 = vld [vmem:[#allocation8] sm:$0xff]
      %v501 = vld [vmem:[#allocation8 + $0x8] sm:$0xff]
      %v502 = vld [vmem:[#allocation8 + $0x10] sm:$0xff]
      %v503 = vld [vmem:[#allocation8 + $0x18] sm:$0xff]
      %v504 = vld [vmem:[#allocation9] sm:$0xff]
      %v505 = vld [vmem:[#allocation9 + $0x8] sm:$0xff]
      %v506 = vld [vmem:[#allocation9 + $0x10] sm:$0xff]
      %v507 = vld [vmem:[#allocation9 + $0x18] sm:$0xff]
      %v508 = vmul.f32 %v492, 0.00390625
      %v509 = vmul.f32 %v493, 0.00390625
      %v510 = vmul.f32 %v494, 0.00390625
      %v511 = vmul.f32 %v495, 0.00390625
      %v512 = vmul.f32 %v500, 0.00390625
      %v513 = vmul.f32 %v501, 0.00390625
      %v514 = vmul.f32 %v502, 0.00390625
      %v515 = vmul.f32 %v503, 0.00390625
      %v516 = vmul.f32 %v508, 256.0
      %v517 = vmul.f32 %v509, 256.0
      %v518 = vmul.f32 %v510, 256.0
      %v519 = vmul.f32 %v511, 256.0
      %v520 = vmul.f32 %v516, %v508
      %v521 = vmul.f32 %v517, %v509
      %v522 = vmul.f32 %v518, %v510
      %v523 = vmul.f32 %v519, %v511
      %v524 = vsub.f32 %v496, %v520
      %v525 = vsub.f32 %v497, %v521
      %v526 = vsub.f32 %v498, %v522
      %v527 = vsub.f32 %v499, %v523
      %v528 = vmul.f32 %v524, 0.003921569
      %v529 = vmul.f32 %v525, 0.003921569
      %v530 = vmul.f32 %v526, 0.003921569
      %v531 = vmul.f32 %v527, 0.003921569
      %v532 = vmax.f32 %v528, 0.0
      %v533 = vmax.f32 %v529, 0.0
      %v534 = vmax.f32 %v530, 0.0
      %v535 = vmax.f32 %v531, 0.0
      %v536 = vmul.f32 %v512, 256.0
      %v537 = vmul.f32 %v513, 256.0
      %v538 = vmul.f32 %v514, 256.0
      %v539 = vmul.f32 %v515, 256.0
      %v540 = vmul.f32 %v536, %v512
      %v541 = vmul.f32 %v537, %v513
      %v542 = vmul.f32 %v538, %v514
      %v543 = vmul.f32 %v539, %v515
      %v544 = vsub.f32 %v504, %v540
      %v545 = vsub.f32 %v505, %v541
      %v546 = vsub.f32 %v506, %v542
      %v547 = vsub.f32 %v507, %v543
      %v548 = vmul.f32 %v544, 0.003921569
      %v549 = vmul.f32 %v545, 0.003921569
      %v550 = vmul.f32 %v546, 0.003921569
      %v551 = vmul.f32 %v547, 0.003921569
      %v552 = vmax.f32 %v548, 0.0
      %v553 = vmax.f32 %v549, 0.0
      %v554 = vmax.f32 %v550, 0.0
      %v555 = vmax.f32 %v551, 0.0
      %v556 = vsub.f32 %v508, %v512
      %v557 = vsub.f32 %v509, %v513
      %v558 = vsub.f32 %v510, %v514
      %v559 = vsub.f32 %v511, %v515
      %v560 = vmul.f32 %v556, %v556
      %v561 = vmul.f32 %v557, %v557
      %v562 = vmul.f32 %v558, %v558
      %v563 = vmul.f32 %v559, %v559
      %v564 = vrsqrt.pop %v532
      %v565 = vmul.f32 %v532, %v564
      %vm566 = vcmp.eq.f32.partialorder %v532, inf
      %v567 = vsel %vm566, %v532, %v565
      %vm568 = vcmp.eq.f32.partialorder %v532, 0.0
      %v569 = vand.u32 %v532, 2147483648
      %v570 = vsel %vm568, %v569, %v567
      %v571 = vrsqrt.pop %v533
      %v572 = vmul.f32 %v533, %v571
      %vm573 = vcmp.eq.f32.partialorder %v533, inf
      %v574 = vsel %vm573, %v533, %v572
      %vm575 = vcmp.eq.f32.partialorder %v533, 0.0
      %v576 = vand.u32 %v533, 2147483648
      %v577 = vsel %vm575, %v576, %v574
      %v578 = vrsqrt.pop %v534
      %v579 = vmul.f32 %v534, %v578
      %vm580 = vcmp.eq.f32.partialorder %v534, inf
      %v581 = vsel %vm580, %v534, %v579
      %vm582 = vcmp.eq.f32.partialorder %v534, 0.0
      %v583 = vand.u32 %v534, 2147483648
      %v584 = vsel %vm582, %v583, %v581
      %v585 = vrsqrt.pop %v535
      %v586 = vmul.f32 %v535, %v585
      %vm587 = vcmp.eq.f32.partialorder %v535, inf
      %v588 = vsel %vm587, %v535, %v586
      %vm589 = vcmp.eq.f32.partialorder %v535, 0.0
      %v590 = vand.u32 %v535, 2147483648
      %v591 = vsel %vm589, %v590, %v588
      %v592 = vrsqrt.pop %v552
      %v593 = vmul.f32 %v552, %v592
      %vm594 = vcmp.eq.f32.partialorder %v552, inf
      %v595 = vsel %vm594, %v552, %v593
      %vm596 = vcmp.eq.f32.partialorder %v552, 0.0
      %v597 = vand.u32 %v552, 2147483648
      %v598 = vsel %vm596, %v597, %v595
      %v599 = vrsqrt.pop %v553
      %v600 = vmul.f32 %v553, %v599
      %vm601 = vcmp.eq.f32.partialorder %v553, inf
      %v602 = vsel %vm601, %v553, %v600
      %vm603 = vcmp.eq.f32.partialorder %v553, 0.0
      %v604 = vand.u32 %v553, 2147483648
      %v605 = vsel %vm603, %v604, %v602
      %v606 = vrsqrt.pop %v554
      %v607 = vmul.f32 %v554, %v606
      %vm608 = vcmp.eq.f32.partialorder %v554, inf
      %v609 = vsel %vm608, %v554, %v607
      %vm610 = vcmp.eq.f32.partialorder %v554, 0.0
      %v611 = vand.u32 %v554, 2147483648
      %v612 = vsel %vm610, %v611, %v609
      %v613 = vrsqrt.pop %v555
      %v614 = vmul.f32 %v555, %v613
      %vm615 = vcmp.eq.f32.partialorder %v555, inf
      %v616 = vsel %vm615, %v555, %v614
      %vm617 = vcmp.eq.f32.partialorder %v555, 0.0
      %v618 = vand.u32 %v555, 2147483648
      %v619 = vsel %vm617, %v618, %v616
      %v620 = vsub.f32 %v570, %v598
      %v621 = vsub.f32 %v577, %v605
      %v622 = vsub.f32 %v584, %v612
      %v623 = vsub.f32 %v591, %v619
      %v624 = vmul.f32 %v620, %v620
      %v625 = vmul.f32 %v621, %v621
      %v626 = vmul.f32 %v622, %v622
      %v627 = vmul.f32 %v623, %v623
      %v628 = vld [vmem:[#allocation10] sm:$0xff]
      %v629 = vld [vmem:[#allocation10 + $0x8] sm:$0xff]
      %v630 = vld [vmem:[#allocation10 + $0x10] sm:$0xff]
      %v631 = vld [vmem:[#allocation10 + $0x18] sm:$0xff]
      %v632 = vadd.f32 %v628, %v560
      %v633 = vadd.f32 %v629, %v561
      %v634 = vadd.f32 %v630, %v562
      %v635 = vadd.f32 %v631, %v563
      %636 = vst.msk [vmem:[#allocation10] sm:$0xff] %vm108, %v632
      %637 = vst.msk [vmem:[#allocation10 + $0x8] sm:$0xff] %vm108, %v633
      %638 = vst.msk [vmem:[#allocation10 + $0x10] sm:$0xff] %vm108, %v634
      %639 = vst.msk [vmem:[#allocation10 + $0x18] sm:$0xff] %vm108, %v635
      %v640 = vld [vmem:[#allocation11] sm:$0xff]
      %v641 = vld [vmem:[#allocation11 + $0x8] sm:$0xff]
      %v642 = vld [vmem:[#allocation11 + $0x10] sm:$0xff]
      %v643 = vld [vmem:[#allocation11 + $0x18] sm:$0xff]
      %v644 = vadd.f32 %v640, %v624
      %v645 = vadd.f32 %v641, %v625
      %v646 = vadd.f32 %v642, %v626
      %v647 = vadd.f32 %v643, %v627
      %648 = vst.msk [vmem:[#allocation11] sm:$0xff] %vm108, %v644
      %649 = vst.msk [vmem:[#allocation11 + $0x8] sm:$0xff] %vm108, %v645
      %650 = vst.msk [vmem:[#allocation11 + $0x10] sm:$0xff] %vm108, %v646
      %651 = vst.msk [vmem:[#allocation11 + $0x18] sm:$0xff] %vm108, %v647
    $region29: #{_lambda_.9} parent=1 // pred_fallthru
      _
    // Predicated region
    $region30: #{_lambda_.9} parent=1 // pred_check
      _
    $region31: #{_lambda_.9} parent=1 // pred_check_branch
      %653 = sbr.rel (%p23) target = $region33
    $region32: #{_lambda_.9} parent=1 // pred_region
      %v654 = vld [vmem:[#allocation10] sm:$0xff]
      %v655 = vld [vmem:[#allocation10 + $0x8] sm:$0xff]
      %v656 = vld [vmem:[#allocation10 + $0x10] sm:$0xff]
      %v657 = vld [vmem:[#allocation10 + $0x18] sm:$0xff]
      %v658 = vsel %vm108, %v654, 0.0
      %v659 = vsel %vm108, %v655, 0.0
      %v660 = vadd.f32 %v658, %v659
      %v661 = vsel %vm108, %v656, 0.0
      %v662 = vadd.f32 %v660, %v661
      %v663 = vsel %vm108, %v657, 0.0
      %v664 = vadd.f32 %v662, %v663
      %v665 = vrot.slane %v664, 4
      %v666 = vadd.f32 %v664, %v665
      %v667 = vrot.slane %v666, 2
      %v668 = vadd.f32 %v666, %v667
      %v669 = vrot.slane %v668, 1
      %v670 = vadd.f32 %v668, %v669
      %vm671 = vcmask 0
      %672 = vst.msk [vmem:[#allocation12] sm:$0x1] %vm671, %v670
      %v673 = vld [vmem:[#allocation11] sm:$0xff]
      %v674 = vld [vmem:[#allocation11 + $0x8] sm:$0xff]
      %v675 = vld [vmem:[#allocation11 + $0x10] sm:$0xff]
      %v676 = vld [vmem:[#allocation11 + $0x18] sm:$0xff]
      %v677 = vsel %vm108, %v673, 0.0
      %v678 = vsel %vm108, %v674, 0.0
      %v679 = vadd.f32 %v677, %v678
      %v680 = vsel %vm108, %v675, 0.0
      %v681 = vadd.f32 %v679, %v680
      %v682 = vsel %vm108, %v676, 0.0
      %v683 = vadd.f32 %v681, %v682
      %v684 = vrot.slane %v683, 4
      %v685 = vadd.f32 %v683, %v684
      %v686 = vrot.slane %v685, 2
      %v687 = vadd.f32 %v685, %v686
      %v688 = vrot.slane %v687, 1
      %v689 = vadd.f32 %v687, %v688
      %690 = vst.msk [vmem:[#allocation14] sm:$0x1] %vm671, %v689
    $region33: #{_lambda_.9} parent=1 // pred_fallthru
      _
    // Predicated region
    $region34: #{_lambda_.9} parent=1 // pred_check
      _
    $region35: #{_lambda_.9} parent=1 // pred_check_branch
      %692 = sbr.rel (0) target = $region37
    $region36: #{_lambda_.9} parent=1 // pred_region
      %s694 = ssub.s32 16, 16
      %695 = vsyncadd [#allocation13], %s694
      %s697 = sshll.u32 [#allocation12], 4
      %s698 = int_to_ptr.vmem [resolvable:$true] %s697
      %700 = dma.vmem_to_hbm [thread:$0]  %s698, 16, %s4, [#allocation13]
    $region37: #{_lambda_.9} parent=1 // pred_fallthru
      _
    // Predicated region
    $region38: #{_lambda_.9} parent=1 // pred_check
      _
    $region39: #{_lambda_.9} parent=1 // pred_check_branch
      %702 = sbr.rel (0) target = $region41
    $region40: #{_lambda_.9} parent=1 // pred_region
      %s704 = ssub.s32 16, 16
      %705 = vsyncadd [#allocation15], %s704
      %s707 = sshll.u32 [#allocation14], 4
      %s708 = int_to_ptr.vmem [resolvable:$true] %s707
      %710 = dma.vmem_to_hbm [thread:$0]  %s708, 16, %s5, [#allocation15]
    $region41: #{_lambda_.9} parent=1 // pred_fallthru
      _
    // Predicated region
    $region42: #{_lambda_.9} parent=1 // pred_check
      _
    $region43: #{_lambda_.9} parent=1 // pred_check_branch
      %712 = sbr.rel (0) target = $region45
    $region44: #{_lambda_.9} parent=1 // pred_region
      %713 = dma.done [#allocation13], 16
    $region45: #{_lambda_.9} parent=1 // pred_fallthru
      _
    // Predicated region
    $region46: #{_lambda_.9} parent=1 // pred_check
      _
    $region47: #{_lambda_.9} parent=1 // pred_check_branch
      %715 = sbr.rel (0) target = $region49
    $region48: #{_lambda_.9} parent=1 // pred_region
      %716 = dma.done [#allocation15], 16
    $region49: #{_lambda_.9} parent=1 // pred_fallthru
      _
    %717 = vsyncpa [#allocation13], 1
    %718 = vsyncpa [#allocation15], 1

// kernel: _lambda_.10
$region0: #{_lambda_.10}
  #allocation0 [shape = 'u32[]', space=smem, size = 0x4, offset = 0x4, fixed_abs, tag = 'smem constant byte address 0x4 - core index']
  #allocation1 [shape = 'u32[144,128]{1,0:T(1,128)}', space=vmem, size = 0x12000, scoped, tag = 'internal scratch']
  #allocation2 [shape = 'f32[8,1]{1,0:T(8,128)}', space=vmem, size = 0x1000, scoped, tag = 'scratch operand']
  #allocation3 [shape = 'f32[8,1]{1,0:T(8,128)}', space=vmem, size = 0x1000, scoped, tag = 'scratch operand']
  %s0 = inlined_call_operand.vmem [shape: f32[8,768], index: 0, kind: input, shape index: {}]
  %s1 = inlined_call_operand.vmem [shape: f32[8,768], index: 1, kind: input, shape index: {}]
  %s2 = inlined_call_operand.vmem [shape: f32[8,768], index: 2, kind: input, shape index: {}]
  %s3 = inlined_call_operand.vmem [shape: f32[8,768], index: 3, kind: input, shape index: {}]
  %s4 = inlined_call_operand.hbm [shape: f32[1,1], index: 4, kind: output, shape index: {0}]
  %s5 = inlined_call_operand.hbm [shape: f32[1,1], index: 5, kind: output, shape index: {1}]
  %6 = xla_tuple %s4, %s5
  %s7 = sld [smem:[#allocation0]]
  $region42: #{_lambda_.10} parent=0
    _
  %s9 = ssub.s32 1, %s7
  %s10 = scalar_select 0, %s9, %s7
  $region1: #{_lambda_.10} parent=0
    #allocation4 [shape = 'u8[512]{0}', space=vmem, size = 0x400, scoped, tag = 'output window, operand 0, single buffered']
    #allocation5 [shape = 's32[1]{0}', space=sflag, size = 0x4, scoped, tag = 'scoped memory for _lambda_.10']
    #allocation6 [shape = 'u8[512]{0}', space=vmem, size = 0x400, scoped, tag = 'output window, operand 1, single buffered']
    #allocation7 [shape = 's32[1]{0}', space=sflag, size = 0x4, scoped, tag = 'scoped memory for _lambda_.10']
    %11 = vsyncpa [#allocation5], 0
    %12 = vsyncpa [#allocation7], 0
    // Predicated region
    $region2: #{_lambda_.10} parent=1 // pred_check
      _
    $region3: #{_lambda_.10} parent=1 // pred_check_branch
      %14 = sbr.rel (0) target = $region5
    $region4: #{_lambda_.10} parent=1 // pred_region
      _
    $region5: #{_lambda_.10} parent=1 // pred_fallthru
      _
    // Predicated region
    $region6: #{_lambda_.10} parent=1 // pred_check
      _
    $region7: #{_lambda_.10} parent=1 // pred_check_branch
      %16 = sbr.rel (0) target = $region9
    $region8: #{_lambda_.10} parent=1 // pred_region
      _
    $region9: #{_lambda_.10} parent=1 // pred_fallthru
      _
    // Predicated region
    $region10: #{_lambda_.10} parent=1 // pred_check
      _
    $region11: #{_lambda_.10} parent=1 // pred_check_branch
      %18 = sbr.rel (0) target = $region13
    $region12: #{_lambda_.10} parent=1 // pred_region
      _
    $region13: #{_lambda_.10} parent=1 // pred_fallthru
      _
    // Predicated region
    $region14: #{_lambda_.10} parent=1 // pred_check
      _
    $region15: #{_lambda_.10} parent=1 // pred_check_branch
      %20 = sbr.rel (0) target = $region17
    $region16: #{_lambda_.10} parent=1 // pred_region
      _
    $region17: #{_lambda_.10} parent=1 // pred_fallthru
      _
    %p21 = scmp.eq.s32.totalorder 0, 0
    // Predicated region
    $region18: #{_lambda_.10} parent=1 // pred_check
      %p22 = pneg %p21
    $region19: #{_lambda_.10} parent=1 // pred_check_branch
      %24 = sbr.rel (%p22) target = $region21
    $region20: #{_lambda_.10} parent=1 // pred_region
      %vm25 = vcmask 7168
      %26 = vst.msk [vmem:[#allocation2] sm:$0xff] %vm25, 0.0
      %27 = vst.msk [vmem:[#allocation3] sm:$0xff] %vm25, 0.0
    $region21: #{_lambda_.10} parent=1 // pred_fallthru
      _
    %v28 = vld [vmem:[%s0] sm:$0xff]
    %v29 = vld [vmem:[%s0 + $0x8] sm:$0xff]
    %v30 = vld [vmem:[%s0 + $0x10] sm:$0xff]
    %v31 = vld [vmem:[%s0 + $0x18] sm:$0xff]
    %v32 = vld [vmem:[%s0 + $0x20] sm:$0xff]
    %v33 = vld [vmem:[%s0 + $0x28] sm:$0xff]
    %v34 = vld [vmem:[%s1] sm:$0xff]
    %v35 = vld [vmem:[%s1 + $0x8] sm:$0xff]
    %v36 = vld [vmem:[%s1 + $0x10] sm:$0xff]
    %v37 = vld [vmem:[%s1 + $0x18] sm:$0xff]
    %v38 = vld [vmem:[%s1 + $0x20] sm:$0xff]
    %v39 = vld [vmem:[%s1 + $0x28] sm:$0xff]
    %v40 = vsub.f32 %v28, %v34
    %v41 = vsub.f32 %v29, %v35
    %v42 = vsub.f32 %v30, %v36
    %v43 = vsub.f32 %v31, %v37
    %v44 = vsub.f32 %v32, %v38
    %v45 = vsub.f32 %v33, %v39
    %v46 = vmul.f32 %v40, %v40
    %v47 = vmul.f32 %v41, %v41
    %v48 = vmul.f32 %v42, %v42
    %v49 = vmul.f32 %v43, %v43
    %v50 = vmul.f32 %v44, %v44
    %v51 = vmul.f32 %v45, %v45
    %v52 = vadd.f32 %v46, %v47
    %v53 = vadd.f32 %v52, %v48
    %v54 = vadd.f32 %v53, %v49
    %v55 = vadd.f32 %v54, %v50
    %v56 = vadd.f32 %v55, %v51
    %57 = vadd.xlane.f32.xlu0 %v56
    %v58 = vpop.xlane.xlu0 %57
    %v59 = vld [vmem:[%s2] sm:$0xff]
    %v60 = vld [vmem:[%s2 + $0x8] sm:$0xff]
    %v61 = vld [vmem:[%s2 + $0x10] sm:$0xff]
    %v62 = vld [vmem:[%s2 + $0x18] sm:$0xff]
    %v63 = vld [vmem:[%s2 + $0x20] sm:$0xff]
    %v64 = vld [vmem:[%s2 + $0x28] sm:$0xff]
    %v65 = vld [vmem:[%s3] sm:$0xff]
    %v66 = vld [vmem:[%s3 + $0x8] sm:$0xff]
    %v67 = vld [vmem:[%s3 + $0x10] sm:$0xff]
    %v68 = vld [vmem:[%s3 + $0x18] sm:$0xff]
    %v69 = vld [vmem:[%s3 + $0x20] sm:$0xff]
    %v70 = vld [vmem:[%s3 + $0x28] sm:$0xff]
    %v71 = vsub.f32 %v59, %v65
    %v72 = vsub.f32 %v60, %v66
    %v73 = vsub.f32 %v61, %v67
    %v74 = vsub.f32 %v62, %v68
    %v75 = vsub.f32 %v63, %v69
    %v76 = vsub.f32 %v64, %v70
    %v77 = vmul.f32 %v71, %v71
    %v78 = vmul.f32 %v72, %v72
    %v79 = vmul.f32 %v73, %v73
    %v80 = vmul.f32 %v74, %v74
    %v81 = vmul.f32 %v75, %v75
    %v82 = vmul.f32 %v76, %v76
    %v83 = vadd.f32 %v77, %v78
    %v84 = vadd.f32 %v83, %v79
    %v85 = vadd.f32 %v84, %v80
    %v86 = vadd.f32 %v85, %v81
    %v87 = vadd.f32 %v86, %v82
    %88 = vadd.xlane.f32.xlu0 %v87
    %v89 = vpop.xlane.xlu0 %88
    %v90 = vld [vmem:[#allocation2] sm:$0xff]
    %v91 = vadd.f32 %v90, %v58
    %vm92 = vcmask 7168
    %93 = vst.msk [vmem:[#allocation2] sm:$0xff] %vm92, %v91
    %v94 = vld [vmem:[#allocation3] sm:$0xff]
    %v95 = vadd.f32 %v94, %v89
    %96 = vst.msk [vmem:[#allocation3] sm:$0xff] %vm92, %v95
    // Predicated region
    $region22: #{_lambda_.10} parent=1 // pred_check
      %p97 = pneg %p21
    $region23: #{_lambda_.10} parent=1 // pred_check_branch
      %99 = sbr.rel (%p97) target = $region25
    $region24: #{_lambda_.10} parent=1 // pred_region
      %v100 = vld [vmem:[#allocation2] sm:$0xff]
      %v101 = vsel %vm92, %v100, 0.0
      %v102 = vrot.slane %v101, 4
      %v103 = vadd.f32 %v101, %v102
      %v104 = vrot.slane %v103, 2
      %v105 = vadd.f32 %v103, %v104
      %v106 = vrot.slane %v105, 1
      %v107 = vadd.f32 %v105, %v106
      %vm108 = vcmask 0
      %109 = vst.msk [vmem:[#allocation4] sm:$0x1] %vm108, %v107
      %v110 = vld [vmem:[#allocation3] sm:$0xff]
      %v111 = vsel %vm92, %v110, 0.0
      %v112 = vrot.slane %v111, 4
      %v113 = vadd.f32 %v111, %v112
      %v114 = vrot.slane %v113, 2
      %v115 = vadd.f32 %v113, %v114
      %v116 = vrot.slane %v115, 1
      %v117 = vadd.f32 %v115, %v116
      %118 = vst.msk [vmem:[#allocation6] sm:$0x1] %vm108, %v117
    $region25: #{_lambda_.10} parent=1 // pred_fallthru
      _
    // Predicated region
    $region26: #{_lambda_.10} parent=1 // pred_check
      _
    $region27: #{_lambda_.10} parent=1 // pred_check_branch
      %120 = sbr.rel (0) target = $region29
    $region28: #{_lambda_.10} parent=1 // pred_region
      %s122 = ssub.s32 16, 16
      %123 = vsyncadd [#allocation5], %s122
      %s125 = sshll.u32 [#allocation4], 4
      %s126 = int_to_ptr.vmem [resolvable:$true] %s125
      %128 = dma.vmem_to_hbm [thread:$0]  %s126, 16, %s4, [#allocation5]
    $region29: #{_lambda_.10} parent=1 // pred_fallthru
      _
    // Predicated region
    $region30: #{_lambda_.10} parent=1 // pred_check
      _
    $region31: #{_lambda_.10} parent=1 // pred_check_branch
      %130 = sbr.rel (0) target = $region33
    $region32: #{_lambda_.10} parent=1 // pred_region
      %s132 = ssub.s32 16, 16
      %133 = vsyncadd [#allocation7], %s132
      %s135 = sshll.u32 [#allocation6], 4
      %s136 = int_to_ptr.vmem [resolvable:$true] %s135
      %138 = dma.vmem_to_hbm [thread:$0]  %s136, 16, %s5, [#allocation7]
    $region33: #{_lambda_.10} parent=1 // pred_fallthru
      _
    // Predicated region
    $region34: #{_lambda_.10} parent=1 // pred_check
      _
    $region35: #{_lambda_.10} parent=1 // pred_check_branch
      %140 = sbr.rel (0) target = $region37
    $region36: #{_lambda_.10} parent=1 // pred_region
      %141 = dma.done [#allocation5], 16
    $region37: #{_lambda_.10} parent=1 // pred_fallthru
      _
    // Predicated region
    $region38: #{_lambda_.10} parent=1 // pred_check
      _
    $region39: #{_lambda_.10} parent=1 // pred_check_branch
      %143 = sbr.rel (0) target = $region41
    $region40: #{_lambda_.10} parent=1 // pred_region
      %144 = dma.done [#allocation7], 16
    $region41: #{_lambda_.10} parent=1 // pred_fallthru
      _
    %145 = vsyncpa [#allocation5], 1
    %146 = vsyncpa [#allocation7], 1

// kernel: _lambda_.7
$region0: #{_lambda_.7}
  #allocation0 [shape = 'u32[]', space=smem, size = 0x4, offset = 0x4, fixed_abs, tag = 'smem constant byte address 0x4 - core index']
  #allocation1 [shape = 'u32[144,128]{1,0:T(1,128)}', space=vmem, size = 0x12000, scoped, tag = 'internal scratch']
  #allocation2 [shape = 'f32[64,1]{1,0:T(8,128)}', space=vmem, size = 0x8000, scoped, tag = 'scratch operand']
  #allocation3 [shape = 'f32[64,1]{1,0:T(8,128)}', space=vmem, size = 0x8000, scoped, tag = 'scratch operand']
  #allocation4 [shape = 'f32[64,1]{1,0:T(8,128)}', space=vmem, size = 0x8000, scoped, tag = 'scratch operand']
  #allocation5 [shape = 'f32[64,1]{1,0:T(8,128)}', space=vmem, size = 0x8000, scoped, tag = 'scratch operand']
  #allocation6 [shape = 'f32[64,1]{1,0:T(8,128)}', space=vmem, size = 0x8000, scoped, tag = 'scratch operand']
  #allocation7 [shape = 'f32[64,1]{1,0:T(8,128)}', space=vmem, size = 0x8000, scoped, tag = 'scratch operand']
  #allocation8 [shape = 'f32[64,1]{1,0:T(8,128)}', space=vmem, size = 0x8000, scoped, tag = 'scratch operand']
  #allocation9 [shape = 'f32[64,1]{1,0:T(8,128)}', space=vmem, size = 0x8000, scoped, tag = 'scratch operand']
  #allocation10 [shape = 'f32[64,1]{1,0:T(8,128)}', space=vmem, size = 0x8000, scoped, tag = 'scratch operand']
  #allocation11 [shape = 'f32[64,1]{1,0:T(8,128)}', space=vmem, size = 0x8000, scoped, tag = 'scratch operand']
  #allocation12 [shape = 'f32[64,1]{1,0:T(8,128)}', space=vmem, size = 0x8000, scoped, tag = 'scratch operand']
  #allocation13 [shape = 'f32[64,1]{1,0:T(8,128)}', space=vmem, size = 0x8000, scoped, tag = 'scratch operand']
  #allocation14 [shape = 'f32[64,1]{1,0:T(8,128)}', space=vmem, size = 0x8000, scoped, tag = 'scratch operand']
  #allocation15 [shape = 'f32[64,1]{1,0:T(8,128)}', space=vmem, size = 0x8000, scoped, tag = 'scratch operand']
  #allocation16 [shape = 'f32[64,1]{1,0:T(8,128)}', space=vmem, size = 0x8000, scoped, tag = 'scratch operand']
  #allocation17 [shape = 'f32[64,1]{1,0:T(8,128)}', space=vmem, size = 0x8000, scoped, tag = 'scratch operand']
  #allocation18 [shape = 'f32[64,1]{1,0:T(8,128)}', space=vmem, size = 0x8000, scoped, tag = 'scratch operand']
  %s0 = inlined_call_operand.vmem [shape: f32[64,64], index: 0, kind: input, shape index: {}]
  %s1 = inlined_call_operand.vmem [shape: f32[64,64], index: 1, kind: input, shape index: {}]
  %s2 = inlined_call_operand.vmem [shape: f32[64,64], index: 2, kind: input, shape index: {}]
  %s3 = inlined_call_operand.vmem [shape: f32[64,64], index: 3, kind: input, shape index: {}]
  %s4 = inlined_call_operand.vmem [shape: f32[64,64], index: 4, kind: input, shape index: {}]
  %s5 = inlined_call_operand.vmem [shape: f32[64,64], index: 5, kind: input, shape index: {}]
  %s6 = inlined_call_operand.hbm [shape: f32[1,1], index: 6, kind: output, shape index: {0}]
  %s7 = inlined_call_operand.hbm [shape: f32[1,1], index: 7, kind: output, shape index: {1}]
  %s8 = inlined_call_operand.hbm [shape: f32[1,1], index: 8, kind: output, shape index: {2}]
  %9 = xla_tuple %s6, %s7, %s8
  %s10 = sld [smem:[#allocation0]]
  $region66: #{_lambda_.7} parent=0
    _
  %s12 = ssub.s32 1, %s10
  %s13 = scalar_select 0, %s12, %s10
  $region1: #{_lambda_.7} parent=0
    #allocation19 [shape = 'u8[512]{0}', space=vmem, size = 0x400, scoped, tag = 'output window, operand 0, single buffered']
    #allocation20 [shape = 's32[1]{0}', space=sflag, size = 0x4, scoped, tag = 'scoped memory for _lambda_.7']
    #allocation21 [shape = 'u8[512]{0}', space=vmem, size = 0x400, scoped, tag = 'output window, operand 1, single buffered']
    #allocation22 [shape = 's32[1]{0}', space=sflag, size = 0x4, scoped, tag = 'scoped memory for _lambda_.7']
    #allocation23 [shape = 'u8[512]{0}', space=vmem, size = 0x400, scoped, tag = 'output window, operand 2, single buffered']
    %14 = vsyncpa [#allocation20], 0
    %15 = vsyncpa [#allocation22], 0
    // Predicated region
    $region2: #{_lambda_.7} parent=1 // pred_check
      _
    $region3: #{_lambda_.7} parent=1 // pred_check_branch
      %17 = sbr.rel (0) target = $region5
    $region4: #{_lambda_.7} parent=1 // pred_region
      _
    $region5: #{_lambda_.7} parent=1 // pred_fallthru
      _
    // Predicated region
    $region6: #{_lambda_.7} parent=1 // pred_check
      _
    $region7: #{_lambda_.7} parent=1 // pred_check_branch
      %19 = sbr.rel (0) target = $region9
    $region8: #{_lambda_.7} parent=1 // pred_region
      _
    $region9: #{_lambda_.7} parent=1 // pred_fallthru
      _
    // Predicated region
    $region10: #{_lambda_.7} parent=1 // pred_check
      _
    $region11: #{_lambda_.7} parent=1 // pred_check_branch
      %21 = sbr.rel (0) target = $region13
    $region12: #{_lambda_.7} parent=1 // pred_region
      _
    $region13: #{_lambda_.7} parent=1 // pred_fallthru
      _
    // Predicated region
    $region14: #{_lambda_.7} parent=1 // pred_check
      _
    $region15: #{_lambda_.7} parent=1 // pred_check_branch
      %23 = sbr.rel (0) target = $region17
    $region16: #{_lambda_.7} parent=1 // pred_region
      _
    $region17: #{_lambda_.7} parent=1 // pred_fallthru
      _
    // Predicated region
    $region18: #{_lambda_.7} parent=1 // pred_check
      _
    $region19: #{_lambda_.7} parent=1 // pred_check_branch
      %25 = sbr.rel (0) target = $region21
    $region20: #{_lambda_.7} parent=1 // pred_region
      _
    $region21: #{_lambda_.7} parent=1 // pred_fallthru
      _
    // Predicated region
    $region22: #{_lambda_.7} parent=1 // pred_check
      _
    $region23: #{_lambda_.7} parent=1 // pred_check_branch
      %27 = sbr.rel (0) target = $region25
    $region24: #{_lambda_.7} parent=1 // pred_region
      _
    $region25: #{_lambda_.7} parent=1 // pred_fallthru
      _
    %p28 = scmp.eq.s32.totalorder 0, 0
    %p29 = scmp.eq.s32.totalorder 0, 0
    %p30 = pnand %p28, %p29
    %p31 = pneg %p30
    // Predicated region
    $region26: #{_lambda_.7} parent=1 // pred_check
      _
    $region27: #{_lambda_.7} parent=1 // pred_check_branch
      %33 = sbr.rel (%p30) target = $region29
    $region28: #{_lambda_.7} parent=1 // pred_region
      %vm34 = vcmask 7168
      %35 = vst.msk [vmem:[#allocation16] sm:$0xff] %vm34, 0.0
      %36 = vst.msk [vmem:[#allocation16 + $0x8] sm:$0xff] %vm34, 0.0
      %37 = vst.msk [vmem:[#allocation16 + $0x10] sm:$0xff] %vm34, 0.0
      %38 = vst.msk [vmem:[#allocation16 + $0x18] sm:$0xff] %vm34, 0.0
      %39 = vst.msk [vmem:[#allocation16 + $0x20] sm:$0xff] %vm34, 0.0
      %40 = vst.msk [vmem:[#allocation16 + $0x28] sm:$0xff] %vm34, 0.0
      %41 = vst.msk [vmem:[#allocation16 + $0x30] sm:$0xff] %vm34, 0.0
      %42 = vst.msk [vmem:[#allocation16 + $0x38] sm:$0xff] %vm34, 0.0
      %43 = vst.msk [vmem:[#allocation17] sm:$0xff] %vm34, 0.0
      %44 = vst.msk [vmem:[#allocation17 + $0x8] sm:$0xff] %vm34, 0.0
      %45 = vst.msk [vmem:[#allocation17 + $0x10] sm:$0xff] %vm34, 0.0
      %46 = vst.msk [vmem:[#allocation17 + $0x18] sm:$0xff] %vm34, 0.0
      %47 = vst.msk [vmem:[#allocation17 + $0x20] sm:$0xff] %vm34, 0.0
      %48 = vst.msk [vmem:[#allocation17 + $0x28] sm:$0xff] %vm34, 0.0
      %49 = vst.msk [vmem:[#allocation17 + $0x30] sm:$0xff] %vm34, 0.0
      %50 = vst.msk [vmem:[#allocation17 + $0x38] sm:$0xff] %vm34, 0.0
      %51 = vst.msk [vmem:[#allocation18] sm:$0xff] %vm34, 0.0
      %52 = vst.msk [vmem:[#allocation18 + $0x8] sm:$0xff] %vm34, 0.0
      %53 = vst.msk [vmem:[#allocation18 + $0x10] sm:$0xff] %vm34, 0.0
      %54 = vst.msk [vmem:[#allocation18 + $0x18] sm:$0xff] %vm34, 0.0
      %55 = vst.msk [vmem:[#allocation18 + $0x20] sm:$0xff] %vm34, 0.0
      %56 = vst.msk [vmem:[#allocation18 + $0x28] sm:$0xff] %vm34, 0.0
      %57 = vst.msk [vmem:[#allocation18 + $0x30] sm:$0xff] %vm34, 0.0
      %58 = vst.msk [vmem:[#allocation18 + $0x38] sm:$0xff] %vm34, 0.0
    $region29: #{_lambda_.7} parent=1 // pred_fallthru
      _
    // Predicated region
    $region30: #{_lambda_.7} parent=1 // pred_check
      %p59 = pneg %p29
    $region31: #{_lambda_.7} parent=1 // pred_check_branch
      %61 = sbr.rel (%p59) target = $region33
    $region32: #{_lambda_.7} parent=1 // pred_region
      %vm62 = vcmask 7168
      %63 = vst.msk [vmem:[#allocation2] sm:$0xff] %vm62, 0.0
      %64 = vst.msk [vmem:[#allocation2 + $0x8] sm:$0xff] %vm62, 0.0
      %65 = vst.msk [vmem:[#allocation2 + $0x10] sm:$0xff] %vm62, 0.0
      %66 = vst.msk [vmem:[#allocation2 + $0x18] sm:$0xff] %vm62, 0.0
      %67 = vst.msk [vmem:[#allocation2 + $0x20] sm:$0xff] %vm62, 0.0
      %68 = vst.msk [vmem:[#allocation2 + $0x28] sm:$0xff] %vm62, 0.0
      %69 = vst.msk [vmem:[#allocation2 + $0x30] sm:$0xff] %vm62, 0.0
      %70 = vst.msk [vmem:[#allocation2 + $0x38] sm:$0xff] %vm62, 0.0
      %71 = vst.msk [vmem:[#allocation3] sm:$0xff] %vm62, 0.0
      %72 = vst.msk [vmem:[#allocation3 + $0x8] sm:$0xff] %vm62, 0.0
      %73 = vst.msk [vmem:[#allocation3 + $0x10] sm:$0xff] %vm62, 0.0
      %74 = vst.msk [vmem:[#allocation3 + $0x18] sm:$0xff] %vm62, 0.0
      %75 = vst.msk [vmem:[#allocation3 + $0x20] sm:$0xff] %vm62, 0.0
      %76 = vst.msk [vmem:[#allocation3 + $0x28] sm:$0xff] %vm62, 0.0
      %77 = vst.msk [vmem:[#allocation3 + $0x30] sm:$0xff] %vm62, 0.0
      %78 = vst.msk [vmem:[#allocation3 + $0x38] sm:$0xff] %vm62, 0.0
      %79 = vst.msk [vmem:[#allocation4] sm:$0xff] %vm62, 0.0
      %80 = vst.msk [vmem:[#allocation4 + $0x8] sm:$0xff] %vm62, 0.0
      %81 = vst.msk [vmem:[#allocation4 + $0x10] sm:$0xff] %vm62, 0.0
      %82 = vst.msk [vmem:[#allocation4 + $0x18] sm:$0xff] %vm62, 0.0
      %83 = vst.msk [vmem:[#allocation4 + $0x20] sm:$0xff] %vm62, 0.0
      %84 = vst.msk [vmem:[#allocation4 + $0x28] sm:$0xff] %vm62, 0.0
      %85 = vst.msk [vmem:[#allocation4 + $0x30] sm:$0xff] %vm62, 0.0
      %86 = vst.msk [vmem:[#allocation4 + $0x38] sm:$0xff] %vm62, 0.0
      %87 = vst.msk [vmem:[#allocation5] sm:$0xff] %vm62, 0.0
      %88 = vst.msk [vmem:[#allocation5 + $0x8] sm:$0xff] %vm62, 0.0
      %89 = vst.msk [vmem:[#allocation5 + $0x10] sm:$0xff] %vm62, 0.0
      %90 = vst.msk [vmem:[#allocation5 + $0x18] sm:$0xff] %vm62, 0.0
      %91 = vst.msk [vmem:[#allocation5 + $0x20] sm:$0xff] %vm62, 0.0
      %92 = vst.msk [vmem:[#allocation5 + $0x28] sm:$0xff] %vm62, 0.0
      %93 = vst.msk [vmem:[#allocation5 + $0x30] sm:$0xff] %vm62, 0.0
      %94 = vst.msk [vmem:[#allocation5 + $0x38] sm:$0xff] %vm62, 0.0
      %95 = vst.msk [vmem:[#allocation6] sm:$0xff] %vm62, 0.0
      %96 = vst.msk [vmem:[#allocation6 + $0x8] sm:$0xff] %vm62, 0.0
      %97 = vst.msk [vmem:[#allocation6 + $0x10] sm:$0xff] %vm62, 0.0
      %98 = vst.msk [vmem:[#allocation6 + $0x18] sm:$0xff] %vm62, 0.0
      %99 = vst.msk [vmem:[#allocation6 + $0x20] sm:$0xff] %vm62, 0.0
      %100 = vst.msk [vmem:[#allocation6 + $0x28] sm:$0xff] %vm62, 0.0
      %101 = vst.msk [vmem:[#allocation6 + $0x30] sm:$0xff] %vm62, 0.0
      %102 = vst.msk [vmem:[#allocation6 + $0x38] sm:$0xff] %vm62, 0.0
      %103 = vst.msk [vmem:[#allocation7] sm:$0xff] %vm62, 0.0
      %104 = vst.msk [vmem:[#allocation7 + $0x8] sm:$0xff] %vm62, 0.0
      %105 = vst.msk [vmem:[#allocation7 + $0x10] sm:$0xff] %vm62, 0.0
      %106 = vst.msk [vmem:[#allocation7 + $0x18] sm:$0xff] %vm62, 0.0
      %107 = vst.msk [vmem:[#allocation7 + $0x20] sm:$0xff] %vm62, 0.0
      %108 = vst.msk [vmem:[#allocation7 + $0x28] sm:$0xff] %vm62, 0.0
      %109 = vst.msk [vmem:[#allocation7 + $0x30] sm:$0xff] %vm62, 0.0
      %110 = vst.msk [vmem:[#allocation7 + $0x38] sm:$0xff] %vm62, 0.0
      %111 = vst.msk [vmem:[#allocation8] sm:$0xff] %vm62, 0.0
      %112 = vst.msk [vmem:[#allocation8 + $0x8] sm:$0xff] %vm62, 0.0
      %113 = vst.msk [vmem:[#allocation8 + $0x10] sm:$0xff] %vm62, 0.0
      %114 = vst.msk [vmem:[#allocation8 + $0x18] sm:$0xff] %vm62, 0.0
      %115 = vst.msk [vmem:[#allocation8 + $0x20] sm:$0xff] %vm62, 0.0
      %116 = vst.msk [vmem:[#allocation8 + $0x28] sm:$0xff] %vm62, 0.0
      %117 = vst.msk [vmem:[#allocation8 + $0x30] sm:$0xff] %vm62, 0.0
      %118 = vst.msk [vmem:[#allocation8 + $0x38] sm:$0xff] %vm62, 0.0
      %119 = vst.msk [vmem:[#allocation9] sm:$0xff] %vm62, 0.0
      %120 = vst.msk [vmem:[#allocation9 + $0x8] sm:$0xff] %vm62, 0.0
      %121 = vst.msk [vmem:[#allocation9 + $0x10] sm:$0xff] %vm62, 0.0
      %122 = vst.msk [vmem:[#allocation9 + $0x18] sm:$0xff] %vm62, 0.0
      %123 = vst.msk [vmem:[#allocation9 + $0x20] sm:$0xff] %vm62, 0.0
      %124 = vst.msk [vmem:[#allocation9 + $0x28] sm:$0xff] %vm62, 0.0
      %125 = vst.msk [vmem:[#allocation9 + $0x30] sm:$0xff] %vm62, 0.0
      %126 = vst.msk [vmem:[#allocation9 + $0x38] sm:$0xff] %vm62, 0.0
      %127 = vst.msk [vmem:[#allocation10] sm:$0xff] %vm62, 0.0
      %128 = vst.msk [vmem:[#allocation10 + $0x8] sm:$0xff] %vm62, 0.0
      %129 = vst.msk [vmem:[#allocation10 + $0x10] sm:$0xff] %vm62, 0.0
      %130 = vst.msk [vmem:[#allocation10 + $0x18] sm:$0xff] %vm62, 0.0
      %131 = vst.msk [vmem:[#allocation10 + $0x20] sm:$0xff] %vm62, 0.0
      %132 = vst.msk [vmem:[#allocation10 + $0x28] sm:$0xff] %vm62, 0.0
      %133 = vst.msk [vmem:[#allocation10 + $0x30] sm:$0xff] %vm62, 0.0
      %134 = vst.msk [vmem:[#allocation10 + $0x38] sm:$0xff] %vm62, 0.0
      %135 = vst.msk [vmem:[#allocation11] sm:$0xff] %vm62, 0.0
      %136 = vst.msk [vmem:[#allocation11 + $0x8] sm:$0xff] %vm62, 0.0
      %137 = vst.msk [vmem:[#allocation11 + $0x10] sm:$0xff] %vm62, 0.0
      %138 = vst.msk [vmem:[#allocation11 + $0x18] sm:$0xff] %vm62, 0.0
      %139 = vst.msk [vmem:[#allocation11 + $0x20] sm:$0xff] %vm62, 0.0
      %140 = vst.msk [vmem:[#allocation11 + $0x28] sm:$0xff] %vm62, 0.0
      %141 = vst.msk [vmem:[#allocation11 + $0x30] sm:$0xff] %vm62, 0.0
      %142 = vst.msk [vmem:[#allocation11 + $0x38] sm:$0xff] %vm62, 0.0
      %143 = vst.msk [vmem:[#allocation12] sm:$0xff] %vm62, 0.0
      %144 = vst.msk [vmem:[#allocation12 + $0x8] sm:$0xff] %vm62, 0.0
      %145 = vst.msk [vmem:[#allocation12 + $0x10] sm:$0xff] %vm62, 0.0
      %146 = vst.msk [vmem:[#allocation12 + $0x18] sm:$0xff] %vm62, 0.0
      %147 = vst.msk [vmem:[#allocation12 + $0x20] sm:$0xff] %vm62, 0.0
      %148 = vst.msk [vmem:[#allocation12 + $0x28] sm:$0xff] %vm62, 0.0
      %149 = vst.msk [vmem:[#allocation12 + $0x30] sm:$0xff] %vm62, 0.0
      %150 = vst.msk [vmem:[#allocation12 + $0x38] sm:$0xff] %vm62, 0.0
      %151 = vst.msk [vmem:[#allocation13] sm:$0xff] %vm62, 0.0
      %152 = vst.msk [vmem:[#allocation13 + $0x8] sm:$0xff] %vm62, 0.0
      %153 = vst.msk [vmem:[#allocation13 + $0x10] sm:$0xff] %vm62, 0.0
      %154 = vst.msk [vmem:[#allocation13 + $0x18] sm:$0xff] %vm62, 0.0
      %155 = vst.msk [vmem:[#allocation13 + $0x20] sm:$0xff] %vm62, 0.0
      %156 = vst.msk [vmem:[#allocation13 + $0x28] sm:$0xff] %vm62, 0.0
      %157 = vst.msk [vmem:[#allocation13 + $0x30] sm:$0xff] %vm62, 0.0
      %158 = vst.msk [vmem:[#allocation13 + $0x38] sm:$0xff] %vm62, 0.0
      %159 = vst.msk [vmem:[#allocation14] sm:$0xff] %vm62, 0.0
      %160 = vst.msk [vmem:[#allocation14 + $0x8] sm:$0xff] %vm62, 0.0
      %161 = vst.msk [vmem:[#allocation14 + $0x10] sm:$0xff] %vm62, 0.0
      %162 = vst.msk [vmem:[#allocation14 + $0x18] sm:$0xff] %vm62, 0.0
      %163 = vst.msk [vmem:[#allocation14 + $0x20] sm:$0xff] %vm62, 0.0
      %164 = vst.msk [vmem:[#allocation14 + $0x28] sm:$0xff] %vm62, 0.0
      %165 = vst.msk [vmem:[#allocation14 + $0x30] sm:$0xff] %vm62, 0.0
      %166 = vst.msk [vmem:[#allocation14 + $0x38] sm:$0xff] %vm62, 0.0
      %167 = vst.msk [vmem:[#allocation15] sm:$0xff] %vm62, 0.0
      %168 = vst.msk [vmem:[#allocation15 + $0x8] sm:$0xff] %vm62, 0.0
      %169 = vst.msk [vmem:[#allocation15 + $0x10] sm:$0xff] %vm62, 0.0
      %170 = vst.msk [vmem:[#allocation15 + $0x18] sm:$0xff] %vm62, 0.0
      %171 = vst.msk [vmem:[#allocation15 + $0x20] sm:$0xff] %vm62, 0.0
      %172 = vst.msk [vmem:[#allocation15 + $0x28] sm:$0xff] %vm62, 0.0
      %173 = vst.msk [vmem:[#allocation15 + $0x30] sm:$0xff] %vm62, 0.0
      %174 = vst.msk [vmem:[#allocation15 + $0x38] sm:$0xff] %vm62, 0.0
    $region33: #{_lambda_.7} parent=1 // pred_fallthru
      _
    %v175 = vld [vmem:[%s0] sm:$0xff]
    %v176 = vld [vmem:[%s0 + $0x8] sm:$0xff]
    %v177 = vld [vmem:[%s0 + $0x10] sm:$0xff]
    %v178 = vld [vmem:[%s0 + $0x18] sm:$0xff]
    %v179 = vld [vmem:[%s0 + $0x20] sm:$0xff]
    %v180 = vld [vmem:[%s0 + $0x28] sm:$0xff]
    %v181 = vld [vmem:[%s0 + $0x30] sm:$0xff]
    %v182 = vld [vmem:[%s0 + $0x38] sm:$0xff]
    %v183 = vld [vmem:[%s1] sm:$0xff]
    %v184 = vld [vmem:[%s1 + $0x8] sm:$0xff]
    %v185 = vld [vmem:[%s1 + $0x10] sm:$0xff]
    %v186 = vld [vmem:[%s1 + $0x18] sm:$0xff]
    %v187 = vld [vmem:[%s1 + $0x20] sm:$0xff]
    %v188 = vld [vmem:[%s1 + $0x28] sm:$0xff]
    %v189 = vld [vmem:[%s1 + $0x30] sm:$0xff]
    %v190 = vld [vmem:[%s1 + $0x38] sm:$0xff]
    %v191 = vld [vmem:[%s2] sm:$0xff]
    %v192 = vld [vmem:[%s2 + $0x8] sm:$0xff]
    %v193 = vld [vmem:[%s2 + $0x10] sm:$0xff]
    %v194 = vld [vmem:[%s2 + $0x18] sm:$0xff]
    %v195 = vld [vmem:[%s2 + $0x20] sm:$0xff]
    %v196 = vld [vmem:[%s2 + $0x28] sm:$0xff]
    %v197 = vld [vmem:[%s2 + $0x30] sm:$0xff]
    %v198 = vld [vmem:[%s2 + $0x38] sm:$0xff]
    %v199 = vld [vmem:[#allocation2] sm:$0xff]
    %v200 = vld [vmem:[#allocation2 + $0x8] sm:$0xff]
    %v201 = vld [vmem:[#allocation2 + $0x10] sm:$0xff]
    %v202 = vld [vmem:[#allocation2 + $0x18] sm:$0xff]
    %v203 = vld [vmem:[#allocation2 + $0x20] sm:$0xff]
    %v204 = vld [vmem:[#allocation2 + $0x28] sm:$0xff]
    %v205 = vld [vmem:[#allocation2 + $0x30] sm:$0xff]
    %v206 = vld [vmem:[#allocation2 + $0x38] sm:$0xff]
    %vm207 = vcmask 523264
    %v208 = vsel %vm207, %v175, 0.0
    %209 = vadd.xlane.f32.xlu0 %v208
    %v210 = vpop.xlane.xlu0 %209
    %v211 = vsel %vm207, %v176, 0.0
    %212 = vadd.xlane.f32.xlu0 %v211
    %v213 = vpop.xlane.xlu0 %212
    %v214 = vsel %vm207, %v177, 0.0
    %215 = vadd.xlane.f32.xlu0 %v214
    %v216 = vpop.xlane.xlu0 %215
    %v217 = vsel %vm207, %v178, 0.0
    %218 = vadd.xlane.f32.xlu0 %v217
    %v219 = vpop.xlane.xlu0 %218
    %v220 = vsel %vm207, %v179, 0.0
    %221 = vadd.xlane.f32.xlu0 %v220
    %v222 = vpop.xlane.xlu0 %221
    %v223 = vsel %vm207, %v180, 0.0
    %224 = vadd.xlane.f32.xlu0 %v223
    %v225 = vpop.xlane.xlu0 %224
    %v226 = vsel %vm207, %v181, 0.0
    %227 = vadd.xlane.f32.xlu0 %v226
    %v228 = vpop.xlane.xlu0 %227
    %v229 = vsel %vm207, %v182, 0.0
    %230 = vadd.xlane.f32.xlu0 %v229
    %v231 = vpop.xlane.xlu0 %230
    %v232 = vadd.f32 %v199, %v210
    %v233 = vadd.f32 %v200, %v213
    %v234 = vadd.f32 %v201, %v216
    %v235 = vadd.f32 %v202, %v219
    %v236 = vadd.f32 %v203, %v222
    %v237 = vadd.f32 %v204, %v225
    %v238 = vadd.f32 %v205, %v228
    %v239 = vadd.f32 %v206, %v231
    %vm240 = vcmask 7168
    %241 = vst.msk [vmem:[#allocation2] sm:$0xff] %vm240, %v232
    %242 = vst.msk [vmem:[#allocation2 + $0x8] sm:$0xff] %vm240, %v233
    %243 = vst.msk [vmem:[#allocation2 + $0x10] sm:$0xff] %vm240, %v234
    %244 = vst.msk [vmem:[#allocation2 + $0x18] sm:$0xff] %vm240, %v235
    %245 = vst.msk [vmem:[#allocation2 + $0x20] sm:$0xff] %vm240, %v236
    %246 = vst.msk [vmem:[#allocation2 + $0x28] sm:$0xff] %vm240, %v237
    %247 = vst.msk [vmem:[#allocation2 + $0x30] sm:$0xff] %vm240, %v238
    %248 = vst.msk [vmem:[#allocation2 + $0x38] sm:$0xff] %vm240, %v239
    %v249 = vld [vmem:[#allocation3] sm:$0xff]
    %v250 = vld [vmem:[#allocation3 + $0x8] sm:$0xff]
    %v251 = vld [vmem:[#allocation3 + $0x10] sm:$0xff]
    %v252 = vld [vmem:[#allocation3 + $0x18] sm:$0xff]
    %v253 = vld [vmem:[#allocation3 + $0x20] sm:$0xff]
    %v254 = vld [vmem:[#allocation3 + $0x28] sm:$0xff]
    %v255 = vld [vmem:[#allocation3 + $0x30] sm:$0xff]
    %v256 = vld [vmem:[#allocation3 + $0x38] sm:$0xff]
    %v257 = vmul.f32 %v175, %v175
    %v258 = vmul.f32 %v176, %v176
    %v259 = vmul.f32 %v177, %v177
    %v260 = vmul.f32 %v178, %v178
    %v261 = vmul.f32 %v179, %v179
    %v262 = vmul.f32 %v180, %v180
    %v263 = vmul.f32 %v181, %v181
    %v264 = vmul.f32 %v182, %v182
    %v265 = vsel %vm207, %v257, 0.0
    %266 = vadd.xlane.f32.xlu0 %v265
    %v267 = vpop.xlane.xlu0 %266
    %v268 = vsel %vm207, %v258, 0.0
    %269 = vadd.xlane.f32.xlu0 %v268
    %v270 = vpop.xlane.xlu0 %269
    %v271 = vsel %vm207, %v259, 0.0
    %272 = vadd.xlane.f32.xlu0 %v271
    %v273 = vpop.xlane.xlu0 %272
    %v274 = vsel %vm207, %v260, 0.0
    %275 = vadd.xlane.f32.xlu0 %v274
    %v276 = vpop.xlane.xlu0 %275
    %v277 = vsel %vm207, %v261, 0.0
    %278 = vadd.xlane.f32.xlu0 %v277
    %v279 = vpop.xlane.xlu0 %278
    %v280 = vsel %vm207, %v262, 0.0
    %281 = vadd.xlane.f32.xlu0 %v280
    %v282 = vpop.xlane.xlu0 %281
    %v283 = vsel %vm207, %v263, 0.0
    %284 = vadd.xlane.f32.xlu0 %v283
    %v285 = vpop.xlane.xlu0 %284
    %v286 = vsel %vm207, %v264, 0.0
    %287 = vadd.xlane.f32.xlu0 %v286
    %v288 = vpop.xlane.xlu0 %287
    %v289 = vadd.f32 %v249, %v267
    %v290 = vadd.f32 %v250, %v270
    %v291 = vadd.f32 %v251, %v273
    %v292 = vadd.f32 %v252, %v276
    %v293 = vadd.f32 %v253, %v279
    %v294 = vadd.f32 %v254, %v282
    %v295 = vadd.f32 %v255, %v285
    %v296 = vadd.f32 %v256, %v288
    %297 = vst.msk [vmem:[#allocation3] sm:$0xff] %vm240, %v289
    %298 = vst.msk [vmem:[#allocation3 + $0x8] sm:$0xff] %vm240, %v290
    %299 = vst.msk [vmem:[#allocation3 + $0x10] sm:$0xff] %vm240, %v291
    %300 = vst.msk [vmem:[#allocation3 + $0x18] sm:$0xff] %vm240, %v292
    %301 = vst.msk [vmem:[#allocation3 + $0x20] sm:$0xff] %vm240, %v293
    %302 = vst.msk [vmem:[#allocation3 + $0x28] sm:$0xff] %vm240, %v294
    %303 = vst.msk [vmem:[#allocation3 + $0x30] sm:$0xff] %vm240, %v295
    %304 = vst.msk [vmem:[#allocation3 + $0x38] sm:$0xff] %vm240, %v296
    %v305 = vld [vmem:[#allocation4] sm:$0xff]
    %v306 = vld [vmem:[#allocation4 + $0x8] sm:$0xff]
    %v307 = vld [vmem:[#allocation4 + $0x10] sm:$0xff]
    %v308 = vld [vmem:[#allocation4 + $0x18] sm:$0xff]
    %v309 = vld [vmem:[#allocation4 + $0x20] sm:$0xff]
    %v310 = vld [vmem:[#allocation4 + $0x28] sm:$0xff]
    %v311 = vld [vmem:[#allocation4 + $0x30] sm:$0xff]
    %v312 = vld [vmem:[#allocation4 + $0x38] sm:$0xff]
    %v313 = vsel %vm207, %v183, 0.0
    %314 = vadd.xlane.f32.xlu0 %v313
    %v315 = vpop.xlane.xlu0 %314
    %v316 = vsel %vm207, %v184, 0.0
    %317 = vadd.xlane.f32.xlu0 %v316
    %v318 = vpop.xlane.xlu0 %317
    %v319 = vsel %vm207, %v185, 0.0
    %320 = vadd.xlane.f32.xlu0 %v319
    %v321 = vpop.xlane.xlu0 %320
    %v322 = vsel %vm207, %v186, 0.0
    %323 = vadd.xlane.f32.xlu0 %v322
    %v324 = vpop.xlane.xlu0 %323
    %v325 = vsel %vm207, %v187, 0.0
    %326 = vadd.xlane.f32.xlu0 %v325
    %v327 = vpop.xlane.xlu0 %326
    %v328 = vsel %vm207, %v188, 0.0
    %329 = vadd.xlane.f32.xlu0 %v328
    %v330 = vpop.xlane.xlu0 %329
    %v331 = vsel %vm207, %v189, 0.0
    %332 = vadd.xlane.f32.xlu0 %v331
    %v333 = vpop.xlane.xlu0 %332
    %v334 = vsel %vm207, %v190, 0.0
    %335 = vadd.xlane.f32.xlu0 %v334
    %v336 = vpop.xlane.xlu0 %335
    %v337 = vadd.f32 %v305, %v315
    %v338 = vadd.f32 %v306, %v318
    %v339 = vadd.f32 %v307, %v321
    %v340 = vadd.f32 %v308, %v324
    %v341 = vadd.f32 %v309, %v327
    %v342 = vadd.f32 %v310, %v330
    %v343 = vadd.f32 %v311, %v333
    %v344 = vadd.f32 %v312, %v336
    %345 = vst.msk [vmem:[#allocation4] sm:$0xff] %vm240, %v337
    %346 = vst.msk [vmem:[#allocation4 + $0x8] sm:$0xff] %vm240, %v338
    %347 = vst.msk [vmem:[#allocation4 + $0x10] sm:$0xff] %vm240, %v339
    %348 = vst.msk [vmem:[#allocation4 + $0x18] sm:$0xff] %vm240, %v340
    %349 = vst.msk [vmem:[#allocation4 + $0x20] sm:$0xff] %vm240, %v341
    %350 = vst.msk [vmem:[#allocation4 + $0x28] sm:$0xff] %vm240, %v342
    %351 = vst.msk [vmem:[#allocation4 + $0x30] sm:$0xff] %vm240, %v343
    %352 = vst.msk [vmem:[#allocation4 + $0x38] sm:$0xff] %vm240, %v344
    %v353 = vld [vmem:[#allocation5] sm:$0xff]
    %v354 = vld [vmem:[#allocation5 + $0x8] sm:$0xff]
    %v355 = vld [vmem:[#allocation5 + $0x10] sm:$0xff]
    %v356 = vld [vmem:[#allocation5 + $0x18] sm:$0xff]
    %v357 = vld [vmem:[#allocation5 + $0x20] sm:$0xff]
    %v358 = vld [vmem:[#allocation5 + $0x28] sm:$0xff]
    %v359 = vld [vmem:[#allocation5 + $0x30] sm:$0xff]
    %v360 = vld [vmem:[#allocation5 + $0x38] sm:$0xff]
    %v361 = vmul.f32 %v183, %v183
    %v362 = vmul.f32 %v184, %v184
    %v363 = vmul.f32 %v185, %v185
    %v364 = vmul.f32 %v186, %v186
    %v365 = vmul.f32 %v187, %v187
    %v366 = vmul.f32 %v188, %v188
    %v367 = vmul.f32 %v189, %v189
    %v368 = vmul.f32 %v190, %v190
    %v369 = vsel %vm207, %v361, 0.0
    %370 = vadd.xlane.f32.xlu0 %v369
    %v371 = vpop.xlane.xlu0 %370
    %v372 = vsel %vm207, %v362, 0.0
    %373 = vadd.xlane.f32.xlu0 %v372
    %v374 = vpop.xlane.xlu0 %373
    %v375 = vsel %vm207, %v363, 0.0
    %376 = vadd.xlane.f32.xlu0 %v375
    %v377 = vpop.xlane.xlu0 %376
    %v378 = vsel %vm207, %v364, 0.0
    %379 = vadd.xlane.f32.xlu0 %v378
    %v380 = vpop.xlane.xlu0 %379
    %v381 = vsel %vm207, %v365, 0.0
    %382 = vadd.xlane.f32.xlu0 %v381
    %v383 = vpop.xlane.xlu0 %382
    %v384 = vsel %vm207, %v366, 0.0
    %385 = vadd.xlane.f32.xlu0 %v384
    %v386 = vpop.xlane.xlu0 %385
    %v387 = vsel %vm207, %v367, 0.0
    %388 = vadd.xlane.f32.xlu0 %v387
    %v389 = vpop.xlane.xlu0 %388
    %v390 = vsel %vm207, %v368, 0.0
    %391 = vadd.xlane.f32.xlu0 %v390
    %v392 = vpop.xlane.xlu0 %391
    %v393 = vadd.f32 %v353, %v371
    %v394 = vadd.f32 %v354, %v374
    %v395 = vadd.f32 %v355, %v377
    %v396 = vadd.f32 %v356, %v380
    %v397 = vadd.f32 %v357, %v383
    %v398 = vadd.f32 %v358, %v386
    %v399 = vadd.f32 %v359, %v389
    %v400 = vadd.f32 %v360, %v392
    %401 = vst.msk [vmem:[#allocation5] sm:$0xff] %vm240, %v393
    %402 = vst.msk [vmem:[#allocation5 + $0x8] sm:$0xff] %vm240, %v394
    %403 = vst.msk [vmem:[#allocation5 + $0x10] sm:$0xff] %vm240, %v395
    %404 = vst.msk [vmem:[#allocation5 + $0x18] sm:$0xff] %vm240, %v396
    %405 = vst.msk [vmem:[#allocation5 + $0x20] sm:$0xff] %vm240, %v397
    %406 = vst.msk [vmem:[#allocation5 + $0x28] sm:$0xff] %vm240, %v398
    %407 = vst.msk [vmem:[#allocation5 + $0x30] sm:$0xff] %vm240, %v399
    %408 = vst.msk [vmem:[#allocation5 + $0x38] sm:$0xff] %vm240, %v400
    %v409 = vld [vmem:[#allocation6] sm:$0xff]
    %v410 = vld [vmem:[#allocation6 + $0x8] sm:$0xff]
    %v411 = vld [vmem:[#allocation6 + $0x10] sm:$0xff]
    %v412 = vld [vmem:[#allocation6 + $0x18] sm:$0xff]
    %v413 = vld [vmem:[#allocation6 + $0x20] sm:$0xff]
    %v414 = vld [vmem:[#allocation6 + $0x28] sm:$0xff]
    %v415 = vld [vmem:[#allocation6 + $0x30] sm:$0xff]
    %v416 = vld [vmem:[#allocation6 + $0x38] sm:$0xff]
    %v417 = vmul.f32 %v175, %v183
    %v418 = vmul.f32 %v176, %v184
    %v419 = vmul.f32 %v177, %v185
    %v420 = vmul.f32 %v178, %v186
    %v421 = vmul.f32 %v179, %v187
    %v422 = vmul.f32 %v180, %v188
    %v423 = vmul.f32 %v181, %v189
    %v424 = vmul.f32 %v182, %v190
    %v425 = vsel %vm207, %v417, 0.0
    %426 = vadd.xlane.f32.xlu0 %v425
    %v427 = vpop.xlane.xlu0 %426
    %v428 = vsel %vm207, %v418, 0.0
    %429 = vadd.xlane.f32.xlu0 %v428
    %v430 = vpop.xlane.xlu0 %429
    %v431 = vsel %vm207, %v419, 0.0
    %432 = vadd.xlane.f32.xlu0 %v431
    %v433 = vpop.xlane.xlu0 %432
    %v434 = vsel %vm207, %v420, 0.0
    %435 = vadd.xlane.f32.xlu0 %v434
    %v436 = vpop.xlane.xlu0 %435
    %v437 = vsel %vm207, %v421, 0.0
    %438 = vadd.xlane.f32.xlu0 %v437
    %v439 = vpop.xlane.xlu0 %438
    %v440 = vsel %vm207, %v422, 0.0
    %441 = vadd.xlane.f32.xlu0 %v440
    %v442 = vpop.xlane.xlu0 %441
    %v443 = vsel %vm207, %v423, 0.0
    %444 = vadd.xlane.f32.xlu0 %v443
    %v445 = vpop.xlane.xlu0 %444
    %v446 = vsel %vm207, %v424, 0.0
    %447 = vadd.xlane.f32.xlu0 %v446
    %v448 = vpop.xlane.xlu0 %447
    %v449 = vadd.f32 %v409, %v427
    %v450 = vadd.f32 %v410, %v430
    %v451 = vadd.f32 %v411, %v433
    %v452 = vadd.f32 %v412, %v436
    %v453 = vadd.f32 %v413, %v439
    %v454 = vadd.f32 %v414, %v442
    %v455 = vadd.f32 %v415, %v445
    %v456 = vadd.f32 %v416, %v448
    %457 = vst.msk [vmem:[#allocation6] sm:$0xff] %vm240, %v449
    %458 = vst.msk [vmem:[#allocation6 + $0x8] sm:$0xff] %vm240, %v450
    %459 = vst.msk [vmem:[#allocation6 + $0x10] sm:$0xff] %vm240, %v451
    %460 = vst.msk [vmem:[#allocation6 + $0x18] sm:$0xff] %vm240, %v452
    %461 = vst.msk [vmem:[#allocation6 + $0x20] sm:$0xff] %vm240, %v453
    %462 = vst.msk [vmem:[#allocation6 + $0x28] sm:$0xff] %vm240, %v454
    %463 = vst.msk [vmem:[#allocation6 + $0x30] sm:$0xff] %vm240, %v455
    %464 = vst.msk [vmem:[#allocation6 + $0x38] sm:$0xff] %vm240, %v456
    %v465 = vld [vmem:[#allocation7] sm:$0xff]
    %v466 = vld [vmem:[#allocation7 + $0x8] sm:$0xff]
    %v467 = vld [vmem:[#allocation7 + $0x10] sm:$0xff]
    %v468 = vld [vmem:[#allocation7 + $0x18] sm:$0xff]
    %v469 = vld [vmem:[#allocation7 + $0x20] sm:$0xff]
    %v470 = vld [vmem:[#allocation7 + $0x28] sm:$0xff]
    %v471 = vld [vmem:[#allocation7 + $0x30] sm:$0xff]
    %v472 = vld [vmem:[#allocation7 + $0x38] sm:$0xff]
    %v473 = vsel %vm207, %v191, 0.0
    %474 = vadd.xlane.f32.xlu0 %v473
    %v475 = vpop.xlane.xlu0 %474
    %v476 = vsel %vm207, %v192, 0.0
    %477 = vadd.xlane.f32.xlu0 %v476
    %v478 = vpop.xlane.xlu0 %477
    %v479 = vsel %vm207, %v193, 0.0
    %480 = vadd.xlane.f32.xlu0 %v479
    %v481 = vpop.xlane.xlu0 %480
    %v482 = vsel %vm207, %v194, 0.0
    %483 = vadd.xlane.f32.xlu0 %v482
    %v484 = vpop.xlane.xlu0 %483
    %v485 = vsel %vm207, %v195, 0.0
    %486 = vadd.xlane.f32.xlu0 %v485
    %v487 = vpop.xlane.xlu0 %486
    %v488 = vsel %vm207, %v196, 0.0
    %489 = vadd.xlane.f32.xlu0 %v488
    %v490 = vpop.xlane.xlu0 %489
    %v491 = vsel %vm207, %v197, 0.0
    %492 = vadd.xlane.f32.xlu0 %v491
    %v493 = vpop.xlane.xlu0 %492
    %v494 = vsel %vm207, %v198, 0.0
    %495 = vadd.xlane.f32.xlu0 %v494
    %v496 = vpop.xlane.xlu0 %495
    %v497 = vadd.f32 %v465, %v475
    %v498 = vadd.f32 %v466, %v478
    %v499 = vadd.f32 %v467, %v481
    %v500 = vadd.f32 %v468, %v484
    %v501 = vadd.f32 %v469, %v487
    %v502 = vadd.f32 %v470, %v490
    %v503 = vadd.f32 %v471, %v493
    %v504 = vadd.f32 %v472, %v496
    %505 = vst.msk [vmem:[#allocation7] sm:$0xff] %vm240, %v497
    %506 = vst.msk [vmem:[#allocation7 + $0x8] sm:$0xff] %vm240, %v498
    %507 = vst.msk [vmem:[#allocation7 + $0x10] sm:$0xff] %vm240, %v499
    %508 = vst.msk [vmem:[#allocation7 + $0x18] sm:$0xff] %vm240, %v500
    %509 = vst.msk [vmem:[#allocation7 + $0x20] sm:$0xff] %vm240, %v501
    %510 = vst.msk [vmem:[#allocation7 + $0x28] sm:$0xff] %vm240, %v502
    %511 = vst.msk [vmem:[#allocation7 + $0x30] sm:$0xff] %vm240, %v503
    %512 = vst.msk [vmem:[#allocation7 + $0x38] sm:$0xff] %vm240, %v504
    %v513 = vld [vmem:[#allocation8] sm:$0xff]
    %v514 = vld [vmem:[#allocation8 + $0x8] sm:$0xff]
    %v515 = vld [vmem:[#allocation8 + $0x10] sm:$0xff]
    %v516 = vld [vmem:[#allocation8 + $0x18] sm:$0xff]
    %v517 = vld [vmem:[#allocation8 + $0x20] sm:$0xff]
    %v518 = vld [vmem:[#allocation8 + $0x28] sm:$0xff]
    %v519 = vld [vmem:[#allocation8 + $0x30] sm:$0xff]
    %v520 = vld [vmem:[#allocation8 + $0x38] sm:$0xff]
    %v521 = vmul.f32 %v191, %v191
    %v522 = vmul.f32 %v192, %v192
    %v523 = vmul.f32 %v193, %v193
    %v524 = vmul.f32 %v194, %v194
    %v525 = vmul.f32 %v195, %v195
    %v526 = vmul.f32 %v196, %v196
    %v527 = vmul.f32 %v197, %v197
    %v528 = vmul.f32 %v198, %v198
    %v529 = vsel %vm207, %v521, 0.0
    %530 = vadd.xlane.f32.xlu0 %v529
    %v531 = vpop.xlane.xlu0 %530
    %v532 = vsel %vm207, %v522, 0.0
    %533 = vadd.xlane.f32.xlu0 %v532
    %v534 = vpop.xlane.xlu0 %533
    %v535 = vsel %vm207, %v523, 0.0
    %536 = vadd.xlane.f32.xlu0 %v535
    %v537 = vpop.xlane.xlu0 %536
    %v538 = vsel %vm207, %v524, 0.0
    %539 = vadd.xlane.f32.xlu0 %v538
    %v540 = vpop.xlane.xlu0 %539
    %v541 = vsel %vm207, %v525, 0.0
    %542 = vadd.xlane.f32.xlu0 %v541
    %v543 = vpop.xlane.xlu0 %542
    %v544 = vsel %vm207, %v526, 0.0
    %545 = vadd.xlane.f32.xlu0 %v544
    %v546 = vpop.xlane.xlu0 %545
    %v547 = vsel %vm207, %v527, 0.0
    %548 = vadd.xlane.f32.xlu0 %v547
    %v549 = vpop.xlane.xlu0 %548
    %v550 = vsel %vm207, %v528, 0.0
    %551 = vadd.xlane.f32.xlu0 %v550
    %v552 = vpop.xlane.xlu0 %551
    %v553 = vadd.f32 %v513, %v531
    %v554 = vadd.f32 %v514, %v534
    %v555 = vadd.f32 %v515, %v537
    %v556 = vadd.f32 %v516, %v540
    %v557 = vadd.f32 %v517, %v543
    %v558 = vadd.f32 %v518, %v546
    %v559 = vadd.f32 %v519, %v549
    %v560 = vadd.f32 %v520, %v552
    %561 = vst.msk [vmem:[#allocation8] sm:$0xff] %vm240, %v553
    %562 = vst.msk [vmem:[#allocation8 + $0x8] sm:$0xff] %vm240, %v554
    %563 = vst.msk [vmem:[#allocation8 + $0x10] sm:$0xff] %vm240, %v555
    %564 = vst.msk [vmem:[#allocation8 + $0x18] sm:$0xff] %vm240, %v556
    %565 = vst.msk [vmem:[#allocation8 + $0x20] sm:$0xff] %vm240, %v557
    %566 = vst.msk [vmem:[#allocation8 + $0x28] sm:$0xff] %vm240, %v558
    %567 = vst.msk [vmem:[#allocation8 + $0x30] sm:$0xff] %vm240, %v559
    %568 = vst.msk [vmem:[#allocation8 + $0x38] sm:$0xff] %vm240, %v560
    %v569 = vld [vmem:[%s3] sm:$0xff]
    %v570 = vld [vmem:[%s3 + $0x8] sm:$0xff]
    %v571 = vld [vmem:[%s3 + $0x10] sm:$0xff]
    %v572 = vld [vmem:[%s3 + $0x18] sm:$0xff]
    %v573 = vld [vmem:[%s3 + $0x20] sm:$0xff]
    %v574 = vld [vmem:[%s3 + $0x28] sm:$0xff]
    %v575 = vld [vmem:[%s3 + $0x30] sm:$0xff]
    %v576 = vld [vmem:[%s3 + $0x38] sm:$0xff]
    %v577 = vld [vmem:[%s4] sm:$0xff]
    %v578 = vld [vmem:[%s4 + $0x8] sm:$0xff]
    %v579 = vld [vmem:[%s4 + $0x10] sm:$0xff]
    %v580 = vld [vmem:[%s4 + $0x18] sm:$0xff]
    %v581 = vld [vmem:[%s4 + $0x20] sm:$0xff]
    %v582 = vld [vmem:[%s4 + $0x28] sm:$0xff]
    %v583 = vld [vmem:[%s4 + $0x30] sm:$0xff]
    %v584 = vld [vmem:[%s4 + $0x38] sm:$0xff]
    %v585 = vld [vmem:[%s5] sm:$0xff]
    %v586 = vld [vmem:[%s5 + $0x8] sm:$0xff]
    %v587 = vld [vmem:[%s5 + $0x10] sm:$0xff]
    %v588 = vld [vmem:[%s5 + $0x18] sm:$0xff]
    %v589 = vld [vmem:[%s5 + $0x20] sm:$0xff]
    %v590 = vld [vmem:[%s5 + $0x28] sm:$0xff]
    %v591 = vld [vmem:[%s5 + $0x30] sm:$0xff]
    %v592 = vld [vmem:[%s5 + $0x38] sm:$0xff]
    %v593 = vld [vmem:[#allocation9] sm:$0xff]
    %v594 = vld [vmem:[#allocation9 + $0x8] sm:$0xff]
    %v595 = vld [vmem:[#allocation9 + $0x10] sm:$0xff]
    %v596 = vld [vmem:[#allocation9 + $0x18] sm:$0xff]
    %v597 = vld [vmem:[#allocation9 + $0x20] sm:$0xff]
    %v598 = vld [vmem:[#allocation9 + $0x28] sm:$0xff]
    %v599 = vld [vmem:[#allocation9 + $0x30] sm:$0xff]
    %v600 = vld [vmem:[#allocation9 + $0x38] sm:$0xff]
    %v601 = vsel %vm207, %v569, 0.0
    %602 = vadd.xlane.f32.xlu0 %v601
    %v603 = vpop.xlane.xlu0 %602
    %v604 = vsel %vm207, %v570, 0.0
    %605 = vadd.xlane.f32.xlu0 %v604
    %v606 = vpop.xlane.xlu0 %605
    %v607 = vsel %vm207, %v571, 0.0
    %608 = vadd.xlane.f32.xlu0 %v607
    %v609 = vpop.xlane.xlu0 %608
    %v610 = vsel %vm207, %v572, 0.0
    %611 = vadd.xlane.f32.xlu0 %v610
    %v612 = vpop.xlane.xlu0 %611
    %v613 = vsel %vm207, %v573, 0.0
    %614 = vadd.xlane.f32.xlu0 %v613
    %v615 = vpop.xlane.xlu0 %614
    %v616 = vsel %vm207, %v574, 0.0
    %617 = vadd.xlane.f32.xlu0 %v616
    %v618 = vpop.xlane.xlu0 %617
    %v619 = vsel %vm207, %v575, 0.0
    %620 = vadd.xlane.f32.xlu0 %v619
    %v621 = vpop.xlane.xlu0 %620
    %v622 = vsel %vm207, %v576, 0.0
    %623 = vadd.xlane.f32.xlu0 %v622
    %v624 = vpop.xlane.xlu0 %623
    %v625 = vadd.f32 %v593, %v603
    %v626 = vadd.f32 %v594, %v606
    %v627 = vadd.f32 %v595, %v609
    %v628 = vadd.f32 %v596, %v612
    %v629 = vadd.f32 %v597, %v615
    %v630 = vadd.f32 %v598, %v618
    %v631 = vadd.f32 %v599, %v621
    %v632 = vadd.f32 %v600, %v624
    %633 = vst.msk [vmem:[#allocation9] sm:$0xff] %vm240, %v625
    %634 = vst.msk [vmem:[#allocation9 + $0x8] sm:$0xff] %vm240, %v626
    %635 = vst.msk [vmem:[#allocation9 + $0x10] sm:$0xff] %vm240, %v627
    %636 = vst.msk [vmem:[#allocation9 + $0x18] sm:$0xff] %vm240, %v628
    %637 = vst.msk [vmem:[#allocation9 + $0x20] sm:$0xff] %vm240, %v629
    %638 = vst.msk [vmem:[#allocation9 + $0x28] sm:$0xff] %vm240, %v630
    %639 = vst.msk [vmem:[#allocation9 + $0x30] sm:$0xff] %vm240, %v631
    %640 = vst.msk [vmem:[#allocation9 + $0x38] sm:$0xff] %vm240, %v632
    %v641 = vld [vmem:[#allocation10] sm:$0xff]
    %v642 = vld [vmem:[#allocation10 + $0x8] sm:$0xff]
    %v643 = vld [vmem:[#allocation10 + $0x10] sm:$0xff]
    %v644 = vld [vmem:[#allocation10 + $0x18] sm:$0xff]
    %v645 = vld [vmem:[#allocation10 + $0x20] sm:$0xff]
    %v646 = vld [vmem:[#allocation10 + $0x28] sm:$0xff]
    %v647 = vld [vmem:[#allocation10 + $0x30] sm:$0xff]
    %v648 = vld [vmem:[#allocation10 + $0x38] sm:$0xff]
    %v649 = vmul.f32 %v569, %v569
    %v650 = vmul.f32 %v570, %v570
    %v651 = vmul.f32 %v571, %v571
    %v652 = vmul.f32 %v572, %v572
    %v653 = vmul.f32 %v573, %v573
    %v654 = vmul.f32 %v574, %v574
    %v655 = vmul.f32 %v575, %v575
    %v656 = vmul.f32 %v576, %v576
    %v657 = vsel %vm207, %v649, 0.0
    %658 = vadd.xlane.f32.xlu0 %v657
    %v659 = vpop.xlane.xlu0 %658
    %v660 = vsel %vm207, %v650, 0.0
    %661 = vadd.xlane.f32.xlu0 %v660
    %v662 = vpop.xlane.xlu0 %661
    %v663 = vsel %vm207, %v651, 0.0
    %664 = vadd.xlane.f32.xlu0 %v663
    %v665 = vpop.xlane.xlu0 %664
    %v666 = vsel %vm207, %v652, 0.0
    %667 = vadd.xlane.f32.xlu0 %v666
    %v668 = vpop.xlane.xlu0 %667
    %v669 = vsel %vm207, %v653, 0.0
    %670 = vadd.xlane.f32.xlu0 %v669
    %v671 = vpop.xlane.xlu0 %670
    %v672 = vsel %vm207, %v654, 0.0
    %673 = vadd.xlane.f32.xlu0 %v672
    %v674 = vpop.xlane.xlu0 %673
    %v675 = vsel %vm207, %v655, 0.0
    %676 = vadd.xlane.f32.xlu0 %v675
    %v677 = vpop.xlane.xlu0 %676
    %v678 = vsel %vm207, %v656, 0.0
    %679 = vadd.xlane.f32.xlu0 %v678
    %v680 = vpop.xlane.xlu0 %679
    %v681 = vadd.f32 %v641, %v659
    %v682 = vadd.f32 %v642, %v662
    %v683 = vadd.f32 %v643, %v665
    %v684 = vadd.f32 %v644, %v668
    %v685 = vadd.f32 %v645, %v671
    %v686 = vadd.f32 %v646, %v674
    %v687 = vadd.f32 %v647, %v677
    %v688 = vadd.f32 %v648, %v680
    %689 = vst.msk [vmem:[#allocation10] sm:$0xff] %vm240, %v681
    %690 = vst.msk [vmem:[#allocation10 + $0x8] sm:$0xff] %vm240, %v682
    %691 = vst.msk [vmem:[#allocation10 + $0x10] sm:$0xff] %vm240, %v683
    %692 = vst.msk [vmem:[#allocation10 + $0x18] sm:$0xff] %vm240, %v684
    %693 = vst.msk [vmem:[#allocation10 + $0x20] sm:$0xff] %vm240, %v685
    %694 = vst.msk [vmem:[#allocation10 + $0x28] sm:$0xff] %vm240, %v686
    %695 = vst.msk [vmem:[#allocation10 + $0x30] sm:$0xff] %vm240, %v687
    %696 = vst.msk [vmem:[#allocation10 + $0x38] sm:$0xff] %vm240, %v688
    %v697 = vld [vmem:[#allocation11] sm:$0xff]
    %v698 = vld [vmem:[#allocation11 + $0x8] sm:$0xff]
    %v699 = vld [vmem:[#allocation11 + $0x10] sm:$0xff]
    %v700 = vld [vmem:[#allocation11 + $0x18] sm:$0xff]
    %v701 = vld [vmem:[#allocation11 + $0x20] sm:$0xff]
    %v702 = vld [vmem:[#allocation11 + $0x28] sm:$0xff]
    %v703 = vld [vmem:[#allocation11 + $0x30] sm:$0xff]
    %v704 = vld [vmem:[#allocation11 + $0x38] sm:$0xff]
    %v705 = vsel %vm207, %v577, 0.0
    %706 = vadd.xlane.f32.xlu0 %v705
    %v707 = vpop.xlane.xlu0 %706
    %v708 = vsel %vm207, %v578, 0.0
    %709 = vadd.xlane.f32.xlu0 %v708
    %v710 = vpop.xlane.xlu0 %709
    %v711 = vsel %vm207, %v579, 0.0
    %712 = vadd.xlane.f32.xlu0 %v711
    %v713 = vpop.xlane.xlu0 %712
    %v714 = vsel %vm207, %v580, 0.0
    %715 = vadd.xlane.f32.xlu0 %v714
    %v716 = vpop.xlane.xlu0 %715
    %v717 = vsel %vm207, %v581, 0.0
    %718 = vadd.xlane.f32.xlu0 %v717
    %v719 = vpop.xlane.xlu0 %718
    %v720 = vsel %vm207, %v582, 0.0
    %721 = vadd.xlane.f32.xlu0 %v720
    %v722 = vpop.xlane.xlu0 %721
    %v723 = vsel %vm207, %v583, 0.0
    %724 = vadd.xlane.f32.xlu0 %v723
    %v725 = vpop.xlane.xlu0 %724
    %v726 = vsel %vm207, %v584, 0.0
    %727 = vadd.xlane.f32.xlu0 %v726
    %v728 = vpop.xlane.xlu0 %727
    %v729 = vadd.f32 %v697, %v707
    %v730 = vadd.f32 %v698, %v710
    %v731 = vadd.f32 %v699, %v713
    %v732 = vadd.f32 %v700, %v716
    %v733 = vadd.f32 %v701, %v719
    %v734 = vadd.f32 %v702, %v722
    %v735 = vadd.f32 %v703, %v725
    %v736 = vadd.f32 %v704, %v728
    %737 = vst.msk [vmem:[#allocation11] sm:$0xff] %vm240, %v729
    %738 = vst.msk [vmem:[#allocation11 + $0x8] sm:$0xff] %vm240, %v730
    %739 = vst.msk [vmem:[#allocation11 + $0x10] sm:$0xff] %vm240, %v731
    %740 = vst.msk [vmem:[#allocation11 + $0x18] sm:$0xff] %vm240, %v732
    %741 = vst.msk [vmem:[#allocation11 + $0x20] sm:$0xff] %vm240, %v733
    %742 = vst.msk [vmem:[#allocation11 + $0x28] sm:$0xff] %vm240, %v734
    %743 = vst.msk [vmem:[#allocation11 + $0x30] sm:$0xff] %vm240, %v735
    %744 = vst.msk [vmem:[#allocation11 + $0x38] sm:$0xff] %vm240, %v736
    %v745 = vld [vmem:[#allocation12] sm:$0xff]
    %v746 = vld [vmem:[#allocation12 + $0x8] sm:$0xff]
    %v747 = vld [vmem:[#allocation12 + $0x10] sm:$0xff]
    %v748 = vld [vmem:[#allocation12 + $0x18] sm:$0xff]
    %v749 = vld [vmem:[#allocation12 + $0x20] sm:$0xff]
    %v750 = vld [vmem:[#allocation12 + $0x28] sm:$0xff]
    %v751 = vld [vmem:[#allocation12 + $0x30] sm:$0xff]
    %v752 = vld [vmem:[#allocation12 + $0x38] sm:$0xff]
    %v753 = vmul.f32 %v577, %v577
    %v754 = vmul.f32 %v578, %v578
    %v755 = vmul.f32 %v579, %v579
    %v756 = vmul.f32 %v580, %v580
    %v757 = vmul.f32 %v581, %v581
    %v758 = vmul.f32 %v582, %v582
    %v759 = vmul.f32 %v583, %v583
    %v760 = vmul.f32 %v584, %v584
    %v761 = vsel %vm207, %v753, 0.0
    %762 = vadd.xlane.f32.xlu0 %v761
    %v763 = vpop.xlane.xlu0 %762
    %v764 = vsel %vm207, %v754, 0.0
    %765 = vadd.xlane.f32.xlu0 %v764
    %v766 = vpop.xlane.xlu0 %765
    %v767 = vsel %vm207, %v755, 0.0
    %768 = vadd.xlane.f32.xlu0 %v767
    %v769 = vpop.xlane.xlu0 %768
    %v770 = vsel %vm207, %v756, 0.0
    %771 = vadd.xlane.f32.xlu0 %v770
    %v772 = vpop.xlane.xlu0 %771
    %v773 = vsel %vm207, %v757, 0.0
    %774 = vadd.xlane.f32.xlu0 %v773
    %v775 = vpop.xlane.xlu0 %774
    %v776 = vsel %vm207, %v758, 0.0
    %777 = vadd.xlane.f32.xlu0 %v776
    %v778 = vpop.xlane.xlu0 %777
    %v779 = vsel %vm207, %v759, 0.0
    %780 = vadd.xlane.f32.xlu0 %v779
    %v781 = vpop.xlane.xlu0 %780
    %v782 = vsel %vm207, %v760, 0.0
    %783 = vadd.xlane.f32.xlu0 %v782
    %v784 = vpop.xlane.xlu0 %783
    %v785 = vadd.f32 %v745, %v763
    %v786 = vadd.f32 %v746, %v766
    %v787 = vadd.f32 %v747, %v769
    %v788 = vadd.f32 %v748, %v772
    %v789 = vadd.f32 %v749, %v775
    %v790 = vadd.f32 %v750, %v778
    %v791 = vadd.f32 %v751, %v781
    %v792 = vadd.f32 %v752, %v784
    %793 = vst.msk [vmem:[#allocation12] sm:$0xff] %vm240, %v785
    %794 = vst.msk [vmem:[#allocation12 + $0x8] sm:$0xff] %vm240, %v786
    %795 = vst.msk [vmem:[#allocation12 + $0x10] sm:$0xff] %vm240, %v787
    %796 = vst.msk [vmem:[#allocation12 + $0x18] sm:$0xff] %vm240, %v788
    %797 = vst.msk [vmem:[#allocation12 + $0x20] sm:$0xff] %vm240, %v789
    %798 = vst.msk [vmem:[#allocation12 + $0x28] sm:$0xff] %vm240, %v790
    %799 = vst.msk [vmem:[#allocation12 + $0x30] sm:$0xff] %vm240, %v791
    %800 = vst.msk [vmem:[#allocation12 + $0x38] sm:$0xff] %vm240, %v792
    %v801 = vld [vmem:[#allocation13] sm:$0xff]
    %v802 = vld [vmem:[#allocation13 + $0x8] sm:$0xff]
    %v803 = vld [vmem:[#allocation13 + $0x10] sm:$0xff]
    %v804 = vld [vmem:[#allocation13 + $0x18] sm:$0xff]
    %v805 = vld [vmem:[#allocation13 + $0x20] sm:$0xff]
    %v806 = vld [vmem:[#allocation13 + $0x28] sm:$0xff]
    %v807 = vld [vmem:[#allocation13 + $0x30] sm:$0xff]
    %v808 = vld [vmem:[#allocation13 + $0x38] sm:$0xff]
    %v809 = vmul.f32 %v569, %v577
    %v810 = vmul.f32 %v570, %v578
    %v811 = vmul.f32 %v571, %v579
    %v812 = vmul.f32 %v572, %v580
    %v813 = vmul.f32 %v573, %v581
    %v814 = vmul.f32 %v574, %v582
    %v815 = vmul.f32 %v575, %v583
    %v816 = vmul.f32 %v576, %v584
    %v817 = vsel %vm207, %v809, 0.0
    %818 = vadd.xlane.f32.xlu0 %v817
    %v819 = vpop.xlane.xlu0 %818
    %v820 = vsel %vm207, %v810, 0.0
    %821 = vadd.xlane.f32.xlu0 %v820
    %v822 = vpop.xlane.xlu0 %821
    %v823 = vsel %vm207, %v811, 0.0
    %824 = vadd.xlane.f32.xlu0 %v823
    %v825 = vpop.xlane.xlu0 %824
    %v826 = vsel %vm207, %v812, 0.0
    %827 = vadd.xlane.f32.xlu0 %v826
    %v828 = vpop.xlane.xlu0 %827
    %v829 = vsel %vm207, %v813, 0.0
    %830 = vadd.xlane.f32.xlu0 %v829
    %v831 = vpop.xlane.xlu0 %830
    %v832 = vsel %vm207, %v814, 0.0
    %833 = vadd.xlane.f32.xlu0 %v832
    %v834 = vpop.xlane.xlu0 %833
    %v835 = vsel %vm207, %v815, 0.0
    %836 = vadd.xlane.f32.xlu0 %v835
    %v837 = vpop.xlane.xlu0 %836
    %v838 = vsel %vm207, %v816, 0.0
    %839 = vadd.xlane.f32.xlu0 %v838
    %v840 = vpop.xlane.xlu0 %839
    %v841 = vadd.f32 %v801, %v819
    %v842 = vadd.f32 %v802, %v822
    %v843 = vadd.f32 %v803, %v825
    %v844 = vadd.f32 %v804, %v828
    %v845 = vadd.f32 %v805, %v831
    %v846 = vadd.f32 %v806, %v834
    %v847 = vadd.f32 %v807, %v837
    %v848 = vadd.f32 %v808, %v840
    %849 = vst.msk [vmem:[#allocation13] sm:$0xff] %vm240, %v841
    %850 = vst.msk [vmem:[#allocation13 + $0x8] sm:$0xff] %vm240, %v842
    %851 = vst.msk [vmem:[#allocation13 + $0x10] sm:$0xff] %vm240, %v843
    %852 = vst.msk [vmem:[#allocation13 + $0x18] sm:$0xff] %vm240, %v844
    %853 = vst.msk [vmem:[#allocation13 + $0x20] sm:$0xff] %vm240, %v845
    %854 = vst.msk [vmem:[#allocation13 + $0x28] sm:$0xff] %vm240, %v846
    %855 = vst.msk [vmem:[#allocation13 + $0x30] sm:$0xff] %vm240, %v847
    %856 = vst.msk [vmem:[#allocation13 + $0x38] sm:$0xff] %vm240, %v848
    %v857 = vld [vmem:[#allocation14] sm:$0xff]
    %v858 = vld [vmem:[#allocation14 + $0x8] sm:$0xff]
    %v859 = vld [vmem:[#allocation14 + $0x10] sm:$0xff]
    %v860 = vld [vmem:[#allocation14 + $0x18] sm:$0xff]
    %v861 = vld [vmem:[#allocation14 + $0x20] sm:$0xff]
    %v862 = vld [vmem:[#allocation14 + $0x28] sm:$0xff]
    %v863 = vld [vmem:[#allocation14 + $0x30] sm:$0xff]
    %v864 = vld [vmem:[#allocation14 + $0x38] sm:$0xff]
    %v865 = vsel %vm207, %v585, 0.0
    %866 = vadd.xlane.f32.xlu0 %v865
    %v867 = vpop.xlane.xlu0 %866
    %v868 = vsel %vm207, %v586, 0.0
    %869 = vadd.xlane.f32.xlu0 %v868
    %v870 = vpop.xlane.xlu0 %869
    %v871 = vsel %vm207, %v587, 0.0
    %872 = vadd.xlane.f32.xlu0 %v871
    %v873 = vpop.xlane.xlu0 %872
    %v874 = vsel %vm207, %v588, 0.0
    %875 = vadd.xlane.f32.xlu0 %v874
    %v876 = vpop.xlane.xlu0 %875
    %v877 = vsel %vm207, %v589, 0.0
    %878 = vadd.xlane.f32.xlu0 %v877
    %v879 = vpop.xlane.xlu0 %878
    %v880 = vsel %vm207, %v590, 0.0
    %881 = vadd.xlane.f32.xlu0 %v880
    %v882 = vpop.xlane.xlu0 %881
    %v883 = vsel %vm207, %v591, 0.0
    %884 = vadd.xlane.f32.xlu0 %v883
    %v885 = vpop.xlane.xlu0 %884
    %v886 = vsel %vm207, %v592, 0.0
    %887 = vadd.xlane.f32.xlu0 %v886
    %v888 = vpop.xlane.xlu0 %887
    %v889 = vadd.f32 %v857, %v867
    %v890 = vadd.f32 %v858, %v870
    %v891 = vadd.f32 %v859, %v873
    %v892 = vadd.f32 %v860, %v876
    %v893 = vadd.f32 %v861, %v879
    %v894 = vadd.f32 %v862, %v882
    %v895 = vadd.f32 %v863, %v885
    %v896 = vadd.f32 %v864, %v888
    %897 = vst.msk [vmem:[#allocation14] sm:$0xff] %vm240, %v889
    %898 = vst.msk [vmem:[#allocation14 + $0x8] sm:$0xff] %vm240, %v890
    %899 = vst.msk [vmem:[#allocation14 + $0x10] sm:$0xff] %vm240, %v891
    %900 = vst.msk [vmem:[#allocation14 + $0x18] sm:$0xff] %vm240, %v892
    %901 = vst.msk [vmem:[#allocation14 + $0x20] sm:$0xff] %vm240, %v893
    %902 = vst.msk [vmem:[#allocation14 + $0x28] sm:$0xff] %vm240, %v894
    %903 = vst.msk [vmem:[#allocation14 + $0x30] sm:$0xff] %vm240, %v895
    %904 = vst.msk [vmem:[#allocation14 + $0x38] sm:$0xff] %vm240, %v896
    %v905 = vld [vmem:[#allocation15] sm:$0xff]
    %v906 = vld [vmem:[#allocation15 + $0x8] sm:$0xff]
    %v907 = vld [vmem:[#allocation15 + $0x10] sm:$0xff]
    %v908 = vld [vmem:[#allocation15 + $0x18] sm:$0xff]
    %v909 = vld [vmem:[#allocation15 + $0x20] sm:$0xff]
    %v910 = vld [vmem:[#allocation15 + $0x28] sm:$0xff]
    %v911 = vld [vmem:[#allocation15 + $0x30] sm:$0xff]
    %v912 = vld [vmem:[#allocation15 + $0x38] sm:$0xff]
    %v913 = vmul.f32 %v585, %v585
    %v914 = vmul.f32 %v586, %v586
    %v915 = vmul.f32 %v587, %v587
    %v916 = vmul.f32 %v588, %v588
    %v917 = vmul.f32 %v589, %v589
    %v918 = vmul.f32 %v590, %v590
    %v919 = vmul.f32 %v591, %v591
    %v920 = vmul.f32 %v592, %v592
    %v921 = vsel %vm207, %v913, 0.0
    %922 = vadd.xlane.f32.xlu0 %v921
    %v923 = vpop.xlane.xlu0 %922
    %v924 = vsel %vm207, %v914, 0.0
    %925 = vadd.xlane.f32.xlu0 %v924
    %v926 = vpop.xlane.xlu0 %925
    %v927 = vsel %vm207, %v915, 0.0
    %928 = vadd.xlane.f32.xlu0 %v927
    %v929 = vpop.xlane.xlu0 %928
    %v930 = vsel %vm207, %v916, 0.0
    %931 = vadd.xlane.f32.xlu0 %v930
    %v932 = vpop.xlane.xlu0 %931
    %v933 = vsel %vm207, %v917, 0.0
    %934 = vadd.xlane.f32.xlu0 %v933
    %v935 = vpop.xlane.xlu0 %934
    %v936 = vsel %vm207, %v918, 0.0
    %937 = vadd.xlane.f32.xlu0 %v936
    %v938 = vpop.xlane.xlu0 %937
    %v939 = vsel %vm207, %v919, 0.0
    %940 = vadd.xlane.f32.xlu0 %v939
    %v941 = vpop.xlane.xlu0 %940
    %v942 = vsel %vm207, %v920, 0.0
    %943 = vadd.xlane.f32.xlu0 %v942
    %v944 = vpop.xlane.xlu0 %943
    %v945 = vadd.f32 %v905, %v923
    %v946 = vadd.f32 %v906, %v926
    %v947 = vadd.f32 %v907, %v929
    %v948 = vadd.f32 %v908, %v932
    %v949 = vadd.f32 %v909, %v935
    %v950 = vadd.f32 %v910, %v938
    %v951 = vadd.f32 %v911, %v941
    %v952 = vadd.f32 %v912, %v944
    %953 = vst.msk [vmem:[#allocation15] sm:$0xff] %vm240, %v945
    %954 = vst.msk [vmem:[#allocation15 + $0x8] sm:$0xff] %vm240, %v946
    %955 = vst.msk [vmem:[#allocation15 + $0x10] sm:$0xff] %vm240, %v947
    %956 = vst.msk [vmem:[#allocation15 + $0x18] sm:$0xff] %vm240, %v948
    %957 = vst.msk [vmem:[#allocation15 + $0x20] sm:$0xff] %vm240, %v949
    %958 = vst.msk [vmem:[#allocation15 + $0x28] sm:$0xff] %vm240, %v950
    %959 = vst.msk [vmem:[#allocation15 + $0x30] sm:$0xff] %vm240, %v951
    %960 = vst.msk [vmem:[#allocation15 + $0x38] sm:$0xff] %vm240, %v952
    // Predicated region
    $region34: #{_lambda_.7} parent=1 // pred_check
      %p961 = pneg %p29
    $region35: #{_lambda_.7} parent=1 // pred_check_branch
      %963 = sbr.rel (%p961) target = $region37
    $region36: #{_lambda_.7} parent=1 // pred_region
      %v964 = vld [vmem:[#allocation2] sm:$0xff]
      %v965 = vld [vmem:[#allocation2 + $0x8] sm:$0xff]
      %v966 = vld [vmem:[#allocation2 + $0x10] sm:$0xff]
      %v967 = vld [vmem:[#allocation2 + $0x18] sm:$0xff]
      %v968 = vld [vmem:[#allocation2 + $0x20] sm:$0xff]
      %v969 = vld [vmem:[#allocation2 + $0x28] sm:$0xff]
      %v970 = vld [vmem:[#allocation2 + $0x30] sm:$0xff]
      %v971 = vld [vmem:[#allocation2 + $0x38] sm:$0xff]
      %v972 = vld [vmem:[#allocation3] sm:$0xff]
      %v973 = vld [vmem:[#allocation3 + $0x8] sm:$0xff]
      %v974 = vld [vmem:[#allocation3 + $0x10] sm:$0xff]
      %v975 = vld [vmem:[#allocation3 + $0x18] sm:$0xff]
      %v976 = vld [vmem:[#allocation3 + $0x20] sm:$0xff]
      %v977 = vld [vmem:[#allocation3 + $0x28] sm:$0xff]
      %v978 = vld [vmem:[#allocation3 + $0x30] sm:$0xff]
      %v979 = vld [vmem:[#allocation3 + $0x38] sm:$0xff]
      %v980 = vld [vmem:[#allocation4] sm:$0xff]
      %v981 = vld [vmem:[#allocation4 + $0x8] sm:$0xff]
      %v982 = vld [vmem:[#allocation4 + $0x10] sm:$0xff]
      %v983 = vld [vmem:[#allocation4 + $0x18] sm:$0xff]
      %v984 = vld [vmem:[#allocation4 + $0x20] sm:$0xff]
      %v985 = vld [vmem:[#allocation4 + $0x28] sm:$0xff]
      %v986 = vld [vmem:[#allocation4 + $0x30] sm:$0xff]
      %v987 = vld [vmem:[#allocation4 + $0x38] sm:$0xff]
      %v988 = vld [vmem:[#allocation5] sm:$0xff]
      %v989 = vld [vmem:[#allocation5 + $0x8] sm:$0xff]
      %v990 = vld [vmem:[#allocation5 + $0x10] sm:$0xff]
      %v991 = vld [vmem:[#allocation5 + $0x18] sm:$0xff]
      %v992 = vld [vmem:[#allocation5 + $0x20] sm:$0xff]
      %v993 = vld [vmem:[#allocation5 + $0x28] sm:$0xff]
      %v994 = vld [vmem:[#allocation5 + $0x30] sm:$0xff]
      %v995 = vld [vmem:[#allocation5 + $0x38] sm:$0xff]
      %v996 = vld [vmem:[#allocation6] sm:$0xff]
      %v997 = vld [vmem:[#allocation6 + $0x8] sm:$0xff]
      %v998 = vld [vmem:[#allocation6 + $0x10] sm:$0xff]
      %v999 = vld [vmem:[#allocation6 + $0x18] sm:$0xff]
      %v1000 = vld [vmem:[#allocation6 + $0x20] sm:$0xff]
      %v1001 = vld [vmem:[#allocation6 + $0x28] sm:$0xff]
      %v1002 = vld [vmem:[#allocation6 + $0x30] sm:$0xff]
      %v1003 = vld [vmem:[#allocation6 + $0x38] sm:$0xff]
      %v1004 = vld [vmem:[#allocation7] sm:$0xff]
      %v1005 = vld [vmem:[#allocation7 + $0x8] sm:$0xff]
      %v1006 = vld [vmem:[#allocation7 + $0x10] sm:$0xff]
      %v1007 = vld [vmem:[#allocation7 + $0x18] sm:$0xff]
      %v1008 = vld [vmem:[#allocation7 + $0x20] sm:$0xff]
      %v1009 = vld [vmem:[#allocation7 + $0x28] sm:$0xff]
      %v1010 = vld [vmem:[#allocation7 + $0x30] sm:$0xff]
      %v1011 = vld [vmem:[#allocation7 + $0x38] sm:$0xff]
      %v1012 = vld [vmem:[#allocation8] sm:$0xff]
      %v1013 = vld [vmem:[#allocation8 + $0x8] sm:$0xff]
      %v1014 = vld [vmem:[#allocation8 + $0x10] sm:$0xff]
      %v1015 = vld [vmem:[#allocation8 + $0x18] sm:$0xff]
      %v1016 = vld [vmem:[#allocation8 + $0x20] sm:$0xff]
      %v1017 = vld [vmem:[#allocation8 + $0x28] sm:$0xff]
      %v1018 = vld [vmem:[#allocation8 + $0x30] sm:$0xff]
      %v1019 = vld [vmem:[#allocation8 + $0x38] sm:$0xff]
      %v1020 = vmul.f32 %v964, 0.015625
      %v1021 = vmul.f32 %v965, 0.015625
      %v1022 = vmul.f32 %v966, 0.015625
      %v1023 = vmul.f32 %v967, 0.015625
      %v1024 = vmul.f32 %v968, 0.015625
      %v1025 = vmul.f32 %v969, 0.015625
      %v1026 = vmul.f32 %v970, 0.015625
      %v1027 = vmul.f32 %v971, 0.015625
      %v1028 = vmul.f32 %v1004, 0.015625
      %v1029 = vmul.f32 %v1005, 0.015625
      %v1030 = vmul.f32 %v1006, 0.015625
      %v1031 = vmul.f32 %v1007, 0.015625
      %v1032 = vmul.f32 %v1008, 0.015625
      %v1033 = vmul.f32 %v1009, 0.015625
      %v1034 = vmul.f32 %v1010, 0.015625
      %v1035 = vmul.f32 %v1011, 0.015625
      %v1036 = vmul.f32 %v1020, 64.0
      %v1037 = vmul.f32 %v1021, 64.0
      %v1038 = vmul.f32 %v1022, 64.0
      %v1039 = vmul.f32 %v1023, 64.0
      %v1040 = vmul.f32 %v1024, 64.0
      %v1041 = vmul.f32 %v1025, 64.0
      %v1042 = vmul.f32 %v1026, 64.0
      %v1043 = vmul.f32 %v1027, 64.0
      %v1044 = vmul.f32 %v1036, %v1020
      %v1045 = vmul.f32 %v1037, %v1021
      %v1046 = vmul.f32 %v1038, %v1022
      %v1047 = vmul.f32 %v1039, %v1023
      %v1048 = vmul.f32 %v1040, %v1024
      %v1049 = vmul.f32 %v1041, %v1025
      %v1050 = vmul.f32 %v1042, %v1026
      %v1051 = vmul.f32 %v1043, %v1027
      %v1052 = vsub.f32 %v972, %v1044
      %v1053 = vsub.f32 %v973, %v1045
      %v1054 = vsub.f32 %v974, %v1046
      %v1055 = vsub.f32 %v975, %v1047
      %v1056 = vsub.f32 %v976, %v1048
      %v1057 = vsub.f32 %v977, %v1049
      %v1058 = vsub.f32 %v978, %v1050
      %v1059 = vsub.f32 %v979, %v1051
      %v1060 = vmul.f32 %v1052, 0.015873017
      %v1061 = vmul.f32 %v1053, 0.015873017
      %v1062 = vmul.f32 %v1054, 0.015873017
      %v1063 = vmul.f32 %v1055, 0.015873017
      %v1064 = vmul.f32 %v1056, 0.015873017
      %v1065 = vmul.f32 %v1057, 0.015873017
      %v1066 = vmul.f32 %v1058, 0.015873017
      %v1067 = vmul.f32 %v1059, 0.015873017
      %v1068 = vmax.f32 %v1060, 0.0
      %v1069 = vmax.f32 %v1061, 0.0
      %v1070 = vmax.f32 %v1062, 0.0
      %v1071 = vmax.f32 %v1063, 0.0
      %v1072 = vmax.f32 %v1064, 0.0
      %v1073 = vmax.f32 %v1065, 0.0
      %v1074 = vmax.f32 %v1066, 0.0
      %v1075 = vmax.f32 %v1067, 0.0
      %v1076 = vmul.f32 %v1028, 64.0
      %v1077 = vmul.f32 %v1029, 64.0
      %v1078 = vmul.f32 %v1030, 64.0
      %v1079 = vmul.f32 %v1031, 64.0
      %v1080 = vmul.f32 %v1032, 64.0
      %v1081 = vmul.f32 %v1033, 64.0
      %v1082 = vmul.f32 %v1034, 64.0
      %v1083 = vmul.f32 %v1035, 64.0
      %v1084 = vmul.f32 %v1076, %v1028
      %v1085 = vmul.f32 %v1077, %v1029
      %v1086 = vmul.f32 %v1078, %v1030
      %v1087 = vmul.f32 %v1079, %v1031
      %v1088 = vmul.f32 %v1080, %v1032
      %v1089 = vmul.f32 %v1081, %v1033
      %v1090 = vmul.f32 %v1082, %v1034
      %v1091 = vmul.f32 %v1083, %v1035
      %v1092 = vsub.f32 %v1012, %v1084
      %v1093 = vsub.f32 %v1013, %v1085
      %v1094 = vsub.f32 %v1014, %v1086
      %v1095 = vsub.f32 %v1015, %v1087
      %v1096 = vsub.f32 %v1016, %v1088
      %v1097 = vsub.f32 %v1017, %v1089
      %v1098 = vsub.f32 %v1018, %v1090
      %v1099 = vsub.f32 %v1019, %v1091
      %v1100 = vmul.f32 %v1092, 0.015873017
      %v1101 = vmul.f32 %v1093, 0.015873017
      %v1102 = vmul.f32 %v1094, 0.015873017
      %v1103 = vmul.f32 %v1095, 0.015873017
      %v1104 = vmul.f32 %v1096, 0.015873017
      %v1105 = vmul.f32 %v1097, 0.015873017
      %v1106 = vmul.f32 %v1098, 0.015873017
      %v1107 = vmul.f32 %v1099, 0.015873017
      %v1108 = vmax.f32 %v1100, 0.0
      %v1109 = vmax.f32 %v1101, 0.0
      %v1110 = vmax.f32 %v1102, 0.0
      %v1111 = vmax.f32 %v1103, 0.0
      %v1112 = vmax.f32 %v1104, 0.0
      %v1113 = vmax.f32 %v1105, 0.0
      %v1114 = vmax.f32 %v1106, 0.0
      %v1115 = vmax.f32 %v1107, 0.0
      %v1116 = vsub.f32 %v1020, %v1028
      %v1117 = vsub.f32 %v1021, %v1029
      %v1118 = vsub.f32 %v1022, %v1030
      %v1119 = vsub.f32 %v1023, %v1031
      %v1120 = vsub.f32 %v1024, %v1032
      %v1121 = vsub.f32 %v1025, %v1033
      %v1122 = vsub.f32 %v1026, %v1034
      %v1123 = vsub.f32 %v1027, %v1035
      %v1124 = vmul.f32 %v1116, %v1116
      %v1125 = vmul.f32 %v1117, %v1117
      %v1126 = vmul.f32 %v1118, %v1118
      %v1127 = vmul.f32 %v1119, %v1119
      %v1128 = vmul.f32 %v1120, %v1120
      %v1129 = vmul.f32 %v1121, %v1121
      %v1130 = vmul.f32 %v1122, %v1122
      %v1131 = vmul.f32 %v1123, %v1123
      %v1132 = vrsqrt.pop %v1068
      %v1133 = vmul.f32 %v1068, %v1132
      %vm1134 = vcmp.eq.f32.partialorder %v1068, inf
      %v1135 = vsel %vm1134, %v1068, %v1133
      %vm1136 = vcmp.eq.f32.partialorder %v1068, 0.0
      %v1137 = vand.u32 %v1068, 2147483648
      %v1138 = vsel %vm1136, %v1137, %v1135
      %v1139 = vrsqrt.pop %v1069
      %v1140 = vmul.f32 %v1069, %v1139
      %vm1141 = vcmp.eq.f32.partialorder %v1069, inf
      %v1142 = vsel %vm1141, %v1069, %v1140
      %vm1143 = vcmp.eq.f32.partialorder %v1069, 0.0
      %v1144 = vand.u32 %v1069, 2147483648
      %v1145 = vsel %vm1143, %v1144, %v1142
      %v1146 = vrsqrt.pop %v1070
      %v1147 = vmul.f32 %v1070, %v1146
      %vm1148 = vcmp.eq.f32.partialorder %v1070, inf
      %v1149 = vsel %vm1148, %v1070, %v1147
      %vm1150 = vcmp.eq.f32.partialorder %v1070, 0.0
      %v1151 = vand.u32 %v1070, 2147483648
      %v1152 = vsel %vm1150, %v1151, %v1149
      %v1153 = vrsqrt.pop %v1071
      %v1154 = vmul.f32 %v1071, %v1153
      %vm1155 = vcmp.eq.f32.partialorder %v1071, inf
      %v1156 = vsel %vm1155, %v1071, %v1154
      %vm1157 = vcmp.eq.f32.partialorder %v1071, 0.0
      %v1158 = vand.u32 %v1071, 2147483648
      %v1159 = vsel %vm1157, %v1158, %v1156
      %v1160 = vrsqrt.pop %v1072
      %v1161 = vmul.f32 %v1072, %v1160
      %vm1162 = vcmp.eq.f32.partialorder %v1072, inf
      %v1163 = vsel %vm1162, %v1072, %v1161
      %vm1164 = vcmp.eq.f32.partialorder %v1072, 0.0
      %v1165 = vand.u32 %v1072, 2147483648
      %v1166 = vsel %vm1164, %v1165, %v1163
      %v1167 = vrsqrt.pop %v1073
      %v1168 = vmul.f32 %v1073, %v1167
      %vm1169 = vcmp.eq.f32.partialorder %v1073, inf
      %v1170 = vsel %vm1169, %v1073, %v1168
      %vm1171 = vcmp.eq.f32.partialorder %v1073, 0.0
      %v1172 = vand.u32 %v1073, 2147483648
      %v1173 = vsel %vm1171, %v1172, %v1170
      %v1174 = vrsqrt.pop %v1074
      %v1175 = vmul.f32 %v1074, %v1174
      %vm1176 = vcmp.eq.f32.partialorder %v1074, inf
      %v1177 = vsel %vm1176, %v1074, %v1175
      %vm1178 = vcmp.eq.f32.partialorder %v1074, 0.0
      %v1179 = vand.u32 %v1074, 2147483648
      %v1180 = vsel %vm1178, %v1179, %v1177
      %v1181 = vrsqrt.pop %v1075
      %v1182 = vmul.f32 %v1075, %v1181
      %vm1183 = vcmp.eq.f32.partialorder %v1075, inf
      %v1184 = vsel %vm1183, %v1075, %v1182
      %vm1185 = vcmp.eq.f32.partialorder %v1075, 0.0
      %v1186 = vand.u32 %v1075, 2147483648
      %v1187 = vsel %vm1185, %v1186, %v1184
      %v1188 = vrsqrt.pop %v1108
      %v1189 = vmul.f32 %v1108, %v1188
      %vm1190 = vcmp.eq.f32.partialorder %v1108, inf
      %v1191 = vsel %vm1190, %v1108, %v1189
      %vm1192 = vcmp.eq.f32.partialorder %v1108, 0.0
      %v1193 = vand.u32 %v1108, 2147483648
      %v1194 = vsel %vm1192, %v1193, %v1191
      %v1195 = vrsqrt.pop %v1109
      %v1196 = vmul.f32 %v1109, %v1195
      %vm1197 = vcmp.eq.f32.partialorder %v1109, inf
      %v1198 = vsel %vm1197, %v1109, %v1196
      %vm1199 = vcmp.eq.f32.partialorder %v1109, 0.0
      %v1200 = vand.u32 %v1109, 2147483648
      %v1201 = vsel %vm1199, %v1200, %v1198
      %v1202 = vrsqrt.pop %v1110
      %v1203 = vmul.f32 %v1110, %v1202
      %vm1204 = vcmp.eq.f32.partialorder %v1110, inf
      %v1205 = vsel %vm1204, %v1110, %v1203
      %vm1206 = vcmp.eq.f32.partialorder %v1110, 0.0
      %v1207 = vand.u32 %v1110, 2147483648
      %v1208 = vsel %vm1206, %v1207, %v1205
      %v1209 = vrsqrt.pop %v1111
      %v1210 = vmul.f32 %v1111, %v1209
      %vm1211 = vcmp.eq.f32.partialorder %v1111, inf
      %v1212 = vsel %vm1211, %v1111, %v1210
      %vm1213 = vcmp.eq.f32.partialorder %v1111, 0.0
      %v1214 = vand.u32 %v1111, 2147483648
      %v1215 = vsel %vm1213, %v1214, %v1212
      %v1216 = vrsqrt.pop %v1112
      %v1217 = vmul.f32 %v1112, %v1216
      %vm1218 = vcmp.eq.f32.partialorder %v1112, inf
      %v1219 = vsel %vm1218, %v1112, %v1217
      %vm1220 = vcmp.eq.f32.partialorder %v1112, 0.0
      %v1221 = vand.u32 %v1112, 2147483648
      %v1222 = vsel %vm1220, %v1221, %v1219
      %v1223 = vrsqrt.pop %v1113
      %v1224 = vmul.f32 %v1113, %v1223
      %vm1225 = vcmp.eq.f32.partialorder %v1113, inf
      %v1226 = vsel %vm1225, %v1113, %v1224
      %vm1227 = vcmp.eq.f32.partialorder %v1113, 0.0
      %v1228 = vand.u32 %v1113, 2147483648
      %v1229 = vsel %vm1227, %v1228, %v1226
      %v1230 = vrsqrt.pop %v1114
      %v1231 = vmul.f32 %v1114, %v1230
      %vm1232 = vcmp.eq.f32.partialorder %v1114, inf
      %v1233 = vsel %vm1232, %v1114, %v1231
      %vm1234 = vcmp.eq.f32.partialorder %v1114, 0.0
      %v1235 = vand.u32 %v1114, 2147483648
      %v1236 = vsel %vm1234, %v1235, %v1233
      %v1237 = vrsqrt.pop %v1115
      %v1238 = vmul.f32 %v1115, %v1237
      %vm1239 = vcmp.eq.f32.partialorder %v1115, inf
      %v1240 = vsel %vm1239, %v1115, %v1238
      %vm1241 = vcmp.eq.f32.partialorder %v1115, 0.0
      %v1242 = vand.u32 %v1115, 2147483648
      %v1243 = vsel %vm1241, %v1242, %v1240
      %v1244 = vsub.f32 %v1138, %v1194
      %v1245 = vsub.f32 %v1145, %v1201
      %v1246 = vsub.f32 %v1152, %v1208
      %v1247 = vsub.f32 %v1159, %v1215
      %v1248 = vsub.f32 %v1166, %v1222
      %v1249 = vsub.f32 %v1173, %v1229
      %v1250 = vsub.f32 %v1180, %v1236
      %v1251 = vsub.f32 %v1187, %v1243
      %v1252 = vmul.f32 %v1244, %v1244
      %v1253 = vmul.f32 %v1245, %v1245
      %v1254 = vmul.f32 %v1246, %v1246
      %v1255 = vmul.f32 %v1247, %v1247
      %v1256 = vmul.f32 %v1248, %v1248
      %v1257 = vmul.f32 %v1249, %v1249
      %v1258 = vmul.f32 %v1250, %v1250
      %v1259 = vmul.f32 %v1251, %v1251
      %v1260 = vmul.f32 %v980, 0.015625
      %v1261 = vmul.f32 %v981, 0.015625
      %v1262 = vmul.f32 %v982, 0.015625
      %v1263 = vmul.f32 %v983, 0.015625
      %v1264 = vmul.f32 %v984, 0.015625
      %v1265 = vmul.f32 %v985, 0.015625
      %v1266 = vmul.f32 %v986, 0.015625
      %v1267 = vmul.f32 %v987, 0.015625
      %v1268 = vmul.f32 %v1260, 64.0
      %v1269 = vmul.f32 %v1261, 64.0
      %v1270 = vmul.f32 %v1262, 64.0
      %v1271 = vmul.f32 %v1263, 64.0
      %v1272 = vmul.f32 %v1264, 64.0
      %v1273 = vmul.f32 %v1265, 64.0
      %v1274 = vmul.f32 %v1266, 64.0
      %v1275 = vmul.f32 %v1267, 64.0
      %v1276 = vmul.f32 %v1268, %v1260
      %v1277 = vmul.f32 %v1269, %v1261
      %v1278 = vmul.f32 %v1270, %v1262
      %v1279 = vmul.f32 %v1271, %v1263
      %v1280 = vmul.f32 %v1272, %v1264
      %v1281 = vmul.f32 %v1273, %v1265
      %v1282 = vmul.f32 %v1274, %v1266
      %v1283 = vmul.f32 %v1275, %v1267
      %v1284 = vsub.f32 %v988, %v1276
      %v1285 = vsub.f32 %v989, %v1277
      %v1286 = vsub.f32 %v990, %v1278
      %v1287 = vsub.f32 %v991, %v1279
      %v1288 = vsub.f32 %v992, %v1280
      %v1289 = vsub.f32 %v993, %v1281
      %v1290 = vsub.f32 %v994, %v1282
      %v1291 = vsub.f32 %v995, %v1283
      %v1292 = vmul.f32 %v1284, 0.015873017
      %v1293 = vmul.f32 %v1285, 0.015873017
      %v1294 = vmul.f32 %v1286, 0.015873017
      %v1295 = vmul.f32 %v1287, 0.015873017
      %v1296 = vmul.f32 %v1288, 0.015873017
      %v1297 = vmul.f32 %v1289, 0.015873017
      %v1298 = vmul.f32 %v1290, 0.015873017
      %v1299 = vmul.f32 %v1291, 0.015873017
      %v1300 = vmax.f32 %v1292, 0.0
      %v1301 = vmax.f32 %v1293, 0.0
      %v1302 = vmax.f32 %v1294, 0.0
      %v1303 = vmax.f32 %v1295, 0.0
      %v1304 = vmax.f32 %v1296, 0.0
      %v1305 = vmax.f32 %v1297, 0.0
      %v1306 = vmax.f32 %v1298, 0.0
      %v1307 = vmax.f32 %v1299, 0.0
      %v1308 = vadd.f32 %v1068, 1e-05
      %v1309 = vadd.f32 %v1069, 1e-05
      %v1310 = vadd.f32 %v1070, 1e-05
      %v1311 = vadd.f32 %v1071, 1e-05
      %v1312 = vadd.f32 %v1072, 1e-05
      %v1313 = vadd.f32 %v1073, 1e-05
      %v1314 = vadd.f32 %v1074, 1e-05
      %v1315 = vadd.f32 %v1075, 1e-05
      %v1316 = vrsqrt.pop %v1308
      %v1317 = vrsqrt.pop %v1309
      %v1318 = vrsqrt.pop %v1310
      %v1319 = vrsqrt.pop %v1311
      %v1320 = vrsqrt.pop %v1312
      %v1321 = vrsqrt.pop %v1313
      %v1322 = vrsqrt.pop %v1314
      %v1323 = vrsqrt.pop %v1315
      %v1324 = vadd.f32 %v1300, 1e-05
      %v1325 = vadd.f32 %v1301, 1e-05
      %v1326 = vadd.f32 %v1302, 1e-05
      %v1327 = vadd.f32 %v1303, 1e-05
      %v1328 = vadd.f32 %v1304, 1e-05
      %v1329 = vadd.f32 %v1305, 1e-05
      %v1330 = vadd.f32 %v1306, 1e-05
      %v1331 = vadd.f32 %v1307, 1e-05
      %v1332 = vrsqrt.pop %v1324
      %v1333 = vrsqrt.pop %v1325
      %v1334 = vrsqrt.pop %v1326
      %v1335 = vrsqrt.pop %v1327
      %v1336 = vrsqrt.pop %v1328
      %v1337 = vrsqrt.pop %v1329
      %v1338 = vrsqrt.pop %v1330
      %v1339 = vrsqrt.pop %v1331
      %v1340 = vmul.f32 %v1316, %v1316
      %v1341 = vmul.f32 %v1317, %v1317
      %v1342 = vmul.f32 %v1318, %v1318
      %v1343 = vmul.f32 %v1319, %v1319
      %v1344 = vmul.f32 %v1320, %v1320
      %v1345 = vmul.f32 %v1321, %v1321
      %v1346 = vmul.f32 %v1322, %v1322
      %v1347 = vmul.f32 %v1323, %v1323
      %v1348 = vmul.f32 %v1340, %v972
      %v1349 = vmul.f32 %v1341, %v973
      %v1350 = vmul.f32 %v1342, %v974
      %v1351 = vmul.f32 %v1343, %v975
      %v1352 = vmul.f32 %v1344, %v976
      %v1353 = vmul.f32 %v1345, %v977
      %v1354 = vmul.f32 %v1346, %v978
      %v1355 = vmul.f32 %v1347, %v979
      %v1356 = vmul.f32 %v1316, 2.0
      %v1357 = vmul.f32 %v1317, 2.0
      %v1358 = vmul.f32 %v1318, 2.0
      %v1359 = vmul.f32 %v1319, 2.0
      %v1360 = vmul.f32 %v1320, 2.0
      %v1361 = vmul.f32 %v1321, 2.0
      %v1362 = vmul.f32 %v1322, 2.0
      %v1363 = vmul.f32 %v1323, 2.0
      %v1364 = vmul.f32 %v1356, %v1332
      %v1365 = vmul.f32 %v1357, %v1333
      %v1366 = vmul.f32 %v1358, %v1334
      %v1367 = vmul.f32 %v1359, %v1335
      %v1368 = vmul.f32 %v1360, %v1336
      %v1369 = vmul.f32 %v1361, %v1337
      %v1370 = vmul.f32 %v1362, %v1338
      %v1371 = vmul.f32 %v1363, %v1339
      %v1372 = vmul.f32 %v1364, %v996
      %v1373 = vmul.f32 %v1365, %v997
      %v1374 = vmul.f32 %v1366, %v998
      %v1375 = vmul.f32 %v1367, %v999
      %v1376 = vmul.f32 %v1368, %v1000
      %v1377 = vmul.f32 %v1369, %v1001
      %v1378 = vmul.f32 %v1370, %v1002
      %v1379 = vmul.f32 %v1371, %v1003
      %v1380 = vsub.f32 %v1348, %v1372
      %v1381 = vsub.f32 %v1349, %v1373
      %v1382 = vsub.f32 %v1350, %v1374
      %v1383 = vsub.f32 %v1351, %v1375
      %v1384 = vsub.f32 %v1352, %v1376
      %v1385 = vsub.f32 %v1353, %v1377
      %v1386 = vsub.f32 %v1354, %v1378
      %v1387 = vsub.f32 %v1355, %v1379
      %v1388 = vmul.f32 %v1332, %v1332
      %v1389 = vmul.f32 %v1333, %v1333
      %v1390 = vmul.f32 %v1334, %v1334
      %v1391 = vmul.f32 %v1335, %v1335
      %v1392 = vmul.f32 %v1336, %v1336
      %v1393 = vmul.f32 %v1337, %v1337
      %v1394 = vmul.f32 %v1338, %v1338
      %v1395 = vmul.f32 %v1339, %v1339
      %v1396 = vmul.f32 %v1388, %v988
      %v1397 = vmul.f32 %v1389, %v989
      %v1398 = vmul.f32 %v1390, %v990
      %v1399 = vmul.f32 %v1391, %v991
      %v1400 = vmul.f32 %v1392, %v992
      %v1401 = vmul.f32 %v1393, %v993
      %v1402 = vmul.f32 %v1394, %v994
      %v1403 = vmul.f32 %v1395, %v995
      %v1404 = vadd.f32 %v1380, %v1396
      %v1405 = vadd.f32 %v1381, %v1397
      %v1406 = vadd.f32 %v1382, %v1398
      %v1407 = vadd.f32 %v1383, %v1399
      %v1408 = vadd.f32 %v1384, %v1400
      %v1409 = vadd.f32 %v1385, %v1401
      %v1410 = vadd.f32 %v1386, %v1402
      %v1411 = vadd.f32 %v1387, %v1403
      %v1412 = vmul.f32 %v1316, %v1020
      %v1413 = vmul.f32 %v1317, %v1021
      %v1414 = vmul.f32 %v1318, %v1022
      %v1415 = vmul.f32 %v1319, %v1023
      %v1416 = vmul.f32 %v1320, %v1024
      %v1417 = vmul.f32 %v1321, %v1025
      %v1418 = vmul.f32 %v1322, %v1026
      %v1419 = vmul.f32 %v1323, %v1027
      %v1420 = vmul.f32 %v1332, %v1260
      %v1421 = vmul.f32 %v1333, %v1261
      %v1422 = vmul.f32 %v1334, %v1262
      %v1423 = vmul.f32 %v1335, %v1263
      %v1424 = vmul.f32 %v1336, %v1264
      %v1425 = vmul.f32 %v1337, %v1265
      %v1426 = vmul.f32 %v1338, %v1266
      %v1427 = vmul.f32 %v1339, %v1267
      %v1428 = vsub.f32 %v1412, %v1420
      %v1429 = vsub.f32 %v1413, %v1421
      %v1430 = vsub.f32 %v1414, %v1422
      %v1431 = vsub.f32 %v1415, %v1423
      %v1432 = vsub.f32 %v1416, %v1424
      %v1433 = vsub.f32 %v1417, %v1425
      %v1434 = vsub.f32 %v1418, %v1426
      %v1435 = vsub.f32 %v1419, %v1427
      %v1436 = vmul.f32 %v1428, %v1428
      %v1437 = vmul.f32 %v1429, %v1429
      %v1438 = vmul.f32 %v1430, %v1430
      %v1439 = vmul.f32 %v1431, %v1431
      %v1440 = vmul.f32 %v1432, %v1432
      %v1441 = vmul.f32 %v1433, %v1433
      %v1442 = vmul.f32 %v1434, %v1434
      %v1443 = vmul.f32 %v1435, %v1435
      %v1444 = vmul.f32 %v1436, 64.0
      %v1445 = vmul.f32 %v1437, 64.0
      %v1446 = vmul.f32 %v1438, 64.0
      %v1447 = vmul.f32 %v1439, 64.0
      %v1448 = vmul.f32 %v1440, 64.0
      %v1449 = vmul.f32 %v1441, 64.0
      %v1450 = vmul.f32 %v1442, 64.0
      %v1451 = vmul.f32 %v1443, 64.0
      %v1452 = vsub.f32 %v1404, %v1444
      %v1453 = vsub.f32 %v1405, %v1445
      %v1454 = vsub.f32 %v1406, %v1446
      %v1455 = vsub.f32 %v1407, %v1447
      %v1456 = vsub.f32 %v1408, %v1448
      %v1457 = vsub.f32 %v1409, %v1449
      %v1458 = vsub.f32 %v1410, %v1450
      %v1459 = vsub.f32 %v1411, %v1451
      %v1460 = vmax.f32 %v1452, 0.0
      %v1461 = vmax.f32 %v1453, 0.0
      %v1462 = vmax.f32 %v1454, 0.0
      %v1463 = vmax.f32 %v1455, 0.0
      %v1464 = vmax.f32 %v1456, 0.0
      %v1465 = vmax.f32 %v1457, 0.0
      %v1466 = vmax.f32 %v1458, 0.0
      %v1467 = vmax.f32 %v1459, 0.0
      %v1468 = vld [vmem:[#allocation16] sm:$0xff]
      %v1469 = vld [vmem:[#allocation16 + $0x8] sm:$0xff]
      %v1470 = vld [vmem:[#allocation16 + $0x10] sm:$0xff]
      %v1471 = vld [vmem:[#allocation16 + $0x18] sm:$0xff]
      %v1472 = vld [vmem:[#allocation16 + $0x20] sm:$0xff]
      %v1473 = vld [vmem:[#allocation16 + $0x28] sm:$0xff]
      %v1474 = vld [vmem:[#allocation16 + $0x30] sm:$0xff]
      %v1475 = vld [vmem:[#allocation16 + $0x38] sm:$0xff]
      %v1476 = vadd.f32 %v1468, %v1460
      %v1477 = vadd.f32 %v1469, %v1461
      %v1478 = vadd.f32 %v1470, %v1462
      %v1479 = vadd.f32 %v1471, %v1463
      %v1480 = vadd.f32 %v1472, %v1464
      %v1481 = vadd.f32 %v1473, %v1465
      %v1482 = vadd.f32 %v1474, %v1466
      %v1483 = vadd.f32 %v1475, %v1467
      %1484 = vst.msk [vmem:[#allocation16] sm:$0xff] %vm240, %v1476
      %1485 = vst.msk [vmem:[#allocation16 + $0x8] sm:$0xff] %vm240, %v1477
      %1486 = vst.msk [vmem:[#allocation16 + $0x10] sm:$0xff] %vm240, %v1478
      %1487 = vst.msk [vmem:[#allocation16 + $0x18] sm:$0xff] %vm240, %v1479
      %1488 = vst.msk [vmem:[#allocation16 + $0x20] sm:$0xff] %vm240, %v1480
      %1489 = vst.msk [vmem:[#allocation16 + $0x28] sm:$0xff] %vm240, %v1481
      %1490 = vst.msk [vmem:[#allocation16 + $0x30] sm:$0xff] %vm240, %v1482
      %1491 = vst.msk [vmem:[#allocation16 + $0x38] sm:$0xff] %vm240, %v1483
      %v1492 = vld [vmem:[#allocation17] sm:$0xff]
      %v1493 = vld [vmem:[#allocation17 + $0x8] sm:$0xff]
      %v1494 = vld [vmem:[#allocation17 + $0x10] sm:$0xff]
      %v1495 = vld [vmem:[#allocation17 + $0x18] sm:$0xff]
      %v1496 = vld [vmem:[#allocation17 + $0x20] sm:$0xff]
      %v1497 = vld [vmem:[#allocation17 + $0x28] sm:$0xff]
      %v1498 = vld [vmem:[#allocation17 + $0x30] sm:$0xff]
      %v1499 = vld [vmem:[#allocation17 + $0x38] sm:$0xff]
      %v1500 = vadd.f32 %v1492, %v1124
      %v1501 = vadd.f32 %v1493, %v1125
      %v1502 = vadd.f32 %v1494, %v1126
      %v1503 = vadd.f32 %v1495, %v1127
      %v1504 = vadd.f32 %v1496, %v1128
      %v1505 = vadd.f32 %v1497, %v1129
      %v1506 = vadd.f32 %v1498, %v1130
      %v1507 = vadd.f32 %v1499, %v1131
      %1508 = vst.msk [vmem:[#allocation17] sm:$0xff] %vm240, %v1500
      %1509 = vst.msk [vmem:[#allocation17 + $0x8] sm:$0xff] %vm240, %v1501
      %1510 = vst.msk [vmem:[#allocation17 + $0x10] sm:$0xff] %vm240, %v1502
      %1511 = vst.msk [vmem:[#allocation17 + $0x18] sm:$0xff] %vm240, %v1503
      %1512 = vst.msk [vmem:[#allocation17 + $0x20] sm:$0xff] %vm240, %v1504
      %1513 = vst.msk [vmem:[#allocation17 + $0x28] sm:$0xff] %vm240, %v1505
      %1514 = vst.msk [vmem:[#allocation17 + $0x30] sm:$0xff] %vm240, %v1506
      %1515 = vst.msk [vmem:[#allocation17 + $0x38] sm:$0xff] %vm240, %v1507
      %v1516 = vld [vmem:[#allocation18] sm:$0xff]
      %v1517 = vld [vmem:[#allocation18 + $0x8] sm:$0xff]
      %v1518 = vld [vmem:[#allocation18 + $0x10] sm:$0xff]
      %v1519 = vld [vmem:[#allocation18 + $0x18] sm:$0xff]
      %v1520 = vld [vmem:[#allocation18 + $0x20] sm:$0xff]
      %v1521 = vld [vmem:[#allocation18 + $0x28] sm:$0xff]
      %v1522 = vld [vmem:[#allocation18 + $0x30] sm:$0xff]
      %v1523 = vld [vmem:[#allocation18 + $0x38] sm:$0xff]
      %v1524 = vadd.f32 %v1516, %v1252
      %v1525 = vadd.f32 %v1517, %v1253
      %v1526 = vadd.f32 %v1518, %v1254
      %v1527 = vadd.f32 %v1519, %v1255
      %v1528 = vadd.f32 %v1520, %v1256
      %v1529 = vadd.f32 %v1521, %v1257
      %v1530 = vadd.f32 %v1522, %v1258
      %v1531 = vadd.f32 %v1523, %v1259
      %1532 = vst.msk [vmem:[#allocation18] sm:$0xff] %vm240, %v1524
      %1533 = vst.msk [vmem:[#allocation18 + $0x8] sm:$0xff] %vm240, %v1525
      %1534 = vst.msk [vmem:[#allocation18 + $0x10] sm:$0xff] %vm240, %v1526
      %1535 = vst.msk [vmem:[#allocation18 + $0x18] sm:$0xff] %vm240, %v1527
      %1536 = vst.msk [vmem:[#allocation18 + $0x20] sm:$0xff] %vm240, %v1528
      %1537 = vst.msk [vmem:[#allocation18 + $0x28] sm:$0xff] %vm240, %v1529
      %1538 = vst.msk [vmem:[#allocation18 + $0x30] sm:$0xff] %vm240, %v1530
      %1539 = vst.msk [vmem:[#allocation18 + $0x38] sm:$0xff] %vm240, %v1531
      %v1540 = vld [vmem:[#allocation9] sm:$0xff]
      %v1541 = vld [vmem:[#allocation9 + $0x8] sm:$0xff]
      %v1542 = vld [vmem:[#allocation9 + $0x10] sm:$0xff]
      %v1543 = vld [vmem:[#allocation9 + $0x18] sm:$0xff]
      %v1544 = vld [vmem:[#allocation9 + $0x20] sm:$0xff]
      %v1545 = vld [vmem:[#allocation9 + $0x28] sm:$0xff]
      %v1546 = vld [vmem:[#allocation9 + $0x30] sm:$0xff]
      %v1547 = vld [vmem:[#allocation9 + $0x38] sm:$0xff]
      %v1548 = vld [vmem:[#allocation10] sm:$0xff]
      %v1549 = vld [vmem:[#allocation10 + $0x8] sm:$0xff]
      %v1550 = vld [vmem:[#allocation10 + $0x10] sm:$0xff]
      %v1551 = vld [vmem:[#allocation10 + $0x18] sm:$0xff]
      %v1552 = vld [vmem:[#allocation10 + $0x20] sm:$0xff]
      %v1553 = vld [vmem:[#allocation10 + $0x28] sm:$0xff]
      %v1554 = vld [vmem:[#allocation10 + $0x30] sm:$0xff]
      %v1555 = vld [vmem:[#allocation10 + $0x38] sm:$0xff]
      %v1556 = vld [vmem:[#allocation11] sm:$0xff]
      %v1557 = vld [vmem:[#allocation11 + $0x8] sm:$0xff]
      %v1558 = vld [vmem:[#allocation11 + $0x10] sm:$0xff]
      %v1559 = vld [vmem:[#allocation11 + $0x18] sm:$0xff]
      %v1560 = vld [vmem:[#allocation11 + $0x20] sm:$0xff]
      %v1561 = vld [vmem:[#allocation11 + $0x28] sm:$0xff]
      %v1562 = vld [vmem:[#allocation11 + $0x30] sm:$0xff]
      %v1563 = vld [vmem:[#allocation11 + $0x38] sm:$0xff]
      %v1564 = vld [vmem:[#allocation12] sm:$0xff]
      %v1565 = vld [vmem:[#allocation12 + $0x8] sm:$0xff]
      %v1566 = vld [vmem:[#allocation12 + $0x10] sm:$0xff]
      %v1567 = vld [vmem:[#allocation12 + $0x18] sm:$0xff]
      %v1568 = vld [vmem:[#allocation12 + $0x20] sm:$0xff]
      %v1569 = vld [vmem:[#allocation12 + $0x28] sm:$0xff]
      %v1570 = vld [vmem:[#allocation12 + $0x30] sm:$0xff]
      %v1571 = vld [vmem:[#allocation12 + $0x38] sm:$0xff]
      %v1572 = vld [vmem:[#allocation13] sm:$0xff]
      %v1573 = vld [vmem:[#allocation13 + $0x8] sm:$0xff]
      %v1574 = vld [vmem:[#allocation13 + $0x10] sm:$0xff]
      %v1575 = vld [vmem:[#allocation13 + $0x18] sm:$0xff]
      %v1576 = vld [vmem:[#allocation13 + $0x20] sm:$0xff]
      %v1577 = vld [vmem:[#allocation13 + $0x28] sm:$0xff]
      %v1578 = vld [vmem:[#allocation13 + $0x30] sm:$0xff]
      %v1579 = vld [vmem:[#allocation13 + $0x38] sm:$0xff]
      %v1580 = vld [vmem:[#allocation14] sm:$0xff]
      %v1581 = vld [vmem:[#allocation14 + $0x8] sm:$0xff]
      %v1582 = vld [vmem:[#allocation14 + $0x10] sm:$0xff]
      %v1583 = vld [vmem:[#allocation14 + $0x18] sm:$0xff]
      %v1584 = vld [vmem:[#allocation14 + $0x20] sm:$0xff]
      %v1585 = vld [vmem:[#allocation14 + $0x28] sm:$0xff]
      %v1586 = vld [vmem:[#allocation14 + $0x30] sm:$0xff]
      %v1587 = vld [vmem:[#allocation14 + $0x38] sm:$0xff]
      %v1588 = vld [vmem:[#allocation15] sm:$0xff]
      %v1589 = vld [vmem:[#allocation15 + $0x8] sm:$0xff]
      %v1590 = vld [vmem:[#allocation15 + $0x10] sm:$0xff]
      %v1591 = vld [vmem:[#allocation15 + $0x18] sm:$0xff]
      %v1592 = vld [vmem:[#allocation15 + $0x20] sm:$0xff]
      %v1593 = vld [vmem:[#allocation15 + $0x28] sm:$0xff]
      %v1594 = vld [vmem:[#allocation15 + $0x30] sm:$0xff]
      %v1595 = vld [vmem:[#allocation15 + $0x38] sm:$0xff]
      %v1596 = vmul.f32 %v1540, 0.015625
      %v1597 = vmul.f32 %v1541, 0.015625
      %v1598 = vmul.f32 %v1542, 0.015625
      %v1599 = vmul.f32 %v1543, 0.015625
      %v1600 = vmul.f32 %v1544, 0.015625
      %v1601 = vmul.f32 %v1545, 0.015625
      %v1602 = vmul.f32 %v1546, 0.015625
      %v1603 = vmul.f32 %v1547, 0.015625
      %v1604 = vmul.f32 %v1580, 0.015625
      %v1605 = vmul.f32 %v1581, 0.015625
      %v1606 = vmul.f32 %v1582, 0.015625
      %v1607 = vmul.f32 %v1583, 0.015625
      %v1608 = vmul.f32 %v1584, 0.015625
      %v1609 = vmul.f32 %v1585, 0.015625
      %v1610 = vmul.f32 %v1586, 0.015625
      %v1611 = vmul.f32 %v1587, 0.015625
      %v1612 = vmul.f32 %v1596, 64.0
      %v1613 = vmul.f32 %v1597, 64.0
      %v1614 = vmul.f32 %v1598, 64.0
      %v1615 = vmul.f32 %v1599, 64.0
      %v1616 = vmul.f32 %v1600, 64.0
      %v1617 = vmul.f32 %v1601, 64.0
      %v1618 = vmul.f32 %v1602, 64.0
      %v1619 = vmul.f32 %v1603, 64.0
      %v1620 = vmul.f32 %v1612, %v1596
      %v1621 = vmul.f32 %v1613, %v1597
      %v1622 = vmul.f32 %v1614, %v1598
      %v1623 = vmul.f32 %v1615, %v1599
      %v1624 = vmul.f32 %v1616, %v1600
      %v1625 = vmul.f32 %v1617, %v1601
      %v1626 = vmul.f32 %v1618, %v1602
      %v1627 = vmul.f32 %v1619, %v1603
      %v1628 = vsub.f32 %v1548, %v1620
      %v1629 = vsub.f32 %v1549, %v1621
      %v1630 = vsub.f32 %v1550, %v1622
      %v1631 = vsub.f32 %v1551, %v1623
      %v1632 = vsub.f32 %v1552, %v1624
      %v1633 = vsub.f32 %v1553, %v1625
      %v1634 = vsub.f32 %v1554, %v1626
      %v1635 = vsub.f32 %v1555, %v1627
      %v1636 = vmul.f32 %v1628, 0.015873017
      %v1637 = vmul.f32 %v1629, 0.015873017
      %v1638 = vmul.f32 %v1630, 0.015873017
      %v1639 = vmul.f32 %v1631, 0.015873017
      %v1640 = vmul.f32 %v1632, 0.015873017
      %v1641 = vmul.f32 %v1633, 0.015873017
      %v1642 = vmul.f32 %v1634, 0.015873017
      %v1643 = vmul.f32 %v1635, 0.015873017
      %v1644 = vmax.f32 %v1636, 0.0
      %v1645 = vmax.f32 %v1637, 0.0
      %v1646 = vmax.f32 %v1638, 0.0
      %v1647 = vmax.f32 %v1639, 0.0
      %v1648 = vmax.f32 %v1640, 0.0
      %v1649 = vmax.f32 %v1641, 0.0
      %v1650 = vmax.f32 %v1642, 0.0
      %v1651 = vmax.f32 %v1643, 0.0
      %v1652 = vmul.f32 %v1604, 64.0
      %v1653 = vmul.f32 %v1605, 64.0
      %v1654 = vmul.f32 %v1606, 64.0
      %v1655 = vmul.f32 %v1607, 64.0
      %v1656 = vmul.f32 %v1608, 64.0
      %v1657 = vmul.f32 %v1609, 64.0
      %v1658 = vmul.f32 %v1610, 64.0
      %v1659 = vmul.f32 %v1611, 64.0
      %v1660 = vmul.f32 %v1652, %v1604
      %v1661 = vmul.f32 %v1653, %v1605
      %v1662 = vmul.f32 %v1654, %v1606
      %v1663 = vmul.f32 %v1655, %v1607
      %v1664 = vmul.f32 %v1656, %v1608
      %v1665 = vmul.f32 %v1657, %v1609
      %v1666 = vmul.f32 %v1658, %v1610
      %v1667 = vmul.f32 %v1659, %v1611
      %v1668 = vsub.f32 %v1588, %v1660
      %v1669 = vsub.f32 %v1589, %v1661
      %v1670 = vsub.f32 %v1590, %v1662
      %v1671 = vsub.f32 %v1591, %v1663
      %v1672 = vsub.f32 %v1592, %v1664
      %v1673 = vsub.f32 %v1593, %v1665
      %v1674 = vsub.f32 %v1594, %v1666
      %v1675 = vsub.f32 %v1595, %v1667
      %v1676 = vmul.f32 %v1668, 0.015873017
      %v1677 = vmul.f32 %v1669, 0.015873017
      %v1678 = vmul.f32 %v1670, 0.015873017
      %v1679 = vmul.f32 %v1671, 0.015873017
      %v1680 = vmul.f32 %v1672, 0.015873017
      %v1681 = vmul.f32 %v1673, 0.015873017
      %v1682 = vmul.f32 %v1674, 0.015873017
      %v1683 = vmul.f32 %v1675, 0.015873017
      %v1684 = vmax.f32 %v1676, 0.0
      %v1685 = vmax.f32 %v1677, 0.0
      %v1686 = vmax.f32 %v1678, 0.0
      %v1687 = vmax.f32 %v1679, 0.0
      %v1688 = vmax.f32 %v1680, 0.0
      %v1689 = vmax.f32 %v1681, 0.0
      %v1690 = vmax.f32 %v1682, 0.0
      %v1691 = vmax.f32 %v1683, 0.0
      %v1692 = vsub.f32 %v1596, %v1604
      %v1693 = vsub.f32 %v1597, %v1605
      %v1694 = vsub.f32 %v1598, %v1606
      %v1695 = vsub.f32 %v1599, %v1607
      %v1696 = vsub.f32 %v1600, %v1608
      %v1697 = vsub.f32 %v1601, %v1609
      %v1698 = vsub.f32 %v1602, %v1610
      %v1699 = vsub.f32 %v1603, %v1611
      %v1700 = vmul.f32 %v1692, %v1692
      %v1701 = vmul.f32 %v1693, %v1693
      %v1702 = vmul.f32 %v1694, %v1694
      %v1703 = vmul.f32 %v1695, %v1695
      %v1704 = vmul.f32 %v1696, %v1696
      %v1705 = vmul.f32 %v1697, %v1697
      %v1706 = vmul.f32 %v1698, %v1698
      %v1707 = vmul.f32 %v1699, %v1699
      %v1708 = vrsqrt.pop %v1644
      %v1709 = vmul.f32 %v1644, %v1708
      %vm1710 = vcmp.eq.f32.partialorder %v1644, inf
      %v1711 = vsel %vm1710, %v1644, %v1709
      %vm1712 = vcmp.eq.f32.partialorder %v1644, 0.0
      %v1713 = vand.u32 %v1644, 2147483648
      %v1714 = vsel %vm1712, %v1713, %v1711
      %v1715 = vrsqrt.pop %v1645
      %v1716 = vmul.f32 %v1645, %v1715
      %vm1717 = vcmp.eq.f32.partialorder %v1645, inf
      %v1718 = vsel %vm1717, %v1645, %v1716
      %vm1719 = vcmp.eq.f32.partialorder %v1645, 0.0
      %v1720 = vand.u32 %v1645, 2147483648
      %v1721 = vsel %vm1719, %v1720, %v1718
      %v1722 = vrsqrt.pop %v1646
      %v1723 = vmul.f32 %v1646, %v1722
      %vm1724 = vcmp.eq.f32.partialorder %v1646, inf
      %v1725 = vsel %vm1724, %v1646, %v1723
      %vm1726 = vcmp.eq.f32.partialorder %v1646, 0.0
      %v1727 = vand.u32 %v1646, 2147483648
      %v1728 = vsel %vm1726, %v1727, %v1725
      %v1729 = vrsqrt.pop %v1647
      %v1730 = vmul.f32 %v1647, %v1729
      %vm1731 = vcmp.eq.f32.partialorder %v1647, inf
      %v1732 = vsel %vm1731, %v1647, %v1730
      %vm1733 = vcmp.eq.f32.partialorder %v1647, 0.0
      %v1734 = vand.u32 %v1647, 2147483648
      %v1735 = vsel %vm1733, %v1734, %v1732
      %v1736 = vrsqrt.pop %v1648
      %v1737 = vmul.f32 %v1648, %v1736
      %vm1738 = vcmp.eq.f32.partialorder %v1648, inf
      %v1739 = vsel %vm1738, %v1648, %v1737
      %vm1740 = vcmp.eq.f32.partialorder %v1648, 0.0
      %v1741 = vand.u32 %v1648, 2147483648
      %v1742 = vsel %vm1740, %v1741, %v1739
      %v1743 = vrsqrt.pop %v1649
      %v1744 = vmul.f32 %v1649, %v1743
      %vm1745 = vcmp.eq.f32.partialorder %v1649, inf
      %v1746 = vsel %vm1745, %v1649, %v1744
      %vm1747 = vcmp.eq.f32.partialorder %v1649, 0.0
      %v1748 = vand.u32 %v1649, 2147483648
      %v1749 = vsel %vm1747, %v1748, %v1746
      %v1750 = vrsqrt.pop %v1650
      %v1751 = vmul.f32 %v1650, %v1750
      %vm1752 = vcmp.eq.f32.partialorder %v1650, inf
      %v1753 = vsel %vm1752, %v1650, %v1751
      %vm1754 = vcmp.eq.f32.partialorder %v1650, 0.0
      %v1755 = vand.u32 %v1650, 2147483648
      %v1756 = vsel %vm1754, %v1755, %v1753
      %v1757 = vrsqrt.pop %v1651
      %v1758 = vmul.f32 %v1651, %v1757
      %vm1759 = vcmp.eq.f32.partialorder %v1651, inf
      %v1760 = vsel %vm1759, %v1651, %v1758
      %vm1761 = vcmp.eq.f32.partialorder %v1651, 0.0
      %v1762 = vand.u32 %v1651, 2147483648
      %v1763 = vsel %vm1761, %v1762, %v1760
      %v1764 = vrsqrt.pop %v1684
      %v1765 = vmul.f32 %v1684, %v1764
      %vm1766 = vcmp.eq.f32.partialorder %v1684, inf
      %v1767 = vsel %vm1766, %v1684, %v1765
      %vm1768 = vcmp.eq.f32.partialorder %v1684, 0.0
      %v1769 = vand.u32 %v1684, 2147483648
      %v1770 = vsel %vm1768, %v1769, %v1767
      %v1771 = vrsqrt.pop %v1685
      %v1772 = vmul.f32 %v1685, %v1771
      %vm1773 = vcmp.eq.f32.partialorder %v1685, inf
      %v1774 = vsel %vm1773, %v1685, %v1772
      %vm1775 = vcmp.eq.f32.partialorder %v1685, 0.0
      %v1776 = vand.u32 %v1685, 2147483648
      %v1777 = vsel %vm1775, %v1776, %v1774
      %v1778 = vrsqrt.pop %v1686
      %v1779 = vmul.f32 %v1686, %v1778
      %vm1780 = vcmp.eq.f32.partialorder %v1686, inf
      %v1781 = vsel %vm1780, %v1686, %v1779
      %vm1782 = vcmp.eq.f32.partialorder %v1686, 0.0
      %v1783 = vand.u32 %v1686, 2147483648
      %v1784 = vsel %vm1782, %v1783, %v1781
      %v1785 = vrsqrt.pop %v1687
      %v1786 = vmul.f32 %v1687, %v1785
      %vm1787 = vcmp.eq.f32.partialorder %v1687, inf
      %v1788 = vsel %vm1787, %v1687, %v1786
      %vm1789 = vcmp.eq.f32.partialorder %v1687, 0.0
      %v1790 = vand.u32 %v1687, 2147483648
      %v1791 = vsel %vm1789, %v1790, %v1788
      %v1792 = vrsqrt.pop %v1688
      %v1793 = vmul.f32 %v1688, %v1792
      %vm1794 = vcmp.eq.f32.partialorder %v1688, inf
      %v1795 = vsel %vm1794, %v1688, %v1793
      %vm1796 = vcmp.eq.f32.partialorder %v1688, 0.0
      %v1797 = vand.u32 %v1688, 2147483648
      %v1798 = vsel %vm1796, %v1797, %v1795
      %v1799 = vrsqrt.pop %v1689
      %v1800 = vmul.f32 %v1689, %v1799
      %vm1801 = vcmp.eq.f32.partialorder %v1689, inf
      %v1802 = vsel %vm1801, %v1689, %v1800
      %vm1803 = vcmp.eq.f32.partialorder %v1689, 0.0
      %v1804 = vand.u32 %v1689, 2147483648
      %v1805 = vsel %vm1803, %v1804, %v1802
      %v1806 = vrsqrt.pop %v1690
      %v1807 = vmul.f32 %v1690, %v1806
      %vm1808 = vcmp.eq.f32.partialorder %v1690, inf
      %v1809 = vsel %vm1808, %v1690, %v1807
      %vm1810 = vcmp.eq.f32.partialorder %v1690, 0.0
      %v1811 = vand.u32 %v1690, 2147483648
      %v1812 = vsel %vm1810, %v1811, %v1809
      %v1813 = vrsqrt.pop %v1691
      %v1814 = vmul.f32 %v1691, %v1813
      %vm1815 = vcmp.eq.f32.partialorder %v1691, inf
      %v1816 = vsel %vm1815, %v1691, %v1814
      %vm1817 = vcmp.eq.f32.partialorder %v1691, 0.0
      %v1818 = vand.u32 %v1691, 2147483648
      %v1819 = vsel %vm1817, %v1818, %v1816
      %v1820 = vsub.f32 %v1714, %v1770
      %v1821 = vsub.f32 %v1721, %v1777
      %v1822 = vsub.f32 %v1728, %v1784
      %v1823 = vsub.f32 %v1735, %v1791
      %v1824 = vsub.f32 %v1742, %v1798
      %v1825 = vsub.f32 %v1749, %v1805
      %v1826 = vsub.f32 %v1756, %v1812
      %v1827 = vsub.f32 %v1763, %v1819
      %v1828 = vmul.f32 %v1820, %v1820
      %v1829 = vmul.f32 %v1821, %v1821
      %v1830 = vmul.f32 %v1822, %v1822
      %v1831 = vmul.f32 %v1823, %v1823
      %v1832 = vmul.f32 %v1824, %v1824
      %v1833 = vmul.f32 %v1825, %v1825
      %v1834 = vmul.f32 %v1826, %v1826
      %v1835 = vmul.f32 %v1827, %v1827
      %v1836 = vmul.f32 %v1556, 0.015625
      %v1837 = vmul.f32 %v1557, 0.015625
      %v1838 = vmul.f32 %v1558, 0.015625
      %v1839 = vmul.f32 %v1559, 0.015625
      %v1840 = vmul.f32 %v1560, 0.015625
      %v1841 = vmul.f32 %v1561, 0.015625
      %v1842 = vmul.f32 %v1562, 0.015625
      %v1843 = vmul.f32 %v1563, 0.015625
      %v1844 = vmul.f32 %v1836, 64.0
      %v1845 = vmul.f32 %v1837, 64.0
      %v1846 = vmul.f32 %v1838, 64.0
      %v1847 = vmul.f32 %v1839, 64.0
      %v1848 = vmul.f32 %v1840, 64.0
      %v1849 = vmul.f32 %v1841, 64.0
      %v1850 = vmul.f32 %v1842, 64.0
      %v1851 = vmul.f32 %v1843, 64.0
      %v1852 = vmul.f32 %v1844, %v1836
      %v1853 = vmul.f32 %v1845, %v1837
      %v1854 = vmul.f32 %v1846, %v1838
      %v1855 = vmul.f32 %v1847, %v1839
      %v1856 = vmul.f32 %v1848, %v1840
      %v1857 = vmul.f32 %v1849, %v1841
      %v1858 = vmul.f32 %v1850, %v1842
      %v1859 = vmul.f32 %v1851, %v1843
      %v1860 = vsub.f32 %v1564, %v1852
      %v1861 = vsub.f32 %v1565, %v1853
      %v1862 = vsub.f32 %v1566, %v1854
      %v1863 = vsub.f32 %v1567, %v1855
      %v1864 = vsub.f32 %v1568, %v1856
      %v1865 = vsub.f32 %v1569, %v1857
      %v1866 = vsub.f32 %v1570, %v1858
      %v1867 = vsub.f32 %v1571, %v1859
      %v1868 = vmul.f32 %v1860, 0.015873017
      %v1869 = vmul.f32 %v1861, 0.015873017
      %v1870 = vmul.f32 %v1862, 0.015873017
      %v1871 = vmul.f32 %v1863, 0.015873017
      %v1872 = vmul.f32 %v1864, 0.015873017
      %v1873 = vmul.f32 %v1865, 0.015873017
      %v1874 = vmul.f32 %v1866, 0.015873017
      %v1875 = vmul.f32 %v1867, 0.015873017
      %v1876 = vmax.f32 %v1868, 0.0
      %v1877 = vmax.f32 %v1869, 0.0
      %v1878 = vmax.f32 %v1870, 0.0
      %v1879 = vmax.f32 %v1871, 0.0
      %v1880 = vmax.f32 %v1872, 0.0
      %v1881 = vmax.f32 %v1873, 0.0
      %v1882 = vmax.f32 %v1874, 0.0
      %v1883 = vmax.f32 %v1875, 0.0
      %v1884 = vadd.f32 %v1644, 1e-05
      %v1885 = vadd.f32 %v1645, 1e-05
      %v1886 = vadd.f32 %v1646, 1e-05
      %v1887 = vadd.f32 %v1647, 1e-05
      %v1888 = vadd.f32 %v1648, 1e-05
      %v1889 = vadd.f32 %v1649, 1e-05
      %v1890 = vadd.f32 %v1650, 1e-05
      %v1891 = vadd.f32 %v1651, 1e-05
      %v1892 = vrsqrt.pop %v1884
      %v1893 = vrsqrt.pop %v1885
      %v1894 = vrsqrt.pop %v1886
      %v1895 = vrsqrt.pop %v1887
      %v1896 = vrsqrt.pop %v1888
      %v1897 = vrsqrt.pop %v1889
      %v1898 = vrsqrt.pop %v1890
      %v1899 = vrsqrt.pop %v1891
      %v1900 = vadd.f32 %v1876, 1e-05
      %v1901 = vadd.f32 %v1877, 1e-05
      %v1902 = vadd.f32 %v1878, 1e-05
      %v1903 = vadd.f32 %v1879, 1e-05
      %v1904 = vadd.f32 %v1880, 1e-05
      %v1905 = vadd.f32 %v1881, 1e-05
      %v1906 = vadd.f32 %v1882, 1e-05
      %v1907 = vadd.f32 %v1883, 1e-05
      %v1908 = vrsqrt.pop %v1900
      %v1909 = vrsqrt.pop %v1901
      %v1910 = vrsqrt.pop %v1902
      %v1911 = vrsqrt.pop %v1903
      %v1912 = vrsqrt.pop %v1904
      %v1913 = vrsqrt.pop %v1905
      %v1914 = vrsqrt.pop %v1906
      %v1915 = vrsqrt.pop %v1907
      %v1916 = vmul.f32 %v1892, %v1892
      %v1917 = vmul.f32 %v1893, %v1893
      %v1918 = vmul.f32 %v1894, %v1894
      %v1919 = vmul.f32 %v1895, %v1895
      %v1920 = vmul.f32 %v1896, %v1896
      %v1921 = vmul.f32 %v1897, %v1897
      %v1922 = vmul.f32 %v1898, %v1898
      %v1923 = vmul.f32 %v1899, %v1899
      %v1924 = vmul.f32 %v1916, %v1548
      %v1925 = vmul.f32 %v1917, %v1549
      %v1926 = vmul.f32 %v1918, %v1550
      %v1927 = vmul.f32 %v1919, %v1551
      %v1928 = vmul.f32 %v1920, %v1552
      %v1929 = vmul.f32 %v1921, %v1553
      %v1930 = vmul.f32 %v1922, %v1554
      %v1931 = vmul.f32 %v1923, %v1555
      %v1932 = vmul.f32 %v1892, 2.0
      %v1933 = vmul.f32 %v1893, 2.0
      %v1934 = vmul.f32 %v1894, 2.0
      %v1935 = vmul.f32 %v1895, 2.0
      %v1936 = vmul.f32 %v1896, 2.0
      %v1937 = vmul.f32 %v1897, 2.0
      %v1938 = vmul.f32 %v1898, 2.0
      %v1939 = vmul.f32 %v1899, 2.0
      %v1940 = vmul.f32 %v1932, %v1908
      %v1941 = vmul.f32 %v1933, %v1909
      %v1942 = vmul.f32 %v1934, %v1910
      %v1943 = vmul.f32 %v1935, %v1911
      %v1944 = vmul.f32 %v1936, %v1912
      %v1945 = vmul.f32 %v1937, %v1913
      %v1946 = vmul.f32 %v1938, %v1914
      %v1947 = vmul.f32 %v1939, %v1915
      %v1948 = vmul.f32 %v1940, %v1572
      %v1949 = vmul.f32 %v1941, %v1573
      %v1950 = vmul.f32 %v1942, %v1574
      %v1951 = vmul.f32 %v1943, %v1575
      %v1952 = vmul.f32 %v1944, %v1576
      %v1953 = vmul.f32 %v1945, %v1577
      %v1954 = vmul.f32 %v1946, %v1578
      %v1955 = vmul.f32 %v1947, %v1579
      %v1956 = vsub.f32 %v1924, %v1948
      %v1957 = vsub.f32 %v1925, %v1949
      %v1958 = vsub.f32 %v1926, %v1950
      %v1959 = vsub.f32 %v1927, %v1951
      %v1960 = vsub.f32 %v1928, %v1952
      %v1961 = vsub.f32 %v1929, %v1953
      %v1962 = vsub.f32 %v1930, %v1954
      %v1963 = vsub.f32 %v1931, %v1955
      %v1964 = vmul.f32 %v1908, %v1908
      %v1965 = vmul.f32 %v1909, %v1909
      %v1966 = vmul.f32 %v1910, %v1910
      %v1967 = vmul.f32 %v1911, %v1911
      %v1968 = vmul.f32 %v1912, %v1912
      %v1969 = vmul.f32 %v1913, %v1913
      %v1970 = vmul.f32 %v1914, %v1914
      %v1971 = vmul.f32 %v1915, %v1915
      %v1972 = vmul.f32 %v1964, %v1564
      %v1973 = vmul.f32 %v1965, %v1565
      %v1974 = vmul.f32 %v1966, %v1566
      %v1975 = vmul.f32 %v1967, %v1567
      %v1976 = vmul.f32 %v1968, %v1568
      %v1977 = vmul.f32 %v1969, %v1569
      %v1978 = vmul.f32 %v1970, %v1570
      %v1979 = vmul.f32 %v1971, %v1571
      %v1980 = vadd.f32 %v1956, %v1972
      %v1981 = vadd.f32 %v1957, %v1973
      %v1982 = vadd.f32 %v1958, %v1974
      %v1983 = vadd.f32 %v1959, %v1975
      %v1984 = vadd.f32 %v1960, %v1976
      %v1985 = vadd.f32 %v1961, %v1977
      %v1986 = vadd.f32 %v1962, %v1978
      %v1987 = vadd.f32 %v1963, %v1979
      %v1988 = vmul.f32 %v1892, %v1596
      %v1989 = vmul.f32 %v1893, %v1597
      %v1990 = vmul.f32 %v1894, %v1598
      %v1991 = vmul.f32 %v1895, %v1599
      %v1992 = vmul.f32 %v1896, %v1600
      %v1993 = vmul.f32 %v1897, %v1601
      %v1994 = vmul.f32 %v1898, %v1602
      %v1995 = vmul.f32 %v1899, %v1603
      %v1996 = vmul.f32 %v1908, %v1836
      %v1997 = vmul.f32 %v1909, %v1837
      %v1998 = vmul.f32 %v1910, %v1838
      %v1999 = vmul.f32 %v1911, %v1839
      %v2000 = vmul.f32 %v1912, %v1840
      %v2001 = vmul.f32 %v1913, %v1841
      %v2002 = vmul.f32 %v1914, %v1842
      %v2003 = vmul.f32 %v1915, %v1843
      %v2004 = vsub.f32 %v1988, %v1996
      %v2005 = vsub.f32 %v1989, %v1997
      %v2006 = vsub.f32 %v1990, %v1998
      %v2007 = vsub.f32 %v1991, %v1999
      %v2008 = vsub.f32 %v1992, %v2000
      %v2009 = vsub.f32 %v1993, %v2001
      %v2010 = vsub.f32 %v1994, %v2002
      %v2011 = vsub.f32 %v1995, %v2003
      %v2012 = vmul.f32 %v2004, %v2004
      %v2013 = vmul.f32 %v2005, %v2005
      %v2014 = vmul.f32 %v2006, %v2006
      %v2015 = vmul.f32 %v2007, %v2007
      %v2016 = vmul.f32 %v2008, %v2008
      %v2017 = vmul.f32 %v2009, %v2009
      %v2018 = vmul.f32 %v2010, %v2010
      %v2019 = vmul.f32 %v2011, %v2011
      %v2020 = vmul.f32 %v2012, 64.0
      %v2021 = vmul.f32 %v2013, 64.0
      %v2022 = vmul.f32 %v2014, 64.0
      %v2023 = vmul.f32 %v2015, 64.0
      %v2024 = vmul.f32 %v2016, 64.0
      %v2025 = vmul.f32 %v2017, 64.0
      %v2026 = vmul.f32 %v2018, 64.0
      %v2027 = vmul.f32 %v2019, 64.0
      %v2028 = vsub.f32 %v1980, %v2020
      %v2029 = vsub.f32 %v1981, %v2021
      %v2030 = vsub.f32 %v1982, %v2022
      %v2031 = vsub.f32 %v1983, %v2023
      %v2032 = vsub.f32 %v1984, %v2024
      %v2033 = vsub.f32 %v1985, %v2025
      %v2034 = vsub.f32 %v1986, %v2026
      %v2035 = vsub.f32 %v1987, %v2027
      %v2036 = vmax.f32 %v2028, 0.0
      %v2037 = vmax.f32 %v2029, 0.0
      %v2038 = vmax.f32 %v2030, 0.0
      %v2039 = vmax.f32 %v2031, 0.0
      %v2040 = vmax.f32 %v2032, 0.0
      %v2041 = vmax.f32 %v2033, 0.0
      %v2042 = vmax.f32 %v2034, 0.0
      %v2043 = vmax.f32 %v2035, 0.0
      %v2044 = vld [vmem:[#allocation16] sm:$0xff]
      %v2045 = vld [vmem:[#allocation16 + $0x8] sm:$0xff]
      %v2046 = vld [vmem:[#allocation16 + $0x10] sm:$0xff]
      %v2047 = vld [vmem:[#allocation16 + $0x18] sm:$0xff]
      %v2048 = vld [vmem:[#allocation16 + $0x20] sm:$0xff]
      %v2049 = vld [vmem:[#allocation16 + $0x28] sm:$0xff]
      %v2050 = vld [vmem:[#allocation16 + $0x30] sm:$0xff]
      %v2051 = vld [vmem:[#allocation16 + $0x38] sm:$0xff]
      %v2052 = vadd.f32 %v2044, %v2036
      %v2053 = vadd.f32 %v2045, %v2037
      %v2054 = vadd.f32 %v2046, %v2038
      %v2055 = vadd.f32 %v2047, %v2039
      %v2056 = vadd.f32 %v2048, %v2040
      %v2057 = vadd.f32 %v2049, %v2041
      %v2058 = vadd.f32 %v2050, %v2042
      %v2059 = vadd.f32 %v2051, %v2043
      %2060 = vst.msk [vmem:[#allocation16] sm:$0xff] %vm240, %v2052
      %2061 = vst.msk [vmem:[#allocation16 + $0x8] sm:$0xff] %vm240, %v2053
      %2062 = vst.msk [vmem:[#allocation16 + $0x10] sm:$0xff] %vm240, %v2054
      %2063 = vst.msk [vmem:[#allocation16 + $0x18] sm:$0xff] %vm240, %v2055
      %2064 = vst.msk [vmem:[#allocation16 + $0x20] sm:$0xff] %vm240, %v2056
      %2065 = vst.msk [vmem:[#allocation16 + $0x28] sm:$0xff] %vm240, %v2057
      %2066 = vst.msk [vmem:[#allocation16 + $0x30] sm:$0xff] %vm240, %v2058
      %2067 = vst.msk [vmem:[#allocation16 + $0x38] sm:$0xff] %vm240, %v2059
      %v2068 = vld [vmem:[#allocation17] sm:$0xff]
      %v2069 = vld [vmem:[#allocation17 + $0x8] sm:$0xff]
      %v2070 = vld [vmem:[#allocation17 + $0x10] sm:$0xff]
      %v2071 = vld [vmem:[#allocation17 + $0x18] sm:$0xff]
      %v2072 = vld [vmem:[#allocation17 + $0x20] sm:$0xff]
      %v2073 = vld [vmem:[#allocation17 + $0x28] sm:$0xff]
      %v2074 = vld [vmem:[#allocation17 + $0x30] sm:$0xff]
      %v2075 = vld [vmem:[#allocation17 + $0x38] sm:$0xff]
      %v2076 = vadd.f32 %v2068, %v1700
      %v2077 = vadd.f32 %v2069, %v1701
      %v2078 = vadd.f32 %v2070, %v1702
      %v2079 = vadd.f32 %v2071, %v1703
      %v2080 = vadd.f32 %v2072, %v1704
      %v2081 = vadd.f32 %v2073, %v1705
      %v2082 = vadd.f32 %v2074, %v1706
      %v2083 = vadd.f32 %v2075, %v1707
      %2084 = vst.msk [vmem:[#allocation17] sm:$0xff] %vm240, %v2076
      %2085 = vst.msk [vmem:[#allocation17 + $0x8] sm:$0xff] %vm240, %v2077
      %2086 = vst.msk [vmem:[#allocation17 + $0x10] sm:$0xff] %vm240, %v2078
      %2087 = vst.msk [vmem:[#allocation17 + $0x18] sm:$0xff] %vm240, %v2079
      %2088 = vst.msk [vmem:[#allocation17 + $0x20] sm:$0xff] %vm240, %v2080
      %2089 = vst.msk [vmem:[#allocation17 + $0x28] sm:$0xff] %vm240, %v2081
      %2090 = vst.msk [vmem:[#allocation17 + $0x30] sm:$0xff] %vm240, %v2082
      %2091 = vst.msk [vmem:[#allocation17 + $0x38] sm:$0xff] %vm240, %v2083
      %v2092 = vld [vmem:[#allocation18] sm:$0xff]
      %v2093 = vld [vmem:[#allocation18 + $0x8] sm:$0xff]
      %v2094 = vld [vmem:[#allocation18 + $0x10] sm:$0xff]
      %v2095 = vld [vmem:[#allocation18 + $0x18] sm:$0xff]
      %v2096 = vld [vmem:[#allocation18 + $0x20] sm:$0xff]
      %v2097 = vld [vmem:[#allocation18 + $0x28] sm:$0xff]
      %v2098 = vld [vmem:[#allocation18 + $0x30] sm:$0xff]
      %v2099 = vld [vmem:[#allocation18 + $0x38] sm:$0xff]
      %v2100 = vadd.f32 %v2092, %v1828
      %v2101 = vadd.f32 %v2093, %v1829
      %v2102 = vadd.f32 %v2094, %v1830
      %v2103 = vadd.f32 %v2095, %v1831
      %v2104 = vadd.f32 %v2096, %v1832
      %v2105 = vadd.f32 %v2097, %v1833
      %v2106 = vadd.f32 %v2098, %v1834
      %v2107 = vadd.f32 %v2099, %v1835
      %2108 = vst.msk [vmem:[#allocation18] sm:$0xff] %vm240, %v2100
      %2109 = vst.msk [vmem:[#allocation18 + $0x8] sm:$0xff] %vm240, %v2101
      %2110 = vst.msk [vmem:[#allocation18 + $0x10] sm:$0xff] %vm240, %v2102
      %2111 = vst.msk [vmem:[#allocation18 + $0x18] sm:$0xff] %vm240, %v2103
      %2112 = vst.msk [vmem:[#allocation18 + $0x20] sm:$0xff] %vm240, %v2104
      %2113 = vst.msk [vmem:[#allocation18 + $0x28] sm:$0xff] %vm240, %v2105
      %2114 = vst.msk [vmem:[#allocation18 + $0x30] sm:$0xff] %vm240, %v2106
      %2115 = vst.msk [vmem:[#allocation18 + $0x38] sm:$0xff] %vm240, %v2107
    $region37: #{_lambda_.7} parent=1 // pred_fallthru
      _
    // Predicated region
    $region38: #{_lambda_.7} parent=1 // pred_check
      _
    $region39: #{_lambda_.7} parent=1 // pred_check_branch
      %2117 = sbr.rel (%p30) target = $region41
    $region40: #{_lambda_.7} parent=1 // pred_region
      %v2118 = vld [vmem:[#allocation16] sm:$0xff]
      %v2119 = vld [vmem:[#allocation16 + $0x8] sm:$0xff]
      %v2120 = vld [vmem:[#allocation16 + $0x10] sm:$0xff]
      %v2121 = vld [vmem:[#allocation16 + $0x18] sm:$0xff]
      %v2122 = vld [vmem:[#allocation16 + $0x20] sm:$0xff]
      %v2123 = vld [vmem:[#allocation16 + $0x28] sm:$0xff]
      %v2124 = vld [vmem:[#allocation16 + $0x30] sm:$0xff]
      %v2125 = vld [vmem:[#allocation16 + $0x38] sm:$0xff]
      %v2126 = vsel %vm240, %v2118, 0.0
      %v2127 = vsel %vm240, %v2119, 0.0
      %v2128 = vadd.f32 %v2126, %v2127
      %v2129 = vsel %vm240, %v2120, 0.0
      %v2130 = vadd.f32 %v2128, %v2129
      %v2131 = vsel %vm240, %v2121, 0.0
      %v2132 = vadd.f32 %v2130, %v2131
      %v2133 = vsel %vm240, %v2122, 0.0
      %v2134 = vadd.f32 %v2132, %v2133
      %v2135 = vsel %vm240, %v2123, 0.0
      %v2136 = vadd.f32 %v2134, %v2135
      %v2137 = vsel %vm240, %v2124, 0.0
      %v2138 = vadd.f32 %v2136, %v2137
      %v2139 = vsel %vm240, %v2125, 0.0
      %v2140 = vadd.f32 %v2138, %v2139
      %v2141 = vrot.slane %v2140, 4
      %v2142 = vadd.f32 %v2140, %v2141
      %v2143 = vrot.slane %v2142, 2
      %v2144 = vadd.f32 %v2142, %v2143
      %v2145 = vrot.slane %v2144, 1
      %v2146 = vadd.f32 %v2144, %v2145
      %vm2147 = vcmask 0
      %2148 = vst.msk [vmem:[#allocation19] sm:$0x1] %vm2147, %v2146
      %v2149 = vld [vmem:[#allocation17] sm:$0xff]
      %v2150 = vld [vmem:[#allocation17 + $0x8] sm:$0xff]
      %v2151 = vld [vmem:[#allocation17 + $0x10] sm:$0xff]
      %v2152 = vld [vmem:[#allocation17 + $0x18] sm:$0xff]
      %v2153 = vld [vmem:[#allocation17 + $0x20] sm:$0xff]
      %v2154 = vld [vmem:[#allocation17 + $0x28] sm:$0xff]
      %v2155 = vld [vmem:[#allocation17 + $0x30] sm:$0xff]
      %v2156 = vld [vmem:[#allocation17 + $0x38] sm:$0xff]
      %v2157 = vsel %vm240, %v2149, 0.0
      %v2158 = vsel %vm240, %v2150, 0.0
      %v2159 = vadd.f32 %v2157, %v2158
      %v2160 = vsel %vm240, %v2151, 0.0
      %v2161 = vadd.f32 %v2159, %v2160
      %v2162 = vsel %vm240, %v2152, 0.0
      %v2163 = vadd.f32 %v2161, %v2162
      %v2164 = vsel %vm240, %v2153, 0.0
      %v2165 = vadd.f32 %v2163, %v2164
      %v2166 = vsel %vm240, %v2154, 0.0
      %v2167 = vadd.f32 %v2165, %v2166
      %v2168 = vsel %vm240, %v2155, 0.0
      %v2169 = vadd.f32 %v2167, %v2168
      %v2170 = vsel %vm240, %v2156, 0.0
      %v2171 = vadd.f32 %v2169, %v2170
      %v2172 = vrot.slane %v2171, 4
      %v2173 = vadd.f32 %v2171, %v2172
      %v2174 = vrot.slane %v2173, 2
      %v2175 = vadd.f32 %v2173, %v2174
      %v2176 = vrot.slane %v2175, 1
      %v2177 = vadd.f32 %v2175, %v2176
      %2178 = vst.msk [vmem:[#allocation21] sm:$0x1] %vm2147, %v2177
      %v2179 = vld [vmem:[#allocation18] sm:$0xff]
      %v2180 = vld [vmem:[#allocation18 + $0x8] sm:$0xff]
      %v2181 = vld [vmem:[#allocation18 + $0x10] sm:$0xff]
      %v2182 = vld [vmem:[#allocation18 + $0x18] sm:$0xff]
      %v2183 = vld [vmem:[#allocation18 + $0x20] sm:$0xff]
      %v2184 = vld [vmem:[#allocation18 + $0x28] sm:$0xff]
      %v2185 = vld [vmem:[#allocation18 + $0x30] sm:$0xff]
      %v2186 = vld [vmem:[#allocation18 + $0x38] sm:$0xff]
      %v2187 = vsel %vm240, %v2179, 0.0
      %v2188 = vsel %vm240, %v2180, 0.0
      %v2189 = vadd.f32 %v2187, %v2188
      %v2190 = vsel %vm240, %v2181, 0.0
      %v2191 = vadd.f32 %v2189, %v2190
      %v2192 = vsel %vm240, %v2182, 0.0
      %v2193 = vadd.f32 %v2191, %v2192
      %v2194 = vsel %vm240, %v2183, 0.0
      %v2195 = vadd.f32 %v2193, %v2194
      %v2196 = vsel %vm240, %v2184, 0.0
      %v2197 = vadd.f32 %v2195, %v2196
      %v2198 = vsel %vm240, %v2185, 0.0
      %v2199 = vadd.f32 %v2197, %v2198
      %v2200 = vsel %vm240, %v2186, 0.0
      %v2201 = vadd.f32 %v2199, %v2200
      %v2202 = vrot.slane %v2201, 4
      %v2203 = vadd.f32 %v2201, %v2202
      %v2204 = vrot.slane %v2203, 2
      %v2205 = vadd.f32 %v2203, %v2204
      %v2206 = vrot.slane %v2205, 1
      %v2207 = vadd.f32 %v2205, %v2206
      %2208 = vst.msk [vmem:[#allocation23] sm:$0x1] %vm2147, %v2207
    $region41: #{_lambda_.7} parent=1 // pred_fallthru
      _
    // Predicated region
    $region42: #{_lambda_.7} parent=1 // pred_check
      _
    $region43: #{_lambda_.7} parent=1 // pred_check_branch
      %2210 = sbr.rel (0) target = $region45
    $region44: #{_lambda_.7} parent=1 // pred_region
      %s2212 = ssub.s32 16, 16
      %2213 = vsyncadd [#allocation20], %s2212
      %s2215 = sshll.u32 [#allocation19], 4
      %s2216 = int_to_ptr.vmem [resolvable:$true] %s2215
      %2218 = dma.vmem_to_hbm [thread:$0]  %s2216, 16, %s6, [#allocation20]
    $region45: #{_lambda_.7} parent=1 // pred_fallthru
      _
    // Predicated region
    $region46: #{_lambda_.7} parent=1 // pred_check
      _
    $region47: #{_lambda_.7} parent=1 // pred_check_branch
      %2220 = sbr.rel (0) target = $region49
    $region48: #{_lambda_.7} parent=1 // pred_region
      %s2222 = ssub.s32 16, 16
      %2223 = vsyncadd [#allocation22], %s2222
      %s2225 = sshll.u32 [#allocation21], 4
      %s2226 = int_to_ptr.vmem [resolvable:$true] %s2225
      %2228 = dma.vmem_to_hbm [thread:$0]  %s2226, 16, %s7, [#allocation22]
    $region49: #{_lambda_.7} parent=1 // pred_fallthru
      _
    // Predicated region
    $region50: #{_lambda_.7} parent=1 // pred_check
      _
    $region51: #{_lambda_.7} parent=1 // pred_check_branch
      %2230 = sbr.rel (0) target = $region53
    $region52: #{_lambda_.7} parent=1 // pred_region
      %s2232 = ssub.s32 16, 16
      %2233 = vsyncadd [#allocation22], %s2232
      %s2235 = sshll.u32 [#allocation23], 4
      %s2236 = int_to_ptr.vmem [resolvable:$true] %s2235
      %2238 = dma.vmem_to_hbm [thread:$0]  %s2236, 16, %s8, [#allocation22]
    $region53: #{_lambda_.7} parent=1 // pred_fallthru
      _
    // Predicated region
    $region54: #{_lambda_.7} parent=1 // pred_check
      _
    $region55: #{_lambda_.7} parent=1 // pred_check_branch
      %2240 = sbr.rel (0) target = $region57
    $region56: #{_lambda_.7} parent=1 // pred_region
      %2241 = dma.done [#allocation20], 16
    $region57: #{_lambda_.7} parent=1 // pred_fallthru
      _
    // Predicated region
    $region58: #{_lambda_.7} parent=1 // pred_check
      _
    $region59: #{_lambda_.7} parent=1 // pred_check_branch
      %2243 = sbr.rel (0) target = $region61
    $region60: #{_lambda_.7} parent=1 // pred_region
      %2244 = dma.done [#allocation22], 16
    $region61: #{_lambda_.7} parent=1 // pred_fallthru
      _
    // Predicated region
    $region62: #{_lambda_.7} parent=1 // pred_check
      _
    $region63: #{_lambda_.7} parent=1 // pred_check_branch
      %2246 = sbr.rel (0) target = $region65
    $region64: #{_lambda_.7} parent=1 // pred_region
      %2247 = dma.done [#allocation22], 16
    $region65: #{_lambda_.7} parent=1 // pred_fallthru
      _
    %2248 = vsyncpa [#allocation20], 1
    %2249 = vsyncpa [#allocation22], 1

// kernel: _lambda_.13
$region0: #{_lambda_.13}
  #allocation0 [shape = 'u32[]', space=smem, size = 0x4, offset = 0x4, fixed_abs, tag = 'smem constant byte address 0x4 - core index']
  #allocation1 [shape = 'u32[144,128]{1,0:T(1,128)}', space=vmem, size = 0x12000, scoped, tag = 'internal scratch']
  #allocation2 [shape = 'f32[8,1]{1,0:T(8,128)}', space=vmem, size = 0x1000, scoped, tag = 'scratch operand']
  %s0 = inlined_call_operand.vmem [shape: f32[8,512], index: 0, kind: input, shape index: {}]
  %s1 = inlined_call_operand.vmem [shape: f32[8,512], index: 1, kind: input, shape index: {}]
  %s2 = inlined_call_operand.vmem [shape: f32[8,512], index: 2, kind: input, shape index: {}]
  %s3 = inlined_call_operand.vmem [shape: f32[8,512], index: 3, kind: input, shape index: {}]
  %s4 = inlined_call_operand.vmem [shape: f32[8,512], index: 4, kind: input, shape index: {}]
  %s5 = inlined_call_operand.vmem [shape: f32[8,512], index: 5, kind: input, shape index: {}]
  %s6 = inlined_call_operand.vmem [shape: f32[8,512], index: 6, kind: input, shape index: {}]
  %s7 = inlined_call_operand.vmem [shape: f32[8,512], index: 7, kind: input, shape index: {}]
  %s8 = inlined_call_operand.hbm [shape: f32[1,1], index: 8, kind: output, shape index: {}]
  %s9 = sld [smem:[#allocation0]]
  $region50: #{_lambda_.13} parent=0
    _
  %s11 = ssub.s32 1, %s9
  %s12 = scalar_select 0, %s11, %s9
  $region1: #{_lambda_.13} parent=0
    #allocation3 [shape = 'u8[512]{0}', space=vmem, size = 0x400, scoped, tag = 'output window, operand 0, single buffered']
    #allocation4 [shape = 's32[1]{0}', space=sflag, size = 0x4, scoped, tag = 'scoped memory for _lambda_.13']
    %13 = vsyncpa [#allocation4], 0
    // Predicated region
    $region2: #{_lambda_.13} parent=1 // pred_check
      _
    $region3: #{_lambda_.13} parent=1 // pred_check_branch
      %15 = sbr.rel (0) target = $region5
    $region4: #{_lambda_.13} parent=1 // pred_region
      _
    $region5: #{_lambda_.13} parent=1 // pred_fallthru
      _
    // Predicated region
    $region6: #{_lambda_.13} parent=1 // pred_check
      _
    $region7: #{_lambda_.13} parent=1 // pred_check_branch
      %17 = sbr.rel (0) target = $region9
    $region8: #{_lambda_.13} parent=1 // pred_region
      _
    $region9: #{_lambda_.13} parent=1 // pred_fallthru
      _
    // Predicated region
    $region10: #{_lambda_.13} parent=1 // pred_check
      _
    $region11: #{_lambda_.13} parent=1 // pred_check_branch
      %19 = sbr.rel (0) target = $region13
    $region12: #{_lambda_.13} parent=1 // pred_region
      _
    $region13: #{_lambda_.13} parent=1 // pred_fallthru
      _
    // Predicated region
    $region14: #{_lambda_.13} parent=1 // pred_check
      _
    $region15: #{_lambda_.13} parent=1 // pred_check_branch
      %21 = sbr.rel (0) target = $region17
    $region16: #{_lambda_.13} parent=1 // pred_region
      _
    $region17: #{_lambda_.13} parent=1 // pred_fallthru
      _
    // Predicated region
    $region18: #{_lambda_.13} parent=1 // pred_check
      _
    $region19: #{_lambda_.13} parent=1 // pred_check_branch
      %23 = sbr.rel (0) target = $region21
    $region20: #{_lambda_.13} parent=1 // pred_region
      _
    $region21: #{_lambda_.13} parent=1 // pred_fallthru
      _
    // Predicated region
    $region22: #{_lambda_.13} parent=1 // pred_check
      _
    $region23: #{_lambda_.13} parent=1 // pred_check_branch
      %25 = sbr.rel (0) target = $region25
    $region24: #{_lambda_.13} parent=1 // pred_region
      _
    $region25: #{_lambda_.13} parent=1 // pred_fallthru
      _
    // Predicated region
    $region26: #{_lambda_.13} parent=1 // pred_check
      _
    $region27: #{_lambda_.13} parent=1 // pred_check_branch
      %27 = sbr.rel (0) target = $region29
    $region28: #{_lambda_.13} parent=1 // pred_region
      _
    $region29: #{_lambda_.13} parent=1 // pred_fallthru
      _
    // Predicated region
    $region30: #{_lambda_.13} parent=1 // pred_check
      _
    $region31: #{_lambda_.13} parent=1 // pred_check_branch
      %29 = sbr.rel (0) target = $region33
    $region32: #{_lambda_.13} parent=1 // pred_region
      _
    $region33: #{_lambda_.13} parent=1 // pred_fallthru
      _
    %p30 = scmp.eq.s32.totalorder 0, 0
    // Predicated region
    $region34: #{_lambda_.13} parent=1 // pred_check
      %p31 = pneg %p30
    $region35: #{_lambda_.13} parent=1 // pred_check_branch
      %33 = sbr.rel (%p31) target = $region37
    $region36: #{_lambda_.13} parent=1 // pred_region
      %vm34 = vcmask 7168
      %35 = vst.msk [vmem:[#allocation2] sm:$0xff] %vm34, 0.0
    $region37: #{_lambda_.13} parent=1 // pred_fallthru
      _
    %v36 = vld [vmem:[%s0] sm:$0xff]
    %v37 = vld [vmem:[%s0 + $0x8] sm:$0xff]
    %v38 = vld [vmem:[%s0 + $0x10] sm:$0xff]
    %v39 = vld [vmem:[%s0 + $0x18] sm:$0xff]
    %v40 = vld [vmem:[%s1] sm:$0xff]
    %v41 = vld [vmem:[%s1 + $0x8] sm:$0xff]
    %v42 = vld [vmem:[%s1 + $0x10] sm:$0xff]
    %v43 = vld [vmem:[%s1 + $0x18] sm:$0xff]
    %v44 = vsub.f32 %v36, %v40
    %v45 = vsub.f32 %v37, %v41
    %v46 = vsub.f32 %v38, %v42
    %v47 = vsub.f32 %v39, %v43
    %v48 = vmul.f32 %v44, %v44
    %v49 = vmul.f32 %v45, %v45
    %v50 = vmul.f32 %v46, %v46
    %v51 = vmul.f32 %v47, %v47
    %v52 = vadd.f32 %v48, %v49
    %v53 = vadd.f32 %v52, %v50
    %v54 = vadd.f32 %v53, %v51
    %55 = vadd.xlane.f32.xlu0 %v54
    %v56 = vpop.xlane.xlu0 %55
    %v57 = vld [vmem:[%s2] sm:$0xff]
    %v58 = vld [vmem:[%s2 + $0x8] sm:$0xff]
    %v59 = vld [vmem:[%s2 + $0x10] sm:$0xff]
    %v60 = vld [vmem:[%s2 + $0x18] sm:$0xff]
    %v61 = vld [vmem:[%s3] sm:$0xff]
    %v62 = vld [vmem:[%s3 + $0x8] sm:$0xff]
    %v63 = vld [vmem:[%s3 + $0x10] sm:$0xff]
    %v64 = vld [vmem:[%s3 + $0x18] sm:$0xff]
    %v65 = vsub.f32 %v57, %v61
    %v66 = vsub.f32 %v58, %v62
    %v67 = vsub.f32 %v59, %v63
    %v68 = vsub.f32 %v60, %v64
    %v69 = vmul.f32 %v65, %v65
    %v70 = vmul.f32 %v66, %v66
    %v71 = vmul.f32 %v67, %v67
    %v72 = vmul.f32 %v68, %v68
    %v73 = vadd.f32 %v69, %v70
    %v74 = vadd.f32 %v73, %v71
    %v75 = vadd.f32 %v74, %v72
    %76 = vadd.xlane.f32.xlu0 %v75
    %v77 = vpop.xlane.xlu0 %76
    %v78 = vadd.f32 %v56, %v77
    %v79 = vld [vmem:[%s4] sm:$0xff]
    %v80 = vld [vmem:[%s4 + $0x8] sm:$0xff]
    %v81 = vld [vmem:[%s4 + $0x10] sm:$0xff]
    %v82 = vld [vmem:[%s4 + $0x18] sm:$0xff]
    %v83 = vld [vmem:[%s5] sm:$0xff]
    %v84 = vld [vmem:[%s5 + $0x8] sm:$0xff]
    %v85 = vld [vmem:[%s5 + $0x10] sm:$0xff]
    %v86 = vld [vmem:[%s5 + $0x18] sm:$0xff]
    %v87 = vsub.f32 %v79, %v83
    %v88 = vsub.f32 %v80, %v84
    %v89 = vsub.f32 %v81, %v85
    %v90 = vsub.f32 %v82, %v86
    %v91 = vmul.f32 %v87, %v87
    %v92 = vmul.f32 %v88, %v88
    %v93 = vmul.f32 %v89, %v89
    %v94 = vmul.f32 %v90, %v90
    %v95 = vadd.f32 %v91, %v92
    %v96 = vadd.f32 %v95, %v93
    %v97 = vadd.f32 %v96, %v94
    %98 = vadd.xlane.f32.xlu0 %v97
    %v99 = vpop.xlane.xlu0 %98
    %v100 = vadd.f32 %v78, %v99
    %v101 = vld [vmem:[%s6] sm:$0xff]
    %v102 = vld [vmem:[%s6 + $0x8] sm:$0xff]
    %v103 = vld [vmem:[%s6 + $0x10] sm:$0xff]
    %v104 = vld [vmem:[%s6 + $0x18] sm:$0xff]
    %v105 = vld [vmem:[%s7] sm:$0xff]
    %v106 = vld [vmem:[%s7 + $0x8] sm:$0xff]
    %v107 = vld [vmem:[%s7 + $0x10] sm:$0xff]
    %v108 = vld [vmem:[%s7 + $0x18] sm:$0xff]
    %v109 = vsub.f32 %v101, %v105
    %v110 = vsub.f32 %v102, %v106
    %v111 = vsub.f32 %v103, %v107
    %v112 = vsub.f32 %v104, %v108
    %v113 = vmul.f32 %v109, %v109
    %v114 = vmul.f32 %v110, %v110
    %v115 = vmul.f32 %v111, %v111
    %v116 = vmul.f32 %v112, %v112
    %v117 = vadd.f32 %v113, %v114
    %v118 = vadd.f32 %v117, %v115
    %v119 = vadd.f32 %v118, %v116
    %120 = vadd.xlane.f32.xlu0 %v119
    %v121 = vpop.xlane.xlu0 %120
    %v122 = vadd.f32 %v100, %v121
    %v123 = vld [vmem:[#allocation2] sm:$0xff]
    %v124 = vadd.f32 %v123, %v122
    %vm125 = vcmask 7168
    %126 = vst.msk [vmem:[#allocation2] sm:$0xff] %vm125, %v124
    // Predicated region
    $region38: #{_lambda_.13} parent=1 // pred_check
      %p127 = pneg %p30
    $region39: #{_lambda_.13} parent=1 // pred_check_branch
      %129 = sbr.rel (%p127) target = $region41
    $region40: #{_lambda_.13} parent=1 // pred_region
      %v130 = vld [vmem:[#allocation2] sm:$0xff]
      %v131 = vsel %vm125, %v130, 0.0
      %v132 = vrot.slane %v131, 4
      %v133 = vadd.f32 %v131, %v132
      %v134 = vrot.slane %v133, 2
      %v135 = vadd.f32 %v133, %v134
      %v136 = vrot.slane %v135, 1
      %v137 = vadd.f32 %v135, %v136
      %vm138 = vcmask 0
      %139 = vst.msk [vmem:[#allocation3] sm:$0x1] %vm138, %v137
    $region41: #{_lambda_.13} parent=1 // pred_fallthru
      _
    // Predicated region
    $region42: #{_lambda_.13} parent=1 // pred_check
      _
    $region43: #{_lambda_.13} parent=1 // pred_check_branch
      %141 = sbr.rel (0) target = $region45
    $region44: #{_lambda_.13} parent=1 // pred_region
      %s143 = ssub.s32 16, 16
      %144 = vsyncadd [#allocation4], %s143
      %s146 = sshll.u32 [#allocation3], 4
      %s147 = int_to_ptr.vmem [resolvable:$true] %s146
      %149 = dma.vmem_to_hbm [thread:$0]  %s147, 16, %s8, [#allocation4]
    $region45: #{_lambda_.13} parent=1 // pred_fallthru
      _
    // Predicated region
    $region46: #{_lambda_.13} parent=1 // pred_check
      _
    $region47: #{_lambda_.13} parent=1 // pred_check_branch
      %151 = sbr.rel (0) target = $region49
    $region48: #{_lambda_.13} parent=1 // pred_region
      %152 = dma.done [#allocation4], 16
    $region49: #{_lambda_.13} parent=1 // pred_fallthru
      _
    %153 = vsyncpa [#allocation4], 1

// kernel: _lambda_.11
$region0: #{_lambda_.11}
  #allocation0 [shape = 'u32[]', space=smem, size = 0x4, offset = 0x4, fixed_abs, tag = 'smem constant byte address 0x4 - core index']
  #allocation1 [shape = 'u32[144,128]{1,0:T(1,128)}', space=vmem, size = 0x12000, scoped, tag = 'internal scratch']
  #allocation2 [shape = 'f32[8,1]{1,0:T(8,128)}', space=vmem, size = 0x1000, scoped, tag = 'scratch operand']
  %s0 = inlined_call_operand.vmem [shape: f32[8,2048], index: 0, kind: input, shape index: {}]
  %s1 = inlined_call_operand.vmem [shape: f32[8,2048], index: 1, kind: input, shape index: {}]
  %s2 = inlined_call_operand.vmem [shape: f32[8,2048], index: 2, kind: input, shape index: {}]
  %s3 = inlined_call_operand.vmem [shape: f32[8,2048], index: 3, kind: input, shape index: {}]
  %s4 = inlined_call_operand.hbm [shape: f32[1,1], index: 4, kind: output, shape index: {}]
  %s5 = sld [smem:[#allocation0]]
  $region34: #{_lambda_.11} parent=0
    _
  %s7 = ssub.s32 1, %s5
  %s8 = scalar_select 0, %s7, %s5
  $region1: #{_lambda_.11} parent=0
    #allocation3 [shape = 'u8[512]{0}', space=vmem, size = 0x400, scoped, tag = 'output window, operand 0, single buffered']
    #allocation4 [shape = 's32[1]{0}', space=sflag, size = 0x4, scoped, tag = 'scoped memory for _lambda_.11']
    %9 = vsyncpa [#allocation4], 0
    // Predicated region
    $region2: #{_lambda_.11} parent=1 // pred_check
      _
    $region3: #{_lambda_.11} parent=1 // pred_check_branch
      %11 = sbr.rel (0) target = $region5
    $region4: #{_lambda_.11} parent=1 // pred_region
      _
    $region5: #{_lambda_.11} parent=1 // pred_fallthru
      _
    // Predicated region
    $region6: #{_lambda_.11} parent=1 // pred_check
      _
    $region7: #{_lambda_.11} parent=1 // pred_check_branch
      %13 = sbr.rel (0) target = $region9
    $region8: #{_lambda_.11} parent=1 // pred_region
      _
    $region9: #{_lambda_.11} parent=1 // pred_fallthru
      _
    // Predicated region
    $region10: #{_lambda_.11} parent=1 // pred_check
      _
    $region11: #{_lambda_.11} parent=1 // pred_check_branch
      %15 = sbr.rel (0) target = $region13
    $region12: #{_lambda_.11} parent=1 // pred_region
      _
    $region13: #{_lambda_.11} parent=1 // pred_fallthru
      _
    // Predicated region
    $region14: #{_lambda_.11} parent=1 // pred_check
      _
    $region15: #{_lambda_.11} parent=1 // pred_check_branch
      %17 = sbr.rel (0) target = $region17
    $region16: #{_lambda_.11} parent=1 // pred_region
      _
    $region17: #{_lambda_.11} parent=1 // pred_fallthru
      _
    %p18 = scmp.eq.s32.totalorder 0, 0
    // Predicated region
    $region18: #{_lambda_.11} parent=1 // pred_check
      %p19 = pneg %p18
    $region19: #{_lambda_.11} parent=1 // pred_check_branch
      %21 = sbr.rel (%p19) target = $region21
    $region20: #{_lambda_.11} parent=1 // pred_region
      %vm22 = vcmask 7168
      %23 = vst.msk [vmem:[#allocation2] sm:$0xff] %vm22, 0.0
    $region21: #{_lambda_.11} parent=1 // pred_fallthru
      _
    %v24 = vld [vmem:[%s0] sm:$0xff]
    %v25 = vld [vmem:[%s0 + $0x8] sm:$0xff]
    %v26 = vld [vmem:[%s0 + $0x10] sm:$0xff]
    %v27 = vld [vmem:[%s0 + $0x18] sm:$0xff]
    %v28 = vld [vmem:[%s0 + $0x20] sm:$0xff]
    %v29 = vld [vmem:[%s0 + $0x28] sm:$0xff]
    %v30 = vld [vmem:[%s0 + $0x30] sm:$0xff]
    %v31 = vld [vmem:[%s0 + $0x38] sm:$0xff]
    %v32 = vld [vmem:[%s0 + $0x40] sm:$0xff]
    %v33 = vld [vmem:[%s0 + $0x48] sm:$0xff]
    %v34 = vld [vmem:[%s0 + $0x50] sm:$0xff]
    %v35 = vld [vmem:[%s0 + $0x58] sm:$0xff]
    %v36 = vld [vmem:[%s0 + $0x60] sm:$0xff]
    %v37 = vld [vmem:[%s0 + $0x68] sm:$0xff]
    %v38 = vld [vmem:[%s0 + $0x70] sm:$0xff]
    %v39 = vld [vmem:[%s0 + $0x78] sm:$0xff]
    %v40 = vld [vmem:[%s1] sm:$0xff]
    %v41 = vld [vmem:[%s1 + $0x8] sm:$0xff]
    %v42 = vld [vmem:[%s1 + $0x10] sm:$0xff]
    %v43 = vld [vmem:[%s1 + $0x18] sm:$0xff]
    %v44 = vld [vmem:[%s1 + $0x20] sm:$0xff]
    %v45 = vld [vmem:[%s1 + $0x28] sm:$0xff]
    %v46 = vld [vmem:[%s1 + $0x30] sm:$0xff]
    %v47 = vld [vmem:[%s1 + $0x38] sm:$0xff]
    %v48 = vld [vmem:[%s1 + $0x40] sm:$0xff]
    %v49 = vld [vmem:[%s1 + $0x48] sm:$0xff]
    %v50 = vld [vmem:[%s1 + $0x50] sm:$0xff]
    %v51 = vld [vmem:[%s1 + $0x58] sm:$0xff]
    %v52 = vld [vmem:[%s1 + $0x60] sm:$0xff]
    %v53 = vld [vmem:[%s1 + $0x68] sm:$0xff]
    %v54 = vld [vmem:[%s1 + $0x70] sm:$0xff]
    %v55 = vld [vmem:[%s1 + $0x78] sm:$0xff]
    %v56 = vsub.f32 %v24, %v40
    %v57 = vsub.f32 %v25, %v41
    %v58 = vsub.f32 %v26, %v42
    %v59 = vsub.f32 %v27, %v43
    %v60 = vsub.f32 %v28, %v44
    %v61 = vsub.f32 %v29, %v45
    %v62 = vsub.f32 %v30, %v46
    %v63 = vsub.f32 %v31, %v47
    %v64 = vsub.f32 %v32, %v48
    %v65 = vsub.f32 %v33, %v49
    %v66 = vsub.f32 %v34, %v50
    %v67 = vsub.f32 %v35, %v51
    %v68 = vsub.f32 %v36, %v52
    %v69 = vsub.f32 %v37, %v53
    %v70 = vsub.f32 %v38, %v54
    %v71 = vsub.f32 %v39, %v55
    %v72 = vmul.f32 %v56, %v56
    %v73 = vmul.f32 %v57, %v57
    %v74 = vmul.f32 %v58, %v58
    %v75 = vmul.f32 %v59, %v59
    %v76 = vmul.f32 %v60, %v60
    %v77 = vmul.f32 %v61, %v61
    %v78 = vmul.f32 %v62, %v62
    %v79 = vmul.f32 %v63, %v63
    %v80 = vmul.f32 %v64, %v64
    %v81 = vmul.f32 %v65, %v65
    %v82 = vmul.f32 %v66, %v66
    %v83 = vmul.f32 %v67, %v67
    %v84 = vmul.f32 %v68, %v68
    %v85 = vmul.f32 %v69, %v69
    %v86 = vmul.f32 %v70, %v70
    %v87 = vmul.f32 %v71, %v71
    %v88 = vadd.f32 %v72, %v73
    %v89 = vadd.f32 %v88, %v74
    %v90 = vadd.f32 %v89, %v75
    %v91 = vadd.f32 %v90, %v76
    %v92 = vadd.f32 %v91, %v77
    %v93 = vadd.f32 %v92, %v78
    %v94 = vadd.f32 %v93, %v79
    %v95 = vadd.f32 %v94, %v80
    %v96 = vadd.f32 %v95, %v81
    %v97 = vadd.f32 %v96, %v82
    %v98 = vadd.f32 %v97, %v83
    %v99 = vadd.f32 %v98, %v84
    %v100 = vadd.f32 %v99, %v85
    %v101 = vadd.f32 %v100, %v86
    %v102 = vadd.f32 %v101, %v87
    %103 = vadd.xlane.f32.xlu0 %v102
    %v104 = vpop.xlane.xlu0 %103
    %v105 = vld [vmem:[%s2] sm:$0xff]
    %v106 = vld [vmem:[%s2 + $0x8] sm:$0xff]
    %v107 = vld [vmem:[%s2 + $0x10] sm:$0xff]
    %v108 = vld [vmem:[%s2 + $0x18] sm:$0xff]
    %v109 = vld [vmem:[%s2 + $0x20] sm:$0xff]
    %v110 = vld [vmem:[%s2 + $0x28] sm:$0xff]
    %v111 = vld [vmem:[%s2 + $0x30] sm:$0xff]
    %v112 = vld [vmem:[%s2 + $0x38] sm:$0xff]
    %v113 = vld [vmem:[%s2 + $0x40] sm:$0xff]
    %v114 = vld [vmem:[%s2 + $0x48] sm:$0xff]
    %v115 = vld [vmem:[%s2 + $0x50] sm:$0xff]
    %v116 = vld [vmem:[%s2 + $0x58] sm:$0xff]
    %v117 = vld [vmem:[%s2 + $0x60] sm:$0xff]
    %v118 = vld [vmem:[%s2 + $0x68] sm:$0xff]
    %v119 = vld [vmem:[%s2 + $0x70] sm:$0xff]
    %v120 = vld [vmem:[%s2 + $0x78] sm:$0xff]
    %v121 = vld [vmem:[%s3] sm:$0xff]
    %v122 = vld [vmem:[%s3 + $0x8] sm:$0xff]
    %v123 = vld [vmem:[%s3 + $0x10] sm:$0xff]
    %v124 = vld [vmem:[%s3 + $0x18] sm:$0xff]
    %v125 = vld [vmem:[%s3 + $0x20] sm:$0xff]
    %v126 = vld [vmem:[%s3 + $0x28] sm:$0xff]
    %v127 = vld [vmem:[%s3 + $0x30] sm:$0xff]
    %v128 = vld [vmem:[%s3 + $0x38] sm:$0xff]
    %v129 = vld [vmem:[%s3 + $0x40] sm:$0xff]
    %v130 = vld [vmem:[%s3 + $0x48] sm:$0xff]
    %v131 = vld [vmem:[%s3 + $0x50] sm:$0xff]
    %v132 = vld [vmem:[%s3 + $0x58] sm:$0xff]
    %v133 = vld [vmem:[%s3 + $0x60] sm:$0xff]
    %v134 = vld [vmem:[%s3 + $0x68] sm:$0xff]
    %v135 = vld [vmem:[%s3 + $0x70] sm:$0xff]
    %v136 = vld [vmem:[%s3 + $0x78] sm:$0xff]
    %v137 = vsub.f32 %v105, %v121
    %v138 = vsub.f32 %v106, %v122
    %v139 = vsub.f32 %v107, %v123
    %v140 = vsub.f32 %v108, %v124
    %v141 = vsub.f32 %v109, %v125
    %v142 = vsub.f32 %v110, %v126
    %v143 = vsub.f32 %v111, %v127
    %v144 = vsub.f32 %v112, %v128
    %v145 = vsub.f32 %v113, %v129
    %v146 = vsub.f32 %v114, %v130
    %v147 = vsub.f32 %v115, %v131
    %v148 = vsub.f32 %v116, %v132
    %v149 = vsub.f32 %v117, %v133
    %v150 = vsub.f32 %v118, %v134
    %v151 = vsub.f32 %v119, %v135
    %v152 = vsub.f32 %v120, %v136
    %v153 = vmul.f32 %v137, %v137
    %v154 = vmul.f32 %v138, %v138
    %v155 = vmul.f32 %v139, %v139
    %v156 = vmul.f32 %v140, %v140
    %v157 = vmul.f32 %v141, %v141
    %v158 = vmul.f32 %v142, %v142
    %v159 = vmul.f32 %v143, %v143
    %v160 = vmul.f32 %v144, %v144
    %v161 = vmul.f32 %v145, %v145
    %v162 = vmul.f32 %v146, %v146
    %v163 = vmul.f32 %v147, %v147
    %v164 = vmul.f32 %v148, %v148
    %v165 = vmul.f32 %v149, %v149
    %v166 = vmul.f32 %v150, %v150
    %v167 = vmul.f32 %v151, %v151
    %v168 = vmul.f32 %v152, %v152
    %v169 = vadd.f32 %v153, %v154
    %v170 = vadd.f32 %v169, %v155
    %v171 = vadd.f32 %v170, %v156
    %v172 = vadd.f32 %v171, %v157
    %v173 = vadd.f32 %v172, %v158
    %v174 = vadd.f32 %v173, %v159
    %v175 = vadd.f32 %v174, %v160
    %v176 = vadd.f32 %v175, %v161
    %v177 = vadd.f32 %v176, %v162
    %v178 = vadd.f32 %v177, %v163
    %v179 = vadd.f32 %v178, %v164
    %v180 = vadd.f32 %v179, %v165
    %v181 = vadd.f32 %v180, %v166
    %v182 = vadd.f32 %v181, %v167
    %v183 = vadd.f32 %v182, %v168
    %184 = vadd.xlane.f32.xlu0 %v183
    %v185 = vpop.xlane.xlu0 %184
    %v186 = vadd.f32 %v104, %v185
    %v187 = vld [vmem:[#allocation2] sm:$0xff]
    %v188 = vadd.f32 %v187, %v186
    %vm189 = vcmask 7168
    %190 = vst.msk [vmem:[#allocation2] sm:$0xff] %vm189, %v188
    // Predicated region
    $region22: #{_lambda_.11} parent=1 // pred_check
      %p191 = pneg %p18
    $region23: #{_lambda_.11} parent=1 // pred_check_branch
      %193 = sbr.rel (%p191) target = $region25
    $region24: #{_lambda_.11} parent=1 // pred_region
      %v194 = vld [vmem:[#allocation2] sm:$0xff]
      %v195 = vsel %vm189, %v194, 0.0
      %v196 = vrot.slane %v195, 4
      %v197 = vadd.f32 %v195, %v196
      %v198 = vrot.slane %v197, 2
      %v199 = vadd.f32 %v197, %v198
      %v200 = vrot.slane %v199, 1
      %v201 = vadd.f32 %v199, %v200
      %vm202 = vcmask 0
      %203 = vst.msk [vmem:[#allocation3] sm:$0x1] %vm202, %v201
    $region25: #{_lambda_.11} parent=1 // pred_fallthru
      _
    // Predicated region
    $region26: #{_lambda_.11} parent=1 // pred_check
      _
    $region27: #{_lambda_.11} parent=1 // pred_check_branch
      %205 = sbr.rel (0) target = $region29
    $region28: #{_lambda_.11} parent=1 // pred_region
      %s207 = ssub.s32 16, 16
      %208 = vsyncadd [#allocation4], %s207
      %s210 = sshll.u32 [#allocation3], 4
      %s211 = int_to_ptr.vmem [resolvable:$true] %s210
      %213 = dma.vmem_to_hbm [thread:$0]  %s211, 16, %s4, [#allocation4]
    $region29: #{_lambda_.11} parent=1 // pred_fallthru
      _
    // Predicated region
    $region30: #{_lambda_.11} parent=1 // pred_check
      _
    $region31: #{_lambda_.11} parent=1 // pred_check_branch
      %215 = sbr.rel (0) target = $region33
    $region32: #{_lambda_.11} parent=1 // pred_region
      %216 = dma.done [#allocation4], 16
    $region33: #{_lambda_.11} parent=1 // pred_fallthru
      _
    %217 = vsyncpa [#allocation4], 1

// kernel: _lambda_.12
$region0: #{_lambda_.12}
  #allocation0 [shape = 'u32[]', space=smem, size = 0x4, offset = 0x4, fixed_abs, tag = 'smem constant byte address 0x4 - core index']
  #allocation1 [shape = 'u32[144,128]{1,0:T(1,128)}', space=vmem, size = 0x12000, scoped, tag = 'internal scratch']
  #allocation2 [shape = 'f32[8,1]{1,0:T(8,128)}', space=vmem, size = 0x1000, scoped, tag = 'scratch operand']
  %s0 = inlined_call_operand.vmem [shape: f32[8,1024], index: 0, kind: input, shape index: {}]
  %s1 = inlined_call_operand.vmem [shape: f32[8,1024], index: 1, kind: input, shape index: {}]
  %s2 = inlined_call_operand.vmem [shape: f32[8,1024], index: 2, kind: input, shape index: {}]
  %s3 = inlined_call_operand.vmem [shape: f32[8,1024], index: 3, kind: input, shape index: {}]
  %s4 = inlined_call_operand.vmem [shape: f32[8,1024], index: 4, kind: input, shape index: {}]
  %s5 = inlined_call_operand.vmem [shape: f32[8,1024], index: 5, kind: input, shape index: {}]
  %s6 = inlined_call_operand.vmem [shape: f32[8,1024], index: 6, kind: input, shape index: {}]
  %s7 = inlined_call_operand.vmem [shape: f32[8,1024], index: 7, kind: input, shape index: {}]
  %s8 = inlined_call_operand.hbm [shape: f32[1,1], index: 8, kind: output, shape index: {}]
  %s9 = sld [smem:[#allocation0]]
  $region50: #{_lambda_.12} parent=0
    _
  %s11 = ssub.s32 1, %s9
  %s12 = scalar_select 0, %s11, %s9
  $region1: #{_lambda_.12} parent=0
    #allocation3 [shape = 'u8[512]{0}', space=vmem, size = 0x400, scoped, tag = 'output window, operand 0, single buffered']
    #allocation4 [shape = 's32[1]{0}', space=sflag, size = 0x4, scoped, tag = 'scoped memory for _lambda_.12']
    %13 = vsyncpa [#allocation4], 0
    // Predicated region
    $region2: #{_lambda_.12} parent=1 // pred_check
      _
    $region3: #{_lambda_.12} parent=1 // pred_check_branch
      %15 = sbr.rel (0) target = $region5
    $region4: #{_lambda_.12} parent=1 // pred_region
      _
    $region5: #{_lambda_.12} parent=1 // pred_fallthru
      _
    // Predicated region
    $region6: #{_lambda_.12} parent=1 // pred_check
      _
    $region7: #{_lambda_.12} parent=1 // pred_check_branch
      %17 = sbr.rel (0) target = $region9
    $region8: #{_lambda_.12} parent=1 // pred_region
      _
    $region9: #{_lambda_.12} parent=1 // pred_fallthru
      _
    // Predicated region
    $region10: #{_lambda_.12} parent=1 // pred_check
      _
    $region11: #{_lambda_.12} parent=1 // pred_check_branch
      %19 = sbr.rel (0) target = $region13
    $region12: #{_lambda_.12} parent=1 // pred_region
      _
    $region13: #{_lambda_.12} parent=1 // pred_fallthru
      _
    // Predicated region
    $region14: #{_lambda_.12} parent=1 // pred_check
      _
    $region15: #{_lambda_.12} parent=1 // pred_check_branch
      %21 = sbr.rel (0) target = $region17
    $region16: #{_lambda_.12} parent=1 // pred_region
      _
    $region17: #{_lambda_.12} parent=1 // pred_fallthru
      _
    // Predicated region
    $region18: #{_lambda_.12} parent=1 // pred_check
      _
    $region19: #{_lambda_.12} parent=1 // pred_check_branch
      %23 = sbr.rel (0) target = $region21
    $region20: #{_lambda_.12} parent=1 // pred_region
      _
    $region21: #{_lambda_.12} parent=1 // pred_fallthru
      _
    // Predicated region
    $region22: #{_lambda_.12} parent=1 // pred_check
      _
    $region23: #{_lambda_.12} parent=1 // pred_check_branch
      %25 = sbr.rel (0) target = $region25
    $region24: #{_lambda_.12} parent=1 // pred_region
      _
    $region25: #{_lambda_.12} parent=1 // pred_fallthru
      _
    // Predicated region
    $region26: #{_lambda_.12} parent=1 // pred_check
      _
    $region27: #{_lambda_.12} parent=1 // pred_check_branch
      %27 = sbr.rel (0) target = $region29
    $region28: #{_lambda_.12} parent=1 // pred_region
      _
    $region29: #{_lambda_.12} parent=1 // pred_fallthru
      _
    // Predicated region
    $region30: #{_lambda_.12} parent=1 // pred_check
      _
    $region31: #{_lambda_.12} parent=1 // pred_check_branch
      %29 = sbr.rel (0) target = $region33
    $region32: #{_lambda_.12} parent=1 // pred_region
      _
    $region33: #{_lambda_.12} parent=1 // pred_fallthru
      _
    %p30 = scmp.eq.s32.totalorder 0, 0
    // Predicated region
    $region34: #{_lambda_.12} parent=1 // pred_check
      %p31 = pneg %p30
    $region35: #{_lambda_.12} parent=1 // pred_check_branch
      %33 = sbr.rel (%p31) target = $region37
    $region36: #{_lambda_.12} parent=1 // pred_region
      %vm34 = vcmask 7168
      %35 = vst.msk [vmem:[#allocation2] sm:$0xff] %vm34, 0.0
    $region37: #{_lambda_.12} parent=1 // pred_fallthru
      _
    %v36 = vld [vmem:[%s0] sm:$0xff]
    %v37 = vld [vmem:[%s0 + $0x8] sm:$0xff]
    %v38 = vld [vmem:[%s0 + $0x10] sm:$0xff]
    %v39 = vld [vmem:[%s0 + $0x18] sm:$0xff]
    %v40 = vld [vmem:[%s0 + $0x20] sm:$0xff]
    %v41 = vld [vmem:[%s0 + $0x28] sm:$0xff]
    %v42 = vld [vmem:[%s0 + $0x30] sm:$0xff]
    %v43 = vld [vmem:[%s0 + $0x38] sm:$0xff]
    %v44 = vld [vmem:[%s1] sm:$0xff]
    %v45 = vld [vmem:[%s1 + $0x8] sm:$0xff]
    %v46 = vld [vmem:[%s1 + $0x10] sm:$0xff]
    %v47 = vld [vmem:[%s1 + $0x18] sm:$0xff]
    %v48 = vld [vmem:[%s1 + $0x20] sm:$0xff]
    %v49 = vld [vmem:[%s1 + $0x28] sm:$0xff]
    %v50 = vld [vmem:[%s1 + $0x30] sm:$0xff]
    %v51 = vld [vmem:[%s1 + $0x38] sm:$0xff]
    %v52 = vsub.f32 %v36, %v44
    %v53 = vsub.f32 %v37, %v45
    %v54 = vsub.f32 %v38, %v46
    %v55 = vsub.f32 %v39, %v47
    %v56 = vsub.f32 %v40, %v48
    %v57 = vsub.f32 %v41, %v49
    %v58 = vsub.f32 %v42, %v50
    %v59 = vsub.f32 %v43, %v51
    %v60 = vmul.f32 %v52, %v52
    %v61 = vmul.f32 %v53, %v53
    %v62 = vmul.f32 %v54, %v54
    %v63 = vmul.f32 %v55, %v55
    %v64 = vmul.f32 %v56, %v56
    %v65 = vmul.f32 %v57, %v57
    %v66 = vmul.f32 %v58, %v58
    %v67 = vmul.f32 %v59, %v59
    %v68 = vadd.f32 %v60, %v61
    %v69 = vadd.f32 %v68, %v62
    %v70 = vadd.f32 %v69, %v63
    %v71 = vadd.f32 %v70, %v64
    %v72 = vadd.f32 %v71, %v65
    %v73 = vadd.f32 %v72, %v66
    %v74 = vadd.f32 %v73, %v67
    %75 = vadd.xlane.f32.xlu0 %v74
    %v76 = vpop.xlane.xlu0 %75
    %v77 = vld [vmem:[%s2] sm:$0xff]
    %v78 = vld [vmem:[%s2 + $0x8] sm:$0xff]
    %v79 = vld [vmem:[%s2 + $0x10] sm:$0xff]
    %v80 = vld [vmem:[%s2 + $0x18] sm:$0xff]
    %v81 = vld [vmem:[%s2 + $0x20] sm:$0xff]
    %v82 = vld [vmem:[%s2 + $0x28] sm:$0xff]
    %v83 = vld [vmem:[%s2 + $0x30] sm:$0xff]
    %v84 = vld [vmem:[%s2 + $0x38] sm:$0xff]
    %v85 = vld [vmem:[%s3] sm:$0xff]
    %v86 = vld [vmem:[%s3 + $0x8] sm:$0xff]
    %v87 = vld [vmem:[%s3 + $0x10] sm:$0xff]
    %v88 = vld [vmem:[%s3 + $0x18] sm:$0xff]
    %v89 = vld [vmem:[%s3 + $0x20] sm:$0xff]
    %v90 = vld [vmem:[%s3 + $0x28] sm:$0xff]
    %v91 = vld [vmem:[%s3 + $0x30] sm:$0xff]
    %v92 = vld [vmem:[%s3 + $0x38] sm:$0xff]
    %v93 = vsub.f32 %v77, %v85
    %v94 = vsub.f32 %v78, %v86
    %v95 = vsub.f32 %v79, %v87
    %v96 = vsub.f32 %v80, %v88
    %v97 = vsub.f32 %v81, %v89
    %v98 = vsub.f32 %v82, %v90
    %v99 = vsub.f32 %v83, %v91
    %v100 = vsub.f32 %v84, %v92
    %v101 = vmul.f32 %v93, %v93
    %v102 = vmul.f32 %v94, %v94
    %v103 = vmul.f32 %v95, %v95
    %v104 = vmul.f32 %v96, %v96
    %v105 = vmul.f32 %v97, %v97
    %v106 = vmul.f32 %v98, %v98
    %v107 = vmul.f32 %v99, %v99
    %v108 = vmul.f32 %v100, %v100
    %v109 = vadd.f32 %v101, %v102
    %v110 = vadd.f32 %v109, %v103
    %v111 = vadd.f32 %v110, %v104
    %v112 = vadd.f32 %v111, %v105
    %v113 = vadd.f32 %v112, %v106
    %v114 = vadd.f32 %v113, %v107
    %v115 = vadd.f32 %v114, %v108
    %116 = vadd.xlane.f32.xlu0 %v115
    %v117 = vpop.xlane.xlu0 %116
    %v118 = vadd.f32 %v76, %v117
    %v119 = vld [vmem:[%s4] sm:$0xff]
    %v120 = vld [vmem:[%s4 + $0x8] sm:$0xff]
    %v121 = vld [vmem:[%s4 + $0x10] sm:$0xff]
    %v122 = vld [vmem:[%s4 + $0x18] sm:$0xff]
    %v123 = vld [vmem:[%s4 + $0x20] sm:$0xff]
    %v124 = vld [vmem:[%s4 + $0x28] sm:$0xff]
    %v125 = vld [vmem:[%s4 + $0x30] sm:$0xff]
    %v126 = vld [vmem:[%s4 + $0x38] sm:$0xff]
    %v127 = vld [vmem:[%s5] sm:$0xff]
    %v128 = vld [vmem:[%s5 + $0x8] sm:$0xff]
    %v129 = vld [vmem:[%s5 + $0x10] sm:$0xff]
    %v130 = vld [vmem:[%s5 + $0x18] sm:$0xff]
    %v131 = vld [vmem:[%s5 + $0x20] sm:$0xff]
    %v132 = vld [vmem:[%s5 + $0x28] sm:$0xff]
    %v133 = vld [vmem:[%s5 + $0x30] sm:$0xff]
    %v134 = vld [vmem:[%s5 + $0x38] sm:$0xff]
    %v135 = vsub.f32 %v119, %v127
    %v136 = vsub.f32 %v120, %v128
    %v137 = vsub.f32 %v121, %v129
    %v138 = vsub.f32 %v122, %v130
    %v139 = vsub.f32 %v123, %v131
    %v140 = vsub.f32 %v124, %v132
    %v141 = vsub.f32 %v125, %v133
    %v142 = vsub.f32 %v126, %v134
    %v143 = vmul.f32 %v135, %v135
    %v144 = vmul.f32 %v136, %v136
    %v145 = vmul.f32 %v137, %v137
    %v146 = vmul.f32 %v138, %v138
    %v147 = vmul.f32 %v139, %v139
    %v148 = vmul.f32 %v140, %v140
    %v149 = vmul.f32 %v141, %v141
    %v150 = vmul.f32 %v142, %v142
    %v151 = vadd.f32 %v143, %v144
    %v152 = vadd.f32 %v151, %v145
    %v153 = vadd.f32 %v152, %v146
    %v154 = vadd.f32 %v153, %v147
    %v155 = vadd.f32 %v154, %v148
    %v156 = vadd.f32 %v155, %v149
    %v157 = vadd.f32 %v156, %v150
    %158 = vadd.xlane.f32.xlu0 %v157
    %v159 = vpop.xlane.xlu0 %158
    %v160 = vadd.f32 %v118, %v159
    %v161 = vld [vmem:[%s6] sm:$0xff]
    %v162 = vld [vmem:[%s6 + $0x8] sm:$0xff]
    %v163 = vld [vmem:[%s6 + $0x10] sm:$0xff]
    %v164 = vld [vmem:[%s6 + $0x18] sm:$0xff]
    %v165 = vld [vmem:[%s6 + $0x20] sm:$0xff]
    %v166 = vld [vmem:[%s6 + $0x28] sm:$0xff]
    %v167 = vld [vmem:[%s6 + $0x30] sm:$0xff]
    %v168 = vld [vmem:[%s6 + $0x38] sm:$0xff]
    %v169 = vld [vmem:[%s7] sm:$0xff]
    %v170 = vld [vmem:[%s7 + $0x8] sm:$0xff]
    %v171 = vld [vmem:[%s7 + $0x10] sm:$0xff]
    %v172 = vld [vmem:[%s7 + $0x18] sm:$0xff]
    %v173 = vld [vmem:[%s7 + $0x20] sm:$0xff]
    %v174 = vld [vmem:[%s7 + $0x28] sm:$0xff]
    %v175 = vld [vmem:[%s7 + $0x30] sm:$0xff]
    %v176 = vld [vmem:[%s7 + $0x38] sm:$0xff]
    %v177 = vsub.f32 %v161, %v169
    %v178 = vsub.f32 %v162, %v170
    %v179 = vsub.f32 %v163, %v171
    %v180 = vsub.f32 %v164, %v172
    %v181 = vsub.f32 %v165, %v173
    %v182 = vsub.f32 %v166, %v174
    %v183 = vsub.f32 %v167, %v175
    %v184 = vsub.f32 %v168, %v176
    %v185 = vmul.f32 %v177, %v177
    %v186 = vmul.f32 %v178, %v178
    %v187 = vmul.f32 %v179, %v179
    %v188 = vmul.f32 %v180, %v180
    %v189 = vmul.f32 %v181, %v181
    %v190 = vmul.f32 %v182, %v182
    %v191 = vmul.f32 %v183, %v183
    %v192 = vmul.f32 %v184, %v184
    %v193 = vadd.f32 %v185, %v186
    %v194 = vadd.f32 %v193, %v187
    %v195 = vadd.f32 %v194, %v188
    %v196 = vadd.f32 %v195, %v189
    %v197 = vadd.f32 %v196, %v190
    %v198 = vadd.f32 %v197, %v191
    %v199 = vadd.f32 %v198, %v192
    %200 = vadd.xlane.f32.xlu0 %v199
    %v201 = vpop.xlane.xlu0 %200
    %v202 = vadd.f32 %v160, %v201
    %v203 = vld [vmem:[#allocation2] sm:$0xff]
    %v204 = vadd.f32 %v203, %v202
    %vm205 = vcmask 7168
    %206 = vst.msk [vmem:[#allocation2] sm:$0xff] %vm205, %v204
    // Predicated region
    $region38: #{_lambda_.12} parent=1 // pred_check
      %p207 = pneg %p30
    $region39: #{_lambda_.12} parent=1 // pred_check_branch
      %209 = sbr.rel (%p207) target = $region41
    $region40: #{_lambda_.12} parent=1 // pred_region
      %v210 = vld [vmem:[#allocation2] sm:$0xff]
      %v211 = vsel %vm205, %v210, 0.0
      %v212 = vrot.slane %v211, 4
      %v213 = vadd.f32 %v211, %v212
      %v214 = vrot.slane %v213, 2
      %v215 = vadd.f32 %v213, %v214
      %v216 = vrot.slane %v215, 1
      %v217 = vadd.f32 %v215, %v216
      %vm218 = vcmask 0
      %219 = vst.msk [vmem:[#allocation3] sm:$0x1] %vm218, %v217
    $region41: #{_lambda_.12} parent=1 // pred_fallthru
      _
    // Predicated region
    $region42: #{_lambda_.12} parent=1 // pred_check
      _
    $region43: #{_lambda_.12} parent=1 // pred_check_branch
      %221 = sbr.rel (0) target = $region45
    $region44: #{_lambda_.12} parent=1 // pred_region
      %s223 = ssub.s32 16, 16
      %224 = vsyncadd [#allocation4], %s223
      %s226 = sshll.u32 [#allocation3], 4
      %s227 = int_to_ptr.vmem [resolvable:$true] %s226
      %229 = dma.vmem_to_hbm [thread:$0]  %s227, 16, %s8, [#allocation4]
    $region45: #{_lambda_.12} parent=1 // pred_fallthru
      _
    // Predicated region
    $region46: #{_lambda_.12} parent=1 // pred_check
      _
    $region47: #{_lambda_.12} parent=1 // pred_check_branch
      %231 = sbr.rel (0) target = $region49
    $region48: #{_lambda_.12} parent=1 // pred_region
      %232 = dma.done [#allocation4], 16
    $region49: #{_lambda_.12} parent=1 // pred_fallthru
      _
    %233 = vsyncpa [#allocation4], 1

</llo_original>
